<compile_context>
chip_gen: v7x
topology: tpu7x:2x2x1
jax: 0.10.0
libtpu: 0.0.40
codegen_flags: <defaults>
</compile_context>

<pallas_src>
import jax
import jax.numpy as jnp
from jax import lax
from jax.experimental import pallas as pl
from jax.experimental.pallas import tpu as pltpu


# ----------------------------- Pallas kernels -----------------------------

def conv_gemm_kernel(p_ref, w_ref, b_ref, o_ref):
    # p_ref: (K, M) bf16 patches of ONE image, w_ref: (O, K) bf16, b_ref: (O, 1) f32.
    acc = jnp.dot(w_ref[...], p_ref[...], preferred_element_type=jnp.float32)
    acc = acc + b_ref[...]                    # f32 bias add; no activation after convs
    o_ref[...] = acc.astype(o_ref.dtype)      # lane-dense (O, M) store


def maxpool4_kernel(a_ref, b_ref, c_ref, d_ref, o_ref):
    o_ref[...] = jnp.maximum(jnp.maximum(a_ref[...], b_ref[...]),
                             jnp.maximum(c_ref[...], d_ref[...]))


def mlp_head_kernel(x_ref, w1_ref, b1_ref, w2_ref, b2_ref, w3_ref, b3_ref, o_ref):
    # fc1 -> relu -> fc2 -> relu -> fc3 -> softmax, fully resident (M = batch = 2).
    h = jnp.dot(x_ref[...], w1_ref[...], preferred_element_type=jnp.float32) + b1_ref[...]
    h = jnp.maximum(h, 0.0).astype(jnp.bfloat16)
    h = jnp.dot(h, w2_ref[...], preferred_element_type=jnp.float32) + b2_ref[...]
    h = jnp.maximum(h, 0.0).astype(jnp.bfloat16)
    z = jnp.dot(h, w3_ref[...], preferred_element_type=jnp.float32) + b3_ref[...]
    z = z - jnp.max(z, axis=-1, keepdims=True)
    e = jnp.exp(z)
    o_ref[...] = (e / jnp.sum(e, axis=-1, keepdims=True)).astype(o_ref.dtype)


# ----------------------------- layer wrappers -----------------------------

def conv2d_nchw(x, w_oihw, b, *, stride, pad):
    """x: (N, C, H, W) bf16; w_oihw: (O, I, KH, KW) f32; returns (N, O, Ho, Wo) bf16."""
    N = x.shape[0]
    O, I, KH, KW = w_oihw.shape

    # im2col with channel-major K = I*KH*KW, kept in NCHW so the GEMM output is
    # channels-first (lane-dense) and feeds the next stage / the flatten directly.
    patches = lax.conv_general_dilated_patches(
        x,
        filter_shape=(KH, KW),
        window_strides=(stride, stride),
        padding=((pad, pad), (pad, pad)),
        dimension_numbers=("NCHW", "OIHW", "NCHW"))            # (N, K, Ho, Wo) bf16
    _, K, Ho, Wo = patches.shape
    M = Ho * Wo
    p3 = patches.reshape(N, K, M)                               # free reshape

    w_mat = w_oihw.reshape(O, K).astype(jnp.bfloat16)           # matches (c, kh, kw) order
    b2 = b.reshape(O, 1).astype(jnp.float32)

    out = pl.pallas_call(
        conv_gemm_kernel,
        out_shape=jax.ShapeDtypeStruct((N, O, M), jnp.bfloat16),
        grid=(N,),
        in_specs=[
            pl.BlockSpec((None, K, M), lambda n: (n, 0, 0)),    # whole image per step
            pl.BlockSpec((O, K), lambda n: (0, 0)),
            pl.BlockSpec((O, 1), lambda n: (0, 0)),
        ],
        out_specs=pl.BlockSpec((None, O, M), lambda n: (n, 0, 0)),
        compiler_params=pltpu.CompilerParams(dimension_semantics=("parallel",)),
    )(p3, w_mat, b2)
    return out.reshape(N, O, Ho, Wo)


def maxpool2x2_nchw(x):
    """x: (N, C, H, W) -> (N, C, H//2, W//2), kernel=2 stride=2 (floor, like torch)."""
    N, C, H, W = x.shape
    Hp, Wp = H // 2, W // 2
    He, We = 2 * Hp, 2 * Wp
    # TODO(synk): the 2x2 strided gather stays in XLA glue; lane-strided selection has
    # no clean/portable Mosaic lowering. The max itself is one lane-dense Pallas kernel.
    a = x[:, :, 0:He:2, 0:We:2].reshape(N * C, Hp * Wp)
    b = x[:, :, 0:He:2, 1:We:2].reshape(N * C, Hp * Wp)
    c = x[:, :, 1:He:2, 0:We:2].reshape(N * C, Hp * Wp)
    d = x[:, :, 1:He:2, 1:We:2].reshape(N * C, Hp * Wp)
    out = pl.pallas_call(
        maxpool4_kernel,
        out_shape=jax.ShapeDtypeStruct((N * C, Hp * Wp), x.dtype),
    )(a, b, c, d)
    return out.reshape(N, C, Hp, Wp)


def mlp_head(x, w1, b1, w2, b2, w3, b3):
    """x: (N, 2304) -> softmax probabilities (N, n_classes) f32, one fused pallas_call."""
    Nb = x.shape[0]
    n_out = w3.shape[1]
    return pl.pallas_call(
        mlp_head_kernel,
        out_shape=jax.ShapeDtypeStruct((Nb, n_out), jnp.float32),
    )(x.astype(jnp.bfloat16),
      w1.astype(jnp.bfloat16), b1.reshape(1, -1).astype(jnp.float32),
      w2.astype(jnp.bfloat16), b2.reshape(1, -1).astype(jnp.float32),
      w3.astype(jnp.bfloat16), b3.reshape(1, -1).astype(jnp.float32))


# ----------------------------- model -----------------------------

def init_params(key, n_classes):
    ks = jax.random.split(key, 6)

    def winit(k, shape, fan_in):
        return jax.random.normal(k, shape, jnp.float32) / jnp.sqrt(jnp.float32(fan_in))

    p = {}
    p["conv1_w"] = winit(ks[0], (16, 3, 5, 5), 3 * 5 * 5)
    p["conv1_b"] = jnp.zeros((16,), jnp.float32)
    p["conv2_w"] = winit(ks[1], (32, 16, 5, 5), 16 * 5 * 5)
    p["conv2_b"] = jnp.zeros((32,), jnp.float32)
    p["conv3_w"] = winit(ks[2], (64, 32, 3, 3), 32 * 3 * 3)
    p["conv3_b"] = jnp.zeros((64,), jnp.float32)
    p["fc1_w"] = winit(ks[3], (64 * 6 * 6, 500), 64 * 6 * 6)   # (in, out)
    p["fc1_b"] = jnp.zeros((500,), jnp.float32)
    p["fc2_w"] = winit(ks[4], (500, 50), 500)
    p["fc2_b"] = jnp.zeros((50,), jnp.float32)
    p["fc3_w"] = winit(ks[5], (50, n_classes), 50)
    p["fc3_b"] = jnp.zeros((n_classes,), jnp.float32)
    return p


def cnn_classifier_forward(params, x_nchw):
    x = x_nchw.astype(jnp.bfloat16)                                            # (N,3,224,224)

    x = conv2d_nchw(x, params["conv1_w"], params["conv1_b"], stride=2, pad=1)  # (N,16,111,111)
    x = maxpool2x2_nchw(x)                                                     # (N,16, 55, 55)
    x = conv2d_nchw(x, params["conv2_w"], params["conv2_b"], stride=2, pad=1)  # (N,32, 27, 27)
    x = maxpool2x2_nchw(x)                                                     # (N,32, 13, 13)
    x = conv2d_nchw(x, params["conv3_w"], params["conv3_b"], stride=1, pad=1)  # (N,64, 13, 13)
    x = maxpool2x2_nchw(x)                                                     # (N,64,  6,  6)

    # NCHW flatten == torch x.view(N, -1) (C, H, W order); free reshape (already CHW-major).
    N = x.shape[0]
    x = x.reshape(N, -1)                                                       # (N, 2304)

    return mlp_head(x, params["fc1_w"], params["fc1_b"],
                    params["fc2_w"], params["fc2_b"],
                    params["fc3_w"], params["fc3_b"])


if __name__ == "__main__":
    n_classes = 10
    key = jax.random.PRNGKey(0)
    k_params, k_x = jax.random.split(key)
    params = init_params(k_params, n_classes)

    # fc1's 64*6*6 in_features implies a 224x224 input through this conv/pool stack.
    x = jax.random.uniform(k_x, (2, 3, 224, 224), dtype=jnp.float32)

    probs = jax.jit(cnn_classifier_forward)(params, x)
    probs = jax.block_until_ready(probs)

    assert probs.shape == (2, n_classes)
    assert bool(jnp.all(jnp.isfinite(probs)))
    assert bool(jnp.allclose(jnp.sum(probs, axis=-1), 1.0, atol=1e-5))
    print("KERNEL_OK")
</pallas_src>

<mosaic_0001>
module attributes {stable_mosaic.version = 11 : i64} {
  func.func @conv_gemm_kernel(%arg0: i32, %arg1: memref<1x75x12321xbf16, #tpu.memory_space<vmem>>, %arg2: memref<16x75xbf16, #tpu.memory_space<vmem>>, %arg3: memref<16x1xf32, #tpu.memory_space<vmem>>, %arg4: memref<1x16x12321xbf16, #tpu.memory_space<vmem>>) attributes {dimension_semantics = [#tpu.dimension_semantics<parallel>], iteration_bounds = array<i64: 2>, scalar_prefetch = 0 : i64, scratch_operands = 0 : i64, tpu.core_type = #tpu.core_type<tc>, window_params = [{transform_indices = @transform_0, window_bounds = array<i64: 1, 75, 12321>}, {pipeline_mode = #tpu.pipeline_mode<synchronous>, transform_indices = @transform_1, window_bounds = array<i64: 16, 75>}, {pipeline_mode = #tpu.pipeline_mode<synchronous>, transform_indices = @transform_2, window_bounds = array<i64: 16, 1>}, {transform_indices = @transform_3, window_bounds = array<i64: 1, 16, 12321>}]} {
    %c0 = arith.constant 0 : index
    %c0_0 = arith.constant 0 : index
    %0 = vector.load %arg2[%c0, %c0_0] : memref<16x75xbf16, #tpu.memory_space<vmem>>, vector<16x75xbf16>
    %c0_1 = arith.constant 0 : index
    %c0_2 = arith.constant 0 : index
    %c0_3 = arith.constant 0 : index
    %1 = vector.load %arg1[%c0_1, %c0_2, %c0_3] : memref<1x75x12321xbf16, #tpu.memory_space<vmem>>, vector<1x75x12321xbf16>
    %2 = vector.shape_cast %1 : vector<1x75x12321xbf16> to vector<75x12321xbf16>
    %cst = arith.constant dense<0.000000e+00> : vector<16x12321xf32>
    %3 = tpu.matmul %0, %2, %cst {dimension_numbers = #tpu.dot_dimension_numbers<[1], [0], [0], [1], [0, 0, 1, 1], [], []>} : vector<16x75xbf16>, vector<75x12321xbf16>, vector<16x12321xf32> -> vector<16x12321xf32>
    %c0_4 = arith.constant 0 : index
    %c0_5 = arith.constant 0 : index
    %4 = vector.load %arg3[%c0_4, %c0_5] : memref<16x1xf32, #tpu.memory_space<vmem>>, vector<16x1xf32>
    %5 = vector.broadcast %4 : vector<16x1xf32> to vector<16x12321xf32>
    %6 = arith.addf %3, %5 : vector<16x12321xf32>
    %7 = arith.truncf %6 : vector<16x12321xf32> to vector<16x12321xbf16>
    %c0_6 = arith.constant 0 : index
    %c0_7 = arith.constant 0 : index
    %c0_8 = arith.constant 0 : index
    %8 = vector.load %arg4[%c0_6, %c0_7, %c0_8] : memref<1x16x12321xbf16, #tpu.memory_space<vmem>>, vector<1x16x12321xbf16>
    %9 = vector.shape_cast %8 : vector<1x16x12321xbf16> to vector<16x12321xbf16>
    %10 = vector.shape_cast %7 : vector<16x12321xbf16> to vector<1x16x12321xbf16>
    tpu.vector_store %arg4[%c0_6, %c0_7, %c0_8], %10 {strides = array<i32>} : memref<1x16x12321xbf16, #tpu.memory_space<vmem>>, vector<1x16x12321xbf16>,
    return
  }
  func.func @transform_0(%arg0: i32) -> (i32, i32, i32) {
    %c0_i32 = arith.constant 0 : i32
    %c0_i32_0 = arith.constant 0 : i32
    %c0_i32_1 = arith.constant 0 : i32
    return %arg0, %c0_i32, %c0_i32_0 : i32, i32, i32
  }
  func.func @transform_1(%arg0: i32) -> (i32, i32) {
    %c0_i32 = arith.constant 0 : i32
    %c0_i32_0 = arith.constant 0 : i32
    %c0_i32_1 = arith.constant 0 : i32
    return %c0_i32, %c0_i32_0 : i32, i32
  }
  func.func @transform_2(%arg0: i32) -> (i32, i32) {
    %c0_i32 = arith.constant 0 : i32
    %c0_i32_0 = arith.constant 0 : i32
    %c0_i32_1 = arith.constant 0 : i32
    return %c0_i32, %c0_i32_0 : i32, i32
  }
  func.func @transform_3(%arg0: i32) -> (i32, i32, i32) {
    %c0_i32 = arith.constant 0 : i32
    %c0_i32_0 = arith.constant 0 : i32
    %c0_i32_1 = arith.constant 0 : i32
    return %arg0, %c0_i32, %c0_i32_0 : i32, i32, i32
  }
}

module attributes {stable_mosaic.version = 11 : i64} {
  func.func @maxpool4_kernel(%arg0: memref<32x3025xbf16, #tpu.memory_space<vmem>>, %arg1: memref<32x3025xbf16, #tpu.memory_space<vmem>>, %arg2: memref<32x3025xbf16, #tpu.memory_space<vmem>>, %arg3: memref<32x3025xbf16, #tpu.memory_space<vmem>>, %arg4: memref<32x3025xbf16, #tpu.memory_space<vmem>>) attributes {dimension_semantics = [], scalar_prefetch = 0 : i64, scratch_operands = 0 : i64, tpu.core_type = #tpu.core_type<tc>} {
    %c0 = arith.constant 0 : index
    %c0_0 = arith.constant 0 : index
    %0 = vector.load %arg0[%c0, %c0_0] : memref<32x3025xbf16, #tpu.memory_space<vmem>>, vector<32x3025xbf16>
    %c0_1 = arith.constant 0 : index
    %c0_2 = arith.constant 0 : index
    %1 = vector.load %arg1[%c0_1, %c0_2] : memref<32x3025xbf16, #tpu.memory_space<vmem>>, vector<32x3025xbf16>
    %2 = arith.maximumf %0, %1 : vector<32x3025xbf16>
    %c0_3 = arith.constant 0 : index
    %c0_4 = arith.constant 0 : index
    %3 = vector.load %arg2[%c0_3, %c0_4] : memref<32x3025xbf16, #tpu.memory_space<vmem>>, vector<32x3025xbf16>
    %c0_5 = arith.constant 0 : index
    %c0_6 = arith.constant 0 : index
    %4 = vector.load %arg3[%c0_5, %c0_6] : memref<32x3025xbf16, #tpu.memory_space<vmem>>, vector<32x3025xbf16>
    %5 = arith.maximumf %3, %4 : vector<32x3025xbf16>
    %6 = arith.maximumf %2, %5 : vector<32x3025xbf16>
    %c0_7 = arith.constant 0 : index
    %c0_8 = arith.constant 0 : index
    %7 = vector.load %arg4[%c0_7, %c0_8] : memref<32x3025xbf16, #tpu.memory_space<vmem>>, vector<32x3025xbf16>
    tpu.vector_store %arg4[%c0_7, %c0_8], %6 {strides = array<i32>} : memref<32x3025xbf16, #tpu.memory_space<vmem>>, vector<32x3025xbf16>,
    return
  }
}

module attributes {stable_mosaic.version = 11 : i64} {
  func.func @conv_gemm_kernel(%arg0: i32, %arg1: memref<1x400x729xbf16, #tpu.memory_space<vmem>>, %arg2: memref<32x400xbf16, #tpu.memory_space<vmem>>, %arg3: memref<32x1xf32, #tpu.memory_space<vmem>>, %arg4: memref<1x32x729xbf16, #tpu.memory_space<vmem>>) attributes {dimension_semantics = [#tpu.dimension_semantics<parallel>], iteration_bounds = array<i64: 2>, scalar_prefetch = 0 : i64, scratch_operands = 0 : i64, tpu.core_type = #tpu.core_type<tc>, window_params = [{transform_indices = @transform_0, window_bounds = array<i64: 1, 400, 729>}, {pipeline_mode = #tpu.pipeline_mode<synchronous>, transform_indices = @transform_1, window_bounds = array<i64: 32, 400>}, {pipeline_mode = #tpu.pipeline_mode<synchronous>, transform_indices = @transform_2, window_bounds = array<i64: 32, 1>}, {transform_indices = @transform_3, window_bounds = array<i64: 1, 32, 729>}]} {
    %c0 = arith.constant 0 : index
    %c0_0 = arith.constant 0 : index
    %0 = vector.load %arg2[%c0, %c0_0] : memref<32x400xbf16, #tpu.memory_space<vmem>>, vector<32x400xbf16>
    %c0_1 = arith.constant 0 : index
    %c0_2 = arith.constant 0 : index
    %c0_3 = arith.constant 0 : index
    %1 = vector.load %arg1[%c0_1, %c0_2, %c0_3] : memref<1x400x729xbf16, #tpu.memory_space<vmem>>, vector<1x400x729xbf16>
    %2 = vector.shape_cast %1 : vector<1x400x729xbf16> to vector<400x729xbf16>
    %cst = arith.constant dense<0.000000e+00> : vector<32x729xf32>
    %3 = tpu.matmul %0, %2, %cst {dimension_numbers = #tpu.dot_dimension_numbers<[1], [0], [0], [1], [0, 0, 1, 1], [], []>} : vector<32x400xbf16>, vector<400x729xbf16>, vector<32x729xf32> -> vector<32x729xf32>
    %c0_4 = arith.constant 0 : index
    %c0_5 = arith.constant 0 : index
    %4 = vector.load %arg3[%c0_4, %c0_5] : memref<32x1xf32, #tpu.memory_space<vmem>>, vector<32x1xf32>
    %5 = vector.broadcast %4 : vector<32x1xf32> to vector<32x729xf32>
    %6 = arith.addf %3, %5 : vector<32x729xf32>
    %7 = arith.truncf %6 : vector<32x729xf32> to vector<32x729xbf16>
    %c0_6 = arith.constant 0 : index
    %c0_7 = arith.constant 0 : index
    %c0_8 = arith.constant 0 : index
    %8 = vector.load %arg4[%c0_6, %c0_7, %c0_8] : memref<1x32x729xbf16, #tpu.memory_space<vmem>>, vector<1x32x729xbf16>
    %9 = vector.shape_cast %8 : vector<1x32x729xbf16> to vector<32x729xbf16>
    %10 = vector.shape_cast %7 : vector<32x729xbf16> to vector<1x32x729xbf16>
    tpu.vector_store %arg4[%c0_6, %c0_7, %c0_8], %10 {strides = array<i32>} : memref<1x32x729xbf16, #tpu.memory_space<vmem>>, vector<1x32x729xbf16>,
    return
  }
  func.func @transform_0(%arg0: i32) -> (i32, i32, i32) {
    %c0_i32 = arith.constant 0 : i32
    %c0_i32_0 = arith.constant 0 : i32
    %c0_i32_1 = arith.constant 0 : i32
    return %arg0, %c0_i32, %c0_i32_0 : i32, i32, i32
  }
  func.func @transform_1(%arg0: i32) -> (i32, i32) {
    %c0_i32 = arith.constant 0 : i32
    %c0_i32_0 = arith.constant 0 : i32
    %c0_i32_1 = arith.constant 0 : i32
    return %c0_i32, %c0_i32_0 : i32, i32
  }
  func.func @transform_2(%arg0: i32) -> (i32, i32) {
    %c0_i32 = arith.constant 0 : i32
    %c0_i32_0 = arith.constant 0 : i32
    %c0_i32_1 = arith.constant 0 : i32
    return %c0_i32, %c0_i32_0 : i32, i32
  }
  func.func @transform_3(%arg0: i32) -> (i32, i32, i32) {
    %c0_i32 = arith.constant 0 : i32
    %c0_i32_0 = arith.constant 0 : i32
    %c0_i32_1 = arith.constant 0 : i32
    return %arg0, %c0_i32, %c0_i32_0 : i32, i32, i32
  }
}

module attributes {stable_mosaic.version = 11 : i64} {
  func.func @maxpool4_kernel(%arg0: memref<64x169xbf16, #tpu.memory_space<vmem>>, %arg1: memref<64x169xbf16, #tpu.memory_space<vmem>>, %arg2: memref<64x169xbf16, #tpu.memory_space<vmem>>, %arg3: memref<64x169xbf16, #tpu.memory_space<vmem>>, %arg4: memref<64x169xbf16, #tpu.memory_space<vmem>>) attributes {dimension_semantics = [], scalar_prefetch = 0 : i64, scratch_operands = 0 : i64, tpu.core_type = #tpu.core_type<tc>} {
    %c0 = arith.constant 0 : index
    %c0_0 = arith.constant 0 : index
    %0 = vector.load %arg0[%c0, %c0_0] : memref<64x169xbf16, #tpu.memory_space<vmem>>, vector<64x169xbf16>
    %c0_1 = arith.constant 0 : index
    %c0_2 = arith.constant 0 : index
    %1 = vector.load %arg1[%c0_1, %c0_2] : memref<64x169xbf16, #tpu.memory_space<vmem>>, vector<64x169xbf16>
    %2 = arith.maximumf %0, %1 : vector<64x169xbf16>
    %c0_3 = arith.constant 0 : index
    %c0_4 = arith.constant 0 : index
    %3 = vector.load %arg2[%c0_3, %c0_4] : memref<64x169xbf16, #tpu.memory_space<vmem>>, vector<64x169xbf16>
    %c0_5 = arith.constant 0 : index
    %c0_6 = arith.constant 0 : index
    %4 = vector.load %arg3[%c0_5, %c0_6] : memref<64x169xbf16, #tpu.memory_space<vmem>>, vector<64x169xbf16>
    %5 = arith.maximumf %3, %4 : vector<64x169xbf16>
    %6 = arith.maximumf %2, %5 : vector<64x169xbf16>
    %c0_7 = arith.constant 0 : index
    %c0_8 = arith.constant 0 : index
    %7 = vector.load %arg4[%c0_7, %c0_8] : memref<64x169xbf16, #tpu.memory_space<vmem>>, vector<64x169xbf16>
    tpu.vector_store %arg4[%c0_7, %c0_8], %6 {strides = array<i32>} : memref<64x169xbf16, #tpu.memory_space<vmem>>, vector<64x169xbf16>,
    return
  }
}

module attributes {stable_mosaic.version = 11 : i64} {
  func.func @conv_gemm_kernel(%arg0: i32, %arg1: memref<1x288x169xbf16, #tpu.memory_space<vmem>>, %arg2: memref<64x288xbf16, #tpu.memory_space<vmem>>, %arg3: memref<64x1xf32, #tpu.memory_space<vmem>>, %arg4: memref<1x64x169xbf16, #tpu.memory_space<vmem>>) attributes {dimension_semantics = [#tpu.dimension_semantics<parallel>], iteration_bounds = array<i64: 2>, scalar_prefetch = 0 : i64, scratch_operands = 0 : i64, tpu.core_type = #tpu.core_type<tc>, window_params = [{transform_indices = @transform_0, window_bounds = array<i64: 1, 288, 169>}, {pipeline_mode = #tpu.pipeline_mode<synchronous>, transform_indices = @transform_1, window_bounds = array<i64: 64, 288>}, {pipeline_mode = #tpu.pipeline_mode<synchronous>, transform_indices = @transform_2, window_bounds = array<i64: 64, 1>}, {transform_indices = @transform_3, window_bounds = array<i64: 1, 64, 169>}]} {
    %c0 = arith.constant 0 : index
    %c0_0 = arith.constant 0 : index
    %0 = vector.load %arg2[%c0, %c0_0] : memref<64x288xbf16, #tpu.memory_space<vmem>>, vector<64x288xbf16>
    %c0_1 = arith.constant 0 : index
    %c0_2 = arith.constant 0 : index
    %c0_3 = arith.constant 0 : index
    %1 = vector.load %arg1[%c0_1, %c0_2, %c0_3] : memref<1x288x169xbf16, #tpu.memory_space<vmem>>, vector<1x288x169xbf16>
    %2 = vector.shape_cast %1 : vector<1x288x169xbf16> to vector<288x169xbf16>
    %cst = arith.constant dense<0.000000e+00> : vector<64x169xf32>
    %3 = tpu.matmul %0, %2, %cst {dimension_numbers = #tpu.dot_dimension_numbers<[1], [0], [0], [1], [0, 0, 1, 1], [], []>} : vector<64x288xbf16>, vector<288x169xbf16>, vector<64x169xf32> -> vector<64x169xf32>
    %c0_4 = arith.constant 0 : index
    %c0_5 = arith.constant 0 : index
    %4 = vector.load %arg3[%c0_4, %c0_5] : memref<64x1xf32, #tpu.memory_space<vmem>>, vector<64x1xf32>
    %5 = vector.broadcast %4 : vector<64x1xf32> to vector<64x169xf32>
    %6 = arith.addf %3, %5 : vector<64x169xf32>
    %7 = arith.truncf %6 : vector<64x169xf32> to vector<64x169xbf16>
    %c0_6 = arith.constant 0 : index
    %c0_7 = arith.constant 0 : index
    %c0_8 = arith.constant 0 : index
    %8 = vector.load %arg4[%c0_6, %c0_7, %c0_8] : memref<1x64x169xbf16, #tpu.memory_space<vmem>>, vector<1x64x169xbf16>
    %9 = vector.shape_cast %8 : vector<1x64x169xbf16> to vector<64x169xbf16>
    %10 = vector.shape_cast %7 : vector<64x169xbf16> to vector<1x64x169xbf16>
    tpu.vector_store %arg4[%c0_6, %c0_7, %c0_8], %10 {strides = array<i32>} : memref<1x64x169xbf16, #tpu.memory_space<vmem>>, vector<1x64x169xbf16>,
    return
  }
  func.func @transform_0(%arg0: i32) -> (i32, i32, i32) {
    %c0_i32 = arith.constant 0 : i32
    %c0_i32_0 = arith.constant 0 : i32
    %c0_i32_1 = arith.constant 0 : i32
    return %arg0, %c0_i32, %c0_i32_0 : i32, i32, i32
  }
  func.func @transform_1(%arg0: i32) -> (i32, i32) {
    %c0_i32 = arith.constant 0 : i32
    %c0_i32_0 = arith.constant 0 : i32
    %c0_i32_1 = arith.constant 0 : i32
    return %c0_i32, %c0_i32_0 : i32, i32
  }
  func.func @transform_2(%arg0: i32) -> (i32, i32) {
    %c0_i32 = arith.constant 0 : i32
    %c0_i32_0 = arith.constant 0 : i32
    %c0_i32_1 = arith.constant 0 : i32
    return %c0_i32, %c0_i32_0 : i32, i32
  }
  func.func @transform_3(%arg0: i32) -> (i32, i32, i32) {
    %c0_i32 = arith.constant 0 : i32
    %c0_i32_0 = arith.constant 0 : i32
    %c0_i32_1 = arith.constant 0 : i32
    return %arg0, %c0_i32, %c0_i32_0 : i32, i32, i32
  }
}

module attributes {stable_mosaic.version = 11 : i64} {
  func.func @maxpool4_kernel(%arg0: memref<128x36xbf16, #tpu.memory_space<vmem>>, %arg1: memref<128x36xbf16, #tpu.memory_space<vmem>>, %arg2: memref<128x36xbf16, #tpu.memory_space<vmem>>, %arg3: memref<128x36xbf16, #tpu.memory_space<vmem>>, %arg4: memref<128x36xbf16, #tpu.memory_space<vmem>>) attributes {dimension_semantics = [], scalar_prefetch = 0 : i64, scratch_operands = 0 : i64, tpu.core_type = #tpu.core_type<tc>} {
    %c0 = arith.constant 0 : index
    %c0_0 = arith.constant 0 : index
    %0 = vector.load %arg0[%c0, %c0_0] : memref<128x36xbf16, #tpu.memory_space<vmem>>, vector<128x36xbf16>
    %c0_1 = arith.constant 0 : index
    %c0_2 = arith.constant 0 : index
    %1 = vector.load %arg1[%c0_1, %c0_2] : memref<128x36xbf16, #tpu.memory_space<vmem>>, vector<128x36xbf16>
    %2 = arith.maximumf %0, %1 : vector<128x36xbf16>
    %c0_3 = arith.constant 0 : index
    %c0_4 = arith.constant 0 : index
    %3 = vector.load %arg2[%c0_3, %c0_4] : memref<128x36xbf16, #tpu.memory_space<vmem>>, vector<128x36xbf16>
    %c0_5 = arith.constant 0 : index
    %c0_6 = arith.constant 0 : index
    %4 = vector.load %arg3[%c0_5, %c0_6] : memref<128x36xbf16, #tpu.memory_space<vmem>>, vector<128x36xbf16>
    %5 = arith.maximumf %3, %4 : vector<128x36xbf16>
    %6 = arith.maximumf %2, %5 : vector<128x36xbf16>
    %c0_7 = arith.constant 0 : index
    %c0_8 = arith.constant 0 : index
    %7 = vector.load %arg4[%c0_7, %c0_8] : memref<128x36xbf16, #tpu.memory_space<vmem>>, vector<128x36xbf16>
    tpu.vector_store %arg4[%c0_7, %c0_8], %6 {strides = array<i32>} : memref<128x36xbf16, #tpu.memory_space<vmem>>, vector<128x36xbf16>,
    return
  }
}

module attributes {stable_mosaic.version = 11 : i64} {
  func.func @mlp_head_kernel(%arg0: memref<2x2304xbf16, #tpu.memory_space<vmem>>, %arg1: memref<2304x500xbf16, #tpu.memory_space<vmem>>, %arg2: memref<1x500xf32, #tpu.memory_space<vmem>>, %arg3: memref<500x50xbf16, #tpu.memory_space<vmem>>, %arg4: memref<1x50xf32, #tpu.memory_space<vmem>>, %arg5: memref<50x10xbf16, #tpu.memory_space<vmem>>, %arg6: memref<1x10xf32, #tpu.memory_space<vmem>>, %arg7: memref<2x10xf32, #tpu.memory_space<vmem>>) attributes {dimension_semantics = [], scalar_prefetch = 0 : i64, scratch_operands = 0 : i64, tpu.core_type = #tpu.core_type<tc>} {
    %c0 = arith.constant 0 : index
    %c0_0 = arith.constant 0 : index
    %0 = vector.load %arg0[%c0, %c0_0] : memref<2x2304xbf16, #tpu.memory_space<vmem>>, vector<2x2304xbf16>
    %c0_1 = arith.constant 0 : index
    %c0_2 = arith.constant 0 : index
    %1 = vector.load %arg1[%c0_1, %c0_2] : memref<2304x500xbf16, #tpu.memory_space<vmem>>, vector<2304x500xbf16>
    %cst = arith.constant dense<0.000000e+00> : vector<2x500xf32>
    %2 = tpu.matmul %0, %1, %cst {dimension_numbers = #tpu.dot_dimension_numbers<[1], [0], [0], [1], [0, 0, 1, 1], [], []>} : vector<2x2304xbf16>, vector<2304x500xbf16>, vector<2x500xf32> -> vector<2x500xf32>
    %c0_3 = arith.constant 0 : index
    %c0_4 = arith.constant 0 : index
    %3 = vector.load %arg2[%c0_3, %c0_4] : memref<1x500xf32, #tpu.memory_space<vmem>>, vector<1x500xf32>
    %4 = vector.broadcast %3 : vector<1x500xf32> to vector<2x500xf32>
    %5 = arith.addf %2, %4 : vector<2x500xf32>
    %cst_5 = arith.constant 0.000000e+00 : f32
    %6 = vector.broadcast %cst_5 : f32 to vector<2x500xf32>
    %7 = arith.maximumf %5, %6 : vector<2x500xf32>
    %8 = arith.truncf %7 : vector<2x500xf32> to vector<2x500xbf16>
    %c0_6 = arith.constant 0 : index
    %c0_7 = arith.constant 0 : index
    %9 = vector.load %arg3[%c0_6, %c0_7] : memref<500x50xbf16, #tpu.memory_space<vmem>>, vector<500x50xbf16>
    %cst_8 = arith.constant dense<0.000000e+00> : vector<2x50xf32>
    %10 = tpu.matmul %8, %9, %cst_8 {dimension_numbers = #tpu.dot_dimension_numbers<[1], [0], [0], [1], [0, 0, 1, 1], [], []>} : vector<2x500xbf16>, vector<500x50xbf16>, vector<2x50xf32> -> vector<2x50xf32>
    %c0_9 = arith.constant 0 : index
    %c0_10 = arith.constant 0 : index
    %11 = vector.load %arg4[%c0_9, %c0_10] : memref<1x50xf32, #tpu.memory_space<vmem>>, vector<1x50xf32>
    %12 = vector.broadcast %11 : vector<1x50xf32> to vector<2x50xf32>
    %13 = arith.addf %10, %12 : vector<2x50xf32>
    %cst_11 = arith.constant 0.000000e+00 : f32
    %14 = vector.broadcast %cst_11 : f32 to vector<2x50xf32>
    %15 = arith.maximumf %13, %14 : vector<2x50xf32>
    %16 = arith.truncf %15 : vector<2x50xf32> to vector<2x50xbf16>
    %c0_12 = arith.constant 0 : index
    %c0_13 = arith.constant 0 : index
    %17 = vector.load %arg5[%c0_12, %c0_13] : memref<50x10xbf16, #tpu.memory_space<vmem>>, vector<50x10xbf16>
    %cst_14 = arith.constant dense<0.000000e+00> : vector<2x10xf32>
    %18 = tpu.matmul %16, %17, %cst_14 {dimension_numbers = #tpu.dot_dimension_numbers<[1], [0], [0], [1], [0, 0, 1, 1], [], []>} : vector<2x50xbf16>, vector<50x10xbf16>, vector<2x10xf32> -> vector<2x10xf32>
    %c0_15 = arith.constant 0 : index
    %c0_16 = arith.constant 0 : index
    %19 = vector.load %arg6[%c0_15, %c0_16] : memref<1x10xf32, #tpu.memory_space<vmem>>, vector<1x10xf32>
    %20 = vector.broadcast %19 : vector<1x10xf32> to vector<2x10xf32>
    %21 = arith.addf %18, %20 : vector<2x10xf32>
    %cst_17 = arith.constant dense<0xFF800000> : vector<2xf32>
    %22 = vector.multi_reduction <maximumf>, %21, %cst_17 [1] : vector<2x10xf32> to vector<2xf32>
    %23 = vector.shape_cast %22 : vector<2xf32> to vector<2x1xf32>
    %24 = vector.broadcast %23 : vector<2x1xf32> to vector<2x10xf32>
    %25 = arith.subf %21, %24 : vector<2x10xf32>
    %26 = math.exp %25 : vector<2x10xf32>
    %cst_18 = arith.constant dense<0.000000e+00> : vector<2xf32>
    %27 = vector.multi_reduction <add>, %26, %cst_18 [1] : vector<2x10xf32> to vector<2xf32>
    %28 = vector.shape_cast %27 : vector<2xf32> to vector<2x1xf32>
    %29 = vector.broadcast %28 : vector<2x1xf32> to vector<2x10xf32>
    %30 = arith.divf %26, %29 : vector<2x10xf32>
    %c0_19 = arith.constant 0 : index
    %c0_20 = arith.constant 0 : index
    %31 = vector.load %arg7[%c0_19, %c0_20] : memref<2x10xf32, #tpu.memory_space<vmem>>, vector<2x10xf32>
    tpu.vector_store %arg7[%c0_19, %c0_20], %30 {strides = array<i32>} : memref<2x10xf32, #tpu.memory_space<vmem>>, vector<2x10xf32>,
    return
  }
}

</mosaic_0001>

<llo_original>
// kernel: cnn_classifier_forward.7
$region0: #{cnn_classifier_forward.7}
  #allocation0 [shape = 'u32[]', space=smem, size = 0x4, offset = 0x4, fixed_abs, tag = 'smem constant byte address 0x4 - core index']
  #allocation1 [shape = 'u32[144,128]{1,0:T(1,128)}', space=vmem, size = 0x12000, scoped, tag = 'internal scratch']
  %s0 = inlined_call_operand.vmem [shape: bf16[2,75,12321], index: 0, kind: input, shape index: {}]
  %s1 = inlined_call_operand.vmem [shape: bf16[16,75], index: 1, kind: input, shape index: {}]
  %s2 = inlined_call_operand.vmem [shape: f32[16,1], index: 2, kind: input, shape index: {}]
  %s3 = inlined_call_operand.vmem [shape: bf16[2,16,12321], index: 3, kind: output, shape index: {}]
  %s4 = sld [smem:[#allocation0]]
  $region45: #{cnn_classifier_forward.7} parent=0
    _
  %s6 = ssub.s32 1, %s4
  %s7 = scalar_select 0, %s6, %s4
  loop: start=0, step=1, limit=4
  $region2: #{cnn_classifier_forward.7} parent=0 // loop_pre_header
    _
  $region3: #{cnn_classifier_forward.7} parent=0 // loop_header
    %s9 = sphi 0, %s13
    %p10 = scmp.ge.s32.totalorder %s9, 4
    %s19 = sphi 0, %s21
    %s22 = sphi 0, %s19
    %s23 = sphi 0, %s22
    %s39 = sphi 0, %s23
    %s43 = sphi 0, %s43
    %s45 = sphi 0, %s43
    %s46 = sphi 0, %s45
    %s60 = sphi 0, %s46
    %s64 = sphi 0, %s64
    %s66 = sphi 0, %s64
    %s67 = sphi 0, %s66
    %s81 = sphi 0, %s67
    %s87 = sphi 0, %s89
    %s90 = sphi 0, %s87
    %s91 = sphi 0, %s90
    %s107 = sphi 0, %s91
  $region4: #{cnn_classifier_forward.7} parent=0 // loop_header_branch
    %12 = sbr.rel (%p10) target = $region8
  $region5: #{cnn_classifier_forward.7} parent=0 // loop_body
    %s14 = ssub.s32 %s9, 1
    %s15 = ssub.s32 %s9, 2
    %s16 = sadd.s32 %s9, 1
    %s17 = ssub.s32 %s9, %s16
    %p18 = scmp.eq.s32.totalorder %s17, 0
    %s20 = sadd.s32 %s19, 1
    %s21 = scalar_select %p18, %s19, %s20
    %p24 = pneg %p18
    %p25 = scmp.eq.s32.totalorder %s9, 1
    %p26 = por %p24, %p25
    %p27 = scmp.ne.s32.totalorder %s19, %s22
    %p28 = scmp.eq.s32.totalorder %s9, 0
    %p29 = por %p27, %p28
    %p30 = scmp.ne.s32.totalorder %s19, %s22
    %p31 = scmp.eq.s32.totalorder %s14, 1
    %p32 = por %p30, %p31
    %p33 = scmp.ne.s32.totalorder %s22, %s23
    %p34 = scmp.eq.s32.totalorder %s14, 0
    %p35 = por %p33, %p34
    %p36 = scmp.ne.s32.totalorder %s22, %s23
    %p37 = scmp.eq.s32.totalorder %s15, 1
    %p38 = por %p36, %p37
    %p40 = scmp.ne.s32.totalorder %s23, %s39
    %p41 = scmp.eq.s32.totalorder %s15, 0
    %p42 = por %p40, %p41
    %s44 = sadd.s32 %s43, 1
    %p47 = scmp.eq.s32.totalorder %s9, 1
    %p48 = scmp.ne.s32.totalorder %s43, %s45
    %p49 = scmp.eq.s32.totalorder %s9, 0
    %p50 = por %p48, %p49
    %p51 = scmp.ne.s32.totalorder %s43, %s45
    %p52 = scmp.eq.s32.totalorder %s14, 1
    %p53 = por %p51, %p52
    %p54 = scmp.ne.s32.totalorder %s45, %s46
    %p55 = scmp.eq.s32.totalorder %s14, 0
    %p56 = por %p54, %p55
    %p57 = scmp.ne.s32.totalorder %s45, %s46
    %p58 = scmp.eq.s32.totalorder %s15, 1
    %p59 = por %p57, %p58
    %p61 = scmp.ne.s32.totalorder %s46, %s60
    %p62 = scmp.eq.s32.totalorder %s15, 0
    %p63 = por %p61, %p62
    %s65 = sadd.s32 %s64, 1
    %p68 = scmp.eq.s32.totalorder %s9, 1
    %p69 = scmp.ne.s32.totalorder %s64, %s66
    %p70 = scmp.eq.s32.totalorder %s9, 0
    %p71 = por %p69, %p70
    %p72 = scmp.ne.s32.totalorder %s64, %s66
    %p73 = scmp.eq.s32.totalorder %s14, 1
    %p74 = por %p72, %p73
    %p75 = scmp.ne.s32.totalorder %s66, %s67
    %p76 = scmp.eq.s32.totalorder %s14, 0
    %p77 = por %p75, %p76
    %p78 = scmp.ne.s32.totalorder %s66, %s67
    %p79 = scmp.eq.s32.totalorder %s15, 1
    %p80 = por %p78, %p79
    %p82 = scmp.ne.s32.totalorder %s67, %s81
    %p83 = scmp.eq.s32.totalorder %s15, 0
    %p84 = por %p82, %p83
    %s85 = ssub.s32 %s9, %s16
    %p86 = scmp.eq.s32.totalorder %s85, 0
    %s88 = sadd.s32 %s87, 1
    %s89 = scalar_select %p86, %s87, %s88
    %p92 = pneg %p86
    %p93 = scmp.eq.s32.totalorder %s9, 1
    %p94 = por %p92, %p93
    %p95 = scmp.ne.s32.totalorder %s87, %s90
    %p96 = scmp.eq.s32.totalorder %s9, 0
    %p97 = por %p95, %p96
    %p98 = scmp.ne.s32.totalorder %s87, %s90
    %p99 = scmp.eq.s32.totalorder %s14, 1
    %p100 = por %p98, %p99
    %p101 = scmp.ne.s32.totalorder %s90, %s91
    %p102 = scmp.eq.s32.totalorder %s14, 0
    %p103 = por %p101, %p102
    %p104 = scmp.ne.s32.totalorder %s90, %s91
    %p105 = scmp.eq.s32.totalorder %s15, 1
    %p106 = por %p104, %p105
    %p108 = scmp.ne.s32.totalorder %s91, %s107
    %p109 = scmp.eq.s32.totalorder %s15, 0
    %p110 = por %p108, %p109
    %p111 = scmp.le.s32.totalorder 1, %s9
    %p112 = scmp.lt.s32.totalorder %s9, 3
    %p113 = pnand %p111, %p112
    %p114 = pneg %p113
    // Predicated region
    $region9: #{cnn_classifier_forward.7} parent=5 // pred_check
      _
    $region10: #{cnn_classifier_forward.7} parent=5 // pred_check_branch
      %116 = sbr.rel (%p113) target = $region12
    $region11: #{cnn_classifier_forward.7} parent=5 // pred_region
      %s117 = ssub.s32 %s9, 1
      // Predicated region
      $region13: #{cnn_classifier_forward.7} parent=11 // pred_check
        %p118 = pneg %p56
      $region14: #{cnn_classifier_forward.7} parent=11 // pred_check_branch
        %120 = sbr.rel (%p118) target = $region16
      $region15: #{cnn_classifier_forward.7} parent=11 // pred_region
        _
      $region16: #{cnn_classifier_forward.7} parent=11 // pred_fallthru
        _
      // Predicated region
      $region17: #{cnn_classifier_forward.7} parent=11 // pred_check
        %p121 = pneg %p77
      $region18: #{cnn_classifier_forward.7} parent=11 // pred_check_branch
        %123 = sbr.rel (%p121) target = $region20
      $region19: #{cnn_classifier_forward.7} parent=11 // pred_region
        _
      $region20: #{cnn_classifier_forward.7} parent=11 // pred_fallthru
        _
    $region12: #{cnn_classifier_forward.7} parent=5 // pred_fallthru
      _
    %p124 = scmp.lt.s32.totalorder %s9, 2
    // Predicated region
    $region21: #{cnn_classifier_forward.7} parent=5 // pred_check
      %p125 = pneg %p124
    $region22: #{cnn_classifier_forward.7} parent=5 // pred_check_branch
      %127 = sbr.rel (%p125) target = $region24
    $region23: #{cnn_classifier_forward.7} parent=5 // pred_region
      // Predicated region
      $region25: #{cnn_classifier_forward.7} parent=23 // pred_check
        %p128 = pneg %p29
      $region26: #{cnn_classifier_forward.7} parent=23 // pred_check_branch
        %130 = sbr.rel (%p128) target = $region28
      $region27: #{cnn_classifier_forward.7} parent=23 // pred_region
        %p131 = scmp.lt.s32.totalorder %s9, 1
        %s132 = scalar_select %p131, %s9, 1
        %s133 = smul.addr %s132, 970
        %s134 = smul.addr %s133, 4
        %s135 = scalar_lea.vmem %s0, %s134
      $region28: #{cnn_classifier_forward.7} parent=23 // pred_fallthru
        _
    $region24: #{cnn_classifier_forward.7} parent=5 // pred_fallthru
      _
    %p136 = scmp.le.s32.totalorder 1, %s9
    %p137 = scmp.lt.s32.totalorder %s9, 3
    %p138 = pnand %p136, %p137
    %p139 = pneg %p138
    // Predicated region
    $region29: #{cnn_classifier_forward.7} parent=5 // pred_check
      _
    $region30: #{cnn_classifier_forward.7} parent=5 // pred_check_branch
      %141 = sbr.rel (%p138) target = $region32
    $region31: #{cnn_classifier_forward.7} parent=5 // pred_region
      %s142 = ssub.s32 %s9, 1
      %p143 = scmp.lt.s32.totalorder %s14, 1
      %s144 = scalar_select %p143, %s14, 1
      %s145 = smul.addr %s144, 970
      %s146 = smul.addr %s145, 4
      %s147 = scalar_lea.vmem %s0, %s146
      %p148 = pneg %p35
      %p149 = pneg %p32
      %p150 = pneg %p56
      %p151 = pneg %p53
      %p152 = pneg %p77
      %p153 = pneg %p74
      %p154 = pneg %p103
      %p155 = pneg %p100
      %p156 = scmp.lt.s32.totalorder %s14, 1
      %s157 = scalar_select %p156, %s14, 1
      %s158 = smul.addr %s157, 194
      %s159 = smul.addr %s158, 4
      %s160 = scalar_lea.vmem %s3, %s159
      %p161 = scmp.lt.s32.totalorder %s14, 1
      %s162 = scalar_select %p161, %s14, 1
      %s163 = smul.addr %s162, 970
      %s164 = smul.addr %s163, 4
      %s165 = scalar_lea.vmem %s0, %s164
      %p166 = scmp.lt.s32.totalorder %s14, 1
      %s167 = scalar_select %p166, %s14, 1
      %s168 = smul.addr %s167, 194
      %s169 = smul.addr %s168, 4
      %s170 = scalar_lea.vmem %s3, %s169
      %v172 = vld [vmem:[%s1] sm:$0xf]
      %v173 = vld [vmem:[%s1 + $0x4] sm:$0xf]
      %v174 = vld [vmem:[%s165] sm:$0xff]
      %v175 = vld [vmem:[%s165 + $0x8] sm:$0xff]
      %v176 = vld [vmem:[%s165 + $0x10] sm:$0xff]
      %v177 = vld [vmem:[%s165 + $0x18] sm:$0xff]
      %v178 = vld [vmem:[%s165 + $0x20] sm:$0xff]
      %v179 = vld [vmem:[%s165 + $0x28] sm:$0xff]
      %v180 = vld [vmem:[%s165 + $0x30] sm:$0xff]
      %v181 = vld [vmem:[%s165 + $0x38] sm:$0xff]
      %v182 = vld [vmem:[%s165 + $0x40] sm:$0xff]
      %v183 = vld [vmem:[%s165 + $0x48] sm:$0xff]
      %v184 = vld [vmem:[%s165 + $0x50] sm:$0xff]
      %v185 = vld [vmem:[%s165 + $0x58] sm:$0xff]
      %v186 = vld [vmem:[%s165 + $0x60] sm:$0xff]
      %v187 = vld [vmem:[%s165 + $0x68] sm:$0xff]
      %v188 = vld [vmem:[%s165 + $0x70] sm:$0xff]
      %v189 = vld [vmem:[%s165 + $0x78] sm:$0xff]
      %v190 = vld [vmem:[%s165 + $0x80] sm:$0xff]
      %v191 = vld [vmem:[%s165 + $0x88] sm:$0xff]
      %v192 = vld [vmem:[%s165 + $0x90] sm:$0xff]
      %v193 = vld [vmem:[%s165 + $0x98] sm:$0xff]
      %v194 = vld [vmem:[%s165 + $0xa0] sm:$0xff]
      %v195 = vld [vmem:[%s165 + $0xa8] sm:$0xff]
      %v196 = vld [vmem:[%s165 + $0xb0] sm:$0xff]
      %v197 = vld [vmem:[%s165 + $0xb8] sm:$0xff]
      %v198 = vld [vmem:[%s165 + $0xc0] sm:$0xff]
      %v199 = vld [vmem:[%s165 + $0xc8] sm:$0xff]
      %v200 = vld [vmem:[%s165 + $0xd0] sm:$0xff]
      %v201 = vld [vmem:[%s165 + $0xd8] sm:$0xff]
      %v202 = vld [vmem:[%s165 + $0xe0] sm:$0xff]
      %v203 = vld [vmem:[%s165 + $0xe8] sm:$0xff]
      %v204 = vld [vmem:[%s165 + $0xf0] sm:$0xff]
      %v205 = vld [vmem:[%s165 + $0xf8] sm:$0xff]
      %v206 = vld [vmem:[%s165 + $0x100] sm:$0xff]
      %v207 = vld [vmem:[%s165 + $0x108] sm:$0xff]
      %v208 = vld [vmem:[%s165 + $0x110] sm:$0xff]
      %v209 = vld [vmem:[%s165 + $0x118] sm:$0xff]
      %v210 = vld [vmem:[%s165 + $0x120] sm:$0xff]
      %v211 = vld [vmem:[%s165 + $0x128] sm:$0xff]
      %v212 = vld [vmem:[%s165 + $0x130] sm:$0xff]
      %v213 = vld [vmem:[%s165 + $0x138] sm:$0xff]
      %v214 = vld [vmem:[%s165 + $0x140] sm:$0xff]
      %v215 = vld [vmem:[%s165 + $0x148] sm:$0xff]
      %v216 = vld [vmem:[%s165 + $0x150] sm:$0xff]
      %v217 = vld [vmem:[%s165 + $0x158] sm:$0xff]
      %v218 = vld [vmem:[%s165 + $0x160] sm:$0xff]
      %v219 = vld [vmem:[%s165 + $0x168] sm:$0xff]
      %v220 = vld [vmem:[%s165 + $0x170] sm:$0xff]
      %v221 = vld [vmem:[%s165 + $0x178] sm:$0xff]
      %v222 = vld [vmem:[%s165 + $0x180] sm:$0xf]
      %v223 = vld [vmem:[%s165 + $0x184] sm:$0xff]
      %v224 = vld [vmem:[%s165 + $0x18c] sm:$0xff]
      %v225 = vld [vmem:[%s165 + $0x194] sm:$0xff]
      %v226 = vld [vmem:[%s165 + $0x19c] sm:$0xff]
      %v227 = vld [vmem:[%s165 + $0x1a4] sm:$0xff]
      %v228 = vld [vmem:[%s165 + $0x1ac] sm:$0xff]
      %v229 = vld [vmem:[%s165 + $0x1b4] sm:$0xff]
      %v230 = vld [vmem:[%s165 + $0x1bc] sm:$0xff]
      %v231 = vld [vmem:[%s165 + $0x1c4] sm:$0xff]
      %v232 = vld [vmem:[%s165 + $0x1cc] sm:$0xff]
      %v233 = vld [vmem:[%s165 + $0x1d4] sm:$0xff]
      %v234 = vld [vmem:[%s165 + $0x1dc] sm:$0xff]
      %v235 = vld [vmem:[%s165 + $0x1e4] sm:$0xff]
      %v236 = vld [vmem:[%s165 + $0x1ec] sm:$0xff]
      %v237 = vld [vmem:[%s165 + $0x1f4] sm:$0xff]
      %v238 = vld [vmem:[%s165 + $0x1fc] sm:$0xff]
      %v239 = vld [vmem:[%s165 + $0x204] sm:$0xff]
      %v240 = vld [vmem:[%s165 + $0x20c] sm:$0xff]
      %v241 = vld [vmem:[%s165 + $0x214] sm:$0xff]
      %v242 = vld [vmem:[%s165 + $0x21c] sm:$0xff]
      %v243 = vld [vmem:[%s165 + $0x224] sm:$0xff]
      %v244 = vld [vmem:[%s165 + $0x22c] sm:$0xff]
      %v245 = vld [vmem:[%s165 + $0x234] sm:$0xff]
      %v246 = vld [vmem:[%s165 + $0x23c] sm:$0xff]
      %v247 = vld [vmem:[%s165 + $0x244] sm:$0xff]
      %v248 = vld [vmem:[%s165 + $0x24c] sm:$0xff]
      %v249 = vld [vmem:[%s165 + $0x254] sm:$0xff]
      %v250 = vld [vmem:[%s165 + $0x25c] sm:$0xff]
      %v251 = vld [vmem:[%s165 + $0x264] sm:$0xff]
      %v252 = vld [vmem:[%s165 + $0x26c] sm:$0xff]
      %v253 = vld [vmem:[%s165 + $0x274] sm:$0xff]
      %v254 = vld [vmem:[%s165 + $0x27c] sm:$0xff]
      %v255 = vld [vmem:[%s165 + $0x284] sm:$0xff]
      %v256 = vld [vmem:[%s165 + $0x28c] sm:$0xff]
      %v257 = vld [vmem:[%s165 + $0x294] sm:$0xff]
      %v258 = vld [vmem:[%s165 + $0x29c] sm:$0xff]
      %v259 = vld [vmem:[%s165 + $0x2a4] sm:$0xff]
      %v260 = vld [vmem:[%s165 + $0x2ac] sm:$0xff]
      %v261 = vld [vmem:[%s165 + $0x2b4] sm:$0xff]
      %v262 = vld [vmem:[%s165 + $0x2bc] sm:$0xff]
      %v263 = vld [vmem:[%s165 + $0x2c4] sm:$0xff]
      %v264 = vld [vmem:[%s165 + $0x2cc] sm:$0xff]
      %v265 = vld [vmem:[%s165 + $0x2d4] sm:$0xff]
      %v266 = vld [vmem:[%s165 + $0x2dc] sm:$0xff]
      %v267 = vld [vmem:[%s165 + $0x2e4] sm:$0xff]
      %v268 = vld [vmem:[%s165 + $0x2ec] sm:$0xff]
      %v269 = vld [vmem:[%s165 + $0x2f4] sm:$0xff]
      %v270 = vld [vmem:[%s165 + $0x2fc] sm:$0xff]
      %v271 = vld [vmem:[%s165 + $0x304] sm:$0xf]
      %v272 = vld [vmem:[%s165 + $0x308] sm:$0xff]
      %v273 = vld [vmem:[%s165 + $0x310] sm:$0xff]
      %v274 = vld [vmem:[%s165 + $0x318] sm:$0xff]
      %v275 = vld [vmem:[%s165 + $0x320] sm:$0xff]
      %v276 = vld [vmem:[%s165 + $0x328] sm:$0xff]
      %v277 = vld [vmem:[%s165 + $0x330] sm:$0xff]
      %v278 = vld [vmem:[%s165 + $0x338] sm:$0xff]
      %v279 = vld [vmem:[%s165 + $0x340] sm:$0xff]
      %v280 = vld [vmem:[%s165 + $0x348] sm:$0xff]
      %v281 = vld [vmem:[%s165 + $0x350] sm:$0xff]
      %v282 = vld [vmem:[%s165 + $0x358] sm:$0xff]
      %v283 = vld [vmem:[%s165 + $0x360] sm:$0xff]
      %v284 = vld [vmem:[%s165 + $0x368] sm:$0xff]
      %v285 = vld [vmem:[%s165 + $0x370] sm:$0xff]
      %v286 = vld [vmem:[%s165 + $0x378] sm:$0xff]
      %v287 = vld [vmem:[%s165 + $0x380] sm:$0xff]
      %v288 = vld [vmem:[%s165 + $0x388] sm:$0xff]
      %v289 = vld [vmem:[%s165 + $0x390] sm:$0xff]
      %v290 = vld [vmem:[%s165 + $0x398] sm:$0xff]
      %v291 = vld [vmem:[%s165 + $0x3a0] sm:$0xff]
      %v292 = vld [vmem:[%s165 + $0x3a8] sm:$0xff]
      %v293 = vld [vmem:[%s165 + $0x3b0] sm:$0xff]
      %v294 = vld [vmem:[%s165 + $0x3b8] sm:$0xff]
      %v295 = vld [vmem:[%s165 + $0x3c0] sm:$0xff]
      %v296 = vld [vmem:[%s165 + $0x3c8] sm:$0xff]
      %v297 = vld [vmem:[%s165 + $0x3d0] sm:$0xff]
      %v298 = vld [vmem:[%s165 + $0x3d8] sm:$0xff]
      %v299 = vld [vmem:[%s165 + $0x3e0] sm:$0xff]
      %v300 = vld [vmem:[%s165 + $0x3e8] sm:$0xff]
      %v301 = vld [vmem:[%s165 + $0x3f0] sm:$0xff]
      %v302 = vld [vmem:[%s165 + $0x3f8] sm:$0xff]
      %v303 = vld [vmem:[%s165 + $0x400] sm:$0xff]
      %v304 = vld [vmem:[%s165 + $0x408] sm:$0xff]
      %v305 = vld [vmem:[%s165 + $0x410] sm:$0xff]
      %v306 = vld [vmem:[%s165 + $0x418] sm:$0xff]
      %v307 = vld [vmem:[%s165 + $0x420] sm:$0xff]
      %v308 = vld [vmem:[%s165 + $0x428] sm:$0xff]
      %v309 = vld [vmem:[%s165 + $0x430] sm:$0xff]
      %v310 = vld [vmem:[%s165 + $0x438] sm:$0xff]
      %v311 = vld [vmem:[%s165 + $0x440] sm:$0xff]
      %v312 = vld [vmem:[%s165 + $0x448] sm:$0xff]
      %v313 = vld [vmem:[%s165 + $0x450] sm:$0xff]
      %v314 = vld [vmem:[%s165 + $0x458] sm:$0xff]
      %v315 = vld [vmem:[%s165 + $0x460] sm:$0xff]
      %v316 = vld [vmem:[%s165 + $0x468] sm:$0xff]
      %v317 = vld [vmem:[%s165 + $0x470] sm:$0xff]
      %v318 = vld [vmem:[%s165 + $0x478] sm:$0xff]
      %v319 = vld [vmem:[%s165 + $0x480] sm:$0xff]
      %v320 = vld [vmem:[%s165 + $0x488] sm:$0xf]
      %v321 = vld [vmem:[%s165 + $0x48c] sm:$0xff]
      %v322 = vld [vmem:[%s165 + $0x494] sm:$0xff]
      %v323 = vld [vmem:[%s165 + $0x49c] sm:$0xff]
      %v324 = vld [vmem:[%s165 + $0x4a4] sm:$0xff]
      %v325 = vld [vmem:[%s165 + $0x4ac] sm:$0xff]
      %v326 = vld [vmem:[%s165 + $0x4b4] sm:$0xff]
      %v327 = vld [vmem:[%s165 + $0x4bc] sm:$0xff]
      %v328 = vld [vmem:[%s165 + $0x4c4] sm:$0xff]
      %v329 = vld [vmem:[%s165 + $0x4cc] sm:$0xff]
      %v330 = vld [vmem:[%s165 + $0x4d4] sm:$0xff]
      %v331 = vld [vmem:[%s165 + $0x4dc] sm:$0xff]
      %v332 = vld [vmem:[%s165 + $0x4e4] sm:$0xff]
      %v333 = vld [vmem:[%s165 + $0x4ec] sm:$0xff]
      %v334 = vld [vmem:[%s165 + $0x4f4] sm:$0xff]
      %v335 = vld [vmem:[%s165 + $0x4fc] sm:$0xff]
      %v336 = vld [vmem:[%s165 + $0x504] sm:$0xff]
      %v337 = vld [vmem:[%s165 + $0x50c] sm:$0xff]
      %v338 = vld [vmem:[%s165 + $0x514] sm:$0xff]
      %v339 = vld [vmem:[%s165 + $0x51c] sm:$0xff]
      %v340 = vld [vmem:[%s165 + $0x524] sm:$0xff]
      %v341 = vld [vmem:[%s165 + $0x52c] sm:$0xff]
      %v342 = vld [vmem:[%s165 + $0x534] sm:$0xff]
      %v343 = vld [vmem:[%s165 + $0x53c] sm:$0xff]
      %v344 = vld [vmem:[%s165 + $0x544] sm:$0xff]
      %v345 = vld [vmem:[%s165 + $0x54c] sm:$0xff]
      %v346 = vld [vmem:[%s165 + $0x554] sm:$0xff]
      %v347 = vld [vmem:[%s165 + $0x55c] sm:$0xff]
      %v348 = vld [vmem:[%s165 + $0x564] sm:$0xff]
      %v349 = vld [vmem:[%s165 + $0x56c] sm:$0xff]
      %v350 = vld [vmem:[%s165 + $0x574] sm:$0xff]
      %v351 = vld [vmem:[%s165 + $0x57c] sm:$0xff]
      %v352 = vld [vmem:[%s165 + $0x584] sm:$0xff]
      %v353 = vld [vmem:[%s165 + $0x58c] sm:$0xff]
      %v354 = vld [vmem:[%s165 + $0x594] sm:$0xff]
      %v355 = vld [vmem:[%s165 + $0x59c] sm:$0xff]
      %v356 = vld [vmem:[%s165 + $0x5a4] sm:$0xff]
      %v357 = vld [vmem:[%s165 + $0x5ac] sm:$0xff]
      %v358 = vld [vmem:[%s165 + $0x5b4] sm:$0xff]
      %v359 = vld [vmem:[%s165 + $0x5bc] sm:$0xff]
      %v360 = vld [vmem:[%s165 + $0x5c4] sm:$0xff]
      %v361 = vld [vmem:[%s165 + $0x5cc] sm:$0xff]
      %v362 = vld [vmem:[%s165 + $0x5d4] sm:$0xff]
      %v363 = vld [vmem:[%s165 + $0x5dc] sm:$0xff]
      %v364 = vld [vmem:[%s165 + $0x5e4] sm:$0xff]
      %v365 = vld [vmem:[%s165 + $0x5ec] sm:$0xff]
      %v366 = vld [vmem:[%s165 + $0x5f4] sm:$0xff]
      %v367 = vld [vmem:[%s165 + $0x5fc] sm:$0xff]
      %v368 = vld [vmem:[%s165 + $0x604] sm:$0xff]
      %v369 = vld [vmem:[%s165 + $0x60c] sm:$0xf]
      %v370 = vld [vmem:[%s165 + $0x610] sm:$0xff]
      %v371 = vld [vmem:[%s165 + $0x618] sm:$0xff]
      %v372 = vld [vmem:[%s165 + $0x620] sm:$0xff]
      %v373 = vld [vmem:[%s165 + $0x628] sm:$0xff]
      %v374 = vld [vmem:[%s165 + $0x630] sm:$0xff]
      %v375 = vld [vmem:[%s165 + $0x638] sm:$0xff]
      %v376 = vld [vmem:[%s165 + $0x640] sm:$0xff]
      %v377 = vld [vmem:[%s165 + $0x648] sm:$0xff]
      %v378 = vld [vmem:[%s165 + $0x650] sm:$0xff]
      %v379 = vld [vmem:[%s165 + $0x658] sm:$0xff]
      %v380 = vld [vmem:[%s165 + $0x660] sm:$0xff]
      %v381 = vld [vmem:[%s165 + $0x668] sm:$0xff]
      %v382 = vld [vmem:[%s165 + $0x670] sm:$0xff]
      %v383 = vld [vmem:[%s165 + $0x678] sm:$0xff]
      %v384 = vld [vmem:[%s165 + $0x680] sm:$0xff]
      %v385 = vld [vmem:[%s165 + $0x688] sm:$0xff]
      %v386 = vld [vmem:[%s165 + $0x690] sm:$0xff]
      %v387 = vld [vmem:[%s165 + $0x698] sm:$0xff]
      %v388 = vld [vmem:[%s165 + $0x6a0] sm:$0xff]
      %v389 = vld [vmem:[%s165 + $0x6a8] sm:$0xff]
      %v390 = vld [vmem:[%s165 + $0x6b0] sm:$0xff]
      %v391 = vld [vmem:[%s165 + $0x6b8] sm:$0xff]
      %v392 = vld [vmem:[%s165 + $0x6c0] sm:$0xff]
      %v393 = vld [vmem:[%s165 + $0x6c8] sm:$0xff]
      %v394 = vld [vmem:[%s165 + $0x6d0] sm:$0xff]
      %v395 = vld [vmem:[%s165 + $0x6d8] sm:$0xff]
      %v396 = vld [vmem:[%s165 + $0x6e0] sm:$0xff]
      %v397 = vld [vmem:[%s165 + $0x6e8] sm:$0xff]
      %v398 = vld [vmem:[%s165 + $0x6f0] sm:$0xff]
      %v399 = vld [vmem:[%s165 + $0x6f8] sm:$0xff]
      %v400 = vld [vmem:[%s165 + $0x700] sm:$0xff]
      %v401 = vld [vmem:[%s165 + $0x708] sm:$0xff]
      %v402 = vld [vmem:[%s165 + $0x710] sm:$0xff]
      %v403 = vld [vmem:[%s165 + $0x718] sm:$0xff]
      %v404 = vld [vmem:[%s165 + $0x720] sm:$0xff]
      %v405 = vld [vmem:[%s165 + $0x728] sm:$0xff]
      %v406 = vld [vmem:[%s165 + $0x730] sm:$0xff]
      %v407 = vld [vmem:[%s165 + $0x738] sm:$0xff]
      %v408 = vld [vmem:[%s165 + $0x740] sm:$0xff]
      %v409 = vld [vmem:[%s165 + $0x748] sm:$0xff]
      %v410 = vld [vmem:[%s165 + $0x750] sm:$0xff]
      %v411 = vld [vmem:[%s165 + $0x758] sm:$0xff]
      %v412 = vld [vmem:[%s165 + $0x760] sm:$0xff]
      %v413 = vld [vmem:[%s165 + $0x768] sm:$0xff]
      %v414 = vld [vmem:[%s165 + $0x770] sm:$0xff]
      %v415 = vld [vmem:[%s165 + $0x778] sm:$0xff]
      %v416 = vld [vmem:[%s165 + $0x780] sm:$0xff]
      %v417 = vld [vmem:[%s165 + $0x788] sm:$0xff]
      %v418 = vld [vmem:[%s165 + $0x790] sm:$0xf]
      %v419 = vld [vmem:[%s165 + $0x794] sm:$0xff]
      %v420 = vld [vmem:[%s165 + $0x79c] sm:$0xff]
      %v421 = vld [vmem:[%s165 + $0x7a4] sm:$0xff]
      %v422 = vld [vmem:[%s165 + $0x7ac] sm:$0xff]
      %v423 = vld [vmem:[%s165 + $0x7b4] sm:$0xff]
      %v424 = vld [vmem:[%s165 + $0x7bc] sm:$0xff]
      %v425 = vld [vmem:[%s165 + $0x7c4] sm:$0xff]
      %v426 = vld [vmem:[%s165 + $0x7cc] sm:$0xff]
      %v427 = vld [vmem:[%s165 + $0x7d4] sm:$0xff]
      %v428 = vld [vmem:[%s165 + $0x7dc] sm:$0xff]
      %v429 = vld [vmem:[%s165 + $0x7e4] sm:$0xff]
      %v430 = vld [vmem:[%s165 + $0x7ec] sm:$0xff]
      %v431 = vld [vmem:[%s165 + $0x7f4] sm:$0xff]
      %v432 = vld [vmem:[%s165 + $0x7fc] sm:$0xff]
      %v433 = vld [vmem:[%s165 + $0x804] sm:$0xff]
      %v434 = vld [vmem:[%s165 + $0x80c] sm:$0xff]
      %v435 = vld [vmem:[%s165 + $0x814] sm:$0xff]
      %v436 = vld [vmem:[%s165 + $0x81c] sm:$0xff]
      %v437 = vld [vmem:[%s165 + $0x824] sm:$0xff]
      %v438 = vld [vmem:[%s165 + $0x82c] sm:$0xff]
      %v439 = vld [vmem:[%s165 + $0x834] sm:$0xff]
      %v440 = vld [vmem:[%s165 + $0x83c] sm:$0xff]
      %v441 = vld [vmem:[%s165 + $0x844] sm:$0xff]
      %v442 = vld [vmem:[%s165 + $0x84c] sm:$0xff]
      %v443 = vld [vmem:[%s165 + $0x854] sm:$0xff]
      %v444 = vld [vmem:[%s165 + $0x85c] sm:$0xff]
      %v445 = vld [vmem:[%s165 + $0x864] sm:$0xff]
      %v446 = vld [vmem:[%s165 + $0x86c] sm:$0xff]
      %v447 = vld [vmem:[%s165 + $0x874] sm:$0xff]
      %v448 = vld [vmem:[%s165 + $0x87c] sm:$0xff]
      %v449 = vld [vmem:[%s165 + $0x884] sm:$0xff]
      %v450 = vld [vmem:[%s165 + $0x88c] sm:$0xff]
      %v451 = vld [vmem:[%s165 + $0x894] sm:$0xff]
      %v452 = vld [vmem:[%s165 + $0x89c] sm:$0xff]
      %v453 = vld [vmem:[%s165 + $0x8a4] sm:$0xff]
      %v454 = vld [vmem:[%s165 + $0x8ac] sm:$0xff]
      %v455 = vld [vmem:[%s165 + $0x8b4] sm:$0xff]
      %v456 = vld [vmem:[%s165 + $0x8bc] sm:$0xff]
      %v457 = vld [vmem:[%s165 + $0x8c4] sm:$0xff]
      %v458 = vld [vmem:[%s165 + $0x8cc] sm:$0xff]
      %v459 = vld [vmem:[%s165 + $0x8d4] sm:$0xff]
      %v460 = vld [vmem:[%s165 + $0x8dc] sm:$0xff]
      %v461 = vld [vmem:[%s165 + $0x8e4] sm:$0xff]
      %v462 = vld [vmem:[%s165 + $0x8ec] sm:$0xff]
      %v463 = vld [vmem:[%s165 + $0x8f4] sm:$0xff]
      %v464 = vld [vmem:[%s165 + $0x8fc] sm:$0xff]
      %v465 = vld [vmem:[%s165 + $0x904] sm:$0xff]
      %v466 = vld [vmem:[%s165 + $0x90c] sm:$0xff]
      %v467 = vld [vmem:[%s165 + $0x914] sm:$0xf]
      %v468 = vld [vmem:[%s165 + $0x918] sm:$0xff]
      %v469 = vld [vmem:[%s165 + $0x920] sm:$0xff]
      %v470 = vld [vmem:[%s165 + $0x928] sm:$0xff]
      %v471 = vld [vmem:[%s165 + $0x930] sm:$0xff]
      %v472 = vld [vmem:[%s165 + $0x938] sm:$0xff]
      %v473 = vld [vmem:[%s165 + $0x940] sm:$0xff]
      %v474 = vld [vmem:[%s165 + $0x948] sm:$0xff]
      %v475 = vld [vmem:[%s165 + $0x950] sm:$0xff]
      %v476 = vld [vmem:[%s165 + $0x958] sm:$0xff]
      %v477 = vld [vmem:[%s165 + $0x960] sm:$0xff]
      %v478 = vld [vmem:[%s165 + $0x968] sm:$0xff]
      %v479 = vld [vmem:[%s165 + $0x970] sm:$0xff]
      %v480 = vld [vmem:[%s165 + $0x978] sm:$0xff]
      %v481 = vld [vmem:[%s165 + $0x980] sm:$0xff]
      %v482 = vld [vmem:[%s165 + $0x988] sm:$0xff]
      %v483 = vld [vmem:[%s165 + $0x990] sm:$0xff]
      %v484 = vld [vmem:[%s165 + $0x998] sm:$0xff]
      %v485 = vld [vmem:[%s165 + $0x9a0] sm:$0xff]
      %v486 = vld [vmem:[%s165 + $0x9a8] sm:$0xff]
      %v487 = vld [vmem:[%s165 + $0x9b0] sm:$0xff]
      %v488 = vld [vmem:[%s165 + $0x9b8] sm:$0xff]
      %v489 = vld [vmem:[%s165 + $0x9c0] sm:$0xff]
      %v490 = vld [vmem:[%s165 + $0x9c8] sm:$0xff]
      %v491 = vld [vmem:[%s165 + $0x9d0] sm:$0xff]
      %v492 = vld [vmem:[%s165 + $0x9d8] sm:$0xff]
      %v493 = vld [vmem:[%s165 + $0x9e0] sm:$0xff]
      %v494 = vld [vmem:[%s165 + $0x9e8] sm:$0xff]
      %v495 = vld [vmem:[%s165 + $0x9f0] sm:$0xff]
      %v496 = vld [vmem:[%s165 + $0x9f8] sm:$0xff]
      %v497 = vld [vmem:[%s165 + $0xa00] sm:$0xff]
      %v498 = vld [vmem:[%s165 + $0xa08] sm:$0xff]
      %v499 = vld [vmem:[%s165 + $0xa10] sm:$0xff]
      %v500 = vld [vmem:[%s165 + $0xa18] sm:$0xff]
      %v501 = vld [vmem:[%s165 + $0xa20] sm:$0xff]
      %v502 = vld [vmem:[%s165 + $0xa28] sm:$0xff]
      %v503 = vld [vmem:[%s165 + $0xa30] sm:$0xff]
      %v504 = vld [vmem:[%s165 + $0xa38] sm:$0xff]
      %v505 = vld [vmem:[%s165 + $0xa40] sm:$0xff]
      %v506 = vld [vmem:[%s165 + $0xa48] sm:$0xff]
      %v507 = vld [vmem:[%s165 + $0xa50] sm:$0xff]
      %v508 = vld [vmem:[%s165 + $0xa58] sm:$0xff]
      %v509 = vld [vmem:[%s165 + $0xa60] sm:$0xff]
      %v510 = vld [vmem:[%s165 + $0xa68] sm:$0xff]
      %v511 = vld [vmem:[%s165 + $0xa70] sm:$0xff]
      %v512 = vld [vmem:[%s165 + $0xa78] sm:$0xff]
      %v513 = vld [vmem:[%s165 + $0xa80] sm:$0xff]
      %v514 = vld [vmem:[%s165 + $0xa88] sm:$0xff]
      %v515 = vld [vmem:[%s165 + $0xa90] sm:$0xff]
      %v516 = vld [vmem:[%s165 + $0xa98] sm:$0xf]
      %v517 = vld [vmem:[%s165 + $0xa9c] sm:$0xff]
      %v518 = vld [vmem:[%s165 + $0xaa4] sm:$0xff]
      %v519 = vld [vmem:[%s165 + $0xaac] sm:$0xff]
      %v520 = vld [vmem:[%s165 + $0xab4] sm:$0xff]
      %v521 = vld [vmem:[%s165 + $0xabc] sm:$0xff]
      %v522 = vld [vmem:[%s165 + $0xac4] sm:$0xff]
      %v523 = vld [vmem:[%s165 + $0xacc] sm:$0xff]
      %v524 = vld [vmem:[%s165 + $0xad4] sm:$0xff]
      %v525 = vld [vmem:[%s165 + $0xadc] sm:$0xff]
      %v526 = vld [vmem:[%s165 + $0xae4] sm:$0xff]
      %v527 = vld [vmem:[%s165 + $0xaec] sm:$0xff]
      %v528 = vld [vmem:[%s165 + $0xaf4] sm:$0xff]
      %v529 = vld [vmem:[%s165 + $0xafc] sm:$0xff]
      %v530 = vld [vmem:[%s165 + $0xb04] sm:$0xff]
      %v531 = vld [vmem:[%s165 + $0xb0c] sm:$0xff]
      %v532 = vld [vmem:[%s165 + $0xb14] sm:$0xff]
      %v533 = vld [vmem:[%s165 + $0xb1c] sm:$0xff]
      %v534 = vld [vmem:[%s165 + $0xb24] sm:$0xff]
      %v535 = vld [vmem:[%s165 + $0xb2c] sm:$0xff]
      %v536 = vld [vmem:[%s165 + $0xb34] sm:$0xff]
      %v537 = vld [vmem:[%s165 + $0xb3c] sm:$0xff]
      %v538 = vld [vmem:[%s165 + $0xb44] sm:$0xff]
      %v539 = vld [vmem:[%s165 + $0xb4c] sm:$0xff]
      %v540 = vld [vmem:[%s165 + $0xb54] sm:$0xff]
      %v541 = vld [vmem:[%s165 + $0xb5c] sm:$0xff]
      %v542 = vld [vmem:[%s165 + $0xb64] sm:$0xff]
      %v543 = vld [vmem:[%s165 + $0xb6c] sm:$0xff]
      %v544 = vld [vmem:[%s165 + $0xb74] sm:$0xff]
      %v545 = vld [vmem:[%s165 + $0xb7c] sm:$0xff]
      %v546 = vld [vmem:[%s165 + $0xb84] sm:$0xff]
      %v547 = vld [vmem:[%s165 + $0xb8c] sm:$0xff]
      %v548 = vld [vmem:[%s165 + $0xb94] sm:$0xff]
      %v549 = vld [vmem:[%s165 + $0xb9c] sm:$0xff]
      %v550 = vld [vmem:[%s165 + $0xba4] sm:$0xff]
      %v551 = vld [vmem:[%s165 + $0xbac] sm:$0xff]
      %v552 = vld [vmem:[%s165 + $0xbb4] sm:$0xff]
      %v553 = vld [vmem:[%s165 + $0xbbc] sm:$0xff]
      %v554 = vld [vmem:[%s165 + $0xbc4] sm:$0xff]
      %v555 = vld [vmem:[%s165 + $0xbcc] sm:$0xff]
      %v556 = vld [vmem:[%s165 + $0xbd4] sm:$0xff]
      %v557 = vld [vmem:[%s165 + $0xbdc] sm:$0xff]
      %v558 = vld [vmem:[%s165 + $0xbe4] sm:$0xff]
      %v559 = vld [vmem:[%s165 + $0xbec] sm:$0xff]
      %v560 = vld [vmem:[%s165 + $0xbf4] sm:$0xff]
      %v561 = vld [vmem:[%s165 + $0xbfc] sm:$0xff]
      %v562 = vld [vmem:[%s165 + $0xc04] sm:$0xff]
      %v563 = vld [vmem:[%s165 + $0xc0c] sm:$0xff]
      %v564 = vld [vmem:[%s165 + $0xc14] sm:$0xff]
      %v565 = vld [vmem:[%s165 + $0xc1c] sm:$0xf]
      %v566 = vld [vmem:[%s165 + $0xc20] sm:$0xff]
      %v567 = vld [vmem:[%s165 + $0xc28] sm:$0xff]
      %v568 = vld [vmem:[%s165 + $0xc30] sm:$0xff]
      %v569 = vld [vmem:[%s165 + $0xc38] sm:$0xff]
      %v570 = vld [vmem:[%s165 + $0xc40] sm:$0xff]
      %v571 = vld [vmem:[%s165 + $0xc48] sm:$0xff]
      %v572 = vld [vmem:[%s165 + $0xc50] sm:$0xff]
      %v573 = vld [vmem:[%s165 + $0xc58] sm:$0xff]
      %v574 = vld [vmem:[%s165 + $0xc60] sm:$0xff]
      %v575 = vld [vmem:[%s165 + $0xc68] sm:$0xff]
      %v576 = vld [vmem:[%s165 + $0xc70] sm:$0xff]
      %v577 = vld [vmem:[%s165 + $0xc78] sm:$0xff]
      %v578 = vld [vmem:[%s165 + $0xc80] sm:$0xff]
      %v579 = vld [vmem:[%s165 + $0xc88] sm:$0xff]
      %v580 = vld [vmem:[%s165 + $0xc90] sm:$0xff]
      %v581 = vld [vmem:[%s165 + $0xc98] sm:$0xff]
      %v582 = vld [vmem:[%s165 + $0xca0] sm:$0xff]
      %v583 = vld [vmem:[%s165 + $0xca8] sm:$0xff]
      %v584 = vld [vmem:[%s165 + $0xcb0] sm:$0xff]
      %v585 = vld [vmem:[%s165 + $0xcb8] sm:$0xff]
      %v586 = vld [vmem:[%s165 + $0xcc0] sm:$0xff]
      %v587 = vld [vmem:[%s165 + $0xcc8] sm:$0xff]
      %v588 = vld [vmem:[%s165 + $0xcd0] sm:$0xff]
      %v589 = vld [vmem:[%s165 + $0xcd8] sm:$0xff]
      %v590 = vld [vmem:[%s165 + $0xce0] sm:$0xff]
      %v591 = vld [vmem:[%s165 + $0xce8] sm:$0xff]
      %v592 = vld [vmem:[%s165 + $0xcf0] sm:$0xff]
      %v593 = vld [vmem:[%s165 + $0xcf8] sm:$0xff]
      %v594 = vld [vmem:[%s165 + $0xd00] sm:$0xff]
      %v595 = vld [vmem:[%s165 + $0xd08] sm:$0xff]
      %v596 = vld [vmem:[%s165 + $0xd10] sm:$0xff]
      %v597 = vld [vmem:[%s165 + $0xd18] sm:$0xff]
      %v598 = vld [vmem:[%s165 + $0xd20] sm:$0xff]
      %v599 = vld [vmem:[%s165 + $0xd28] sm:$0xff]
      %v600 = vld [vmem:[%s165 + $0xd30] sm:$0xff]
      %v601 = vld [vmem:[%s165 + $0xd38] sm:$0xff]
      %v602 = vld [vmem:[%s165 + $0xd40] sm:$0xff]
      %v603 = vld [vmem:[%s165 + $0xd48] sm:$0xff]
      %v604 = vld [vmem:[%s165 + $0xd50] sm:$0xff]
      %v605 = vld [vmem:[%s165 + $0xd58] sm:$0xff]
      %v606 = vld [vmem:[%s165 + $0xd60] sm:$0xff]
      %v607 = vld [vmem:[%s165 + $0xd68] sm:$0xff]
      %v608 = vld [vmem:[%s165 + $0xd70] sm:$0xff]
      %v609 = vld [vmem:[%s165 + $0xd78] sm:$0xff]
      %v610 = vld [vmem:[%s165 + $0xd80] sm:$0xff]
      %v611 = vld [vmem:[%s165 + $0xd88] sm:$0xff]
      %v612 = vld [vmem:[%s165 + $0xd90] sm:$0xff]
      %v613 = vld [vmem:[%s165 + $0xd98] sm:$0xff]
      %v614 = vld [vmem:[%s165 + $0xda0] sm:$0xf]
      %v615 = vld [vmem:[%s165 + $0xda4] sm:$0x33]
      %v616 = vld [vmem:[%s165 + $0xdac] sm:$0x33]
      %v617 = vld [vmem:[%s165 + $0xdb4] sm:$0x33]
      %v618 = vld [vmem:[%s165 + $0xdbc] sm:$0x33]
      %v619 = vld [vmem:[%s165 + $0xdc4] sm:$0x33]
      %v620 = vld [vmem:[%s165 + $0xdcc] sm:$0x33]
      %v621 = vld [vmem:[%s165 + $0xdd4] sm:$0x33]
      %v622 = vld [vmem:[%s165 + $0xddc] sm:$0x33]
      %v623 = vld [vmem:[%s165 + $0xde4] sm:$0x33]
      %v624 = vld [vmem:[%s165 + $0xdec] sm:$0x33]
      %v625 = vld [vmem:[%s165 + $0xdf4] sm:$0x33]
      %v626 = vld [vmem:[%s165 + $0xdfc] sm:$0x33]
      %v627 = vld [vmem:[%s165 + $0xe04] sm:$0x33]
      %v628 = vld [vmem:[%s165 + $0xe0c] sm:$0x33]
      %v629 = vld [vmem:[%s165 + $0xe14] sm:$0x33]
      %v630 = vld [vmem:[%s165 + $0xe1c] sm:$0x33]
      %v631 = vld [vmem:[%s165 + $0xe24] sm:$0x33]
      %v632 = vld [vmem:[%s165 + $0xe2c] sm:$0x33]
      %v633 = vld [vmem:[%s165 + $0xe34] sm:$0x33]
      %v634 = vld [vmem:[%s165 + $0xe3c] sm:$0x33]
      %v635 = vld [vmem:[%s165 + $0xe44] sm:$0x33]
      %v636 = vld [vmem:[%s165 + $0xe4c] sm:$0x33]
      %v637 = vld [vmem:[%s165 + $0xe54] sm:$0x33]
      %v638 = vld [vmem:[%s165 + $0xe5c] sm:$0x33]
      %v639 = vld [vmem:[%s165 + $0xe64] sm:$0x33]
      %v640 = vld [vmem:[%s165 + $0xe6c] sm:$0x33]
      %v641 = vld [vmem:[%s165 + $0xe74] sm:$0x33]
      %v642 = vld [vmem:[%s165 + $0xe7c] sm:$0x33]
      %v643 = vld [vmem:[%s165 + $0xe84] sm:$0x33]
      %v644 = vld [vmem:[%s165 + $0xe8c] sm:$0x33]
      %v645 = vld [vmem:[%s165 + $0xe94] sm:$0x33]
      %v646 = vld [vmem:[%s165 + $0xe9c] sm:$0x33]
      %v647 = vld [vmem:[%s165 + $0xea4] sm:$0x33]
      %v648 = vld [vmem:[%s165 + $0xeac] sm:$0x33]
      %v649 = vld [vmem:[%s165 + $0xeb4] sm:$0x33]
      %v650 = vld [vmem:[%s165 + $0xebc] sm:$0x33]
      %v651 = vld [vmem:[%s165 + $0xec4] sm:$0x33]
      %v652 = vld [vmem:[%s165 + $0xecc] sm:$0x33]
      %v653 = vld [vmem:[%s165 + $0xed4] sm:$0x33]
      %v654 = vld [vmem:[%s165 + $0xedc] sm:$0x33]
      %v655 = vld [vmem:[%s165 + $0xee4] sm:$0x33]
      %v656 = vld [vmem:[%s165 + $0xeec] sm:$0x33]
      %v657 = vld [vmem:[%s165 + $0xef4] sm:$0x33]
      %v658 = vld [vmem:[%s165 + $0xefc] sm:$0x33]
      %v659 = vld [vmem:[%s165 + $0xf04] sm:$0x33]
      %v660 = vld [vmem:[%s165 + $0xf0c] sm:$0x33]
      %v661 = vld [vmem:[%s165 + $0xf14] sm:$0x33]
      %v662 = vld [vmem:[%s165 + $0xf1c] sm:$0x33]
      %v663 = vld [vmem:[%s165 + $0xf24] sm:$0x3]
      %v664 = vld [vmem:[%s2] sm:$0xff]
      %v665 = vld [vmem:[%s2 + $0x8] sm:$0xff]
      %667 = vset.pattern.permute.xlu0 0
      %668 = vperm.xlu0 %667, %v664
      %v669 = vpop.permute.xlu0 %668
      %672 = vset.pattern.permute.xlu0 0
      %673 = vperm.xlu0 %672, %v665
      %v674 = vpop.permute.xlu0 %673
      %v678 = vunpack.c.l.b16 %v172
      %v679 = vunpack.c.l.b16 %v173
      %v680 = vpack.c.b16 %v679, %v678
      %v1171 = vunpack.c.l.b16 %v174
      %v1172 = vunpack.c.h.b16 %v174
      %v1173 = vunpack.c.l.b16 %v175
      %v1174 = vunpack.c.h.b16 %v175
      %v1175 = vunpack.c.l.b16 %v176
      %v1176 = vunpack.c.h.b16 %v176
      %v1177 = vunpack.c.l.b16 %v177
      %v1178 = vunpack.c.h.b16 %v177
      %v1179 = vunpack.c.l.b16 %v178
      %v1180 = vunpack.c.h.b16 %v178
      %v1181 = vunpack.c.l.b16 %v179
      %v1182 = vunpack.c.h.b16 %v179
      %v1183 = vunpack.c.l.b16 %v180
      %v1184 = vunpack.c.h.b16 %v180
      %v1185 = vunpack.c.l.b16 %v181
      %v1186 = vunpack.c.h.b16 %v181
      %v1187 = vunpack.c.l.b16 %v182
      %v1188 = vunpack.c.h.b16 %v182
      %v1189 = vunpack.c.l.b16 %v183
      %v1190 = vunpack.c.h.b16 %v183
      %v1191 = vunpack.c.l.b16 %v184
      %v1192 = vunpack.c.h.b16 %v184
      %v1193 = vunpack.c.l.b16 %v185
      %v1194 = vunpack.c.h.b16 %v185
      %v1195 = vunpack.c.l.b16 %v186
      %v1196 = vunpack.c.h.b16 %v186
      %v1197 = vunpack.c.l.b16 %v187
      %v1198 = vunpack.c.h.b16 %v187
      %v1199 = vunpack.c.l.b16 %v188
      %v1200 = vunpack.c.h.b16 %v188
      %v1201 = vunpack.c.l.b16 %v189
      %v1202 = vunpack.c.h.b16 %v189
      %v1203 = vunpack.c.l.b16 %v190
      %v1204 = vunpack.c.h.b16 %v190
      %v1205 = vunpack.c.l.b16 %v191
      %v1206 = vunpack.c.h.b16 %v191
      %v1207 = vunpack.c.l.b16 %v192
      %v1208 = vunpack.c.h.b16 %v192
      %v1209 = vunpack.c.l.b16 %v193
      %v1210 = vunpack.c.h.b16 %v193
      %v1211 = vunpack.c.l.b16 %v194
      %v1212 = vunpack.c.h.b16 %v194
      %v1213 = vunpack.c.l.b16 %v195
      %v1214 = vunpack.c.h.b16 %v195
      %v1215 = vunpack.c.l.b16 %v196
      %v1216 = vunpack.c.h.b16 %v196
      %v1217 = vunpack.c.l.b16 %v197
      %v1218 = vunpack.c.h.b16 %v197
      %v1219 = vunpack.c.l.b16 %v198
      %v1220 = vunpack.c.h.b16 %v198
      %v1221 = vunpack.c.l.b16 %v199
      %v1222 = vunpack.c.h.b16 %v199
      %v1223 = vunpack.c.l.b16 %v200
      %v1224 = vunpack.c.h.b16 %v200
      %v1225 = vunpack.c.l.b16 %v201
      %v1226 = vunpack.c.h.b16 %v201
      %v1227 = vunpack.c.l.b16 %v202
      %v1228 = vunpack.c.h.b16 %v202
      %v1229 = vunpack.c.l.b16 %v203
      %v1230 = vunpack.c.h.b16 %v203
      %v1231 = vunpack.c.l.b16 %v204
      %v1232 = vunpack.c.h.b16 %v204
      %v1233 = vunpack.c.l.b16 %v205
      %v1234 = vunpack.c.h.b16 %v205
      %v1235 = vunpack.c.l.b16 %v206
      %v1236 = vunpack.c.h.b16 %v206
      %v1237 = vunpack.c.l.b16 %v207
      %v1238 = vunpack.c.h.b16 %v207
      %v1239 = vunpack.c.l.b16 %v208
      %v1240 = vunpack.c.h.b16 %v208
      %v1241 = vunpack.c.l.b16 %v209
      %v1242 = vunpack.c.h.b16 %v209
      %v1243 = vunpack.c.l.b16 %v210
      %v1244 = vunpack.c.h.b16 %v210
      %v1245 = vunpack.c.l.b16 %v211
      %v1246 = vunpack.c.h.b16 %v211
      %v1247 = vunpack.c.l.b16 %v212
      %v1248 = vunpack.c.h.b16 %v212
      %v1249 = vunpack.c.l.b16 %v213
      %v1250 = vunpack.c.h.b16 %v213
      %v1251 = vunpack.c.l.b16 %v214
      %v1252 = vunpack.c.h.b16 %v214
      %v1253 = vunpack.c.l.b16 %v215
      %v1254 = vunpack.c.h.b16 %v215
      %v1255 = vunpack.c.l.b16 %v216
      %v1256 = vunpack.c.h.b16 %v216
      %v1257 = vunpack.c.l.b16 %v217
      %v1258 = vunpack.c.h.b16 %v217
      %v1259 = vunpack.c.l.b16 %v218
      %v1260 = vunpack.c.h.b16 %v218
      %v1261 = vunpack.c.l.b16 %v219
      %v1262 = vunpack.c.h.b16 %v219
      %v1263 = vunpack.c.l.b16 %v220
      %v1264 = vunpack.c.h.b16 %v220
      %v1265 = vunpack.c.l.b16 %v221
      %v1266 = vunpack.c.h.b16 %v221
      %v1267 = vunpack.c.l.b16 %v222
      %v1268 = vunpack.c.l.b16 %v223
      %v1269 = vunpack.c.h.b16 %v223
      %v1270 = vunpack.c.l.b16 %v224
      %v1271 = vunpack.c.h.b16 %v224
      %v1272 = vunpack.c.l.b16 %v225
      %v1273 = vunpack.c.h.b16 %v225
      %v1274 = vunpack.c.l.b16 %v226
      %v1275 = vunpack.c.h.b16 %v226
      %v1276 = vunpack.c.l.b16 %v227
      %v1277 = vunpack.c.h.b16 %v227
      %v1278 = vunpack.c.l.b16 %v228
      %v1279 = vunpack.c.h.b16 %v228
      %v1280 = vunpack.c.l.b16 %v229
      %v1281 = vunpack.c.h.b16 %v229
      %v1282 = vunpack.c.l.b16 %v230
      %v1283 = vunpack.c.h.b16 %v230
      %v1284 = vunpack.c.l.b16 %v231
      %v1285 = vunpack.c.h.b16 %v231
      %v1286 = vunpack.c.l.b16 %v232
      %v1287 = vunpack.c.h.b16 %v232
      %v1288 = vunpack.c.l.b16 %v233
      %v1289 = vunpack.c.h.b16 %v233
      %v1290 = vunpack.c.l.b16 %v234
      %v1291 = vunpack.c.h.b16 %v234
      %v1292 = vunpack.c.l.b16 %v235
      %v1293 = vunpack.c.h.b16 %v235
      %v1294 = vunpack.c.l.b16 %v236
      %v1295 = vunpack.c.h.b16 %v236
      %v1296 = vunpack.c.l.b16 %v237
      %v1297 = vunpack.c.h.b16 %v237
      %v1298 = vunpack.c.l.b16 %v238
      %v1299 = vunpack.c.h.b16 %v238
      %v1300 = vunpack.c.l.b16 %v239
      %v1301 = vunpack.c.h.b16 %v239
      %v1302 = vunpack.c.l.b16 %v240
      %v1303 = vunpack.c.h.b16 %v240
      %v1304 = vunpack.c.l.b16 %v241
      %v1305 = vunpack.c.h.b16 %v241
      %v1306 = vunpack.c.l.b16 %v242
      %v1307 = vunpack.c.h.b16 %v242
      %v1308 = vunpack.c.l.b16 %v243
      %v1309 = vunpack.c.h.b16 %v243
      %v1310 = vunpack.c.l.b16 %v244
      %v1311 = vunpack.c.h.b16 %v244
      %v1312 = vunpack.c.l.b16 %v245
      %v1313 = vunpack.c.h.b16 %v245
      %v1314 = vunpack.c.l.b16 %v246
      %v1315 = vunpack.c.h.b16 %v246
      %v1316 = vunpack.c.l.b16 %v247
      %v1317 = vunpack.c.h.b16 %v247
      %v1318 = vunpack.c.l.b16 %v248
      %v1319 = vunpack.c.h.b16 %v248
      %v1320 = vunpack.c.l.b16 %v249
      %v1321 = vunpack.c.h.b16 %v249
      %v1322 = vunpack.c.l.b16 %v250
      %v1323 = vunpack.c.h.b16 %v250
      %v1324 = vunpack.c.l.b16 %v251
      %v1325 = vunpack.c.h.b16 %v251
      %v1326 = vunpack.c.l.b16 %v252
      %v1327 = vunpack.c.h.b16 %v252
      %v1328 = vunpack.c.l.b16 %v253
      %v1329 = vunpack.c.h.b16 %v253
      %v1330 = vunpack.c.l.b16 %v254
      %v1331 = vunpack.c.h.b16 %v254
      %v1332 = vunpack.c.l.b16 %v255
      %v1333 = vunpack.c.h.b16 %v255
      %v1334 = vunpack.c.l.b16 %v256
      %v1335 = vunpack.c.h.b16 %v256
      %v1336 = vunpack.c.l.b16 %v257
      %v1337 = vunpack.c.h.b16 %v257
      %v1338 = vunpack.c.l.b16 %v258
      %v1339 = vunpack.c.h.b16 %v258
      %v1340 = vunpack.c.l.b16 %v259
      %v1341 = vunpack.c.h.b16 %v259
      %v1342 = vunpack.c.l.b16 %v260
      %v1343 = vunpack.c.h.b16 %v260
      %v1344 = vunpack.c.l.b16 %v261
      %v1345 = vunpack.c.h.b16 %v261
      %v1346 = vunpack.c.l.b16 %v262
      %v1347 = vunpack.c.h.b16 %v262
      %v1348 = vunpack.c.l.b16 %v263
      %v1349 = vunpack.c.h.b16 %v263
      %v1350 = vunpack.c.l.b16 %v264
      %v1351 = vunpack.c.h.b16 %v264
      %v1352 = vunpack.c.l.b16 %v265
      %v1353 = vunpack.c.h.b16 %v265
      %v1354 = vunpack.c.l.b16 %v266
      %v1355 = vunpack.c.h.b16 %v266
      %v1356 = vunpack.c.l.b16 %v267
      %v1357 = vunpack.c.h.b16 %v267
      %v1358 = vunpack.c.l.b16 %v268
      %v1359 = vunpack.c.h.b16 %v268
      %v1360 = vunpack.c.l.b16 %v269
      %v1361 = vunpack.c.h.b16 %v269
      %v1362 = vunpack.c.l.b16 %v270
      %v1363 = vunpack.c.h.b16 %v270
      %v1364 = vunpack.c.l.b16 %v271
      %v1365 = vunpack.c.l.b16 %v272
      %v1366 = vunpack.c.h.b16 %v272
      %v1367 = vunpack.c.l.b16 %v273
      %v1368 = vunpack.c.h.b16 %v273
      %v1369 = vunpack.c.l.b16 %v274
      %v1370 = vunpack.c.h.b16 %v274
      %v1371 = vunpack.c.l.b16 %v275
      %v1372 = vunpack.c.h.b16 %v275
      %v1373 = vunpack.c.l.b16 %v276
      %v1374 = vunpack.c.h.b16 %v276
      %v1375 = vunpack.c.l.b16 %v277
      %v1376 = vunpack.c.h.b16 %v277
      %v1377 = vunpack.c.l.b16 %v278
      %v1378 = vunpack.c.h.b16 %v278
      %v1379 = vunpack.c.l.b16 %v279
      %v1380 = vunpack.c.h.b16 %v279
      %v1381 = vunpack.c.l.b16 %v280
      %v1382 = vunpack.c.h.b16 %v280
      %v1383 = vunpack.c.l.b16 %v281
      %v1384 = vunpack.c.h.b16 %v281
      %v1385 = vunpack.c.l.b16 %v282
      %v1386 = vunpack.c.h.b16 %v282
      %v1387 = vunpack.c.l.b16 %v283
      %v1388 = vunpack.c.h.b16 %v283
      %v1389 = vunpack.c.l.b16 %v284
      %v1390 = vunpack.c.h.b16 %v284
      %v1391 = vunpack.c.l.b16 %v285
      %v1392 = vunpack.c.h.b16 %v285
      %v1393 = vunpack.c.l.b16 %v286
      %v1394 = vunpack.c.h.b16 %v286
      %v1395 = vunpack.c.l.b16 %v287
      %v1396 = vunpack.c.h.b16 %v287
      %v1397 = vunpack.c.l.b16 %v288
      %v1398 = vunpack.c.h.b16 %v288
      %v1399 = vunpack.c.l.b16 %v289
      %v1400 = vunpack.c.h.b16 %v289
      %v1401 = vunpack.c.l.b16 %v290
      %v1402 = vunpack.c.h.b16 %v290
      %v1403 = vunpack.c.l.b16 %v291
      %v1404 = vunpack.c.h.b16 %v291
      %v1405 = vunpack.c.l.b16 %v292
      %v1406 = vunpack.c.h.b16 %v292
      %v1407 = vunpack.c.l.b16 %v293
      %v1408 = vunpack.c.h.b16 %v293
      %v1409 = vunpack.c.l.b16 %v294
      %v1410 = vunpack.c.h.b16 %v294
      %v1411 = vunpack.c.l.b16 %v295
      %v1412 = vunpack.c.h.b16 %v295
      %v1413 = vunpack.c.l.b16 %v296
      %v1414 = vunpack.c.h.b16 %v296
      %v1415 = vunpack.c.l.b16 %v297
      %v1416 = vunpack.c.h.b16 %v297
      %v1417 = vunpack.c.l.b16 %v298
      %v1418 = vunpack.c.h.b16 %v298
      %v1419 = vunpack.c.l.b16 %v299
      %v1420 = vunpack.c.h.b16 %v299
      %v1421 = vunpack.c.l.b16 %v300
      %v1422 = vunpack.c.h.b16 %v300
      %v1423 = vunpack.c.l.b16 %v301
      %v1424 = vunpack.c.h.b16 %v301
      %v1425 = vunpack.c.l.b16 %v302
      %v1426 = vunpack.c.h.b16 %v302
      %v1427 = vunpack.c.l.b16 %v303
      %v1428 = vunpack.c.h.b16 %v303
      %v1429 = vunpack.c.l.b16 %v304
      %v1430 = vunpack.c.h.b16 %v304
      %v1431 = vunpack.c.l.b16 %v305
      %v1432 = vunpack.c.h.b16 %v305
      %v1433 = vunpack.c.l.b16 %v306
      %v1434 = vunpack.c.h.b16 %v306
      %v1435 = vunpack.c.l.b16 %v307
      %v1436 = vunpack.c.h.b16 %v307
      %v1437 = vunpack.c.l.b16 %v308
      %v1438 = vunpack.c.h.b16 %v308
      %v1439 = vunpack.c.l.b16 %v309
      %v1440 = vunpack.c.h.b16 %v309
      %v1441 = vunpack.c.l.b16 %v310
      %v1442 = vunpack.c.h.b16 %v310
      %v1443 = vunpack.c.l.b16 %v311
      %v1444 = vunpack.c.h.b16 %v311
      %v1445 = vunpack.c.l.b16 %v312
      %v1446 = vunpack.c.h.b16 %v312
      %v1447 = vunpack.c.l.b16 %v313
      %v1448 = vunpack.c.h.b16 %v313
      %v1449 = vunpack.c.l.b16 %v314
      %v1450 = vunpack.c.h.b16 %v314
      %v1451 = vunpack.c.l.b16 %v315
      %v1452 = vunpack.c.h.b16 %v315
      %v1453 = vunpack.c.l.b16 %v316
      %v1454 = vunpack.c.h.b16 %v316
      %v1455 = vunpack.c.l.b16 %v317
      %v1456 = vunpack.c.h.b16 %v317
      %v1457 = vunpack.c.l.b16 %v318
      %v1458 = vunpack.c.h.b16 %v318
      %v1459 = vunpack.c.l.b16 %v319
      %v1460 = vunpack.c.h.b16 %v319
      %v1461 = vunpack.c.l.b16 %v320
      %v1462 = vunpack.c.l.b16 %v321
      %v1463 = vunpack.c.h.b16 %v321
      %v1464 = vunpack.c.l.b16 %v322
      %v1465 = vunpack.c.h.b16 %v322
      %v1466 = vunpack.c.l.b16 %v323
      %v1467 = vunpack.c.h.b16 %v323
      %v1468 = vunpack.c.l.b16 %v324
      %v1469 = vunpack.c.h.b16 %v324
      %v1470 = vunpack.c.l.b16 %v325
      %v1471 = vunpack.c.h.b16 %v325
      %v1472 = vunpack.c.l.b16 %v326
      %v1473 = vunpack.c.h.b16 %v326
      %v1474 = vunpack.c.l.b16 %v327
      %v1475 = vunpack.c.h.b16 %v327
      %v1476 = vunpack.c.l.b16 %v328
      %v1477 = vunpack.c.h.b16 %v328
      %v1478 = vunpack.c.l.b16 %v329
      %v1479 = vunpack.c.h.b16 %v329
      %v1480 = vunpack.c.l.b16 %v330
      %v1481 = vunpack.c.h.b16 %v330
      %v1482 = vunpack.c.l.b16 %v331
      %v1483 = vunpack.c.h.b16 %v331
      %v1484 = vunpack.c.l.b16 %v332
      %v1485 = vunpack.c.h.b16 %v332
      %v1486 = vunpack.c.l.b16 %v333
      %v1487 = vunpack.c.h.b16 %v333
      %v1488 = vunpack.c.l.b16 %v334
      %v1489 = vunpack.c.h.b16 %v334
      %v1490 = vunpack.c.l.b16 %v335
      %v1491 = vunpack.c.h.b16 %v335
      %v1492 = vunpack.c.l.b16 %v336
      %v1493 = vunpack.c.h.b16 %v336
      %v1494 = vunpack.c.l.b16 %v337
      %v1495 = vunpack.c.h.b16 %v337
      %v1496 = vunpack.c.l.b16 %v338
      %v1497 = vunpack.c.h.b16 %v338
      %v1498 = vunpack.c.l.b16 %v339
      %v1499 = vunpack.c.h.b16 %v339
      %v1500 = vunpack.c.l.b16 %v340
      %v1501 = vunpack.c.h.b16 %v340
      %v1502 = vunpack.c.l.b16 %v341
      %v1503 = vunpack.c.h.b16 %v341
      %v1504 = vunpack.c.l.b16 %v342
      %v1505 = vunpack.c.h.b16 %v342
      %v1506 = vunpack.c.l.b16 %v343
      %v1507 = vunpack.c.h.b16 %v343
      %v1508 = vunpack.c.l.b16 %v344
      %v1509 = vunpack.c.h.b16 %v344
      %v1510 = vunpack.c.l.b16 %v345
      %v1511 = vunpack.c.h.b16 %v345
      %v1512 = vunpack.c.l.b16 %v346
      %v1513 = vunpack.c.h.b16 %v346
      %v1514 = vunpack.c.l.b16 %v347
      %v1515 = vunpack.c.h.b16 %v347
      %v1516 = vunpack.c.l.b16 %v348
      %v1517 = vunpack.c.h.b16 %v348
      %v1518 = vunpack.c.l.b16 %v349
      %v1519 = vunpack.c.h.b16 %v349
      %v1520 = vunpack.c.l.b16 %v350
      %v1521 = vunpack.c.h.b16 %v350
      %v1522 = vunpack.c.l.b16 %v351
      %v1523 = vunpack.c.h.b16 %v351
      %v1524 = vunpack.c.l.b16 %v352
      %v1525 = vunpack.c.h.b16 %v352
      %v1526 = vunpack.c.l.b16 %v353
      %v1527 = vunpack.c.h.b16 %v353
      %v1528 = vunpack.c.l.b16 %v354
      %v1529 = vunpack.c.h.b16 %v354
      %v1530 = vunpack.c.l.b16 %v355
      %v1531 = vunpack.c.h.b16 %v355
      %v1532 = vunpack.c.l.b16 %v356
      %v1533 = vunpack.c.h.b16 %v356
      %v1534 = vunpack.c.l.b16 %v357
      %v1535 = vunpack.c.h.b16 %v357
      %v1536 = vunpack.c.l.b16 %v358
      %v1537 = vunpack.c.h.b16 %v358
      %v1538 = vunpack.c.l.b16 %v359
      %v1539 = vunpack.c.h.b16 %v359
      %v1540 = vunpack.c.l.b16 %v360
      %v1541 = vunpack.c.h.b16 %v360
      %v1542 = vunpack.c.l.b16 %v361
      %v1543 = vunpack.c.h.b16 %v361
      %v1544 = vunpack.c.l.b16 %v362
      %v1545 = vunpack.c.h.b16 %v362
      %v1546 = vunpack.c.l.b16 %v363
      %v1547 = vunpack.c.h.b16 %v363
      %v1548 = vunpack.c.l.b16 %v364
      %v1549 = vunpack.c.h.b16 %v364
      %v1550 = vunpack.c.l.b16 %v365
      %v1551 = vunpack.c.h.b16 %v365
      %v1552 = vunpack.c.l.b16 %v366
      %v1553 = vunpack.c.h.b16 %v366
      %v1554 = vunpack.c.l.b16 %v367
      %v1555 = vunpack.c.h.b16 %v367
      %v1556 = vunpack.c.l.b16 %v368
      %v1557 = vunpack.c.h.b16 %v368
      %v1558 = vunpack.c.l.b16 %v369
      %v1559 = vunpack.c.l.b16 %v370
      %v1560 = vunpack.c.h.b16 %v370
      %v1561 = vunpack.c.l.b16 %v371
      %v1562 = vunpack.c.h.b16 %v371
      %v1563 = vunpack.c.l.b16 %v372
      %v1564 = vunpack.c.h.b16 %v372
      %v1565 = vunpack.c.l.b16 %v373
      %v1566 = vunpack.c.h.b16 %v373
      %v1567 = vunpack.c.l.b16 %v374
      %v1568 = vunpack.c.h.b16 %v374
      %v1569 = vunpack.c.l.b16 %v375
      %v1570 = vunpack.c.h.b16 %v375
      %v1571 = vunpack.c.l.b16 %v376
      %v1572 = vunpack.c.h.b16 %v376
      %v1573 = vunpack.c.l.b16 %v377
      %v1574 = vunpack.c.h.b16 %v377
      %v1575 = vunpack.c.l.b16 %v378
      %v1576 = vunpack.c.h.b16 %v378
      %v1577 = vunpack.c.l.b16 %v379
      %v1578 = vunpack.c.h.b16 %v379
      %v1579 = vunpack.c.l.b16 %v380
      %v1580 = vunpack.c.h.b16 %v380
      %v1581 = vunpack.c.l.b16 %v381
      %v1582 = vunpack.c.h.b16 %v381
      %v1583 = vunpack.c.l.b16 %v382
      %v1584 = vunpack.c.h.b16 %v382
      %v1585 = vunpack.c.l.b16 %v383
      %v1586 = vunpack.c.h.b16 %v383
      %v1587 = vunpack.c.l.b16 %v384
      %v1588 = vunpack.c.h.b16 %v384
      %v1589 = vunpack.c.l.b16 %v385
      %v1590 = vunpack.c.h.b16 %v385
      %v1591 = vunpack.c.l.b16 %v386
      %v1592 = vunpack.c.h.b16 %v386
      %v1593 = vunpack.c.l.b16 %v387
      %v1594 = vunpack.c.h.b16 %v387
      %v1595 = vunpack.c.l.b16 %v388
      %v1596 = vunpack.c.h.b16 %v388
      %v1597 = vunpack.c.l.b16 %v389
      %v1598 = vunpack.c.h.b16 %v389
      %v1599 = vunpack.c.l.b16 %v390
      %v1600 = vunpack.c.h.b16 %v390
      %v1601 = vunpack.c.l.b16 %v391
      %v1602 = vunpack.c.h.b16 %v391
      %v1603 = vunpack.c.l.b16 %v392
      %v1604 = vunpack.c.h.b16 %v392
      %v1605 = vunpack.c.l.b16 %v393
      %v1606 = vunpack.c.h.b16 %v393
      %v1607 = vunpack.c.l.b16 %v394
      %v1608 = vunpack.c.h.b16 %v394
      %v1609 = vunpack.c.l.b16 %v395
      %v1610 = vunpack.c.h.b16 %v395
      %v1611 = vunpack.c.l.b16 %v396
      %v1612 = vunpack.c.h.b16 %v396
      %v1613 = vunpack.c.l.b16 %v397
      %v1614 = vunpack.c.h.b16 %v397
      %v1615 = vunpack.c.l.b16 %v398
      %v1616 = vunpack.c.h.b16 %v398
      %v1617 = vunpack.c.l.b16 %v399
      %v1618 = vunpack.c.h.b16 %v399
      %v1619 = vunpack.c.l.b16 %v400
      %v1620 = vunpack.c.h.b16 %v400
      %v1621 = vunpack.c.l.b16 %v401
      %v1622 = vunpack.c.h.b16 %v401
      %v1623 = vunpack.c.l.b16 %v402
      %v1624 = vunpack.c.h.b16 %v402
      %v1625 = vunpack.c.l.b16 %v403
      %v1626 = vunpack.c.h.b16 %v403
      %v1627 = vunpack.c.l.b16 %v404
      %v1628 = vunpack.c.h.b16 %v404
      %v1629 = vunpack.c.l.b16 %v405
      %v1630 = vunpack.c.h.b16 %v405
      %v1631 = vunpack.c.l.b16 %v406
      %v1632 = vunpack.c.h.b16 %v406
      %v1633 = vunpack.c.l.b16 %v407
      %v1634 = vunpack.c.h.b16 %v407
      %v1635 = vunpack.c.l.b16 %v408
      %v1636 = vunpack.c.h.b16 %v408
      %v1637 = vunpack.c.l.b16 %v409
      %v1638 = vunpack.c.h.b16 %v409
      %v1639 = vunpack.c.l.b16 %v410
      %v1640 = vunpack.c.h.b16 %v410
      %v1641 = vunpack.c.l.b16 %v411
      %v1642 = vunpack.c.h.b16 %v411
      %v1643 = vunpack.c.l.b16 %v412
      %v1644 = vunpack.c.h.b16 %v412
      %v1645 = vunpack.c.l.b16 %v413
      %v1646 = vunpack.c.h.b16 %v413
      %v1647 = vunpack.c.l.b16 %v414
      %v1648 = vunpack.c.h.b16 %v414
      %v1649 = vunpack.c.l.b16 %v415
      %v1650 = vunpack.c.h.b16 %v415
      %v1651 = vunpack.c.l.b16 %v416
      %v1652 = vunpack.c.h.b16 %v416
      %v1653 = vunpack.c.l.b16 %v417
      %v1654 = vunpack.c.h.b16 %v417
      %v1655 = vunpack.c.l.b16 %v418
      %v1656 = vunpack.c.l.b16 %v419
      %v1657 = vunpack.c.h.b16 %v419
      %v1658 = vunpack.c.l.b16 %v420
      %v1659 = vunpack.c.h.b16 %v420
      %v1660 = vunpack.c.l.b16 %v421
      %v1661 = vunpack.c.h.b16 %v421
      %v1662 = vunpack.c.l.b16 %v422
      %v1663 = vunpack.c.h.b16 %v422
      %v1664 = vunpack.c.l.b16 %v423
      %v1665 = vunpack.c.h.b16 %v423
      %v1666 = vunpack.c.l.b16 %v424
      %v1667 = vunpack.c.h.b16 %v424
      %v1668 = vunpack.c.l.b16 %v425
      %v1669 = vunpack.c.h.b16 %v425
      %v1670 = vunpack.c.l.b16 %v426
      %v1671 = vunpack.c.h.b16 %v426
      %v1672 = vunpack.c.l.b16 %v427
      %v1673 = vunpack.c.h.b16 %v427
      %v1674 = vunpack.c.l.b16 %v428
      %v1675 = vunpack.c.h.b16 %v428
      %v1676 = vunpack.c.l.b16 %v429
      %v1677 = vunpack.c.h.b16 %v429
      %v1678 = vunpack.c.l.b16 %v430
      %v1679 = vunpack.c.h.b16 %v430
      %v1680 = vunpack.c.l.b16 %v431
      %v1681 = vunpack.c.h.b16 %v431
      %v1682 = vunpack.c.l.b16 %v432
      %v1683 = vunpack.c.h.b16 %v432
      %v1684 = vunpack.c.l.b16 %v433
      %v1685 = vunpack.c.h.b16 %v433
      %v1686 = vunpack.c.l.b16 %v434
      %v1687 = vunpack.c.h.b16 %v434
      %v1688 = vunpack.c.l.b16 %v435
      %v1689 = vunpack.c.h.b16 %v435
      %v1690 = vunpack.c.l.b16 %v436
      %v1691 = vunpack.c.h.b16 %v436
      %v1692 = vunpack.c.l.b16 %v437
      %v1693 = vunpack.c.h.b16 %v437
      %v1694 = vunpack.c.l.b16 %v438
      %v1695 = vunpack.c.h.b16 %v438
      %v1696 = vunpack.c.l.b16 %v439
      %v1697 = vunpack.c.h.b16 %v439
      %v1698 = vunpack.c.l.b16 %v440
      %v1699 = vunpack.c.h.b16 %v440
      %v1700 = vunpack.c.l.b16 %v441
      %v1701 = vunpack.c.h.b16 %v441
      %v1702 = vunpack.c.l.b16 %v442
      %v1703 = vunpack.c.h.b16 %v442
      %v1704 = vunpack.c.l.b16 %v443
      %v1705 = vunpack.c.h.b16 %v443
      %v1706 = vunpack.c.l.b16 %v444
      %v1707 = vunpack.c.h.b16 %v444
      %v1708 = vunpack.c.l.b16 %v445
      %v1709 = vunpack.c.h.b16 %v445
      %v1710 = vunpack.c.l.b16 %v446
      %v1711 = vunpack.c.h.b16 %v446
      %v1712 = vunpack.c.l.b16 %v447
      %v1713 = vunpack.c.h.b16 %v447
      %v1714 = vunpack.c.l.b16 %v448
      %v1715 = vunpack.c.h.b16 %v448
      %v1716 = vunpack.c.l.b16 %v449
      %v1717 = vunpack.c.h.b16 %v449
      %v1718 = vunpack.c.l.b16 %v450
      %v1719 = vunpack.c.h.b16 %v450
      %v1720 = vunpack.c.l.b16 %v451
      %v1721 = vunpack.c.h.b16 %v451
      %v1722 = vunpack.c.l.b16 %v452
      %v1723 = vunpack.c.h.b16 %v452
      %v1724 = vunpack.c.l.b16 %v453
      %v1725 = vunpack.c.h.b16 %v453
      %v1726 = vunpack.c.l.b16 %v454
      %v1727 = vunpack.c.h.b16 %v454
      %v1728 = vunpack.c.l.b16 %v455
      %v1729 = vunpack.c.h.b16 %v455
      %v1730 = vunpack.c.l.b16 %v456
      %v1731 = vunpack.c.h.b16 %v456
      %v1732 = vunpack.c.l.b16 %v457
      %v1733 = vunpack.c.h.b16 %v457
      %v1734 = vunpack.c.l.b16 %v458
      %v1735 = vunpack.c.h.b16 %v458
      %v1736 = vunpack.c.l.b16 %v459
      %v1737 = vunpack.c.h.b16 %v459
      %v1738 = vunpack.c.l.b16 %v460
      %v1739 = vunpack.c.h.b16 %v460
      %v1740 = vunpack.c.l.b16 %v461
      %v1741 = vunpack.c.h.b16 %v461
      %v1742 = vunpack.c.l.b16 %v462
      %v1743 = vunpack.c.h.b16 %v462
      %v1744 = vunpack.c.l.b16 %v463
      %v1745 = vunpack.c.h.b16 %v463
      %v1746 = vunpack.c.l.b16 %v464
      %v1747 = vunpack.c.h.b16 %v464
      %v1748 = vunpack.c.l.b16 %v465
      %v1749 = vunpack.c.h.b16 %v465
      %v1750 = vunpack.c.l.b16 %v466
      %v1751 = vunpack.c.h.b16 %v466
      %v1752 = vunpack.c.l.b16 %v467
      %v1753 = vunpack.c.l.b16 %v468
      %v1754 = vunpack.c.h.b16 %v468
      %v1755 = vunpack.c.l.b16 %v469
      %v1756 = vunpack.c.h.b16 %v469
      %v1757 = vunpack.c.l.b16 %v470
      %v1758 = vunpack.c.h.b16 %v470
      %v1759 = vunpack.c.l.b16 %v471
      %v1760 = vunpack.c.h.b16 %v471
      %v1761 = vunpack.c.l.b16 %v472
      %v1762 = vunpack.c.h.b16 %v472
      %v1763 = vunpack.c.l.b16 %v473
      %v1764 = vunpack.c.h.b16 %v473
      %v1765 = vunpack.c.l.b16 %v474
      %v1766 = vunpack.c.h.b16 %v474
      %v1767 = vunpack.c.l.b16 %v475
      %v1768 = vunpack.c.h.b16 %v475
      %v1769 = vunpack.c.l.b16 %v476
      %v1770 = vunpack.c.h.b16 %v476
      %v1771 = vunpack.c.l.b16 %v477
      %v1772 = vunpack.c.h.b16 %v477
      %v1773 = vunpack.c.l.b16 %v478
      %v1774 = vunpack.c.h.b16 %v478
      %v1775 = vunpack.c.l.b16 %v479
      %v1776 = vunpack.c.h.b16 %v479
      %v1777 = vunpack.c.l.b16 %v480
      %v1778 = vunpack.c.h.b16 %v480
      %v1779 = vunpack.c.l.b16 %v481
      %v1780 = vunpack.c.h.b16 %v481
      %v1781 = vunpack.c.l.b16 %v482
      %v1782 = vunpack.c.h.b16 %v482
      %v1783 = vunpack.c.l.b16 %v483
      %v1784 = vunpack.c.h.b16 %v483
      %v1785 = vunpack.c.l.b16 %v484
      %v1786 = vunpack.c.h.b16 %v484
      %v1787 = vunpack.c.l.b16 %v485
      %v1788 = vunpack.c.h.b16 %v485
      %v1789 = vunpack.c.l.b16 %v486
      %v1790 = vunpack.c.h.b16 %v486
      %v1791 = vunpack.c.l.b16 %v487
      %v1792 = vunpack.c.h.b16 %v487
      %v1793 = vunpack.c.l.b16 %v488
      %v1794 = vunpack.c.h.b16 %v488
      %v1795 = vunpack.c.l.b16 %v489
      %v1796 = vunpack.c.h.b16 %v489
      %v1797 = vunpack.c.l.b16 %v490
      %v1798 = vunpack.c.h.b16 %v490
      %v1799 = vunpack.c.l.b16 %v491
      %v1800 = vunpack.c.h.b16 %v491
      %v1801 = vunpack.c.l.b16 %v492
      %v1802 = vunpack.c.h.b16 %v492
      %v1803 = vunpack.c.l.b16 %v493
      %v1804 = vunpack.c.h.b16 %v493
      %v1805 = vunpack.c.l.b16 %v494
      %v1806 = vunpack.c.h.b16 %v494
      %v1807 = vunpack.c.l.b16 %v495
      %v1808 = vunpack.c.h.b16 %v495
      %v1809 = vunpack.c.l.b16 %v496
      %v1810 = vunpack.c.h.b16 %v496
      %v1811 = vunpack.c.l.b16 %v497
      %v1812 = vunpack.c.h.b16 %v497
      %v1813 = vunpack.c.l.b16 %v498
      %v1814 = vunpack.c.h.b16 %v498
      %v1815 = vunpack.c.l.b16 %v499
      %v1816 = vunpack.c.h.b16 %v499
      %v1817 = vunpack.c.l.b16 %v500
      %v1818 = vunpack.c.h.b16 %v500
      %v1819 = vunpack.c.l.b16 %v501
      %v1820 = vunpack.c.h.b16 %v501
      %v1821 = vunpack.c.l.b16 %v502
      %v1822 = vunpack.c.h.b16 %v502
      %v1823 = vunpack.c.l.b16 %v503
      %v1824 = vunpack.c.h.b16 %v503
      %v1825 = vunpack.c.l.b16 %v504
      %v1826 = vunpack.c.h.b16 %v504
      %v1827 = vunpack.c.l.b16 %v505
      %v1828 = vunpack.c.h.b16 %v505
      %v1829 = vunpack.c.l.b16 %v506
      %v1830 = vunpack.c.h.b16 %v506
      %v1831 = vunpack.c.l.b16 %v507
      %v1832 = vunpack.c.h.b16 %v507
      %v1833 = vunpack.c.l.b16 %v508
      %v1834 = vunpack.c.h.b16 %v508
      %v1835 = vunpack.c.l.b16 %v509
      %v1836 = vunpack.c.h.b16 %v509
      %v1837 = vunpack.c.l.b16 %v510
      %v1838 = vunpack.c.h.b16 %v510
      %v1839 = vunpack.c.l.b16 %v511
      %v1840 = vunpack.c.h.b16 %v511
      %v1841 = vunpack.c.l.b16 %v512
      %v1842 = vunpack.c.h.b16 %v512
      %v1843 = vunpack.c.l.b16 %v513
      %v1844 = vunpack.c.h.b16 %v513
      %v1845 = vunpack.c.l.b16 %v514
      %v1846 = vunpack.c.h.b16 %v514
      %v1847 = vunpack.c.l.b16 %v515
      %v1848 = vunpack.c.h.b16 %v515
      %v1849 = vunpack.c.l.b16 %v516
      %v1850 = vunpack.c.l.b16 %v517
      %v1851 = vunpack.c.h.b16 %v517
      %v1852 = vunpack.c.l.b16 %v518
      %v1853 = vunpack.c.h.b16 %v518
      %v1854 = vunpack.c.l.b16 %v519
      %v1855 = vunpack.c.h.b16 %v519
      %v1856 = vunpack.c.l.b16 %v520
      %v1857 = vunpack.c.h.b16 %v520
      %v1858 = vunpack.c.l.b16 %v521
      %v1859 = vunpack.c.h.b16 %v521
      %v1860 = vunpack.c.l.b16 %v522
      %v1861 = vunpack.c.h.b16 %v522
      %v1862 = vunpack.c.l.b16 %v523
      %v1863 = vunpack.c.h.b16 %v523
      %v1864 = vunpack.c.l.b16 %v524
      %v1865 = vunpack.c.h.b16 %v524
      %v1866 = vunpack.c.l.b16 %v525
      %v1867 = vunpack.c.h.b16 %v525
      %v1868 = vunpack.c.l.b16 %v526
      %v1869 = vunpack.c.h.b16 %v526
      %v1870 = vunpack.c.l.b16 %v527
      %v1871 = vunpack.c.h.b16 %v527
      %v1872 = vunpack.c.l.b16 %v528
      %v1873 = vunpack.c.h.b16 %v528
      %v1874 = vunpack.c.l.b16 %v529
      %v1875 = vunpack.c.h.b16 %v529
      %v1876 = vunpack.c.l.b16 %v530
      %v1877 = vunpack.c.h.b16 %v530
      %v1878 = vunpack.c.l.b16 %v531
      %v1879 = vunpack.c.h.b16 %v531
      %v1880 = vunpack.c.l.b16 %v532
      %v1881 = vunpack.c.h.b16 %v532
      %v1882 = vunpack.c.l.b16 %v533
      %v1883 = vunpack.c.h.b16 %v533
      %v1884 = vunpack.c.l.b16 %v534
      %v1885 = vunpack.c.h.b16 %v534
      %v1886 = vunpack.c.l.b16 %v535
      %v1887 = vunpack.c.h.b16 %v535
      %v1888 = vunpack.c.l.b16 %v536
      %v1889 = vunpack.c.h.b16 %v536
      %v1890 = vunpack.c.l.b16 %v537
      %v1891 = vunpack.c.h.b16 %v537
      %v1892 = vunpack.c.l.b16 %v538
      %v1893 = vunpack.c.h.b16 %v538
      %v1894 = vunpack.c.l.b16 %v539
      %v1895 = vunpack.c.h.b16 %v539
      %v1896 = vunpack.c.l.b16 %v540
      %v1897 = vunpack.c.h.b16 %v540
      %v1898 = vunpack.c.l.b16 %v541
      %v1899 = vunpack.c.h.b16 %v541
      %v1900 = vunpack.c.l.b16 %v542
      %v1901 = vunpack.c.h.b16 %v542
      %v1902 = vunpack.c.l.b16 %v543
      %v1903 = vunpack.c.h.b16 %v543
      %v1904 = vunpack.c.l.b16 %v544
      %v1905 = vunpack.c.h.b16 %v544
      %v1906 = vunpack.c.l.b16 %v545
      %v1907 = vunpack.c.h.b16 %v545
      %v1908 = vunpack.c.l.b16 %v546
      %v1909 = vunpack.c.h.b16 %v546
      %v1910 = vunpack.c.l.b16 %v547
      %v1911 = vunpack.c.h.b16 %v547
      %v1912 = vunpack.c.l.b16 %v548
      %v1913 = vunpack.c.h.b16 %v548
      %v1914 = vunpack.c.l.b16 %v549
      %v1915 = vunpack.c.h.b16 %v549
      %v1916 = vunpack.c.l.b16 %v550
      %v1917 = vunpack.c.h.b16 %v550
      %v1918 = vunpack.c.l.b16 %v551
      %v1919 = vunpack.c.h.b16 %v551
      %v1920 = vunpack.c.l.b16 %v552
      %v1921 = vunpack.c.h.b16 %v552
      %v1922 = vunpack.c.l.b16 %v553
      %v1923 = vunpack.c.h.b16 %v553
      %v1924 = vunpack.c.l.b16 %v554
      %v1925 = vunpack.c.h.b16 %v554
      %v1926 = vunpack.c.l.b16 %v555
      %v1927 = vunpack.c.h.b16 %v555
      %v1928 = vunpack.c.l.b16 %v556
      %v1929 = vunpack.c.h.b16 %v556
      %v1930 = vunpack.c.l.b16 %v557
      %v1931 = vunpack.c.h.b16 %v557
      %v1932 = vunpack.c.l.b16 %v558
      %v1933 = vunpack.c.h.b16 %v558
      %v1934 = vunpack.c.l.b16 %v559
      %v1935 = vunpack.c.h.b16 %v559
      %v1936 = vunpack.c.l.b16 %v560
      %v1937 = vunpack.c.h.b16 %v560
      %v1938 = vunpack.c.l.b16 %v561
      %v1939 = vunpack.c.h.b16 %v561
      %v1940 = vunpack.c.l.b16 %v562
      %v1941 = vunpack.c.h.b16 %v562
      %v1942 = vunpack.c.l.b16 %v563
      %v1943 = vunpack.c.h.b16 %v563
      %v1944 = vunpack.c.l.b16 %v564
      %v1945 = vunpack.c.h.b16 %v564
      %v1946 = vunpack.c.l.b16 %v565
      %v1947 = vunpack.c.l.b16 %v566
      %v1948 = vunpack.c.h.b16 %v566
      %v1949 = vunpack.c.l.b16 %v567
      %v1950 = vunpack.c.h.b16 %v567
      %v1951 = vunpack.c.l.b16 %v568
      %v1952 = vunpack.c.h.b16 %v568
      %v1953 = vunpack.c.l.b16 %v569
      %v1954 = vunpack.c.h.b16 %v569
      %v1955 = vunpack.c.l.b16 %v570
      %v1956 = vunpack.c.h.b16 %v570
      %v1957 = vunpack.c.l.b16 %v571
      %v1958 = vunpack.c.h.b16 %v571
      %v1959 = vunpack.c.l.b16 %v572
      %v1960 = vunpack.c.h.b16 %v572
      %v1961 = vunpack.c.l.b16 %v573
      %v1962 = vunpack.c.h.b16 %v573
      %v1963 = vunpack.c.l.b16 %v574
      %v1964 = vunpack.c.h.b16 %v574
      %v1965 = vunpack.c.l.b16 %v575
      %v1966 = vunpack.c.h.b16 %v575
      %v1967 = vunpack.c.l.b16 %v576
      %v1968 = vunpack.c.h.b16 %v576
      %v1969 = vunpack.c.l.b16 %v577
      %v1970 = vunpack.c.h.b16 %v577
      %v1971 = vunpack.c.l.b16 %v578
      %v1972 = vunpack.c.h.b16 %v578
      %v1973 = vunpack.c.l.b16 %v579
      %v1974 = vunpack.c.h.b16 %v579
      %v1975 = vunpack.c.l.b16 %v580
      %v1976 = vunpack.c.h.b16 %v580
      %v1977 = vunpack.c.l.b16 %v581
      %v1978 = vunpack.c.h.b16 %v581
      %v1979 = vunpack.c.l.b16 %v582
      %v1980 = vunpack.c.h.b16 %v582
      %v1981 = vunpack.c.l.b16 %v583
      %v1982 = vunpack.c.h.b16 %v583
      %v1983 = vunpack.c.l.b16 %v584
      %v1984 = vunpack.c.h.b16 %v584
      %v1985 = vunpack.c.l.b16 %v585
      %v1986 = vunpack.c.h.b16 %v585
      %v1987 = vunpack.c.l.b16 %v586
      %v1988 = vunpack.c.h.b16 %v586
      %v1989 = vunpack.c.l.b16 %v587
      %v1990 = vunpack.c.h.b16 %v587
      %v1991 = vunpack.c.l.b16 %v588
      %v1992 = vunpack.c.h.b16 %v588
      %v1993 = vunpack.c.l.b16 %v589
      %v1994 = vunpack.c.h.b16 %v589
      %v1995 = vunpack.c.l.b16 %v590
      %v1996 = vunpack.c.h.b16 %v590
      %v1997 = vunpack.c.l.b16 %v591
      %v1998 = vunpack.c.h.b16 %v591
      %v1999 = vunpack.c.l.b16 %v592
      %v2000 = vunpack.c.h.b16 %v592
      %v2001 = vunpack.c.l.b16 %v593
      %v2002 = vunpack.c.h.b16 %v593
      %v2003 = vunpack.c.l.b16 %v594
      %v2004 = vunpack.c.h.b16 %v594
      %v2005 = vunpack.c.l.b16 %v595
      %v2006 = vunpack.c.h.b16 %v595
      %v2007 = vunpack.c.l.b16 %v596
      %v2008 = vunpack.c.h.b16 %v596
      %v2009 = vunpack.c.l.b16 %v597
      %v2010 = vunpack.c.h.b16 %v597
      %v2011 = vunpack.c.l.b16 %v598
      %v2012 = vunpack.c.h.b16 %v598
      %v2013 = vunpack.c.l.b16 %v599
      %v2014 = vunpack.c.h.b16 %v599
      %v2015 = vunpack.c.l.b16 %v600
      %v2016 = vunpack.c.h.b16 %v600
      %v2017 = vunpack.c.l.b16 %v601
      %v2018 = vunpack.c.h.b16 %v601
      %v2019 = vunpack.c.l.b16 %v602
      %v2020 = vunpack.c.h.b16 %v602
      %v2021 = vunpack.c.l.b16 %v603
      %v2022 = vunpack.c.h.b16 %v603
      %v2023 = vunpack.c.l.b16 %v604
      %v2024 = vunpack.c.h.b16 %v604
      %v2025 = vunpack.c.l.b16 %v605
      %v2026 = vunpack.c.h.b16 %v605
      %v2027 = vunpack.c.l.b16 %v606
      %v2028 = vunpack.c.h.b16 %v606
      %v2029 = vunpack.c.l.b16 %v607
      %v2030 = vunpack.c.h.b16 %v607
      %v2031 = vunpack.c.l.b16 %v608
      %v2032 = vunpack.c.h.b16 %v608
      %v2033 = vunpack.c.l.b16 %v609
      %v2034 = vunpack.c.h.b16 %v609
      %v2035 = vunpack.c.l.b16 %v610
      %v2036 = vunpack.c.h.b16 %v610
      %v2037 = vunpack.c.l.b16 %v611
      %v2038 = vunpack.c.h.b16 %v611
      %v2039 = vunpack.c.l.b16 %v612
      %v2040 = vunpack.c.h.b16 %v612
      %v2041 = vunpack.c.l.b16 %v613
      %v2042 = vunpack.c.h.b16 %v613
      %v2043 = vunpack.c.l.b16 %v614
      %v2044 = vunpack.c.l.b16 %v615
      %v2045 = vunpack.c.h.b16 %v615
      %v2046 = vunpack.c.l.b16 %v616
      %v2047 = vunpack.c.h.b16 %v616
      %v2048 = vunpack.c.l.b16 %v617
      %v2049 = vunpack.c.h.b16 %v617
      %v2050 = vunpack.c.l.b16 %v618
      %v2051 = vunpack.c.h.b16 %v618
      %v2052 = vunpack.c.l.b16 %v619
      %v2053 = vunpack.c.h.b16 %v619
      %v2054 = vunpack.c.l.b16 %v620
      %v2055 = vunpack.c.h.b16 %v620
      %v2056 = vunpack.c.l.b16 %v621
      %v2057 = vunpack.c.h.b16 %v621
      %v2058 = vunpack.c.l.b16 %v622
      %v2059 = vunpack.c.h.b16 %v622
      %v2060 = vunpack.c.l.b16 %v623
      %v2061 = vunpack.c.h.b16 %v623
      %v2062 = vunpack.c.l.b16 %v624
      %v2063 = vunpack.c.h.b16 %v624
      %v2064 = vunpack.c.l.b16 %v625
      %v2065 = vunpack.c.h.b16 %v625
      %v2066 = vunpack.c.l.b16 %v626
      %v2067 = vunpack.c.h.b16 %v626
      %v2068 = vunpack.c.l.b16 %v627
      %v2069 = vunpack.c.h.b16 %v627
      %v2070 = vunpack.c.l.b16 %v628
      %v2071 = vunpack.c.h.b16 %v628
      %v2072 = vunpack.c.l.b16 %v629
      %v2073 = vunpack.c.h.b16 %v629
      %v2074 = vunpack.c.l.b16 %v630
      %v2075 = vunpack.c.h.b16 %v630
      %v2076 = vunpack.c.l.b16 %v631
      %v2077 = vunpack.c.h.b16 %v631
      %v2078 = vunpack.c.l.b16 %v632
      %v2079 = vunpack.c.h.b16 %v632
      %v2080 = vunpack.c.l.b16 %v633
      %v2081 = vunpack.c.h.b16 %v633
      %v2082 = vunpack.c.l.b16 %v634
      %v2083 = vunpack.c.h.b16 %v634
      %v2084 = vunpack.c.l.b16 %v635
      %v2085 = vunpack.c.h.b16 %v635
      %v2086 = vunpack.c.l.b16 %v636
      %v2087 = vunpack.c.h.b16 %v636
      %v2088 = vunpack.c.l.b16 %v637
      %v2089 = vunpack.c.h.b16 %v637
      %v2090 = vunpack.c.l.b16 %v638
      %v2091 = vunpack.c.h.b16 %v638
      %v2092 = vunpack.c.l.b16 %v639
      %v2093 = vunpack.c.h.b16 %v639
      %v2094 = vunpack.c.l.b16 %v640
      %v2095 = vunpack.c.h.b16 %v640
      %v2096 = vunpack.c.l.b16 %v641
      %v2097 = vunpack.c.h.b16 %v641
      %v2098 = vunpack.c.l.b16 %v642
      %v2099 = vunpack.c.h.b16 %v642
      %v2100 = vunpack.c.l.b16 %v643
      %v2101 = vunpack.c.h.b16 %v643
      %v2102 = vunpack.c.l.b16 %v644
      %v2103 = vunpack.c.h.b16 %v644
      %v2104 = vunpack.c.l.b16 %v645
      %v2105 = vunpack.c.h.b16 %v645
      %v2106 = vunpack.c.l.b16 %v646
      %v2107 = vunpack.c.h.b16 %v646
      %v2108 = vunpack.c.l.b16 %v647
      %v2109 = vunpack.c.h.b16 %v647
      %v2110 = vunpack.c.l.b16 %v648
      %v2111 = vunpack.c.h.b16 %v648
      %v2112 = vunpack.c.l.b16 %v649
      %v2113 = vunpack.c.h.b16 %v649
      %v2114 = vunpack.c.l.b16 %v650
      %v2115 = vunpack.c.h.b16 %v650
      %v2116 = vunpack.c.l.b16 %v651
      %v2117 = vunpack.c.h.b16 %v651
      %v2118 = vunpack.c.l.b16 %v652
      %v2119 = vunpack.c.h.b16 %v652
      %v2120 = vunpack.c.l.b16 %v653
      %v2121 = vunpack.c.h.b16 %v653
      %v2122 = vunpack.c.l.b16 %v654
      %v2123 = vunpack.c.h.b16 %v654
      %v2124 = vunpack.c.l.b16 %v655
      %v2125 = vunpack.c.h.b16 %v655
      %v2126 = vunpack.c.l.b16 %v656
      %v2127 = vunpack.c.h.b16 %v656
      %v2128 = vunpack.c.l.b16 %v657
      %v2129 = vunpack.c.h.b16 %v657
      %v2130 = vunpack.c.l.b16 %v658
      %v2131 = vunpack.c.h.b16 %v658
      %v2132 = vunpack.c.l.b16 %v659
      %v2133 = vunpack.c.h.b16 %v659
      %v2134 = vunpack.c.l.b16 %v660
      %v2135 = vunpack.c.h.b16 %v660
      %v2136 = vunpack.c.l.b16 %v661
      %v2137 = vunpack.c.h.b16 %v661
      %v2138 = vunpack.c.l.b16 %v662
      %v2139 = vunpack.c.h.b16 %v662
      %v2140 = vunpack.c.l.b16 %v663
      %v2141 = vpack.c.b16 %v1268, %v1171
      %v2142 = vpack.c.b16 %v1269, %v1172
      %v2143 = vpack.c.b16 %v1270, %v1173
      %v2144 = vpack.c.b16 %v1271, %v1174
      %v2145 = vpack.c.b16 %v1272, %v1175
      %v2146 = vpack.c.b16 %v1273, %v1176
      %v2147 = vpack.c.b16 %v1274, %v1177
      %v2148 = vpack.c.b16 %v1275, %v1178
      %v2149 = vpack.c.b16 %v1276, %v1179
      %v2150 = vpack.c.b16 %v1277, %v1180
      %v2151 = vpack.c.b16 %v1278, %v1181
      %v2152 = vpack.c.b16 %v1279, %v1182
      %v2153 = vpack.c.b16 %v1280, %v1183
      %v2154 = vpack.c.b16 %v1281, %v1184
      %v2155 = vpack.c.b16 %v1282, %v1185
      %v2156 = vpack.c.b16 %v1283, %v1186
      %v2157 = vpack.c.b16 %v1284, %v1187
      %v2158 = vpack.c.b16 %v1285, %v1188
      %v2159 = vpack.c.b16 %v1286, %v1189
      %v2160 = vpack.c.b16 %v1287, %v1190
      %v2161 = vpack.c.b16 %v1288, %v1191
      %v2162 = vpack.c.b16 %v1289, %v1192
      %v2163 = vpack.c.b16 %v1290, %v1193
      %v2164 = vpack.c.b16 %v1291, %v1194
      %v2165 = vpack.c.b16 %v1292, %v1195
      %v2166 = vpack.c.b16 %v1293, %v1196
      %v2167 = vpack.c.b16 %v1294, %v1197
      %v2168 = vpack.c.b16 %v1295, %v1198
      %v2169 = vpack.c.b16 %v1296, %v1199
      %v2170 = vpack.c.b16 %v1297, %v1200
      %v2171 = vpack.c.b16 %v1298, %v1201
      %v2172 = vpack.c.b16 %v1299, %v1202
      %v2173 = vpack.c.b16 %v1300, %v1203
      %v2174 = vpack.c.b16 %v1301, %v1204
      %v2175 = vpack.c.b16 %v1302, %v1205
      %v2176 = vpack.c.b16 %v1303, %v1206
      %v2177 = vpack.c.b16 %v1304, %v1207
      %v2178 = vpack.c.b16 %v1305, %v1208
      %v2179 = vpack.c.b16 %v1306, %v1209
      %v2180 = vpack.c.b16 %v1307, %v1210
      %v2181 = vpack.c.b16 %v1308, %v1211
      %v2182 = vpack.c.b16 %v1309, %v1212
      %v2183 = vpack.c.b16 %v1310, %v1213
      %v2184 = vpack.c.b16 %v1311, %v1214
      %v2185 = vpack.c.b16 %v1312, %v1215
      %v2186 = vpack.c.b16 %v1313, %v1216
      %v2187 = vpack.c.b16 %v1314, %v1217
      %v2188 = vpack.c.b16 %v1315, %v1218
      %v2189 = vpack.c.b16 %v1316, %v1219
      %v2190 = vpack.c.b16 %v1317, %v1220
      %v2191 = vpack.c.b16 %v1318, %v1221
      %v2192 = vpack.c.b16 %v1319, %v1222
      %v2193 = vpack.c.b16 %v1320, %v1223
      %v2194 = vpack.c.b16 %v1321, %v1224
      %v2195 = vpack.c.b16 %v1322, %v1225
      %v2196 = vpack.c.b16 %v1323, %v1226
      %v2197 = vpack.c.b16 %v1324, %v1227
      %v2198 = vpack.c.b16 %v1325, %v1228
      %v2199 = vpack.c.b16 %v1326, %v1229
      %v2200 = vpack.c.b16 %v1327, %v1230
      %v2201 = vpack.c.b16 %v1328, %v1231
      %v2202 = vpack.c.b16 %v1329, %v1232
      %v2203 = vpack.c.b16 %v1330, %v1233
      %v2204 = vpack.c.b16 %v1331, %v1234
      %v2205 = vpack.c.b16 %v1332, %v1235
      %v2206 = vpack.c.b16 %v1333, %v1236
      %v2207 = vpack.c.b16 %v1334, %v1237
      %v2208 = vpack.c.b16 %v1335, %v1238
      %v2209 = vpack.c.b16 %v1336, %v1239
      %v2210 = vpack.c.b16 %v1337, %v1240
      %v2211 = vpack.c.b16 %v1338, %v1241
      %v2212 = vpack.c.b16 %v1339, %v1242
      %v2213 = vpack.c.b16 %v1340, %v1243
      %v2214 = vpack.c.b16 %v1341, %v1244
      %v2215 = vpack.c.b16 %v1342, %v1245
      %v2216 = vpack.c.b16 %v1343, %v1246
      %v2217 = vpack.c.b16 %v1344, %v1247
      %v2218 = vpack.c.b16 %v1345, %v1248
      %v2219 = vpack.c.b16 %v1346, %v1249
      %v2220 = vpack.c.b16 %v1347, %v1250
      %v2221 = vpack.c.b16 %v1348, %v1251
      %v2222 = vpack.c.b16 %v1349, %v1252
      %v2223 = vpack.c.b16 %v1350, %v1253
      %v2224 = vpack.c.b16 %v1351, %v1254
      %v2225 = vpack.c.b16 %v1352, %v1255
      %v2226 = vpack.c.b16 %v1353, %v1256
      %v2227 = vpack.c.b16 %v1354, %v1257
      %v2228 = vpack.c.b16 %v1355, %v1258
      %v2229 = vpack.c.b16 %v1356, %v1259
      %v2230 = vpack.c.b16 %v1357, %v1260
      %v2231 = vpack.c.b16 %v1358, %v1261
      %v2232 = vpack.c.b16 %v1359, %v1262
      %v2233 = vpack.c.b16 %v1360, %v1263
      %v2234 = vpack.c.b16 %v1361, %v1264
      %v2235 = vpack.c.b16 %v1362, %v1265
      %v2236 = vpack.c.b16 %v1363, %v1266
      %v2237 = vpack.c.b16 %v1364, %v1267
      %v2238 = vpack.c.b16 %v1462, %v1365
      %v2239 = vpack.c.b16 %v1463, %v1366
      %v2240 = vpack.c.b16 %v1464, %v1367
      %v2241 = vpack.c.b16 %v1465, %v1368
      %v2242 = vpack.c.b16 %v1466, %v1369
      %v2243 = vpack.c.b16 %v1467, %v1370
      %v2244 = vpack.c.b16 %v1468, %v1371
      %v2245 = vpack.c.b16 %v1469, %v1372
      %v2246 = vpack.c.b16 %v1470, %v1373
      %v2247 = vpack.c.b16 %v1471, %v1374
      %v2248 = vpack.c.b16 %v1472, %v1375
      %v2249 = vpack.c.b16 %v1473, %v1376
      %v2250 = vpack.c.b16 %v1474, %v1377
      %v2251 = vpack.c.b16 %v1475, %v1378
      %v2252 = vpack.c.b16 %v1476, %v1379
      %v2253 = vpack.c.b16 %v1477, %v1380
      %v2254 = vpack.c.b16 %v1478, %v1381
      %v2255 = vpack.c.b16 %v1479, %v1382
      %v2256 = vpack.c.b16 %v1480, %v1383
      %v2257 = vpack.c.b16 %v1481, %v1384
      %v2258 = vpack.c.b16 %v1482, %v1385
      %v2259 = vpack.c.b16 %v1483, %v1386
      %v2260 = vpack.c.b16 %v1484, %v1387
      %v2261 = vpack.c.b16 %v1485, %v1388
      %v2262 = vpack.c.b16 %v1486, %v1389
      %v2263 = vpack.c.b16 %v1487, %v1390
      %v2264 = vpack.c.b16 %v1488, %v1391
      %v2265 = vpack.c.b16 %v1489, %v1392
      %v2266 = vpack.c.b16 %v1490, %v1393
      %v2267 = vpack.c.b16 %v1491, %v1394
      %v2268 = vpack.c.b16 %v1492, %v1395
      %v2269 = vpack.c.b16 %v1493, %v1396
      %v2270 = vpack.c.b16 %v1494, %v1397
      %v2271 = vpack.c.b16 %v1495, %v1398
      %v2272 = vpack.c.b16 %v1496, %v1399
      %v2273 = vpack.c.b16 %v1497, %v1400
      %v2274 = vpack.c.b16 %v1498, %v1401
      %v2275 = vpack.c.b16 %v1499, %v1402
      %v2276 = vpack.c.b16 %v1500, %v1403
      %v2277 = vpack.c.b16 %v1501, %v1404
      %v2278 = vpack.c.b16 %v1502, %v1405
      %v2279 = vpack.c.b16 %v1503, %v1406
      %v2280 = vpack.c.b16 %v1504, %v1407
      %v2281 = vpack.c.b16 %v1505, %v1408
      %v2282 = vpack.c.b16 %v1506, %v1409
      %v2283 = vpack.c.b16 %v1507, %v1410
      %v2284 = vpack.c.b16 %v1508, %v1411
      %v2285 = vpack.c.b16 %v1509, %v1412
      %v2286 = vpack.c.b16 %v1510, %v1413
      %v2287 = vpack.c.b16 %v1511, %v1414
      %v2288 = vpack.c.b16 %v1512, %v1415
      %v2289 = vpack.c.b16 %v1513, %v1416
      %v2290 = vpack.c.b16 %v1514, %v1417
      %v2291 = vpack.c.b16 %v1515, %v1418
      %v2292 = vpack.c.b16 %v1516, %v1419
      %v2293 = vpack.c.b16 %v1517, %v1420
      %v2294 = vpack.c.b16 %v1518, %v1421
      %v2295 = vpack.c.b16 %v1519, %v1422
      %v2296 = vpack.c.b16 %v1520, %v1423
      %v2297 = vpack.c.b16 %v1521, %v1424
      %v2298 = vpack.c.b16 %v1522, %v1425
      %v2299 = vpack.c.b16 %v1523, %v1426
      %v2300 = vpack.c.b16 %v1524, %v1427
      %v2301 = vpack.c.b16 %v1525, %v1428
      %v2302 = vpack.c.b16 %v1526, %v1429
      %v2303 = vpack.c.b16 %v1527, %v1430
      %v2304 = vpack.c.b16 %v1528, %v1431
      %v2305 = vpack.c.b16 %v1529, %v1432
      %v2306 = vpack.c.b16 %v1530, %v1433
      %v2307 = vpack.c.b16 %v1531, %v1434
      %v2308 = vpack.c.b16 %v1532, %v1435
      %v2309 = vpack.c.b16 %v1533, %v1436
      %v2310 = vpack.c.b16 %v1534, %v1437
      %v2311 = vpack.c.b16 %v1535, %v1438
      %v2312 = vpack.c.b16 %v1536, %v1439
      %v2313 = vpack.c.b16 %v1537, %v1440
      %v2314 = vpack.c.b16 %v1538, %v1441
      %v2315 = vpack.c.b16 %v1539, %v1442
      %v2316 = vpack.c.b16 %v1540, %v1443
      %v2317 = vpack.c.b16 %v1541, %v1444
      %v2318 = vpack.c.b16 %v1542, %v1445
      %v2319 = vpack.c.b16 %v1543, %v1446
      %v2320 = vpack.c.b16 %v1544, %v1447
      %v2321 = vpack.c.b16 %v1545, %v1448
      %v2322 = vpack.c.b16 %v1546, %v1449
      %v2323 = vpack.c.b16 %v1547, %v1450
      %v2324 = vpack.c.b16 %v1548, %v1451
      %v2325 = vpack.c.b16 %v1549, %v1452
      %v2326 = vpack.c.b16 %v1550, %v1453
      %v2327 = vpack.c.b16 %v1551, %v1454
      %v2328 = vpack.c.b16 %v1552, %v1455
      %v2329 = vpack.c.b16 %v1553, %v1456
      %v2330 = vpack.c.b16 %v1554, %v1457
      %v2331 = vpack.c.b16 %v1555, %v1458
      %v2332 = vpack.c.b16 %v1556, %v1459
      %v2333 = vpack.c.b16 %v1557, %v1460
      %v2334 = vpack.c.b16 %v1558, %v1461
      %v2335 = vpack.c.b16 %v1656, %v1559
      %v2336 = vpack.c.b16 %v1657, %v1560
      %v2337 = vpack.c.b16 %v1658, %v1561
      %v2338 = vpack.c.b16 %v1659, %v1562
      %v2339 = vpack.c.b16 %v1660, %v1563
      %v2340 = vpack.c.b16 %v1661, %v1564
      %v2341 = vpack.c.b16 %v1662, %v1565
      %v2342 = vpack.c.b16 %v1663, %v1566
      %v2343 = vpack.c.b16 %v1664, %v1567
      %v2344 = vpack.c.b16 %v1665, %v1568
      %v2345 = vpack.c.b16 %v1666, %v1569
      %v2346 = vpack.c.b16 %v1667, %v1570
      %v2347 = vpack.c.b16 %v1668, %v1571
      %v2348 = vpack.c.b16 %v1669, %v1572
      %v2349 = vpack.c.b16 %v1670, %v1573
      %v2350 = vpack.c.b16 %v1671, %v1574
      %v2351 = vpack.c.b16 %v1672, %v1575
      %v2352 = vpack.c.b16 %v1673, %v1576
      %v2353 = vpack.c.b16 %v1674, %v1577
      %v2354 = vpack.c.b16 %v1675, %v1578
      %v2355 = vpack.c.b16 %v1676, %v1579
      %v2356 = vpack.c.b16 %v1677, %v1580
      %v2357 = vpack.c.b16 %v1678, %v1581
      %v2358 = vpack.c.b16 %v1679, %v1582
      %v2359 = vpack.c.b16 %v1680, %v1583
      %v2360 = vpack.c.b16 %v1681, %v1584
      %v2361 = vpack.c.b16 %v1682, %v1585
      %v2362 = vpack.c.b16 %v1683, %v1586
      %v2363 = vpack.c.b16 %v1684, %v1587
      %v2364 = vpack.c.b16 %v1685, %v1588
      %v2365 = vpack.c.b16 %v1686, %v1589
      %v2366 = vpack.c.b16 %v1687, %v1590
      %v2367 = vpack.c.b16 %v1688, %v1591
      %v2368 = vpack.c.b16 %v1689, %v1592
      %v2369 = vpack.c.b16 %v1690, %v1593
      %v2370 = vpack.c.b16 %v1691, %v1594
      %v2371 = vpack.c.b16 %v1692, %v1595
      %v2372 = vpack.c.b16 %v1693, %v1596
      %v2373 = vpack.c.b16 %v1694, %v1597
      %v2374 = vpack.c.b16 %v1695, %v1598
      %v2375 = vpack.c.b16 %v1696, %v1599
      %v2376 = vpack.c.b16 %v1697, %v1600
      %v2377 = vpack.c.b16 %v1698, %v1601
      %v2378 = vpack.c.b16 %v1699, %v1602
      %v2379 = vpack.c.b16 %v1700, %v1603
      %v2380 = vpack.c.b16 %v1701, %v1604
      %v2381 = vpack.c.b16 %v1702, %v1605
      %v2382 = vpack.c.b16 %v1703, %v1606
      %v2383 = vpack.c.b16 %v1704, %v1607
      %v2384 = vpack.c.b16 %v1705, %v1608
      %v2385 = vpack.c.b16 %v1706, %v1609
      %v2386 = vpack.c.b16 %v1707, %v1610
      %v2387 = vpack.c.b16 %v1708, %v1611
      %v2388 = vpack.c.b16 %v1709, %v1612
      %v2389 = vpack.c.b16 %v1710, %v1613
      %v2390 = vpack.c.b16 %v1711, %v1614
      %v2391 = vpack.c.b16 %v1712, %v1615
      %v2392 = vpack.c.b16 %v1713, %v1616
      %v2393 = vpack.c.b16 %v1714, %v1617
      %v2394 = vpack.c.b16 %v1715, %v1618
      %v2395 = vpack.c.b16 %v1716, %v1619
      %v2396 = vpack.c.b16 %v1717, %v1620
      %v2397 = vpack.c.b16 %v1718, %v1621
      %v2398 = vpack.c.b16 %v1719, %v1622
      %v2399 = vpack.c.b16 %v1720, %v1623
      %v2400 = vpack.c.b16 %v1721, %v1624
      %v2401 = vpack.c.b16 %v1722, %v1625
      %v2402 = vpack.c.b16 %v1723, %v1626
      %v2403 = vpack.c.b16 %v1724, %v1627
      %v2404 = vpack.c.b16 %v1725, %v1628
      %v2405 = vpack.c.b16 %v1726, %v1629
      %v2406 = vpack.c.b16 %v1727, %v1630
      %v2407 = vpack.c.b16 %v1728, %v1631
      %v2408 = vpack.c.b16 %v1729, %v1632
      %v2409 = vpack.c.b16 %v1730, %v1633
      %v2410 = vpack.c.b16 %v1731, %v1634
      %v2411 = vpack.c.b16 %v1732, %v1635
      %v2412 = vpack.c.b16 %v1733, %v1636
      %v2413 = vpack.c.b16 %v1734, %v1637
      %v2414 = vpack.c.b16 %v1735, %v1638
      %v2415 = vpack.c.b16 %v1736, %v1639
      %v2416 = vpack.c.b16 %v1737, %v1640
      %v2417 = vpack.c.b16 %v1738, %v1641
      %v2418 = vpack.c.b16 %v1739, %v1642
      %v2419 = vpack.c.b16 %v1740, %v1643
      %v2420 = vpack.c.b16 %v1741, %v1644
      %v2421 = vpack.c.b16 %v1742, %v1645
      %v2422 = vpack.c.b16 %v1743, %v1646
      %v2423 = vpack.c.b16 %v1744, %v1647
      %v2424 = vpack.c.b16 %v1745, %v1648
      %v2425 = vpack.c.b16 %v1746, %v1649
      %v2426 = vpack.c.b16 %v1747, %v1650
      %v2427 = vpack.c.b16 %v1748, %v1651
      %v2428 = vpack.c.b16 %v1749, %v1652
      %v2429 = vpack.c.b16 %v1750, %v1653
      %v2430 = vpack.c.b16 %v1751, %v1654
      %v2431 = vpack.c.b16 %v1752, %v1655
      %v2432 = vpack.c.b16 %v1850, %v1753
      %v2433 = vpack.c.b16 %v1851, %v1754
      %v2434 = vpack.c.b16 %v1852, %v1755
      %v2435 = vpack.c.b16 %v1853, %v1756
      %v2436 = vpack.c.b16 %v1854, %v1757
      %v2437 = vpack.c.b16 %v1855, %v1758
      %v2438 = vpack.c.b16 %v1856, %v1759
      %v2439 = vpack.c.b16 %v1857, %v1760
      %v2440 = vpack.c.b16 %v1858, %v1761
      %v2441 = vpack.c.b16 %v1859, %v1762
      %v2442 = vpack.c.b16 %v1860, %v1763
      %v2443 = vpack.c.b16 %v1861, %v1764
      %v2444 = vpack.c.b16 %v1862, %v1765
      %v2445 = vpack.c.b16 %v1863, %v1766
      %v2446 = vpack.c.b16 %v1864, %v1767
      %v2447 = vpack.c.b16 %v1865, %v1768
      %v2448 = vpack.c.b16 %v1866, %v1769
      %v2449 = vpack.c.b16 %v1867, %v1770
      %v2450 = vpack.c.b16 %v1868, %v1771
      %v2451 = vpack.c.b16 %v1869, %v1772
      %v2452 = vpack.c.b16 %v1870, %v1773
      %v2453 = vpack.c.b16 %v1871, %v1774
      %v2454 = vpack.c.b16 %v1872, %v1775
      %v2455 = vpack.c.b16 %v1873, %v1776
      %v2456 = vpack.c.b16 %v1874, %v1777
      %v2457 = vpack.c.b16 %v1875, %v1778
      %v2458 = vpack.c.b16 %v1876, %v1779
      %v2459 = vpack.c.b16 %v1877, %v1780
      %v2460 = vpack.c.b16 %v1878, %v1781
      %v2461 = vpack.c.b16 %v1879, %v1782
      %v2462 = vpack.c.b16 %v1880, %v1783
      %v2463 = vpack.c.b16 %v1881, %v1784
      %v2464 = vpack.c.b16 %v1882, %v1785
      %v2465 = vpack.c.b16 %v1883, %v1786
      %v2466 = vpack.c.b16 %v1884, %v1787
      %v2467 = vpack.c.b16 %v1885, %v1788
      %v2468 = vpack.c.b16 %v1886, %v1789
      %v2469 = vpack.c.b16 %v1887, %v1790
      %v2470 = vpack.c.b16 %v1888, %v1791
      %v2471 = vpack.c.b16 %v1889, %v1792
      %v2472 = vpack.c.b16 %v1890, %v1793
      %v2473 = vpack.c.b16 %v1891, %v1794
      %v2474 = vpack.c.b16 %v1892, %v1795
      %v2475 = vpack.c.b16 %v1893, %v1796
      %v2476 = vpack.c.b16 %v1894, %v1797
      %v2477 = vpack.c.b16 %v1895, %v1798
      %v2478 = vpack.c.b16 %v1896, %v1799
      %v2479 = vpack.c.b16 %v1897, %v1800
      %v2480 = vpack.c.b16 %v1898, %v1801
      %v2481 = vpack.c.b16 %v1899, %v1802
      %v2482 = vpack.c.b16 %v1900, %v1803
      %v2483 = vpack.c.b16 %v1901, %v1804
      %v2484 = vpack.c.b16 %v1902, %v1805
      %v2485 = vpack.c.b16 %v1903, %v1806
      %v2486 = vpack.c.b16 %v1904, %v1807
      %v2487 = vpack.c.b16 %v1905, %v1808
      %v2488 = vpack.c.b16 %v1906, %v1809
      %v2489 = vpack.c.b16 %v1907, %v1810
      %v2490 = vpack.c.b16 %v1908, %v1811
      %v2491 = vpack.c.b16 %v1909, %v1812
      %v2492 = vpack.c.b16 %v1910, %v1813
      %v2493 = vpack.c.b16 %v1911, %v1814
      %v2494 = vpack.c.b16 %v1912, %v1815
      %v2495 = vpack.c.b16 %v1913, %v1816
      %v2496 = vpack.c.b16 %v1914, %v1817
      %v2497 = vpack.c.b16 %v1915, %v1818
      %v2498 = vpack.c.b16 %v1916, %v1819
      %v2499 = vpack.c.b16 %v1917, %v1820
      %v2500 = vpack.c.b16 %v1918, %v1821
      %v2501 = vpack.c.b16 %v1919, %v1822
      %v2502 = vpack.c.b16 %v1920, %v1823
      %v2503 = vpack.c.b16 %v1921, %v1824
      %v2504 = vpack.c.b16 %v1922, %v1825
      %v2505 = vpack.c.b16 %v1923, %v1826
      %v2506 = vpack.c.b16 %v1924, %v1827
      %v2507 = vpack.c.b16 %v1925, %v1828
      %v2508 = vpack.c.b16 %v1926, %v1829
      %v2509 = vpack.c.b16 %v1927, %v1830
      %v2510 = vpack.c.b16 %v1928, %v1831
      %v2511 = vpack.c.b16 %v1929, %v1832
      %v2512 = vpack.c.b16 %v1930, %v1833
      %v2513 = vpack.c.b16 %v1931, %v1834
      %v2514 = vpack.c.b16 %v1932, %v1835
      %v2515 = vpack.c.b16 %v1933, %v1836
      %v2516 = vpack.c.b16 %v1934, %v1837
      %v2517 = vpack.c.b16 %v1935, %v1838
      %v2518 = vpack.c.b16 %v1936, %v1839
      %v2519 = vpack.c.b16 %v1937, %v1840
      %v2520 = vpack.c.b16 %v1938, %v1841
      %v2521 = vpack.c.b16 %v1939, %v1842
      %v2522 = vpack.c.b16 %v1940, %v1843
      %v2523 = vpack.c.b16 %v1941, %v1844
      %v2524 = vpack.c.b16 %v1942, %v1845
      %v2525 = vpack.c.b16 %v1943, %v1846
      %v2526 = vpack.c.b16 %v1944, %v1847
      %v2527 = vpack.c.b16 %v1945, %v1848
      %v2528 = vpack.c.b16 %v1946, %v1849
      %v2529 = vpack.c.b16 %v2044, %v1947
      %v2530 = vpack.c.b16 %v2045, %v1948
      %v2531 = vpack.c.b16 %v2046, %v1949
      %v2532 = vpack.c.b16 %v2047, %v1950
      %v2533 = vpack.c.b16 %v2048, %v1951
      %v2534 = vpack.c.b16 %v2049, %v1952
      %v2535 = vpack.c.b16 %v2050, %v1953
      %v2536 = vpack.c.b16 %v2051, %v1954
      %v2537 = vpack.c.b16 %v2052, %v1955
      %v2538 = vpack.c.b16 %v2053, %v1956
      %v2539 = vpack.c.b16 %v2054, %v1957
      %v2540 = vpack.c.b16 %v2055, %v1958
      %v2541 = vpack.c.b16 %v2056, %v1959
      %v2542 = vpack.c.b16 %v2057, %v1960
      %v2543 = vpack.c.b16 %v2058, %v1961
      %v2544 = vpack.c.b16 %v2059, %v1962
      %v2545 = vpack.c.b16 %v2060, %v1963
      %v2546 = vpack.c.b16 %v2061, %v1964
      %v2547 = vpack.c.b16 %v2062, %v1965
      %v2548 = vpack.c.b16 %v2063, %v1966
      %v2549 = vpack.c.b16 %v2064, %v1967
      %v2550 = vpack.c.b16 %v2065, %v1968
      %v2551 = vpack.c.b16 %v2066, %v1969
      %v2552 = vpack.c.b16 %v2067, %v1970
      %v2553 = vpack.c.b16 %v2068, %v1971
      %v2554 = vpack.c.b16 %v2069, %v1972
      %v2555 = vpack.c.b16 %v2070, %v1973
      %v2556 = vpack.c.b16 %v2071, %v1974
      %v2557 = vpack.c.b16 %v2072, %v1975
      %v2558 = vpack.c.b16 %v2073, %v1976
      %v2559 = vpack.c.b16 %v2074, %v1977
      %v2560 = vpack.c.b16 %v2075, %v1978
      %v2561 = vpack.c.b16 %v2076, %v1979
      %v2562 = vpack.c.b16 %v2077, %v1980
      %v2563 = vpack.c.b16 %v2078, %v1981
      %v2564 = vpack.c.b16 %v2079, %v1982
      %v2565 = vpack.c.b16 %v2080, %v1983
      %v2566 = vpack.c.b16 %v2081, %v1984
      %v2567 = vpack.c.b16 %v2082, %v1985
      %v2568 = vpack.c.b16 %v2083, %v1986
      %v2569 = vpack.c.b16 %v2084, %v1987
      %v2570 = vpack.c.b16 %v2085, %v1988
      %v2571 = vpack.c.b16 %v2086, %v1989
      %v2572 = vpack.c.b16 %v2087, %v1990
      %v2573 = vpack.c.b16 %v2088, %v1991
      %v2574 = vpack.c.b16 %v2089, %v1992
      %v2575 = vpack.c.b16 %v2090, %v1993
      %v2576 = vpack.c.b16 %v2091, %v1994
      %v2577 = vpack.c.b16 %v2092, %v1995
      %v2578 = vpack.c.b16 %v2093, %v1996
      %v2579 = vpack.c.b16 %v2094, %v1997
      %v2580 = vpack.c.b16 %v2095, %v1998
      %v2581 = vpack.c.b16 %v2096, %v1999
      %v2582 = vpack.c.b16 %v2097, %v2000
      %v2583 = vpack.c.b16 %v2098, %v2001
      %v2584 = vpack.c.b16 %v2099, %v2002
      %v2585 = vpack.c.b16 %v2100, %v2003
      %v2586 = vpack.c.b16 %v2101, %v2004
      %v2587 = vpack.c.b16 %v2102, %v2005
      %v2588 = vpack.c.b16 %v2103, %v2006
      %v2589 = vpack.c.b16 %v2104, %v2007
      %v2590 = vpack.c.b16 %v2105, %v2008
      %v2591 = vpack.c.b16 %v2106, %v2009
      %v2592 = vpack.c.b16 %v2107, %v2010
      %v2593 = vpack.c.b16 %v2108, %v2011
      %v2594 = vpack.c.b16 %v2109, %v2012
      %v2595 = vpack.c.b16 %v2110, %v2013
      %v2596 = vpack.c.b16 %v2111, %v2014
      %v2597 = vpack.c.b16 %v2112, %v2015
      %v2598 = vpack.c.b16 %v2113, %v2016
      %v2599 = vpack.c.b16 %v2114, %v2017
      %v2600 = vpack.c.b16 %v2115, %v2018
      %v2601 = vpack.c.b16 %v2116, %v2019
      %v2602 = vpack.c.b16 %v2117, %v2020
      %v2603 = vpack.c.b16 %v2118, %v2021
      %v2604 = vpack.c.b16 %v2119, %v2022
      %v2605 = vpack.c.b16 %v2120, %v2023
      %v2606 = vpack.c.b16 %v2121, %v2024
      %v2607 = vpack.c.b16 %v2122, %v2025
      %v2608 = vpack.c.b16 %v2123, %v2026
      %v2609 = vpack.c.b16 %v2124, %v2027
      %v2610 = vpack.c.b16 %v2125, %v2028
      %v2611 = vpack.c.b16 %v2126, %v2029
      %v2612 = vpack.c.b16 %v2127, %v2030
      %v2613 = vpack.c.b16 %v2128, %v2031
      %v2614 = vpack.c.b16 %v2129, %v2032
      %v2615 = vpack.c.b16 %v2130, %v2033
      %v2616 = vpack.c.b16 %v2131, %v2034
      %v2617 = vpack.c.b16 %v2132, %v2035
      %v2618 = vpack.c.b16 %v2133, %v2036
      %v2619 = vpack.c.b16 %v2134, %v2037
      %v2620 = vpack.c.b16 %v2135, %v2038
      %v2621 = vpack.c.b16 %v2136, %v2039
      %v2622 = vpack.c.b16 %v2137, %v2040
      %v2623 = vpack.c.b16 %v2138, %v2041
      %v2624 = vpack.c.b16 %v2139, %v2042
      %v2625 = vpack.c.b16 %v2140, %v2043
      %vm3014 = vcmask 613376
      %v3016 = vsel %vm3014, %v680, 0
      %vm3018 = vcmask 1044480
      %vm3019 = vcmask 1045504
      %v3020 = vsel %vm3018, 4294967295, 65535
      %v3021 = vsel %vm3019, %v3020, 0
      %v3023 = vand.u32 %v2529, %v3021
      %v3026 = vand.u32 %v2530, %v3021
      %v3029 = vand.u32 %v2531, %v3021
      %v3032 = vand.u32 %v2532, %v3021
      %v3035 = vand.u32 %v2533, %v3021
      %v3038 = vand.u32 %v2534, %v3021
      %v3041 = vand.u32 %v2535, %v3021
      %v3044 = vand.u32 %v2536, %v3021
      %v3047 = vand.u32 %v2537, %v3021
      %v3050 = vand.u32 %v2538, %v3021
      %v3053 = vand.u32 %v2539, %v3021
      %v3056 = vand.u32 %v2540, %v3021
      %v3059 = vand.u32 %v2541, %v3021
      %v3062 = vand.u32 %v2542, %v3021
      %v3065 = vand.u32 %v2543, %v3021
      %v3068 = vand.u32 %v2544, %v3021
      %v3071 = vand.u32 %v2545, %v3021
      %v3074 = vand.u32 %v2546, %v3021
      %v3077 = vand.u32 %v2547, %v3021
      %v3080 = vand.u32 %v2548, %v3021
      %v3083 = vand.u32 %v2549, %v3021
      %v3086 = vand.u32 %v2550, %v3021
      %v3089 = vand.u32 %v2551, %v3021
      %v3092 = vand.u32 %v2552, %v3021
      %v3095 = vand.u32 %v2553, %v3021
      %v3098 = vand.u32 %v2554, %v3021
      %v3101 = vand.u32 %v2555, %v3021
      %v3104 = vand.u32 %v2556, %v3021
      %v3107 = vand.u32 %v2557, %v3021
      %v3110 = vand.u32 %v2558, %v3021
      %v3113 = vand.u32 %v2559, %v3021
      %v3116 = vand.u32 %v2560, %v3021
      %v3119 = vand.u32 %v2561, %v3021
      %v3122 = vand.u32 %v2562, %v3021
      %v3125 = vand.u32 %v2563, %v3021
      %v3128 = vand.u32 %v2564, %v3021
      %v3131 = vand.u32 %v2565, %v3021
      %v3134 = vand.u32 %v2566, %v3021
      %v3137 = vand.u32 %v2567, %v3021
      %v3140 = vand.u32 %v2568, %v3021
      %v3143 = vand.u32 %v2569, %v3021
      %v3146 = vand.u32 %v2570, %v3021
      %v3149 = vand.u32 %v2571, %v3021
      %v3152 = vand.u32 %v2572, %v3021
      %v3155 = vand.u32 %v2573, %v3021
      %v3158 = vand.u32 %v2574, %v3021
      %v3161 = vand.u32 %v2575, %v3021
      %v3164 = vand.u32 %v2576, %v3021
      %v3167 = vand.u32 %v2577, %v3021
      %v3170 = vand.u32 %v2578, %v3021
      %v3173 = vand.u32 %v2579, %v3021
      %v3176 = vand.u32 %v2580, %v3021
      %v3179 = vand.u32 %v2581, %v3021
      %v3182 = vand.u32 %v2582, %v3021
      %v3185 = vand.u32 %v2583, %v3021
      %v3188 = vand.u32 %v2584, %v3021
      %v3191 = vand.u32 %v2585, %v3021
      %v3194 = vand.u32 %v2586, %v3021
      %v3197 = vand.u32 %v2587, %v3021
      %v3200 = vand.u32 %v2588, %v3021
      %v3203 = vand.u32 %v2589, %v3021
      %v3206 = vand.u32 %v2590, %v3021
      %v3209 = vand.u32 %v2591, %v3021
      %v3212 = vand.u32 %v2592, %v3021
      %v3215 = vand.u32 %v2593, %v3021
      %v3218 = vand.u32 %v2594, %v3021
      %v3221 = vand.u32 %v2595, %v3021
      %v3224 = vand.u32 %v2596, %v3021
      %v3227 = vand.u32 %v2597, %v3021
      %v3230 = vand.u32 %v2598, %v3021
      %v3233 = vand.u32 %v2599, %v3021
      %v3236 = vand.u32 %v2600, %v3021
      %v3239 = vand.u32 %v2601, %v3021
      %v3242 = vand.u32 %v2602, %v3021
      %v3245 = vand.u32 %v2603, %v3021
      %v3248 = vand.u32 %v2604, %v3021
      %v3251 = vand.u32 %v2605, %v3021
      %v3254 = vand.u32 %v2606, %v3021
      %v3257 = vand.u32 %v2607, %v3021
      %v3260 = vand.u32 %v2608, %v3021
      %v3263 = vand.u32 %v2609, %v3021
      %v3266 = vand.u32 %v2610, %v3021
      %v3269 = vand.u32 %v2611, %v3021
      %v3272 = vand.u32 %v2612, %v3021
      %v3275 = vand.u32 %v2613, %v3021
      %v3278 = vand.u32 %v2614, %v3021
      %v3281 = vand.u32 %v2615, %v3021
      %v3284 = vand.u32 %v2616, %v3021
      %v3287 = vand.u32 %v2617, %v3021
      %v3290 = vand.u32 %v2618, %v3021
      %v3293 = vand.u32 %v2619, %v3021
      %v3296 = vand.u32 %v2620, %v3021
      %v3299 = vand.u32 %v2621, %v3021
      %v3302 = vand.u32 %v2622, %v3021
      %v3305 = vand.u32 %v2623, %v3021
      %v3308 = vand.u32 %v2624, %v3021
      %v3311 = vand.u32 %v2625, %v3021
      %3313 = vmatprep.subr.bf16.mxu0 %v2142
      %3314 = vmatpush1.bf16.msra.mxu0 %v2141
      %3315 = vmatprep.subr.bf16.mxu0 %v2239
      %3316 = vmatpush1.bf16.msra.mxu0 %v2238
      %3317 = vmatprep.subr.bf16.mxu0 %v2336
      %3318 = vmatpush1.bf16.msra.mxu0 %v2335
      %3319 = vmatprep.subr.bf16.mxu0 %v2433
      %3320 = vmatpush1.bf16.msra.mxu0 %v2432
      %3321 = vmatprep.subr.bf16.mxu0 %v3026
      %3322 = vmatpush1.bf16.msra.mxu0 %v3023
      %3323 = vmatprep.subr.bf16.mxu0 0
      %3324 = vmatpush1.bf16.msra.mxu0 0
      %3325 = vmatprep.subr.bf16.mxu0 0
      %3326 = vmatpush1.bf16.msra.mxu0 0
      %3327 = vmatprep.subr.bf16.mxu0 0
      %3328 = vmatpush1.bf16.msra.mxu0 0
      %3329 = vmatprep.subr.bf16.mxu0 0
      %3330 = vmatpush1.bf16.msra.mxu0 0
      %3331 = vmatprep.subr.bf16.mxu0 0
      %3332 = vmatpush1.bf16.msra.mxu0 0
      %3333 = vmatprep.subr.bf16.mxu0 0
      %3334 = vmatpush1.bf16.msra.mxu0 0
      %3335 = vmatprep.subr.bf16.mxu0 0
      %3336 = vmatpush1.bf16.msra.mxu0 0
      %3337 = vmatprep.subr.bf16.mxu0 0
      %3338 = vmatpush1.bf16.msra.mxu0 0
      %3339 = vmatprep.subr.bf16.mxu0 0
      %3340 = vmatpush1.bf16.msra.mxu0 0
      %3341 = vmatprep.subr.bf16.mxu0 0
      %3342 = vmatpush1.bf16.msra.mxu0 0
      %3343 = vmatprep.subr.bf16.mxu0 0
      %3344 = vmatpush1.bf16.msra.mxu0 0
      %3345 = vmatprep.mubr.bf16.mxu0 0
      %3346 = vmatmul.mubr.bf16.gmra.mrb[0].mxu0 %v3016
      %v3347 = vpop.f32.mrb[0].mxu0
      %v3348 = vadd.f32 %v669, %v3347
      %v3349 = vpop.f32.mrb[0].mxu0
      %v3350 = vadd.f32 %v669, %v3349
      %v3351 = vpop.f32.mrb[0].mxu0
      %v3352 = vadd.f32 %v674, %v3351
      %v3353 = vpop.f32.mrb[0].mxu0
      %v3354 = vadd.f32 %v674, %v3353
      %3355 = vdwg.mxu0
      %3356 = vmatprep.subr.bf16.mxu0 %v2144
      %3357 = vmatpush1.bf16.msra.mxu0 %v2143
      %3358 = vmatprep.subr.bf16.mxu0 %v2241
      %3359 = vmatpush1.bf16.msra.mxu0 %v2240
      %3360 = vmatprep.subr.bf16.mxu0 %v2338
      %3361 = vmatpush1.bf16.msra.mxu0 %v2337
      %3362 = vmatprep.subr.bf16.mxu0 %v2435
      %3363 = vmatpush1.bf16.msra.mxu0 %v2434
      %3364 = vmatprep.subr.bf16.mxu0 %v3032
      %3365 = vmatpush1.bf16.msra.mxu0 %v3029
      %3366 = vmatprep.subr.bf16.mxu0 0
      %3367 = vmatpush1.bf16.msra.mxu0 0
      %3368 = vmatprep.subr.bf16.mxu0 0
      %3369 = vmatpush1.bf16.msra.mxu0 0
      %3370 = vmatprep.subr.bf16.mxu0 0
      %3371 = vmatpush1.bf16.msra.mxu0 0
      %3372 = vmatprep.subr.bf16.mxu0 0
      %3373 = vmatpush1.bf16.msra.mxu0 0
      %3374 = vmatprep.subr.bf16.mxu0 0
      %3375 = vmatpush1.bf16.msra.mxu0 0
      %3376 = vmatprep.subr.bf16.mxu0 0
      %3377 = vmatpush1.bf16.msra.mxu0 0
      %3378 = vmatprep.subr.bf16.mxu0 0
      %3379 = vmatpush1.bf16.msra.mxu0 0
      %3380 = vmatprep.subr.bf16.mxu0 0
      %3381 = vmatpush1.bf16.msra.mxu0 0
      %3382 = vmatprep.subr.bf16.mxu0 0
      %3383 = vmatpush1.bf16.msra.mxu0 0
      %3384 = vmatprep.subr.bf16.mxu0 0
      %3385 = vmatpush1.bf16.msra.mxu0 0
      %3386 = vmatprep.subr.bf16.mxu0 0
      %3387 = vmatpush1.bf16.msra.mxu0 0
      %3388 = vmatprep.mubr.bf16.mxu0 0
      %3389 = vmatmul.mubr.bf16.gmra.mrb[0].mxu0 %v3016
      %v3390 = vpop.f32.mrb[0].mxu0
      %v3391 = vadd.f32 %v669, %v3390
      %v3392 = vpop.f32.mrb[0].mxu0
      %v3393 = vadd.f32 %v669, %v3392
      %v3394 = vpop.f32.mrb[0].mxu0
      %v3395 = vadd.f32 %v674, %v3394
      %v3396 = vpop.f32.mrb[0].mxu0
      %v3397 = vadd.f32 %v674, %v3396
      %3398 = vdwg.mxu0
      %3399 = vmatprep.subr.bf16.mxu0 %v2146
      %3400 = vmatpush1.bf16.msra.mxu0 %v2145
      %3401 = vmatprep.subr.bf16.mxu0 %v2243
      %3402 = vmatpush1.bf16.msra.mxu0 %v2242
      %3403 = vmatprep.subr.bf16.mxu0 %v2340
      %3404 = vmatpush1.bf16.msra.mxu0 %v2339
      %3405 = vmatprep.subr.bf16.mxu0 %v2437
      %3406 = vmatpush1.bf16.msra.mxu0 %v2436
      %3407 = vmatprep.subr.bf16.mxu0 %v3038
      %3408 = vmatpush1.bf16.msra.mxu0 %v3035
      %3409 = vmatprep.subr.bf16.mxu0 0
      %3410 = vmatpush1.bf16.msra.mxu0 0
      %3411 = vmatprep.subr.bf16.mxu0 0
      %3412 = vmatpush1.bf16.msra.mxu0 0
      %3413 = vmatprep.subr.bf16.mxu0 0
      %3414 = vmatpush1.bf16.msra.mxu0 0
      %3415 = vmatprep.subr.bf16.mxu0 0
      %3416 = vmatpush1.bf16.msra.mxu0 0
      %3417 = vmatprep.subr.bf16.mxu0 0
      %3418 = vmatpush1.bf16.msra.mxu0 0
      %3419 = vmatprep.subr.bf16.mxu0 0
      %3420 = vmatpush1.bf16.msra.mxu0 0
      %3421 = vmatprep.subr.bf16.mxu0 0
      %3422 = vmatpush1.bf16.msra.mxu0 0
      %3423 = vmatprep.subr.bf16.mxu0 0
      %3424 = vmatpush1.bf16.msra.mxu0 0
      %3425 = vmatprep.subr.bf16.mxu0 0
      %3426 = vmatpush1.bf16.msra.mxu0 0
      %3427 = vmatprep.subr.bf16.mxu0 0
      %3428 = vmatpush1.bf16.msra.mxu0 0
      %3429 = vmatprep.subr.bf16.mxu0 0
      %3430 = vmatpush1.bf16.msra.mxu0 0
      %3431 = vmatprep.mubr.bf16.mxu0 0
      %3432 = vmatmul.mubr.bf16.gmra.mrb[0].mxu0 %v3016
      %v3433 = vpop.f32.mrb[0].mxu0
      %v3434 = vadd.f32 %v669, %v3433
      %v3435 = vpop.f32.mrb[0].mxu0
      %v3436 = vadd.f32 %v669, %v3435
      %v3437 = vpop.f32.mrb[0].mxu0
      %v3438 = vadd.f32 %v674, %v3437
      %v3439 = vpop.f32.mrb[0].mxu0
      %v3440 = vadd.f32 %v674, %v3439
      %3441 = vdwg.mxu0
      %3442 = vmatprep.subr.bf16.mxu0 %v2148
      %3443 = vmatpush1.bf16.msra.mxu0 %v2147
      %3444 = vmatprep.subr.bf16.mxu0 %v2245
      %3445 = vmatpush1.bf16.msra.mxu0 %v2244
      %3446 = vmatprep.subr.bf16.mxu0 %v2342
      %3447 = vmatpush1.bf16.msra.mxu0 %v2341
      %3448 = vmatprep.subr.bf16.mxu0 %v2439
      %3449 = vmatpush1.bf16.msra.mxu0 %v2438
      %3450 = vmatprep.subr.bf16.mxu0 %v3044
      %3451 = vmatpush1.bf16.msra.mxu0 %v3041
      %3452 = vmatprep.subr.bf16.mxu0 0
      %3453 = vmatpush1.bf16.msra.mxu0 0
      %3454 = vmatprep.subr.bf16.mxu0 0
      %3455 = vmatpush1.bf16.msra.mxu0 0
      %3456 = vmatprep.subr.bf16.mxu0 0
      %3457 = vmatpush1.bf16.msra.mxu0 0
      %3458 = vmatprep.subr.bf16.mxu0 0
      %3459 = vmatpush1.bf16.msra.mxu0 0
      %3460 = vmatprep.subr.bf16.mxu0 0
      %3461 = vmatpush1.bf16.msra.mxu0 0
      %3462 = vmatprep.subr.bf16.mxu0 0
      %3463 = vmatpush1.bf16.msra.mxu0 0
      %3464 = vmatprep.subr.bf16.mxu0 0
      %3465 = vmatpush1.bf16.msra.mxu0 0
      %3466 = vmatprep.subr.bf16.mxu0 0
      %3467 = vmatpush1.bf16.msra.mxu0 0
      %3468 = vmatprep.subr.bf16.mxu0 0
      %3469 = vmatpush1.bf16.msra.mxu0 0
      %3470 = vmatprep.subr.bf16.mxu0 0
      %3471 = vmatpush1.bf16.msra.mxu0 0
      %3472 = vmatprep.subr.bf16.mxu0 0
      %3473 = vmatpush1.bf16.msra.mxu0 0
      %3474 = vmatprep.mubr.bf16.mxu0 0
      %3475 = vmatmul.mubr.bf16.gmra.mrb[0].mxu0 %v3016
      %v3476 = vpop.f32.mrb[0].mxu0
      %v3477 = vadd.f32 %v669, %v3476
      %v3478 = vpop.f32.mrb[0].mxu0
      %v3479 = vadd.f32 %v669, %v3478
      %v3480 = vpop.f32.mrb[0].mxu0
      %v3481 = vadd.f32 %v674, %v3480
      %v3482 = vpop.f32.mrb[0].mxu0
      %v3483 = vadd.f32 %v674, %v3482
      %3484 = vdwg.mxu0
      %3485 = vmatprep.subr.bf16.mxu0 %v2150
      %3486 = vmatpush1.bf16.msra.mxu0 %v2149
      %3487 = vmatprep.subr.bf16.mxu0 %v2247
      %3488 = vmatpush1.bf16.msra.mxu0 %v2246
      %3489 = vmatprep.subr.bf16.mxu0 %v2344
      %3490 = vmatpush1.bf16.msra.mxu0 %v2343
      %3491 = vmatprep.subr.bf16.mxu0 %v2441
      %3492 = vmatpush1.bf16.msra.mxu0 %v2440
      %3493 = vmatprep.subr.bf16.mxu0 %v3050
      %3494 = vmatpush1.bf16.msra.mxu0 %v3047
      %3495 = vmatprep.subr.bf16.mxu0 0
      %3496 = vmatpush1.bf16.msra.mxu0 0
      %3497 = vmatprep.subr.bf16.mxu0 0
      %3498 = vmatpush1.bf16.msra.mxu0 0
      %3499 = vmatprep.subr.bf16.mxu0 0
      %3500 = vmatpush1.bf16.msra.mxu0 0
      %3501 = vmatprep.subr.bf16.mxu0 0
      %3502 = vmatpush1.bf16.msra.mxu0 0
      %3503 = vmatprep.subr.bf16.mxu0 0
      %3504 = vmatpush1.bf16.msra.mxu0 0
      %3505 = vmatprep.subr.bf16.mxu0 0
      %3506 = vmatpush1.bf16.msra.mxu0 0
      %3507 = vmatprep.subr.bf16.mxu0 0
      %3508 = vmatpush1.bf16.msra.mxu0 0
      %3509 = vmatprep.subr.bf16.mxu0 0
      %3510 = vmatpush1.bf16.msra.mxu0 0
      %3511 = vmatprep.subr.bf16.mxu0 0
      %3512 = vmatpush1.bf16.msra.mxu0 0
      %3513 = vmatprep.subr.bf16.mxu0 0
      %3514 = vmatpush1.bf16.msra.mxu0 0
      %3515 = vmatprep.subr.bf16.mxu0 0
      %3516 = vmatpush1.bf16.msra.mxu0 0
      %3517 = vmatprep.mubr.bf16.mxu0 0
      %3518 = vmatmul.mubr.bf16.gmra.mrb[0].mxu0 %v3016
      %v3519 = vpop.f32.mrb[0].mxu0
      %v3520 = vadd.f32 %v669, %v3519
      %v3521 = vpop.f32.mrb[0].mxu0
      %v3522 = vadd.f32 %v669, %v3521
      %v3523 = vpop.f32.mrb[0].mxu0
      %v3524 = vadd.f32 %v674, %v3523
      %v3525 = vpop.f32.mrb[0].mxu0
      %v3526 = vadd.f32 %v674, %v3525
      %3527 = vdwg.mxu0
      %3528 = vmatprep.subr.bf16.mxu0 %v2152
      %3529 = vmatpush1.bf16.msra.mxu0 %v2151
      %3530 = vmatprep.subr.bf16.mxu0 %v2249
      %3531 = vmatpush1.bf16.msra.mxu0 %v2248
      %3532 = vmatprep.subr.bf16.mxu0 %v2346
      %3533 = vmatpush1.bf16.msra.mxu0 %v2345
      %3534 = vmatprep.subr.bf16.mxu0 %v2443
      %3535 = vmatpush1.bf16.msra.mxu0 %v2442
      %3536 = vmatprep.subr.bf16.mxu0 %v3056
      %3537 = vmatpush1.bf16.msra.mxu0 %v3053
      %3538 = vmatprep.subr.bf16.mxu0 0
      %3539 = vmatpush1.bf16.msra.mxu0 0
      %3540 = vmatprep.subr.bf16.mxu0 0
      %3541 = vmatpush1.bf16.msra.mxu0 0
      %3542 = vmatprep.subr.bf16.mxu0 0
      %3543 = vmatpush1.bf16.msra.mxu0 0
      %3544 = vmatprep.subr.bf16.mxu0 0
      %3545 = vmatpush1.bf16.msra.mxu0 0
      %3546 = vmatprep.subr.bf16.mxu0 0
      %3547 = vmatpush1.bf16.msra.mxu0 0
      %3548 = vmatprep.subr.bf16.mxu0 0
      %3549 = vmatpush1.bf16.msra.mxu0 0
      %3550 = vmatprep.subr.bf16.mxu0 0
      %3551 = vmatpush1.bf16.msra.mxu0 0
      %3552 = vmatprep.subr.bf16.mxu0 0
      %3553 = vmatpush1.bf16.msra.mxu0 0
      %3554 = vmatprep.subr.bf16.mxu0 0
      %3555 = vmatpush1.bf16.msra.mxu0 0
      %3556 = vmatprep.subr.bf16.mxu0 0
      %3557 = vmatpush1.bf16.msra.mxu0 0
      %3558 = vmatprep.subr.bf16.mxu0 0
      %3559 = vmatpush1.bf16.msra.mxu0 0
      %3560 = vmatprep.mubr.bf16.mxu0 0
      %3561 = vmatmul.mubr.bf16.gmra.mrb[0].mxu0 %v3016
      %v3562 = vpop.f32.mrb[0].mxu0
      %v3563 = vadd.f32 %v669, %v3562
      %v3564 = vpop.f32.mrb[0].mxu0
      %v3565 = vadd.f32 %v669, %v3564
      %v3566 = vpop.f32.mrb[0].mxu0
      %v3567 = vadd.f32 %v674, %v3566
      %v3568 = vpop.f32.mrb[0].mxu0
      %v3569 = vadd.f32 %v674, %v3568
      %3570 = vdwg.mxu0
      %3571 = vmatprep.subr.bf16.mxu0 %v2154
      %3572 = vmatpush1.bf16.msra.mxu0 %v2153
      %3573 = vmatprep.subr.bf16.mxu0 %v2251
      %3574 = vmatpush1.bf16.msra.mxu0 %v2250
      %3575 = vmatprep.subr.bf16.mxu0 %v2348
      %3576 = vmatpush1.bf16.msra.mxu0 %v2347
      %3577 = vmatprep.subr.bf16.mxu0 %v2445
      %3578 = vmatpush1.bf16.msra.mxu0 %v2444
      %3579 = vmatprep.subr.bf16.mxu0 %v3062
      %3580 = vmatpush1.bf16.msra.mxu0 %v3059
      %3581 = vmatprep.subr.bf16.mxu0 0
      %3582 = vmatpush1.bf16.msra.mxu0 0
      %3583 = vmatprep.subr.bf16.mxu0 0
      %3584 = vmatpush1.bf16.msra.mxu0 0
      %3585 = vmatprep.subr.bf16.mxu0 0
      %3586 = vmatpush1.bf16.msra.mxu0 0
      %3587 = vmatprep.subr.bf16.mxu0 0
      %3588 = vmatpush1.bf16.msra.mxu0 0
      %3589 = vmatprep.subr.bf16.mxu0 0
      %3590 = vmatpush1.bf16.msra.mxu0 0
      %3591 = vmatprep.subr.bf16.mxu0 0
      %3592 = vmatpush1.bf16.msra.mxu0 0
      %3593 = vmatprep.subr.bf16.mxu0 0
      %3594 = vmatpush1.bf16.msra.mxu0 0
      %3595 = vmatprep.subr.bf16.mxu0 0
      %3596 = vmatpush1.bf16.msra.mxu0 0
      %3597 = vmatprep.subr.bf16.mxu0 0
      %3598 = vmatpush1.bf16.msra.mxu0 0
      %3599 = vmatprep.subr.bf16.mxu0 0
      %3600 = vmatpush1.bf16.msra.mxu0 0
      %3601 = vmatprep.subr.bf16.mxu0 0
      %3602 = vmatpush1.bf16.msra.mxu0 0
      %3603 = vmatprep.mubr.bf16.mxu0 0
      %3604 = vmatmul.mubr.bf16.gmra.mrb[0].mxu0 %v3016
      %v3605 = vpop.f32.mrb[0].mxu0
      %v3606 = vadd.f32 %v669, %v3605
      %v3607 = vpop.f32.mrb[0].mxu0
      %v3608 = vadd.f32 %v669, %v3607
      %v3609 = vpop.f32.mrb[0].mxu0
      %v3610 = vadd.f32 %v674, %v3609
      %v3611 = vpop.f32.mrb[0].mxu0
      %v3612 = vadd.f32 %v674, %v3611
      %3613 = vdwg.mxu0
      %3614 = vmatprep.subr.bf16.mxu0 %v2156
      %3615 = vmatpush1.bf16.msra.mxu0 %v2155
      %3616 = vmatprep.subr.bf16.mxu0 %v2253
      %3617 = vmatpush1.bf16.msra.mxu0 %v2252
      %3618 = vmatprep.subr.bf16.mxu0 %v2350
      %3619 = vmatpush1.bf16.msra.mxu0 %v2349
      %3620 = vmatprep.subr.bf16.mxu0 %v2447
      %3621 = vmatpush1.bf16.msra.mxu0 %v2446
      %3622 = vmatprep.subr.bf16.mxu0 %v3068
      %3623 = vmatpush1.bf16.msra.mxu0 %v3065
      %3624 = vmatprep.subr.bf16.mxu0 0
      %3625 = vmatpush1.bf16.msra.mxu0 0
      %3626 = vmatprep.subr.bf16.mxu0 0
      %3627 = vmatpush1.bf16.msra.mxu0 0
      %3628 = vmatprep.subr.bf16.mxu0 0
      %3629 = vmatpush1.bf16.msra.mxu0 0
      %3630 = vmatprep.subr.bf16.mxu0 0
      %3631 = vmatpush1.bf16.msra.mxu0 0
      %3632 = vmatprep.subr.bf16.mxu0 0
      %3633 = vmatpush1.bf16.msra.mxu0 0
      %3634 = vmatprep.subr.bf16.mxu0 0
      %3635 = vmatpush1.bf16.msra.mxu0 0
      %3636 = vmatprep.subr.bf16.mxu0 0
      %3637 = vmatpush1.bf16.msra.mxu0 0
      %3638 = vmatprep.subr.bf16.mxu0 0
      %3639 = vmatpush1.bf16.msra.mxu0 0
      %3640 = vmatprep.subr.bf16.mxu0 0
      %3641 = vmatpush1.bf16.msra.mxu0 0
      %3642 = vmatprep.subr.bf16.mxu0 0
      %3643 = vmatpush1.bf16.msra.mxu0 0
      %3644 = vmatprep.subr.bf16.mxu0 0
      %3645 = vmatpush1.bf16.msra.mxu0 0
      %3646 = vmatprep.mubr.bf16.mxu0 0
      %3647 = vmatmul.mubr.bf16.gmra.mrb[0].mxu0 %v3016
      %v3648 = vpop.f32.mrb[0].mxu0
      %v3649 = vadd.f32 %v669, %v3648
      %v3650 = vpop.f32.mrb[0].mxu0
      %v3651 = vadd.f32 %v669, %v3650
      %v3652 = vpop.f32.mrb[0].mxu0
      %v3653 = vadd.f32 %v674, %v3652
      %v3654 = vpop.f32.mrb[0].mxu0
      %v3655 = vadd.f32 %v674, %v3654
      %3656 = vdwg.mxu0
      %3657 = vmatprep.subr.bf16.mxu0 %v2158
      %3658 = vmatpush1.bf16.msra.mxu0 %v2157
      %3659 = vmatprep.subr.bf16.mxu0 %v2255
      %3660 = vmatpush1.bf16.msra.mxu0 %v2254
      %3661 = vmatprep.subr.bf16.mxu0 %v2352
      %3662 = vmatpush1.bf16.msra.mxu0 %v2351
      %3663 = vmatprep.subr.bf16.mxu0 %v2449
      %3664 = vmatpush1.bf16.msra.mxu0 %v2448
      %3665 = vmatprep.subr.bf16.mxu0 %v3074
      %3666 = vmatpush1.bf16.msra.mxu0 %v3071
      %3667 = vmatprep.subr.bf16.mxu0 0
      %3668 = vmatpush1.bf16.msra.mxu0 0
      %3669 = vmatprep.subr.bf16.mxu0 0
      %3670 = vmatpush1.bf16.msra.mxu0 0
      %3671 = vmatprep.subr.bf16.mxu0 0
      %3672 = vmatpush1.bf16.msra.mxu0 0
      %3673 = vmatprep.subr.bf16.mxu0 0
      %3674 = vmatpush1.bf16.msra.mxu0 0
      %3675 = vmatprep.subr.bf16.mxu0 0
      %3676 = vmatpush1.bf16.msra.mxu0 0
      %3677 = vmatprep.subr.bf16.mxu0 0
      %3678 = vmatpush1.bf16.msra.mxu0 0
      %3679 = vmatprep.subr.bf16.mxu0 0
      %3680 = vmatpush1.bf16.msra.mxu0 0
      %3681 = vmatprep.subr.bf16.mxu0 0
      %3682 = vmatpush1.bf16.msra.mxu0 0
      %3683 = vmatprep.subr.bf16.mxu0 0
      %3684 = vmatpush1.bf16.msra.mxu0 0
      %3685 = vmatprep.subr.bf16.mxu0 0
      %3686 = vmatpush1.bf16.msra.mxu0 0
      %3687 = vmatprep.subr.bf16.mxu0 0
      %3688 = vmatpush1.bf16.msra.mxu0 0
      %3689 = vmatprep.mubr.bf16.mxu0 0
      %3690 = vmatmul.mubr.bf16.gmra.mrb[0].mxu0 %v3016
      %v3691 = vpop.f32.mrb[0].mxu0
      %v3692 = vadd.f32 %v669, %v3691
      %v3693 = vpop.f32.mrb[0].mxu0
      %v3694 = vadd.f32 %v669, %v3693
      %v3695 = vpop.f32.mrb[0].mxu0
      %v3696 = vadd.f32 %v674, %v3695
      %v3697 = vpop.f32.mrb[0].mxu0
      %v3698 = vadd.f32 %v674, %v3697
      %3699 = vdwg.mxu0
      %3700 = vmatprep.subr.bf16.mxu0 %v2160
      %3701 = vmatpush1.bf16.msra.mxu0 %v2159
      %3702 = vmatprep.subr.bf16.mxu0 %v2257
      %3703 = vmatpush1.bf16.msra.mxu0 %v2256
      %3704 = vmatprep.subr.bf16.mxu0 %v2354
      %3705 = vmatpush1.bf16.msra.mxu0 %v2353
      %3706 = vmatprep.subr.bf16.mxu0 %v2451
      %3707 = vmatpush1.bf16.msra.mxu0 %v2450
      %3708 = vmatprep.subr.bf16.mxu0 %v3080
      %3709 = vmatpush1.bf16.msra.mxu0 %v3077
      %3710 = vmatprep.subr.bf16.mxu0 0
      %3711 = vmatpush1.bf16.msra.mxu0 0
      %3712 = vmatprep.subr.bf16.mxu0 0
      %3713 = vmatpush1.bf16.msra.mxu0 0
      %3714 = vmatprep.subr.bf16.mxu0 0
      %3715 = vmatpush1.bf16.msra.mxu0 0
      %3716 = vmatprep.subr.bf16.mxu0 0
      %3717 = vmatpush1.bf16.msra.mxu0 0
      %3718 = vmatprep.subr.bf16.mxu0 0
      %3719 = vmatpush1.bf16.msra.mxu0 0
      %3720 = vmatprep.subr.bf16.mxu0 0
      %3721 = vmatpush1.bf16.msra.mxu0 0
      %3722 = vmatprep.subr.bf16.mxu0 0
      %3723 = vmatpush1.bf16.msra.mxu0 0
      %3724 = vmatprep.subr.bf16.mxu0 0
      %3725 = vmatpush1.bf16.msra.mxu0 0
      %3726 = vmatprep.subr.bf16.mxu0 0
      %3727 = vmatpush1.bf16.msra.mxu0 0
      %3728 = vmatprep.subr.bf16.mxu0 0
      %3729 = vmatpush1.bf16.msra.mxu0 0
      %3730 = vmatprep.subr.bf16.mxu0 0
      %3731 = vmatpush1.bf16.msra.mxu0 0
      %3732 = vmatprep.mubr.bf16.mxu0 0
      %3733 = vmatmul.mubr.bf16.gmra.mrb[0].mxu0 %v3016
      %v3734 = vpop.f32.mrb[0].mxu0
      %v3735 = vadd.f32 %v669, %v3734
      %v3736 = vpop.f32.mrb[0].mxu0
      %v3737 = vadd.f32 %v669, %v3736
      %v3738 = vpop.f32.mrb[0].mxu0
      %v3739 = vadd.f32 %v674, %v3738
      %v3740 = vpop.f32.mrb[0].mxu0
      %v3741 = vadd.f32 %v674, %v3740
      %3742 = vdwg.mxu0
      %3743 = vmatprep.subr.bf16.mxu0 %v2162
      %3744 = vmatpush1.bf16.msra.mxu0 %v2161
      %3745 = vmatprep.subr.bf16.mxu0 %v2259
      %3746 = vmatpush1.bf16.msra.mxu0 %v2258
      %3747 = vmatprep.subr.bf16.mxu0 %v2356
      %3748 = vmatpush1.bf16.msra.mxu0 %v2355
      %3749 = vmatprep.subr.bf16.mxu0 %v2453
      %3750 = vmatpush1.bf16.msra.mxu0 %v2452
      %3751 = vmatprep.subr.bf16.mxu0 %v3086
      %3752 = vmatpush1.bf16.msra.mxu0 %v3083
      %3753 = vmatprep.subr.bf16.mxu0 0
      %3754 = vmatpush1.bf16.msra.mxu0 0
      %3755 = vmatprep.subr.bf16.mxu0 0
      %3756 = vmatpush1.bf16.msra.mxu0 0
      %3757 = vmatprep.subr.bf16.mxu0 0
      %3758 = vmatpush1.bf16.msra.mxu0 0
      %3759 = vmatprep.subr.bf16.mxu0 0
      %3760 = vmatpush1.bf16.msra.mxu0 0
      %3761 = vmatprep.subr.bf16.mxu0 0
      %3762 = vmatpush1.bf16.msra.mxu0 0
      %3763 = vmatprep.subr.bf16.mxu0 0
      %3764 = vmatpush1.bf16.msra.mxu0 0
      %3765 = vmatprep.subr.bf16.mxu0 0
      %3766 = vmatpush1.bf16.msra.mxu0 0
      %3767 = vmatprep.subr.bf16.mxu0 0
      %3768 = vmatpush1.bf16.msra.mxu0 0
      %3769 = vmatprep.subr.bf16.mxu0 0
      %3770 = vmatpush1.bf16.msra.mxu0 0
      %3771 = vmatprep.subr.bf16.mxu0 0
      %3772 = vmatpush1.bf16.msra.mxu0 0
      %3773 = vmatprep.subr.bf16.mxu0 0
      %3774 = vmatpush1.bf16.msra.mxu0 0
      %3775 = vmatprep.mubr.bf16.mxu0 0
      %3776 = vmatmul.mubr.bf16.gmra.mrb[0].mxu0 %v3016
      %v3777 = vpop.f32.mrb[0].mxu0
      %v3778 = vadd.f32 %v669, %v3777
      %v3779 = vpop.f32.mrb[0].mxu0
      %v3780 = vadd.f32 %v669, %v3779
      %v3781 = vpop.f32.mrb[0].mxu0
      %v3782 = vadd.f32 %v674, %v3781
      %v3783 = vpop.f32.mrb[0].mxu0
      %v3784 = vadd.f32 %v674, %v3783
      %3785 = vdwg.mxu0
      %3786 = vmatprep.subr.bf16.mxu0 %v2164
      %3787 = vmatpush1.bf16.msra.mxu0 %v2163
      %3788 = vmatprep.subr.bf16.mxu0 %v2261
      %3789 = vmatpush1.bf16.msra.mxu0 %v2260
      %3790 = vmatprep.subr.bf16.mxu0 %v2358
      %3791 = vmatpush1.bf16.msra.mxu0 %v2357
      %3792 = vmatprep.subr.bf16.mxu0 %v2455
      %3793 = vmatpush1.bf16.msra.mxu0 %v2454
      %3794 = vmatprep.subr.bf16.mxu0 %v3092
      %3795 = vmatpush1.bf16.msra.mxu0 %v3089
      %3796 = vmatprep.subr.bf16.mxu0 0
      %3797 = vmatpush1.bf16.msra.mxu0 0
      %3798 = vmatprep.subr.bf16.mxu0 0
      %3799 = vmatpush1.bf16.msra.mxu0 0
      %3800 = vmatprep.subr.bf16.mxu0 0
      %3801 = vmatpush1.bf16.msra.mxu0 0
      %3802 = vmatprep.subr.bf16.mxu0 0
      %3803 = vmatpush1.bf16.msra.mxu0 0
      %3804 = vmatprep.subr.bf16.mxu0 0
      %3805 = vmatpush1.bf16.msra.mxu0 0
      %3806 = vmatprep.subr.bf16.mxu0 0
      %3807 = vmatpush1.bf16.msra.mxu0 0
      %3808 = vmatprep.subr.bf16.mxu0 0
      %3809 = vmatpush1.bf16.msra.mxu0 0
      %3810 = vmatprep.subr.bf16.mxu0 0
      %3811 = vmatpush1.bf16.msra.mxu0 0
      %3812 = vmatprep.subr.bf16.mxu0 0
      %3813 = vmatpush1.bf16.msra.mxu0 0
      %3814 = vmatprep.subr.bf16.mxu0 0
      %3815 = vmatpush1.bf16.msra.mxu0 0
      %3816 = vmatprep.subr.bf16.mxu0 0
      %3817 = vmatpush1.bf16.msra.mxu0 0
      %3818 = vmatprep.mubr.bf16.mxu0 0
      %3819 = vmatmul.mubr.bf16.gmra.mrb[0].mxu0 %v3016
      %v3820 = vpop.f32.mrb[0].mxu0
      %v3821 = vadd.f32 %v669, %v3820
      %v3822 = vpop.f32.mrb[0].mxu0
      %v3823 = vadd.f32 %v669, %v3822
      %v3824 = vpop.f32.mrb[0].mxu0
      %v3825 = vadd.f32 %v674, %v3824
      %v3826 = vpop.f32.mrb[0].mxu0
      %v3827 = vadd.f32 %v674, %v3826
      %3828 = vdwg.mxu0
      %3829 = vmatprep.subr.bf16.mxu0 %v2166
      %3830 = vmatpush1.bf16.msra.mxu0 %v2165
      %3831 = vmatprep.subr.bf16.mxu0 %v2263
      %3832 = vmatpush1.bf16.msra.mxu0 %v2262
      %3833 = vmatprep.subr.bf16.mxu0 %v2360
      %3834 = vmatpush1.bf16.msra.mxu0 %v2359
      %3835 = vmatprep.subr.bf16.mxu0 %v2457
      %3836 = vmatpush1.bf16.msra.mxu0 %v2456
      %3837 = vmatprep.subr.bf16.mxu0 %v3098
      %3838 = vmatpush1.bf16.msra.mxu0 %v3095
      %3839 = vmatprep.subr.bf16.mxu0 0
      %3840 = vmatpush1.bf16.msra.mxu0 0
      %3841 = vmatprep.subr.bf16.mxu0 0
      %3842 = vmatpush1.bf16.msra.mxu0 0
      %3843 = vmatprep.subr.bf16.mxu0 0
      %3844 = vmatpush1.bf16.msra.mxu0 0
      %3845 = vmatprep.subr.bf16.mxu0 0
      %3846 = vmatpush1.bf16.msra.mxu0 0
      %3847 = vmatprep.subr.bf16.mxu0 0
      %3848 = vmatpush1.bf16.msra.mxu0 0
      %3849 = vmatprep.subr.bf16.mxu0 0
      %3850 = vmatpush1.bf16.msra.mxu0 0
      %3851 = vmatprep.subr.bf16.mxu0 0
      %3852 = vmatpush1.bf16.msra.mxu0 0
      %3853 = vmatprep.subr.bf16.mxu0 0
      %3854 = vmatpush1.bf16.msra.mxu0 0
      %3855 = vmatprep.subr.bf16.mxu0 0
      %3856 = vmatpush1.bf16.msra.mxu0 0
      %3857 = vmatprep.subr.bf16.mxu0 0
      %3858 = vmatpush1.bf16.msra.mxu0 0
      %3859 = vmatprep.subr.bf16.mxu0 0
      %3860 = vmatpush1.bf16.msra.mxu0 0
      %3861 = vmatprep.mubr.bf16.mxu0 0
      %3862 = vmatmul.mubr.bf16.gmra.mrb[0].mxu0 %v3016
      %v3863 = vpop.f32.mrb[0].mxu0
      %v3864 = vadd.f32 %v669, %v3863
      %v3865 = vpop.f32.mrb[0].mxu0
      %v3866 = vadd.f32 %v669, %v3865
      %v3867 = vpop.f32.mrb[0].mxu0
      %v3868 = vadd.f32 %v674, %v3867
      %v3869 = vpop.f32.mrb[0].mxu0
      %v3870 = vadd.f32 %v674, %v3869
      %3871 = vdwg.mxu0
      %3872 = vmatprep.subr.bf16.mxu0 %v2168
      %3873 = vmatpush1.bf16.msra.mxu0 %v2167
      %3874 = vmatprep.subr.bf16.mxu0 %v2265
      %3875 = vmatpush1.bf16.msra.mxu0 %v2264
      %3876 = vmatprep.subr.bf16.mxu0 %v2362
      %3877 = vmatpush1.bf16.msra.mxu0 %v2361
      %3878 = vmatprep.subr.bf16.mxu0 %v2459
      %3879 = vmatpush1.bf16.msra.mxu0 %v2458
      %3880 = vmatprep.subr.bf16.mxu0 %v3104
      %3881 = vmatpush1.bf16.msra.mxu0 %v3101
      %3882 = vmatprep.subr.bf16.mxu0 0
      %3883 = vmatpush1.bf16.msra.mxu0 0
      %3884 = vmatprep.subr.bf16.mxu0 0
      %3885 = vmatpush1.bf16.msra.mxu0 0
      %3886 = vmatprep.subr.bf16.mxu0 0
      %3887 = vmatpush1.bf16.msra.mxu0 0
      %3888 = vmatprep.subr.bf16.mxu0 0
      %3889 = vmatpush1.bf16.msra.mxu0 0
      %3890 = vmatprep.subr.bf16.mxu0 0
      %3891 = vmatpush1.bf16.msra.mxu0 0
      %3892 = vmatprep.subr.bf16.mxu0 0
      %3893 = vmatpush1.bf16.msra.mxu0 0
      %3894 = vmatprep.subr.bf16.mxu0 0
      %3895 = vmatpush1.bf16.msra.mxu0 0
      %3896 = vmatprep.subr.bf16.mxu0 0
      %3897 = vmatpush1.bf16.msra.mxu0 0
      %3898 = vmatprep.subr.bf16.mxu0 0
      %3899 = vmatpush1.bf16.msra.mxu0 0
      %3900 = vmatprep.subr.bf16.mxu0 0
      %3901 = vmatpush1.bf16.msra.mxu0 0
      %3902 = vmatprep.subr.bf16.mxu0 0
      %3903 = vmatpush1.bf16.msra.mxu0 0
      %3904 = vmatprep.mubr.bf16.mxu0 0
      %3905 = vmatmul.mubr.bf16.gmra.mrb[0].mxu0 %v3016
      %v3906 = vpop.f32.mrb[0].mxu0
      %v3907 = vadd.f32 %v669, %v3906
      %v3908 = vpop.f32.mrb[0].mxu0
      %v3909 = vadd.f32 %v669, %v3908
      %v3910 = vpop.f32.mrb[0].mxu0
      %v3911 = vadd.f32 %v674, %v3910
      %v3912 = vpop.f32.mrb[0].mxu0
      %v3913 = vadd.f32 %v674, %v3912
      %3914 = vdwg.mxu0
      %3915 = vmatprep.subr.bf16.mxu0 %v2170
      %3916 = vmatpush1.bf16.msra.mxu0 %v2169
      %3917 = vmatprep.subr.bf16.mxu0 %v2267
      %3918 = vmatpush1.bf16.msra.mxu0 %v2266
      %3919 = vmatprep.subr.bf16.mxu0 %v2364
      %3920 = vmatpush1.bf16.msra.mxu0 %v2363
      %3921 = vmatprep.subr.bf16.mxu0 %v2461
      %3922 = vmatpush1.bf16.msra.mxu0 %v2460
      %3923 = vmatprep.subr.bf16.mxu0 %v3110
      %3924 = vmatpush1.bf16.msra.mxu0 %v3107
      %3925 = vmatprep.subr.bf16.mxu0 0
      %3926 = vmatpush1.bf16.msra.mxu0 0
      %3927 = vmatprep.subr.bf16.mxu0 0
      %3928 = vmatpush1.bf16.msra.mxu0 0
      %3929 = vmatprep.subr.bf16.mxu0 0
      %3930 = vmatpush1.bf16.msra.mxu0 0
      %3931 = vmatprep.subr.bf16.mxu0 0
      %3932 = vmatpush1.bf16.msra.mxu0 0
      %3933 = vmatprep.subr.bf16.mxu0 0
      %3934 = vmatpush1.bf16.msra.mxu0 0
      %3935 = vmatprep.subr.bf16.mxu0 0
      %3936 = vmatpush1.bf16.msra.mxu0 0
      %3937 = vmatprep.subr.bf16.mxu0 0
      %3938 = vmatpush1.bf16.msra.mxu0 0
      %3939 = vmatprep.subr.bf16.mxu0 0
      %3940 = vmatpush1.bf16.msra.mxu0 0
      %3941 = vmatprep.subr.bf16.mxu0 0
      %3942 = vmatpush1.bf16.msra.mxu0 0
      %3943 = vmatprep.subr.bf16.mxu0 0
      %3944 = vmatpush1.bf16.msra.mxu0 0
      %3945 = vmatprep.subr.bf16.mxu0 0
      %3946 = vmatpush1.bf16.msra.mxu0 0
      %3947 = vmatprep.mubr.bf16.mxu0 0
      %3948 = vmatmul.mubr.bf16.gmra.mrb[0].mxu0 %v3016
      %v3949 = vpop.f32.mrb[0].mxu0
      %v3950 = vadd.f32 %v669, %v3949
      %v3951 = vpop.f32.mrb[0].mxu0
      %v3952 = vadd.f32 %v669, %v3951
      %v3953 = vpop.f32.mrb[0].mxu0
      %v3954 = vadd.f32 %v674, %v3953
      %v3955 = vpop.f32.mrb[0].mxu0
      %v3956 = vadd.f32 %v674, %v3955
      %3957 = vdwg.mxu0
      %3958 = vmatprep.subr.bf16.mxu0 %v2172
      %3959 = vmatpush1.bf16.msra.mxu0 %v2171
      %3960 = vmatprep.subr.bf16.mxu0 %v2269
      %3961 = vmatpush1.bf16.msra.mxu0 %v2268
      %3962 = vmatprep.subr.bf16.mxu0 %v2366
      %3963 = vmatpush1.bf16.msra.mxu0 %v2365
      %3964 = vmatprep.subr.bf16.mxu0 %v2463
      %3965 = vmatpush1.bf16.msra.mxu0 %v2462
      %3966 = vmatprep.subr.bf16.mxu0 %v3116
      %3967 = vmatpush1.bf16.msra.mxu0 %v3113
      %3968 = vmatprep.subr.bf16.mxu0 0
      %3969 = vmatpush1.bf16.msra.mxu0 0
      %3970 = vmatprep.subr.bf16.mxu0 0
      %3971 = vmatpush1.bf16.msra.mxu0 0
      %3972 = vmatprep.subr.bf16.mxu0 0
      %3973 = vmatpush1.bf16.msra.mxu0 0
      %3974 = vmatprep.subr.bf16.mxu0 0
      %3975 = vmatpush1.bf16.msra.mxu0 0
      %3976 = vmatprep.subr.bf16.mxu0 0
      %3977 = vmatpush1.bf16.msra.mxu0 0
      %3978 = vmatprep.subr.bf16.mxu0 0
      %3979 = vmatpush1.bf16.msra.mxu0 0
      %3980 = vmatprep.subr.bf16.mxu0 0
      %3981 = vmatpush1.bf16.msra.mxu0 0
      %3982 = vmatprep.subr.bf16.mxu0 0
      %3983 = vmatpush1.bf16.msra.mxu0 0
      %3984 = vmatprep.subr.bf16.mxu0 0
      %3985 = vmatpush1.bf16.msra.mxu0 0
      %3986 = vmatprep.subr.bf16.mxu0 0
      %3987 = vmatpush1.bf16.msra.mxu0 0
      %3988 = vmatprep.subr.bf16.mxu0 0
      %3989 = vmatpush1.bf16.msra.mxu0 0
      %3990 = vmatprep.mubr.bf16.mxu0 0
      %3991 = vmatmul.mubr.bf16.gmra.mrb[0].mxu0 %v3016
      %v3992 = vpop.f32.mrb[0].mxu0
      %v3993 = vadd.f32 %v669, %v3992
      %v3994 = vpop.f32.mrb[0].mxu0
      %v3995 = vadd.f32 %v669, %v3994
      %v3996 = vpop.f32.mrb[0].mxu0
      %v3997 = vadd.f32 %v674, %v3996
      %v3998 = vpop.f32.mrb[0].mxu0
      %v3999 = vadd.f32 %v674, %v3998
      %4000 = vdwg.mxu0
      %4001 = vmatprep.subr.bf16.mxu0 %v2174
      %4002 = vmatpush1.bf16.msra.mxu0 %v2173
      %4003 = vmatprep.subr.bf16.mxu0 %v2271
      %4004 = vmatpush1.bf16.msra.mxu0 %v2270
      %4005 = vmatprep.subr.bf16.mxu0 %v2368
      %4006 = vmatpush1.bf16.msra.mxu0 %v2367
      %4007 = vmatprep.subr.bf16.mxu0 %v2465
      %4008 = vmatpush1.bf16.msra.mxu0 %v2464
      %4009 = vmatprep.subr.bf16.mxu0 %v3122
      %4010 = vmatpush1.bf16.msra.mxu0 %v3119
      %4011 = vmatprep.subr.bf16.mxu0 0
      %4012 = vmatpush1.bf16.msra.mxu0 0
      %4013 = vmatprep.subr.bf16.mxu0 0
      %4014 = vmatpush1.bf16.msra.mxu0 0
      %4015 = vmatprep.subr.bf16.mxu0 0
      %4016 = vmatpush1.bf16.msra.mxu0 0
      %4017 = vmatprep.subr.bf16.mxu0 0
      %4018 = vmatpush1.bf16.msra.mxu0 0
      %4019 = vmatprep.subr.bf16.mxu0 0
      %4020 = vmatpush1.bf16.msra.mxu0 0
      %4021 = vmatprep.subr.bf16.mxu0 0
      %4022 = vmatpush1.bf16.msra.mxu0 0
      %4023 = vmatprep.subr.bf16.mxu0 0
      %4024 = vmatpush1.bf16.msra.mxu0 0
      %4025 = vmatprep.subr.bf16.mxu0 0
      %4026 = vmatpush1.bf16.msra.mxu0 0
      %4027 = vmatprep.subr.bf16.mxu0 0
      %4028 = vmatpush1.bf16.msra.mxu0 0
      %4029 = vmatprep.subr.bf16.mxu0 0
      %4030 = vmatpush1.bf16.msra.mxu0 0
      %4031 = vmatprep.subr.bf16.mxu0 0
      %4032 = vmatpush1.bf16.msra.mxu0 0
      %4033 = vmatprep.mubr.bf16.mxu0 0
      %4034 = vmatmul.mubr.bf16.gmra.mrb[0].mxu0 %v3016
      %v4035 = vpop.f32.mrb[0].mxu0
      %v4036 = vadd.f32 %v669, %v4035
      %v4037 = vpop.f32.mrb[0].mxu0
      %v4038 = vadd.f32 %v669, %v4037
      %v4039 = vpop.f32.mrb[0].mxu0
      %v4040 = vadd.f32 %v674, %v4039
      %v4041 = vpop.f32.mrb[0].mxu0
      %v4042 = vadd.f32 %v674, %v4041
      %4043 = vdwg.mxu0
      %4044 = vmatprep.subr.bf16.mxu0 %v2176
      %4045 = vmatpush1.bf16.msra.mxu0 %v2175
      %4046 = vmatprep.subr.bf16.mxu0 %v2273
      %4047 = vmatpush1.bf16.msra.mxu0 %v2272
      %4048 = vmatprep.subr.bf16.mxu0 %v2370
      %4049 = vmatpush1.bf16.msra.mxu0 %v2369
      %4050 = vmatprep.subr.bf16.mxu0 %v2467
      %4051 = vmatpush1.bf16.msra.mxu0 %v2466
      %4052 = vmatprep.subr.bf16.mxu0 %v3128
      %4053 = vmatpush1.bf16.msra.mxu0 %v3125
      %4054 = vmatprep.subr.bf16.mxu0 0
      %4055 = vmatpush1.bf16.msra.mxu0 0
      %4056 = vmatprep.subr.bf16.mxu0 0
      %4057 = vmatpush1.bf16.msra.mxu0 0
      %4058 = vmatprep.subr.bf16.mxu0 0
      %4059 = vmatpush1.bf16.msra.mxu0 0
      %4060 = vmatprep.subr.bf16.mxu0 0
      %4061 = vmatpush1.bf16.msra.mxu0 0
      %4062 = vmatprep.subr.bf16.mxu0 0
      %4063 = vmatpush1.bf16.msra.mxu0 0
      %4064 = vmatprep.subr.bf16.mxu0 0
      %4065 = vmatpush1.bf16.msra.mxu0 0
      %4066 = vmatprep.subr.bf16.mxu0 0
      %4067 = vmatpush1.bf16.msra.mxu0 0
      %4068 = vmatprep.subr.bf16.mxu0 0
      %4069 = vmatpush1.bf16.msra.mxu0 0
      %4070 = vmatprep.subr.bf16.mxu0 0
      %4071 = vmatpush1.bf16.msra.mxu0 0
      %4072 = vmatprep.subr.bf16.mxu0 0
      %4073 = vmatpush1.bf16.msra.mxu0 0
      %4074 = vmatprep.subr.bf16.mxu0 0
      %4075 = vmatpush1.bf16.msra.mxu0 0
      %4076 = vmatprep.mubr.bf16.mxu0 0
      %4077 = vmatmul.mubr.bf16.gmra.mrb[0].mxu0 %v3016
      %v4078 = vpop.f32.mrb[0].mxu0
      %v4079 = vadd.f32 %v669, %v4078
      %v4080 = vpop.f32.mrb[0].mxu0
      %v4081 = vadd.f32 %v669, %v4080
      %v4082 = vpop.f32.mrb[0].mxu0
      %v4083 = vadd.f32 %v674, %v4082
      %v4084 = vpop.f32.mrb[0].mxu0
      %v4085 = vadd.f32 %v674, %v4084
      %4086 = vdwg.mxu0
      %4087 = vmatprep.subr.bf16.mxu0 %v2178
      %4088 = vmatpush1.bf16.msra.mxu0 %v2177
      %4089 = vmatprep.subr.bf16.mxu0 %v2275
      %4090 = vmatpush1.bf16.msra.mxu0 %v2274
      %4091 = vmatprep.subr.bf16.mxu0 %v2372
      %4092 = vmatpush1.bf16.msra.mxu0 %v2371
      %4093 = vmatprep.subr.bf16.mxu0 %v2469
      %4094 = vmatpush1.bf16.msra.mxu0 %v2468
      %4095 = vmatprep.subr.bf16.mxu0 %v3134
      %4096 = vmatpush1.bf16.msra.mxu0 %v3131
      %4097 = vmatprep.subr.bf16.mxu0 0
      %4098 = vmatpush1.bf16.msra.mxu0 0
      %4099 = vmatprep.subr.bf16.mxu0 0
      %4100 = vmatpush1.bf16.msra.mxu0 0
      %4101 = vmatprep.subr.bf16.mxu0 0
      %4102 = vmatpush1.bf16.msra.mxu0 0
      %4103 = vmatprep.subr.bf16.mxu0 0
      %4104 = vmatpush1.bf16.msra.mxu0 0
      %4105 = vmatprep.subr.bf16.mxu0 0
      %4106 = vmatpush1.bf16.msra.mxu0 0
      %4107 = vmatprep.subr.bf16.mxu0 0
      %4108 = vmatpush1.bf16.msra.mxu0 0
      %4109 = vmatprep.subr.bf16.mxu0 0
      %4110 = vmatpush1.bf16.msra.mxu0 0
      %4111 = vmatprep.subr.bf16.mxu0 0
      %4112 = vmatpush1.bf16.msra.mxu0 0
      %4113 = vmatprep.subr.bf16.mxu0 0
      %4114 = vmatpush1.bf16.msra.mxu0 0
      %4115 = vmatprep.subr.bf16.mxu0 0
      %4116 = vmatpush1.bf16.msra.mxu0 0
      %4117 = vmatprep.subr.bf16.mxu0 0
      %4118 = vmatpush1.bf16.msra.mxu0 0
      %4119 = vmatprep.mubr.bf16.mxu0 0
      %4120 = vmatmul.mubr.bf16.gmra.mrb[0].mxu0 %v3016
      %v4121 = vpop.f32.mrb[0].mxu0
      %v4122 = vadd.f32 %v669, %v4121
      %v4123 = vpop.f32.mrb[0].mxu0
      %v4124 = vadd.f32 %v669, %v4123
      %v4125 = vpop.f32.mrb[0].mxu0
      %v4126 = vadd.f32 %v674, %v4125
      %v4127 = vpop.f32.mrb[0].mxu0
      %v4128 = vadd.f32 %v674, %v4127
      %4129 = vdwg.mxu0
      %4130 = vmatprep.subr.bf16.mxu0 %v2180
      %4131 = vmatpush1.bf16.msra.mxu0 %v2179
      %4132 = vmatprep.subr.bf16.mxu0 %v2277
      %4133 = vmatpush1.bf16.msra.mxu0 %v2276
      %4134 = vmatprep.subr.bf16.mxu0 %v2374
      %4135 = vmatpush1.bf16.msra.mxu0 %v2373
      %4136 = vmatprep.subr.bf16.mxu0 %v2471
      %4137 = vmatpush1.bf16.msra.mxu0 %v2470
      %4138 = vmatprep.subr.bf16.mxu0 %v3140
      %4139 = vmatpush1.bf16.msra.mxu0 %v3137
      %4140 = vmatprep.subr.bf16.mxu0 0
      %4141 = vmatpush1.bf16.msra.mxu0 0
      %4142 = vmatprep.subr.bf16.mxu0 0
      %4143 = vmatpush1.bf16.msra.mxu0 0
      %4144 = vmatprep.subr.bf16.mxu0 0
      %4145 = vmatpush1.bf16.msra.mxu0 0
      %4146 = vmatprep.subr.bf16.mxu0 0
      %4147 = vmatpush1.bf16.msra.mxu0 0
      %4148 = vmatprep.subr.bf16.mxu0 0
      %4149 = vmatpush1.bf16.msra.mxu0 0
      %4150 = vmatprep.subr.bf16.mxu0 0
      %4151 = vmatpush1.bf16.msra.mxu0 0
      %4152 = vmatprep.subr.bf16.mxu0 0
      %4153 = vmatpush1.bf16.msra.mxu0 0
      %4154 = vmatprep.subr.bf16.mxu0 0
      %4155 = vmatpush1.bf16.msra.mxu0 0
      %4156 = vmatprep.subr.bf16.mxu0 0
      %4157 = vmatpush1.bf16.msra.mxu0 0
      %4158 = vmatprep.subr.bf16.mxu0 0
      %4159 = vmatpush1.bf16.msra.mxu0 0
      %4160 = vmatprep.subr.bf16.mxu0 0
      %4161 = vmatpush1.bf16.msra.mxu0 0
      %4162 = vmatprep.mubr.bf16.mxu0 0
      %4163 = vmatmul.mubr.bf16.gmra.mrb[0].mxu0 %v3016
      %v4164 = vpop.f32.mrb[0].mxu0
      %v4165 = vadd.f32 %v669, %v4164
      %v4166 = vpop.f32.mrb[0].mxu0
      %v4167 = vadd.f32 %v669, %v4166
      %v4168 = vpop.f32.mrb[0].mxu0
      %v4169 = vadd.f32 %v674, %v4168
      %v4170 = vpop.f32.mrb[0].mxu0
      %v4171 = vadd.f32 %v674, %v4170
      %4172 = vdwg.mxu0
      %4173 = vmatprep.subr.bf16.mxu0 %v2182
      %4174 = vmatpush1.bf16.msra.mxu0 %v2181
      %4175 = vmatprep.subr.bf16.mxu0 %v2279
      %4176 = vmatpush1.bf16.msra.mxu0 %v2278
      %4177 = vmatprep.subr.bf16.mxu0 %v2376
      %4178 = vmatpush1.bf16.msra.mxu0 %v2375
      %4179 = vmatprep.subr.bf16.mxu0 %v2473
      %4180 = vmatpush1.bf16.msra.mxu0 %v2472
      %4181 = vmatprep.subr.bf16.mxu0 %v3146
      %4182 = vmatpush1.bf16.msra.mxu0 %v3143
      %4183 = vmatprep.subr.bf16.mxu0 0
      %4184 = vmatpush1.bf16.msra.mxu0 0
      %4185 = vmatprep.subr.bf16.mxu0 0
      %4186 = vmatpush1.bf16.msra.mxu0 0
      %4187 = vmatprep.subr.bf16.mxu0 0
      %4188 = vmatpush1.bf16.msra.mxu0 0
      %4189 = vmatprep.subr.bf16.mxu0 0
      %4190 = vmatpush1.bf16.msra.mxu0 0
      %4191 = vmatprep.subr.bf16.mxu0 0
      %4192 = vmatpush1.bf16.msra.mxu0 0
      %4193 = vmatprep.subr.bf16.mxu0 0
      %4194 = vmatpush1.bf16.msra.mxu0 0
      %4195 = vmatprep.subr.bf16.mxu0 0
      %4196 = vmatpush1.bf16.msra.mxu0 0
      %4197 = vmatprep.subr.bf16.mxu0 0
      %4198 = vmatpush1.bf16.msra.mxu0 0
      %4199 = vmatprep.subr.bf16.mxu0 0
      %4200 = vmatpush1.bf16.msra.mxu0 0
      %4201 = vmatprep.subr.bf16.mxu0 0
      %4202 = vmatpush1.bf16.msra.mxu0 0
      %4203 = vmatprep.subr.bf16.mxu0 0
      %4204 = vmatpush1.bf16.msra.mxu0 0
      %4205 = vmatprep.mubr.bf16.mxu0 0
      %4206 = vmatmul.mubr.bf16.gmra.mrb[0].mxu0 %v3016
      %v4207 = vpop.f32.mrb[0].mxu0
      %v4208 = vadd.f32 %v669, %v4207
      %v4209 = vpop.f32.mrb[0].mxu0
      %v4210 = vadd.f32 %v669, %v4209
      %v4211 = vpop.f32.mrb[0].mxu0
      %v4212 = vadd.f32 %v674, %v4211
      %v4213 = vpop.f32.mrb[0].mxu0
      %v4214 = vadd.f32 %v674, %v4213
      %4215 = vdwg.mxu0
      %4216 = vmatprep.subr.bf16.mxu0 %v2184
      %4217 = vmatpush1.bf16.msra.mxu0 %v2183
      %4218 = vmatprep.subr.bf16.mxu0 %v2281
      %4219 = vmatpush1.bf16.msra.mxu0 %v2280
      %4220 = vmatprep.subr.bf16.mxu0 %v2378
      %4221 = vmatpush1.bf16.msra.mxu0 %v2377
      %4222 = vmatprep.subr.bf16.mxu0 %v2475
      %4223 = vmatpush1.bf16.msra.mxu0 %v2474
      %4224 = vmatprep.subr.bf16.mxu0 %v3152
      %4225 = vmatpush1.bf16.msra.mxu0 %v3149
      %4226 = vmatprep.subr.bf16.mxu0 0
      %4227 = vmatpush1.bf16.msra.mxu0 0
      %4228 = vmatprep.subr.bf16.mxu0 0
      %4229 = vmatpush1.bf16.msra.mxu0 0
      %4230 = vmatprep.subr.bf16.mxu0 0
      %4231 = vmatpush1.bf16.msra.mxu0 0
      %4232 = vmatprep.subr.bf16.mxu0 0
      %4233 = vmatpush1.bf16.msra.mxu0 0
      %4234 = vmatprep.subr.bf16.mxu0 0
      %4235 = vmatpush1.bf16.msra.mxu0 0
      %4236 = vmatprep.subr.bf16.mxu0 0
      %4237 = vmatpush1.bf16.msra.mxu0 0
      %4238 = vmatprep.subr.bf16.mxu0 0
      %4239 = vmatpush1.bf16.msra.mxu0 0
      %4240 = vmatprep.subr.bf16.mxu0 0
      %4241 = vmatpush1.bf16.msra.mxu0 0
      %4242 = vmatprep.subr.bf16.mxu0 0
      %4243 = vmatpush1.bf16.msra.mxu0 0
      %4244 = vmatprep.subr.bf16.mxu0 0
      %4245 = vmatpush1.bf16.msra.mxu0 0
      %4246 = vmatprep.subr.bf16.mxu0 0
      %4247 = vmatpush1.bf16.msra.mxu0 0
      %4248 = vmatprep.mubr.bf16.mxu0 0
      %4249 = vmatmul.mubr.bf16.gmra.mrb[0].mxu0 %v3016
      %v4250 = vpop.f32.mrb[0].mxu0
      %v4251 = vadd.f32 %v669, %v4250
      %v4252 = vpop.f32.mrb[0].mxu0
      %v4253 = vadd.f32 %v669, %v4252
      %v4254 = vpop.f32.mrb[0].mxu0
      %v4255 = vadd.f32 %v674, %v4254
      %v4256 = vpop.f32.mrb[0].mxu0
      %v4257 = vadd.f32 %v674, %v4256
      %4258 = vdwg.mxu0
      %4259 = vmatprep.subr.bf16.mxu0 %v2186
      %4260 = vmatpush1.bf16.msra.mxu0 %v2185
      %4261 = vmatprep.subr.bf16.mxu0 %v2283
      %4262 = vmatpush1.bf16.msra.mxu0 %v2282
      %4263 = vmatprep.subr.bf16.mxu0 %v2380
      %4264 = vmatpush1.bf16.msra.mxu0 %v2379
      %4265 = vmatprep.subr.bf16.mxu0 %v2477
      %4266 = vmatpush1.bf16.msra.mxu0 %v2476
      %4267 = vmatprep.subr.bf16.mxu0 %v3158
      %4268 = vmatpush1.bf16.msra.mxu0 %v3155
      %4269 = vmatprep.subr.bf16.mxu0 0
      %4270 = vmatpush1.bf16.msra.mxu0 0
      %4271 = vmatprep.subr.bf16.mxu0 0
      %4272 = vmatpush1.bf16.msra.mxu0 0
      %4273 = vmatprep.subr.bf16.mxu0 0
      %4274 = vmatpush1.bf16.msra.mxu0 0
      %4275 = vmatprep.subr.bf16.mxu0 0
      %4276 = vmatpush1.bf16.msra.mxu0 0
      %4277 = vmatprep.subr.bf16.mxu0 0
      %4278 = vmatpush1.bf16.msra.mxu0 0
      %4279 = vmatprep.subr.bf16.mxu0 0
      %4280 = vmatpush1.bf16.msra.mxu0 0
      %4281 = vmatprep.subr.bf16.mxu0 0
      %4282 = vmatpush1.bf16.msra.mxu0 0
      %4283 = vmatprep.subr.bf16.mxu0 0
      %4284 = vmatpush1.bf16.msra.mxu0 0
      %4285 = vmatprep.subr.bf16.mxu0 0
      %4286 = vmatpush1.bf16.msra.mxu0 0
      %4287 = vmatprep.subr.bf16.mxu0 0
      %4288 = vmatpush1.bf16.msra.mxu0 0
      %4289 = vmatprep.subr.bf16.mxu0 0
      %4290 = vmatpush1.bf16.msra.mxu0 0
      %4291 = vmatprep.mubr.bf16.mxu0 0
      %4292 = vmatmul.mubr.bf16.gmra.mrb[0].mxu0 %v3016
      %v4293 = vpop.f32.mrb[0].mxu0
      %v4294 = vadd.f32 %v669, %v4293
      %v4295 = vpop.f32.mrb[0].mxu0
      %v4296 = vadd.f32 %v669, %v4295
      %v4297 = vpop.f32.mrb[0].mxu0
      %v4298 = vadd.f32 %v674, %v4297
      %v4299 = vpop.f32.mrb[0].mxu0
      %v4300 = vadd.f32 %v674, %v4299
      %4301 = vdwg.mxu0
      %4302 = vmatprep.subr.bf16.mxu0 %v2188
      %4303 = vmatpush1.bf16.msra.mxu0 %v2187
      %4304 = vmatprep.subr.bf16.mxu0 %v2285
      %4305 = vmatpush1.bf16.msra.mxu0 %v2284
      %4306 = vmatprep.subr.bf16.mxu0 %v2382
      %4307 = vmatpush1.bf16.msra.mxu0 %v2381
      %4308 = vmatprep.subr.bf16.mxu0 %v2479
      %4309 = vmatpush1.bf16.msra.mxu0 %v2478
      %4310 = vmatprep.subr.bf16.mxu0 %v3164
      %4311 = vmatpush1.bf16.msra.mxu0 %v3161
      %4312 = vmatprep.subr.bf16.mxu0 0
      %4313 = vmatpush1.bf16.msra.mxu0 0
      %4314 = vmatprep.subr.bf16.mxu0 0
      %4315 = vmatpush1.bf16.msra.mxu0 0
      %4316 = vmatprep.subr.bf16.mxu0 0
      %4317 = vmatpush1.bf16.msra.mxu0 0
      %4318 = vmatprep.subr.bf16.mxu0 0
      %4319 = vmatpush1.bf16.msra.mxu0 0
      %4320 = vmatprep.subr.bf16.mxu0 0
      %4321 = vmatpush1.bf16.msra.mxu0 0
      %4322 = vmatprep.subr.bf16.mxu0 0
      %4323 = vmatpush1.bf16.msra.mxu0 0
      %4324 = vmatprep.subr.bf16.mxu0 0
      %4325 = vmatpush1.bf16.msra.mxu0 0
      %4326 = vmatprep.subr.bf16.mxu0 0
      %4327 = vmatpush1.bf16.msra.mxu0 0
      %4328 = vmatprep.subr.bf16.mxu0 0
      %4329 = vmatpush1.bf16.msra.mxu0 0
      %4330 = vmatprep.subr.bf16.mxu0 0
      %4331 = vmatpush1.bf16.msra.mxu0 0
      %4332 = vmatprep.subr.bf16.mxu0 0
      %4333 = vmatpush1.bf16.msra.mxu0 0
      %4334 = vmatprep.mubr.bf16.mxu0 0
      %4335 = vmatmul.mubr.bf16.gmra.mrb[0].mxu0 %v3016
      %v4336 = vpop.f32.mrb[0].mxu0
      %v4337 = vadd.f32 %v669, %v4336
      %v4338 = vpop.f32.mrb[0].mxu0
      %v4339 = vadd.f32 %v669, %v4338
      %v4340 = vpop.f32.mrb[0].mxu0
      %v4341 = vadd.f32 %v674, %v4340
      %v4342 = vpop.f32.mrb[0].mxu0
      %v4343 = vadd.f32 %v674, %v4342
      %4344 = vdwg.mxu0
      %4345 = vmatprep.subr.bf16.mxu0 %v2190
      %4346 = vmatpush1.bf16.msra.mxu0 %v2189
      %4347 = vmatprep.subr.bf16.mxu0 %v2287
      %4348 = vmatpush1.bf16.msra.mxu0 %v2286
      %4349 = vmatprep.subr.bf16.mxu0 %v2384
      %4350 = vmatpush1.bf16.msra.mxu0 %v2383
      %4351 = vmatprep.subr.bf16.mxu0 %v2481
      %4352 = vmatpush1.bf16.msra.mxu0 %v2480
      %4353 = vmatprep.subr.bf16.mxu0 %v3170
      %4354 = vmatpush1.bf16.msra.mxu0 %v3167
      %4355 = vmatprep.subr.bf16.mxu0 0
      %4356 = vmatpush1.bf16.msra.mxu0 0
      %4357 = vmatprep.subr.bf16.mxu0 0
      %4358 = vmatpush1.bf16.msra.mxu0 0
      %4359 = vmatprep.subr.bf16.mxu0 0
      %4360 = vmatpush1.bf16.msra.mxu0 0
      %4361 = vmatprep.subr.bf16.mxu0 0
      %4362 = vmatpush1.bf16.msra.mxu0 0
      %4363 = vmatprep.subr.bf16.mxu0 0
      %4364 = vmatpush1.bf16.msra.mxu0 0
      %4365 = vmatprep.subr.bf16.mxu0 0
      %4366 = vmatpush1.bf16.msra.mxu0 0
      %4367 = vmatprep.subr.bf16.mxu0 0
      %4368 = vmatpush1.bf16.msra.mxu0 0
      %4369 = vmatprep.subr.bf16.mxu0 0
      %4370 = vmatpush1.bf16.msra.mxu0 0
      %4371 = vmatprep.subr.bf16.mxu0 0
      %4372 = vmatpush1.bf16.msra.mxu0 0
      %4373 = vmatprep.subr.bf16.mxu0 0
      %4374 = vmatpush1.bf16.msra.mxu0 0
      %4375 = vmatprep.subr.bf16.mxu0 0
      %4376 = vmatpush1.bf16.msra.mxu0 0
      %4377 = vmatprep.mubr.bf16.mxu0 0
      %4378 = vmatmul.mubr.bf16.gmra.mrb[0].mxu0 %v3016
      %v4379 = vpop.f32.mrb[0].mxu0
      %v4380 = vadd.f32 %v669, %v4379
      %v4381 = vpop.f32.mrb[0].mxu0
      %v4382 = vadd.f32 %v669, %v4381
      %v4383 = vpop.f32.mrb[0].mxu0
      %v4384 = vadd.f32 %v674, %v4383
      %v4385 = vpop.f32.mrb[0].mxu0
      %v4386 = vadd.f32 %v674, %v4385
      %4387 = vdwg.mxu0
      %4388 = vmatprep.subr.bf16.mxu0 %v2192
      %4389 = vmatpush1.bf16.msra.mxu0 %v2191
      %4390 = vmatprep.subr.bf16.mxu0 %v2289
      %4391 = vmatpush1.bf16.msra.mxu0 %v2288
      %4392 = vmatprep.subr.bf16.mxu0 %v2386
      %4393 = vmatpush1.bf16.msra.mxu0 %v2385
      %4394 = vmatprep.subr.bf16.mxu0 %v2483
      %4395 = vmatpush1.bf16.msra.mxu0 %v2482
      %4396 = vmatprep.subr.bf16.mxu0 %v3176
      %4397 = vmatpush1.bf16.msra.mxu0 %v3173
      %4398 = vmatprep.subr.bf16.mxu0 0
      %4399 = vmatpush1.bf16.msra.mxu0 0
      %4400 = vmatprep.subr.bf16.mxu0 0
      %4401 = vmatpush1.bf16.msra.mxu0 0
      %4402 = vmatprep.subr.bf16.mxu0 0
      %4403 = vmatpush1.bf16.msra.mxu0 0
      %4404 = vmatprep.subr.bf16.mxu0 0
      %4405 = vmatpush1.bf16.msra.mxu0 0
      %4406 = vmatprep.subr.bf16.mxu0 0
      %4407 = vmatpush1.bf16.msra.mxu0 0
      %4408 = vmatprep.subr.bf16.mxu0 0
      %4409 = vmatpush1.bf16.msra.mxu0 0
      %4410 = vmatprep.subr.bf16.mxu0 0
      %4411 = vmatpush1.bf16.msra.mxu0 0
      %4412 = vmatprep.subr.bf16.mxu0 0
      %4413 = vmatpush1.bf16.msra.mxu0 0
      %4414 = vmatprep.subr.bf16.mxu0 0
      %4415 = vmatpush1.bf16.msra.mxu0 0
      %4416 = vmatprep.subr.bf16.mxu0 0
      %4417 = vmatpush1.bf16.msra.mxu0 0
      %4418 = vmatprep.subr.bf16.mxu0 0
      %4419 = vmatpush1.bf16.msra.mxu0 0
      %4420 = vmatprep.mubr.bf16.mxu0 0
      %4421 = vmatmul.mubr.bf16.gmra.mrb[0].mxu0 %v3016
      %v4422 = vpop.f32.mrb[0].mxu0
      %v4423 = vadd.f32 %v669, %v4422
      %v4424 = vpop.f32.mrb[0].mxu0
      %v4425 = vadd.f32 %v669, %v4424
      %v4426 = vpop.f32.mrb[0].mxu0
      %v4427 = vadd.f32 %v674, %v4426
      %v4428 = vpop.f32.mrb[0].mxu0
      %v4429 = vadd.f32 %v674, %v4428
      %4430 = vdwg.mxu0
      %4431 = vmatprep.subr.bf16.mxu0 %v2194
      %4432 = vmatpush1.bf16.msra.mxu0 %v2193
      %4433 = vmatprep.subr.bf16.mxu0 %v2291
      %4434 = vmatpush1.bf16.msra.mxu0 %v2290
      %4435 = vmatprep.subr.bf16.mxu0 %v2388
      %4436 = vmatpush1.bf16.msra.mxu0 %v2387
      %4437 = vmatprep.subr.bf16.mxu0 %v2485
      %4438 = vmatpush1.bf16.msra.mxu0 %v2484
      %4439 = vmatprep.subr.bf16.mxu0 %v3182
      %4440 = vmatpush1.bf16.msra.mxu0 %v3179
      %4441 = vmatprep.subr.bf16.mxu0 0
      %4442 = vmatpush1.bf16.msra.mxu0 0
      %4443 = vmatprep.subr.bf16.mxu0 0
      %4444 = vmatpush1.bf16.msra.mxu0 0
      %4445 = vmatprep.subr.bf16.mxu0 0
      %4446 = vmatpush1.bf16.msra.mxu0 0
      %4447 = vmatprep.subr.bf16.mxu0 0
      %4448 = vmatpush1.bf16.msra.mxu0 0
      %4449 = vmatprep.subr.bf16.mxu0 0
      %4450 = vmatpush1.bf16.msra.mxu0 0
      %4451 = vmatprep.subr.bf16.mxu0 0
      %4452 = vmatpush1.bf16.msra.mxu0 0
      %4453 = vmatprep.subr.bf16.mxu0 0
      %4454 = vmatpush1.bf16.msra.mxu0 0
      %4455 = vmatprep.subr.bf16.mxu0 0
      %4456 = vmatpush1.bf16.msra.mxu0 0
      %4457 = vmatprep.subr.bf16.mxu0 0
      %4458 = vmatpush1.bf16.msra.mxu0 0
      %4459 = vmatprep.subr.bf16.mxu0 0
      %4460 = vmatpush1.bf16.msra.mxu0 0
      %4461 = vmatprep.subr.bf16.mxu0 0
      %4462 = vmatpush1.bf16.msra.mxu0 0
      %4463 = vmatprep.mubr.bf16.mxu0 0
      %4464 = vmatmul.mubr.bf16.gmra.mrb[0].mxu0 %v3016
      %v4465 = vpop.f32.mrb[0].mxu0
      %v4466 = vadd.f32 %v669, %v4465
      %v4467 = vpop.f32.mrb[0].mxu0
      %v4468 = vadd.f32 %v669, %v4467
      %v4469 = vpop.f32.mrb[0].mxu0
      %v4470 = vadd.f32 %v674, %v4469
      %v4471 = vpop.f32.mrb[0].mxu0
      %v4472 = vadd.f32 %v674, %v4471
      %4473 = vdwg.mxu0
      %4474 = vmatprep.subr.bf16.mxu0 %v2196
      %4475 = vmatpush1.bf16.msra.mxu0 %v2195
      %4476 = vmatprep.subr.bf16.mxu0 %v2293
      %4477 = vmatpush1.bf16.msra.mxu0 %v2292
      %4478 = vmatprep.subr.bf16.mxu0 %v2390
      %4479 = vmatpush1.bf16.msra.mxu0 %v2389
      %4480 = vmatprep.subr.bf16.mxu0 %v2487
      %4481 = vmatpush1.bf16.msra.mxu0 %v2486
      %4482 = vmatprep.subr.bf16.mxu0 %v3188
      %4483 = vmatpush1.bf16.msra.mxu0 %v3185
      %4484 = vmatprep.subr.bf16.mxu0 0
      %4485 = vmatpush1.bf16.msra.mxu0 0
      %4486 = vmatprep.subr.bf16.mxu0 0
      %4487 = vmatpush1.bf16.msra.mxu0 0
      %4488 = vmatprep.subr.bf16.mxu0 0
      %4489 = vmatpush1.bf16.msra.mxu0 0
      %4490 = vmatprep.subr.bf16.mxu0 0
      %4491 = vmatpush1.bf16.msra.mxu0 0
      %4492 = vmatprep.subr.bf16.mxu0 0
      %4493 = vmatpush1.bf16.msra.mxu0 0
      %4494 = vmatprep.subr.bf16.mxu0 0
      %4495 = vmatpush1.bf16.msra.mxu0 0
      %4496 = vmatprep.subr.bf16.mxu0 0
      %4497 = vmatpush1.bf16.msra.mxu0 0
      %4498 = vmatprep.subr.bf16.mxu0 0
      %4499 = vmatpush1.bf16.msra.mxu0 0
      %4500 = vmatprep.subr.bf16.mxu0 0
      %4501 = vmatpush1.bf16.msra.mxu0 0
      %4502 = vmatprep.subr.bf16.mxu0 0
      %4503 = vmatpush1.bf16.msra.mxu0 0
      %4504 = vmatprep.subr.bf16.mxu0 0
      %4505 = vmatpush1.bf16.msra.mxu0 0
      %4506 = vmatprep.mubr.bf16.mxu0 0
      %4507 = vmatmul.mubr.bf16.gmra.mrb[0].mxu0 %v3016
      %v4508 = vpop.f32.mrb[0].mxu0
      %v4509 = vadd.f32 %v669, %v4508
      %v4510 = vpop.f32.mrb[0].mxu0
      %v4511 = vadd.f32 %v669, %v4510
      %v4512 = vpop.f32.mrb[0].mxu0
      %v4513 = vadd.f32 %v674, %v4512
      %v4514 = vpop.f32.mrb[0].mxu0
      %v4515 = vadd.f32 %v674, %v4514
      %4516 = vdwg.mxu0
      %4517 = vmatprep.subr.bf16.mxu0 %v2198
      %4518 = vmatpush1.bf16.msra.mxu0 %v2197
      %4519 = vmatprep.subr.bf16.mxu0 %v2295
      %4520 = vmatpush1.bf16.msra.mxu0 %v2294
      %4521 = vmatprep.subr.bf16.mxu0 %v2392
      %4522 = vmatpush1.bf16.msra.mxu0 %v2391
      %4523 = vmatprep.subr.bf16.mxu0 %v2489
      %4524 = vmatpush1.bf16.msra.mxu0 %v2488
      %4525 = vmatprep.subr.bf16.mxu0 %v3194
      %4526 = vmatpush1.bf16.msra.mxu0 %v3191
      %4527 = vmatprep.subr.bf16.mxu0 0
      %4528 = vmatpush1.bf16.msra.mxu0 0
      %4529 = vmatprep.subr.bf16.mxu0 0
      %4530 = vmatpush1.bf16.msra.mxu0 0
      %4531 = vmatprep.subr.bf16.mxu0 0
      %4532 = vmatpush1.bf16.msra.mxu0 0
      %4533 = vmatprep.subr.bf16.mxu0 0
      %4534 = vmatpush1.bf16.msra.mxu0 0
      %4535 = vmatprep.subr.bf16.mxu0 0
      %4536 = vmatpush1.bf16.msra.mxu0 0
      %4537 = vmatprep.subr.bf16.mxu0 0
      %4538 = vmatpush1.bf16.msra.mxu0 0
      %4539 = vmatprep.subr.bf16.mxu0 0
      %4540 = vmatpush1.bf16.msra.mxu0 0
      %4541 = vmatprep.subr.bf16.mxu0 0
      %4542 = vmatpush1.bf16.msra.mxu0 0
      %4543 = vmatprep.subr.bf16.mxu0 0
      %4544 = vmatpush1.bf16.msra.mxu0 0
      %4545 = vmatprep.subr.bf16.mxu0 0
      %4546 = vmatpush1.bf16.msra.mxu0 0
      %4547 = vmatprep.subr.bf16.mxu0 0
      %4548 = vmatpush1.bf16.msra.mxu0 0
      %4549 = vmatprep.mubr.bf16.mxu0 0
      %4550 = vmatmul.mubr.bf16.gmra.mrb[0].mxu0 %v3016
      %v4551 = vpop.f32.mrb[0].mxu0
      %v4552 = vadd.f32 %v669, %v4551
      %v4553 = vpop.f32.mrb[0].mxu0
      %v4554 = vadd.f32 %v669, %v4553
      %v4555 = vpop.f32.mrb[0].mxu0
      %v4556 = vadd.f32 %v674, %v4555
      %v4557 = vpop.f32.mrb[0].mxu0
      %v4558 = vadd.f32 %v674, %v4557
      %4559 = vdwg.mxu0
      %4560 = vmatprep.subr.bf16.mxu0 %v2200
      %4561 = vmatpush1.bf16.msra.mxu0 %v2199
      %4562 = vmatprep.subr.bf16.mxu0 %v2297
      %4563 = vmatpush1.bf16.msra.mxu0 %v2296
      %4564 = vmatprep.subr.bf16.mxu0 %v2394
      %4565 = vmatpush1.bf16.msra.mxu0 %v2393
      %4566 = vmatprep.subr.bf16.mxu0 %v2491
      %4567 = vmatpush1.bf16.msra.mxu0 %v2490
      %4568 = vmatprep.subr.bf16.mxu0 %v3200
      %4569 = vmatpush1.bf16.msra.mxu0 %v3197
      %4570 = vmatprep.subr.bf16.mxu0 0
      %4571 = vmatpush1.bf16.msra.mxu0 0
      %4572 = vmatprep.subr.bf16.mxu0 0
      %4573 = vmatpush1.bf16.msra.mxu0 0
      %4574 = vmatprep.subr.bf16.mxu0 0
      %4575 = vmatpush1.bf16.msra.mxu0 0
      %4576 = vmatprep.subr.bf16.mxu0 0
      %4577 = vmatpush1.bf16.msra.mxu0 0
      %4578 = vmatprep.subr.bf16.mxu0 0
      %4579 = vmatpush1.bf16.msra.mxu0 0
      %4580 = vmatprep.subr.bf16.mxu0 0
      %4581 = vmatpush1.bf16.msra.mxu0 0
      %4582 = vmatprep.subr.bf16.mxu0 0
      %4583 = vmatpush1.bf16.msra.mxu0 0
      %4584 = vmatprep.subr.bf16.mxu0 0
      %4585 = vmatpush1.bf16.msra.mxu0 0
      %4586 = vmatprep.subr.bf16.mxu0 0
      %4587 = vmatpush1.bf16.msra.mxu0 0
      %4588 = vmatprep.subr.bf16.mxu0 0
      %4589 = vmatpush1.bf16.msra.mxu0 0
      %4590 = vmatprep.subr.bf16.mxu0 0
      %4591 = vmatpush1.bf16.msra.mxu0 0
      %4592 = vmatprep.mubr.bf16.mxu0 0
      %4593 = vmatmul.mubr.bf16.gmra.mrb[0].mxu0 %v3016
      %v4594 = vpop.f32.mrb[0].mxu0
      %v4595 = vadd.f32 %v669, %v4594
      %v4596 = vpop.f32.mrb[0].mxu0
      %v4597 = vadd.f32 %v669, %v4596
      %v4598 = vpop.f32.mrb[0].mxu0
      %v4599 = vadd.f32 %v674, %v4598
      %v4600 = vpop.f32.mrb[0].mxu0
      %v4601 = vadd.f32 %v674, %v4600
      %4602 = vdwg.mxu0
      %4603 = vmatprep.subr.bf16.mxu0 %v2202
      %4604 = vmatpush1.bf16.msra.mxu0 %v2201
      %4605 = vmatprep.subr.bf16.mxu0 %v2299
      %4606 = vmatpush1.bf16.msra.mxu0 %v2298
      %4607 = vmatprep.subr.bf16.mxu0 %v2396
      %4608 = vmatpush1.bf16.msra.mxu0 %v2395
      %4609 = vmatprep.subr.bf16.mxu0 %v2493
      %4610 = vmatpush1.bf16.msra.mxu0 %v2492
      %4611 = vmatprep.subr.bf16.mxu0 %v3206
      %4612 = vmatpush1.bf16.msra.mxu0 %v3203
      %4613 = vmatprep.subr.bf16.mxu0 0
      %4614 = vmatpush1.bf16.msra.mxu0 0
      %4615 = vmatprep.subr.bf16.mxu0 0
      %4616 = vmatpush1.bf16.msra.mxu0 0
      %4617 = vmatprep.subr.bf16.mxu0 0
      %4618 = vmatpush1.bf16.msra.mxu0 0
      %4619 = vmatprep.subr.bf16.mxu0 0
      %4620 = vmatpush1.bf16.msra.mxu0 0
      %4621 = vmatprep.subr.bf16.mxu0 0
      %4622 = vmatpush1.bf16.msra.mxu0 0
      %4623 = vmatprep.subr.bf16.mxu0 0
      %4624 = vmatpush1.bf16.msra.mxu0 0
      %4625 = vmatprep.subr.bf16.mxu0 0
      %4626 = vmatpush1.bf16.msra.mxu0 0
      %4627 = vmatprep.subr.bf16.mxu0 0
      %4628 = vmatpush1.bf16.msra.mxu0 0
      %4629 = vmatprep.subr.bf16.mxu0 0
      %4630 = vmatpush1.bf16.msra.mxu0 0
      %4631 = vmatprep.subr.bf16.mxu0 0
      %4632 = vmatpush1.bf16.msra.mxu0 0
      %4633 = vmatprep.subr.bf16.mxu0 0
      %4634 = vmatpush1.bf16.msra.mxu0 0
      %4635 = vmatprep.mubr.bf16.mxu0 0
      %4636 = vmatmul.mubr.bf16.gmra.mrb[0].mxu0 %v3016
      %v4637 = vpop.f32.mrb[0].mxu0
      %v4638 = vadd.f32 %v669, %v4637
      %v4639 = vpop.f32.mrb[0].mxu0
      %v4640 = vadd.f32 %v669, %v4639
      %v4641 = vpop.f32.mrb[0].mxu0
      %v4642 = vadd.f32 %v674, %v4641
      %v4643 = vpop.f32.mrb[0].mxu0
      %v4644 = vadd.f32 %v674, %v4643
      %4645 = vdwg.mxu0
      %4646 = vmatprep.subr.bf16.mxu0 %v2204
      %4647 = vmatpush1.bf16.msra.mxu0 %v2203
      %4648 = vmatprep.subr.bf16.mxu0 %v2301
      %4649 = vmatpush1.bf16.msra.mxu0 %v2300
      %4650 = vmatprep.subr.bf16.mxu0 %v2398
      %4651 = vmatpush1.bf16.msra.mxu0 %v2397
      %4652 = vmatprep.subr.bf16.mxu0 %v2495
      %4653 = vmatpush1.bf16.msra.mxu0 %v2494
      %4654 = vmatprep.subr.bf16.mxu0 %v3212
      %4655 = vmatpush1.bf16.msra.mxu0 %v3209
      %4656 = vmatprep.subr.bf16.mxu0 0
      %4657 = vmatpush1.bf16.msra.mxu0 0
      %4658 = vmatprep.subr.bf16.mxu0 0
      %4659 = vmatpush1.bf16.msra.mxu0 0
      %4660 = vmatprep.subr.bf16.mxu0 0
      %4661 = vmatpush1.bf16.msra.mxu0 0
      %4662 = vmatprep.subr.bf16.mxu0 0
      %4663 = vmatpush1.bf16.msra.mxu0 0
      %4664 = vmatprep.subr.bf16.mxu0 0
      %4665 = vmatpush1.bf16.msra.mxu0 0
      %4666 = vmatprep.subr.bf16.mxu0 0
      %4667 = vmatpush1.bf16.msra.mxu0 0
      %4668 = vmatprep.subr.bf16.mxu0 0
      %4669 = vmatpush1.bf16.msra.mxu0 0
      %4670 = vmatprep.subr.bf16.mxu0 0
      %4671 = vmatpush1.bf16.msra.mxu0 0
      %4672 = vmatprep.subr.bf16.mxu0 0
      %4673 = vmatpush1.bf16.msra.mxu0 0
      %4674 = vmatprep.subr.bf16.mxu0 0
      %4675 = vmatpush1.bf16.msra.mxu0 0
      %4676 = vmatprep.subr.bf16.mxu0 0
      %4677 = vmatpush1.bf16.msra.mxu0 0
      %4678 = vmatprep.mubr.bf16.mxu0 0
      %4679 = vmatmul.mubr.bf16.gmra.mrb[0].mxu0 %v3016
      %v4680 = vpop.f32.mrb[0].mxu0
      %v4681 = vadd.f32 %v669, %v4680
      %v4682 = vpop.f32.mrb[0].mxu0
      %v4683 = vadd.f32 %v669, %v4682
      %v4684 = vpop.f32.mrb[0].mxu0
      %v4685 = vadd.f32 %v674, %v4684
      %v4686 = vpop.f32.mrb[0].mxu0
      %v4687 = vadd.f32 %v674, %v4686
      %4688 = vdwg.mxu0
      %4689 = vmatprep.subr.bf16.mxu0 %v2206
      %4690 = vmatpush1.bf16.msra.mxu0 %v2205
      %4691 = vmatprep.subr.bf16.mxu0 %v2303
      %4692 = vmatpush1.bf16.msra.mxu0 %v2302
      %4693 = vmatprep.subr.bf16.mxu0 %v2400
      %4694 = vmatpush1.bf16.msra.mxu0 %v2399
      %4695 = vmatprep.subr.bf16.mxu0 %v2497
      %4696 = vmatpush1.bf16.msra.mxu0 %v2496
      %4697 = vmatprep.subr.bf16.mxu0 %v3218
      %4698 = vmatpush1.bf16.msra.mxu0 %v3215
      %4699 = vmatprep.subr.bf16.mxu0 0
      %4700 = vmatpush1.bf16.msra.mxu0 0
      %4701 = vmatprep.subr.bf16.mxu0 0
      %4702 = vmatpush1.bf16.msra.mxu0 0
      %4703 = vmatprep.subr.bf16.mxu0 0
      %4704 = vmatpush1.bf16.msra.mxu0 0
      %4705 = vmatprep.subr.bf16.mxu0 0
      %4706 = vmatpush1.bf16.msra.mxu0 0
      %4707 = vmatprep.subr.bf16.mxu0 0
      %4708 = vmatpush1.bf16.msra.mxu0 0
      %4709 = vmatprep.subr.bf16.mxu0 0
      %4710 = vmatpush1.bf16.msra.mxu0 0
      %4711 = vmatprep.subr.bf16.mxu0 0
      %4712 = vmatpush1.bf16.msra.mxu0 0
      %4713 = vmatprep.subr.bf16.mxu0 0
      %4714 = vmatpush1.bf16.msra.mxu0 0
      %4715 = vmatprep.subr.bf16.mxu0 0
      %4716 = vmatpush1.bf16.msra.mxu0 0
      %4717 = vmatprep.subr.bf16.mxu0 0
      %4718 = vmatpush1.bf16.msra.mxu0 0
      %4719 = vmatprep.subr.bf16.mxu0 0
      %4720 = vmatpush1.bf16.msra.mxu0 0
      %4721 = vmatprep.mubr.bf16.mxu0 0
      %4722 = vmatmul.mubr.bf16.gmra.mrb[0].mxu0 %v3016
      %v4723 = vpop.f32.mrb[0].mxu0
      %v4724 = vadd.f32 %v669, %v4723
      %v4725 = vpop.f32.mrb[0].mxu0
      %v4726 = vadd.f32 %v669, %v4725
      %v4727 = vpop.f32.mrb[0].mxu0
      %v4728 = vadd.f32 %v674, %v4727
      %v4729 = vpop.f32.mrb[0].mxu0
      %v4730 = vadd.f32 %v674, %v4729
      %4731 = vdwg.mxu0
      %4732 = vmatprep.subr.bf16.mxu0 %v2208
      %4733 = vmatpush1.bf16.msra.mxu0 %v2207
      %4734 = vmatprep.subr.bf16.mxu0 %v2305
      %4735 = vmatpush1.bf16.msra.mxu0 %v2304
      %4736 = vmatprep.subr.bf16.mxu0 %v2402
      %4737 = vmatpush1.bf16.msra.mxu0 %v2401
      %4738 = vmatprep.subr.bf16.mxu0 %v2499
      %4739 = vmatpush1.bf16.msra.mxu0 %v2498
      %4740 = vmatprep.subr.bf16.mxu0 %v3224
      %4741 = vmatpush1.bf16.msra.mxu0 %v3221
      %4742 = vmatprep.subr.bf16.mxu0 0
      %4743 = vmatpush1.bf16.msra.mxu0 0
      %4744 = vmatprep.subr.bf16.mxu0 0
      %4745 = vmatpush1.bf16.msra.mxu0 0
      %4746 = vmatprep.subr.bf16.mxu0 0
      %4747 = vmatpush1.bf16.msra.mxu0 0
      %4748 = vmatprep.subr.bf16.mxu0 0
      %4749 = vmatpush1.bf16.msra.mxu0 0
      %4750 = vmatprep.subr.bf16.mxu0 0
      %4751 = vmatpush1.bf16.msra.mxu0 0
      %4752 = vmatprep.subr.bf16.mxu0 0
      %4753 = vmatpush1.bf16.msra.mxu0 0
      %4754 = vmatprep.subr.bf16.mxu0 0
      %4755 = vmatpush1.bf16.msra.mxu0 0
      %4756 = vmatprep.subr.bf16.mxu0 0
      %4757 = vmatpush1.bf16.msra.mxu0 0
      %4758 = vmatprep.subr.bf16.mxu0 0
      %4759 = vmatpush1.bf16.msra.mxu0 0
      %4760 = vmatprep.subr.bf16.mxu0 0
      %4761 = vmatpush1.bf16.msra.mxu0 0
      %4762 = vmatprep.subr.bf16.mxu0 0
      %4763 = vmatpush1.bf16.msra.mxu0 0
      %4764 = vmatprep.mubr.bf16.mxu0 0
      %4765 = vmatmul.mubr.bf16.gmra.mrb[0].mxu0 %v3016
      %v4766 = vpop.f32.mrb[0].mxu0
      %v4767 = vadd.f32 %v669, %v4766
      %v4768 = vpop.f32.mrb[0].mxu0
      %v4769 = vadd.f32 %v669, %v4768
      %v4770 = vpop.f32.mrb[0].mxu0
      %v4771 = vadd.f32 %v674, %v4770
      %v4772 = vpop.f32.mrb[0].mxu0
      %v4773 = vadd.f32 %v674, %v4772
      %4774 = vdwg.mxu0
      %4775 = vmatprep.subr.bf16.mxu0 %v2210
      %4776 = vmatpush1.bf16.msra.mxu0 %v2209
      %4777 = vmatprep.subr.bf16.mxu0 %v2307
      %4778 = vmatpush1.bf16.msra.mxu0 %v2306
      %4779 = vmatprep.subr.bf16.mxu0 %v2404
      %4780 = vmatpush1.bf16.msra.mxu0 %v2403
      %4781 = vmatprep.subr.bf16.mxu0 %v2501
      %4782 = vmatpush1.bf16.msra.mxu0 %v2500
      %4783 = vmatprep.subr.bf16.mxu0 %v3230
      %4784 = vmatpush1.bf16.msra.mxu0 %v3227
      %4785 = vmatprep.subr.bf16.mxu0 0
      %4786 = vmatpush1.bf16.msra.mxu0 0
      %4787 = vmatprep.subr.bf16.mxu0 0
      %4788 = vmatpush1.bf16.msra.mxu0 0
      %4789 = vmatprep.subr.bf16.mxu0 0
      %4790 = vmatpush1.bf16.msra.mxu0 0
      %4791 = vmatprep.subr.bf16.mxu0 0
      %4792 = vmatpush1.bf16.msra.mxu0 0
      %4793 = vmatprep.subr.bf16.mxu0 0
      %4794 = vmatpush1.bf16.msra.mxu0 0
      %4795 = vmatprep.subr.bf16.mxu0 0
      %4796 = vmatpush1.bf16.msra.mxu0 0
      %4797 = vmatprep.subr.bf16.mxu0 0
      %4798 = vmatpush1.bf16.msra.mxu0 0
      %4799 = vmatprep.subr.bf16.mxu0 0
      %4800 = vmatpush1.bf16.msra.mxu0 0
      %4801 = vmatprep.subr.bf16.mxu0 0
      %4802 = vmatpush1.bf16.msra.mxu0 0
      %4803 = vmatprep.subr.bf16.mxu0 0
      %4804 = vmatpush1.bf16.msra.mxu0 0
      %4805 = vmatprep.subr.bf16.mxu0 0
      %4806 = vmatpush1.bf16.msra.mxu0 0
      %4807 = vmatprep.mubr.bf16.mxu0 0
      %4808 = vmatmul.mubr.bf16.gmra.mrb[0].mxu0 %v3016
      %v4809 = vpop.f32.mrb[0].mxu0
      %v4810 = vadd.f32 %v669, %v4809
      %v4811 = vpop.f32.mrb[0].mxu0
      %v4812 = vadd.f32 %v669, %v4811
      %v4813 = vpop.f32.mrb[0].mxu0
      %v4814 = vadd.f32 %v674, %v4813
      %v4815 = vpop.f32.mrb[0].mxu0
      %v4816 = vadd.f32 %v674, %v4815
      %4817 = vdwg.mxu0
      %4818 = vmatprep.subr.bf16.mxu0 %v2212
      %4819 = vmatpush1.bf16.msra.mxu0 %v2211
      %4820 = vmatprep.subr.bf16.mxu0 %v2309
      %4821 = vmatpush1.bf16.msra.mxu0 %v2308
      %4822 = vmatprep.subr.bf16.mxu0 %v2406
      %4823 = vmatpush1.bf16.msra.mxu0 %v2405
      %4824 = vmatprep.subr.bf16.mxu0 %v2503
      %4825 = vmatpush1.bf16.msra.mxu0 %v2502
      %4826 = vmatprep.subr.bf16.mxu0 %v3236
      %4827 = vmatpush1.bf16.msra.mxu0 %v3233
      %4828 = vmatprep.subr.bf16.mxu0 0
      %4829 = vmatpush1.bf16.msra.mxu0 0
      %4830 = vmatprep.subr.bf16.mxu0 0
      %4831 = vmatpush1.bf16.msra.mxu0 0
      %4832 = vmatprep.subr.bf16.mxu0 0
      %4833 = vmatpush1.bf16.msra.mxu0 0
      %4834 = vmatprep.subr.bf16.mxu0 0
      %4835 = vmatpush1.bf16.msra.mxu0 0
      %4836 = vmatprep.subr.bf16.mxu0 0
      %4837 = vmatpush1.bf16.msra.mxu0 0
      %4838 = vmatprep.subr.bf16.mxu0 0
      %4839 = vmatpush1.bf16.msra.mxu0 0
      %4840 = vmatprep.subr.bf16.mxu0 0
      %4841 = vmatpush1.bf16.msra.mxu0 0
      %4842 = vmatprep.subr.bf16.mxu0 0
      %4843 = vmatpush1.bf16.msra.mxu0 0
      %4844 = vmatprep.subr.bf16.mxu0 0
      %4845 = vmatpush1.bf16.msra.mxu0 0
      %4846 = vmatprep.subr.bf16.mxu0 0
      %4847 = vmatpush1.bf16.msra.mxu0 0
      %4848 = vmatprep.subr.bf16.mxu0 0
      %4849 = vmatpush1.bf16.msra.mxu0 0
      %4850 = vmatprep.mubr.bf16.mxu0 0
      %4851 = vmatmul.mubr.bf16.gmra.mrb[0].mxu0 %v3016
      %v4852 = vpop.f32.mrb[0].mxu0
      %v4853 = vadd.f32 %v669, %v4852
      %v4854 = vpop.f32.mrb[0].mxu0
      %v4855 = vadd.f32 %v669, %v4854
      %v4856 = vpop.f32.mrb[0].mxu0
      %v4857 = vadd.f32 %v674, %v4856
      %v4858 = vpop.f32.mrb[0].mxu0
      %v4859 = vadd.f32 %v674, %v4858
      %4860 = vdwg.mxu0
      %4861 = vmatprep.subr.bf16.mxu0 %v2214
      %4862 = vmatpush1.bf16.msra.mxu0 %v2213
      %4863 = vmatprep.subr.bf16.mxu0 %v2311
      %4864 = vmatpush1.bf16.msra.mxu0 %v2310
      %4865 = vmatprep.subr.bf16.mxu0 %v2408
      %4866 = vmatpush1.bf16.msra.mxu0 %v2407
      %4867 = vmatprep.subr.bf16.mxu0 %v2505
      %4868 = vmatpush1.bf16.msra.mxu0 %v2504
      %4869 = vmatprep.subr.bf16.mxu0 %v3242
      %4870 = vmatpush1.bf16.msra.mxu0 %v3239
      %4871 = vmatprep.subr.bf16.mxu0 0
      %4872 = vmatpush1.bf16.msra.mxu0 0
      %4873 = vmatprep.subr.bf16.mxu0 0
      %4874 = vmatpush1.bf16.msra.mxu0 0
      %4875 = vmatprep.subr.bf16.mxu0 0
      %4876 = vmatpush1.bf16.msra.mxu0 0
      %4877 = vmatprep.subr.bf16.mxu0 0
      %4878 = vmatpush1.bf16.msra.mxu0 0
      %4879 = vmatprep.subr.bf16.mxu0 0
      %4880 = vmatpush1.bf16.msra.mxu0 0
      %4881 = vmatprep.subr.bf16.mxu0 0
      %4882 = vmatpush1.bf16.msra.mxu0 0
      %4883 = vmatprep.subr.bf16.mxu0 0
      %4884 = vmatpush1.bf16.msra.mxu0 0
      %4885 = vmatprep.subr.bf16.mxu0 0
      %4886 = vmatpush1.bf16.msra.mxu0 0
      %4887 = vmatprep.subr.bf16.mxu0 0
      %4888 = vmatpush1.bf16.msra.mxu0 0
      %4889 = vmatprep.subr.bf16.mxu0 0
      %4890 = vmatpush1.bf16.msra.mxu0 0
      %4891 = vmatprep.subr.bf16.mxu0 0
      %4892 = vmatpush1.bf16.msra.mxu0 0
      %4893 = vmatprep.mubr.bf16.mxu0 0
      %4894 = vmatmul.mubr.bf16.gmra.mrb[0].mxu0 %v3016
      %v4895 = vpop.f32.mrb[0].mxu0
      %v4896 = vadd.f32 %v669, %v4895
      %v4897 = vpop.f32.mrb[0].mxu0
      %v4898 = vadd.f32 %v669, %v4897
      %v4899 = vpop.f32.mrb[0].mxu0
      %v4900 = vadd.f32 %v674, %v4899
      %v4901 = vpop.f32.mrb[0].mxu0
      %v4902 = vadd.f32 %v674, %v4901
      %4903 = vdwg.mxu0
      %4904 = vmatprep.subr.bf16.mxu0 %v2216
      %4905 = vmatpush1.bf16.msra.mxu0 %v2215
      %4906 = vmatprep.subr.bf16.mxu0 %v2313
      %4907 = vmatpush1.bf16.msra.mxu0 %v2312
      %4908 = vmatprep.subr.bf16.mxu0 %v2410
      %4909 = vmatpush1.bf16.msra.mxu0 %v2409
      %4910 = vmatprep.subr.bf16.mxu0 %v2507
      %4911 = vmatpush1.bf16.msra.mxu0 %v2506
      %4912 = vmatprep.subr.bf16.mxu0 %v3248
      %4913 = vmatpush1.bf16.msra.mxu0 %v3245
      %4914 = vmatprep.subr.bf16.mxu0 0
      %4915 = vmatpush1.bf16.msra.mxu0 0
      %4916 = vmatprep.subr.bf16.mxu0 0
      %4917 = vmatpush1.bf16.msra.mxu0 0
      %4918 = vmatprep.subr.bf16.mxu0 0
      %4919 = vmatpush1.bf16.msra.mxu0 0
      %4920 = vmatprep.subr.bf16.mxu0 0
      %4921 = vmatpush1.bf16.msra.mxu0 0
      %4922 = vmatprep.subr.bf16.mxu0 0
      %4923 = vmatpush1.bf16.msra.mxu0 0
      %4924 = vmatprep.subr.bf16.mxu0 0
      %4925 = vmatpush1.bf16.msra.mxu0 0
      %4926 = vmatprep.subr.bf16.mxu0 0
      %4927 = vmatpush1.bf16.msra.mxu0 0
      %4928 = vmatprep.subr.bf16.mxu0 0
      %4929 = vmatpush1.bf16.msra.mxu0 0
      %4930 = vmatprep.subr.bf16.mxu0 0
      %4931 = vmatpush1.bf16.msra.mxu0 0
      %4932 = vmatprep.subr.bf16.mxu0 0
      %4933 = vmatpush1.bf16.msra.mxu0 0
      %4934 = vmatprep.subr.bf16.mxu0 0
      %4935 = vmatpush1.bf16.msra.mxu0 0
      %4936 = vmatprep.mubr.bf16.mxu0 0
      %4937 = vmatmul.mubr.bf16.gmra.mrb[0].mxu0 %v3016
      %v4938 = vpop.f32.mrb[0].mxu0
      %v4939 = vadd.f32 %v669, %v4938
      %v4940 = vpop.f32.mrb[0].mxu0
      %v4941 = vadd.f32 %v669, %v4940
      %v4942 = vpop.f32.mrb[0].mxu0
      %v4943 = vadd.f32 %v674, %v4942
      %v4944 = vpop.f32.mrb[0].mxu0
      %v4945 = vadd.f32 %v674, %v4944
      %4946 = vdwg.mxu0
      %4947 = vmatprep.subr.bf16.mxu0 %v2218
      %4948 = vmatpush1.bf16.msra.mxu0 %v2217
      %4949 = vmatprep.subr.bf16.mxu0 %v2315
      %4950 = vmatpush1.bf16.msra.mxu0 %v2314
      %4951 = vmatprep.subr.bf16.mxu0 %v2412
      %4952 = vmatpush1.bf16.msra.mxu0 %v2411
      %4953 = vmatprep.subr.bf16.mxu0 %v2509
      %4954 = vmatpush1.bf16.msra.mxu0 %v2508
      %4955 = vmatprep.subr.bf16.mxu0 %v3254
      %4956 = vmatpush1.bf16.msra.mxu0 %v3251
      %4957 = vmatprep.subr.bf16.mxu0 0
      %4958 = vmatpush1.bf16.msra.mxu0 0
      %4959 = vmatprep.subr.bf16.mxu0 0
      %4960 = vmatpush1.bf16.msra.mxu0 0
      %4961 = vmatprep.subr.bf16.mxu0 0
      %4962 = vmatpush1.bf16.msra.mxu0 0
      %4963 = vmatprep.subr.bf16.mxu0 0
      %4964 = vmatpush1.bf16.msra.mxu0 0
      %4965 = vmatprep.subr.bf16.mxu0 0
      %4966 = vmatpush1.bf16.msra.mxu0 0
      %4967 = vmatprep.subr.bf16.mxu0 0
      %4968 = vmatpush1.bf16.msra.mxu0 0
      %4969 = vmatprep.subr.bf16.mxu0 0
      %4970 = vmatpush1.bf16.msra.mxu0 0
      %4971 = vmatprep.subr.bf16.mxu0 0
      %4972 = vmatpush1.bf16.msra.mxu0 0
      %4973 = vmatprep.subr.bf16.mxu0 0
      %4974 = vmatpush1.bf16.msra.mxu0 0
      %4975 = vmatprep.subr.bf16.mxu0 0
      %4976 = vmatpush1.bf16.msra.mxu0 0
      %4977 = vmatprep.subr.bf16.mxu0 0
      %4978 = vmatpush1.bf16.msra.mxu0 0
      %4979 = vmatprep.mubr.bf16.mxu0 0
      %4980 = vmatmul.mubr.bf16.gmra.mrb[0].mxu0 %v3016
      %v4981 = vpop.f32.mrb[0].mxu0
      %v4982 = vadd.f32 %v669, %v4981
      %v4983 = vpop.f32.mrb[0].mxu0
      %v4984 = vadd.f32 %v669, %v4983
      %v4985 = vpop.f32.mrb[0].mxu0
      %v4986 = vadd.f32 %v674, %v4985
      %v4987 = vpop.f32.mrb[0].mxu0
      %v4988 = vadd.f32 %v674, %v4987
      %4989 = vdwg.mxu0
      %4990 = vmatprep.subr.bf16.mxu0 %v2220
      %4991 = vmatpush1.bf16.msra.mxu0 %v2219
      %4992 = vmatprep.subr.bf16.mxu0 %v2317
      %4993 = vmatpush1.bf16.msra.mxu0 %v2316
      %4994 = vmatprep.subr.bf16.mxu0 %v2414
      %4995 = vmatpush1.bf16.msra.mxu0 %v2413
      %4996 = vmatprep.subr.bf16.mxu0 %v2511
      %4997 = vmatpush1.bf16.msra.mxu0 %v2510
      %4998 = vmatprep.subr.bf16.mxu0 %v3260
      %4999 = vmatpush1.bf16.msra.mxu0 %v3257
      %5000 = vmatprep.subr.bf16.mxu0 0
      %5001 = vmatpush1.bf16.msra.mxu0 0
      %5002 = vmatprep.subr.bf16.mxu0 0
      %5003 = vmatpush1.bf16.msra.mxu0 0
      %5004 = vmatprep.subr.bf16.mxu0 0
      %5005 = vmatpush1.bf16.msra.mxu0 0
      %5006 = vmatprep.subr.bf16.mxu0 0
      %5007 = vmatpush1.bf16.msra.mxu0 0
      %5008 = vmatprep.subr.bf16.mxu0 0
      %5009 = vmatpush1.bf16.msra.mxu0 0
      %5010 = vmatprep.subr.bf16.mxu0 0
      %5011 = vmatpush1.bf16.msra.mxu0 0
      %5012 = vmatprep.subr.bf16.mxu0 0
      %5013 = vmatpush1.bf16.msra.mxu0 0
      %5014 = vmatprep.subr.bf16.mxu0 0
      %5015 = vmatpush1.bf16.msra.mxu0 0
      %5016 = vmatprep.subr.bf16.mxu0 0
      %5017 = vmatpush1.bf16.msra.mxu0 0
      %5018 = vmatprep.subr.bf16.mxu0 0
      %5019 = vmatpush1.bf16.msra.mxu0 0
      %5020 = vmatprep.subr.bf16.mxu0 0
      %5021 = vmatpush1.bf16.msra.mxu0 0
      %5022 = vmatprep.mubr.bf16.mxu0 0
      %5023 = vmatmul.mubr.bf16.gmra.mrb[0].mxu0 %v3016
      %v5024 = vpop.f32.mrb[0].mxu0
      %v5025 = vadd.f32 %v669, %v5024
      %v5026 = vpop.f32.mrb[0].mxu0
      %v5027 = vadd.f32 %v669, %v5026
      %v5028 = vpop.f32.mrb[0].mxu0
      %v5029 = vadd.f32 %v674, %v5028
      %v5030 = vpop.f32.mrb[0].mxu0
      %v5031 = vadd.f32 %v674, %v5030
      %5032 = vdwg.mxu0
      %5033 = vmatprep.subr.bf16.mxu0 %v2222
      %5034 = vmatpush1.bf16.msra.mxu0 %v2221
      %5035 = vmatprep.subr.bf16.mxu0 %v2319
      %5036 = vmatpush1.bf16.msra.mxu0 %v2318
      %5037 = vmatprep.subr.bf16.mxu0 %v2416
      %5038 = vmatpush1.bf16.msra.mxu0 %v2415
      %5039 = vmatprep.subr.bf16.mxu0 %v2513
      %5040 = vmatpush1.bf16.msra.mxu0 %v2512
      %5041 = vmatprep.subr.bf16.mxu0 %v3266
      %5042 = vmatpush1.bf16.msra.mxu0 %v3263
      %5043 = vmatprep.subr.bf16.mxu0 0
      %5044 = vmatpush1.bf16.msra.mxu0 0
      %5045 = vmatprep.subr.bf16.mxu0 0
      %5046 = vmatpush1.bf16.msra.mxu0 0
      %5047 = vmatprep.subr.bf16.mxu0 0
      %5048 = vmatpush1.bf16.msra.mxu0 0
      %5049 = vmatprep.subr.bf16.mxu0 0
      %5050 = vmatpush1.bf16.msra.mxu0 0
      %5051 = vmatprep.subr.bf16.mxu0 0
      %5052 = vmatpush1.bf16.msra.mxu0 0
      %5053 = vmatprep.subr.bf16.mxu0 0
      %5054 = vmatpush1.bf16.msra.mxu0 0
      %5055 = vmatprep.subr.bf16.mxu0 0
      %5056 = vmatpush1.bf16.msra.mxu0 0
      %5057 = vmatprep.subr.bf16.mxu0 0
      %5058 = vmatpush1.bf16.msra.mxu0 0
      %5059 = vmatprep.subr.bf16.mxu0 0
      %5060 = vmatpush1.bf16.msra.mxu0 0
      %5061 = vmatprep.subr.bf16.mxu0 0
      %5062 = vmatpush1.bf16.msra.mxu0 0
      %5063 = vmatprep.subr.bf16.mxu0 0
      %5064 = vmatpush1.bf16.msra.mxu0 0
      %5065 = vmatprep.mubr.bf16.mxu0 0
      %5066 = vmatmul.mubr.bf16.gmra.mrb[0].mxu0 %v3016
      %v5067 = vpop.f32.mrb[0].mxu0
      %v5068 = vadd.f32 %v669, %v5067
      %v5069 = vpop.f32.mrb[0].mxu0
      %v5070 = vadd.f32 %v669, %v5069
      %v5071 = vpop.f32.mrb[0].mxu0
      %v5072 = vadd.f32 %v674, %v5071
      %v5073 = vpop.f32.mrb[0].mxu0
      %v5074 = vadd.f32 %v674, %v5073
      %5075 = vdwg.mxu0
      %5076 = vmatprep.subr.bf16.mxu0 %v2224
      %5077 = vmatpush1.bf16.msra.mxu0 %v2223
      %5078 = vmatprep.subr.bf16.mxu0 %v2321
      %5079 = vmatpush1.bf16.msra.mxu0 %v2320
      %5080 = vmatprep.subr.bf16.mxu0 %v2418
      %5081 = vmatpush1.bf16.msra.mxu0 %v2417
      %5082 = vmatprep.subr.bf16.mxu0 %v2515
      %5083 = vmatpush1.bf16.msra.mxu0 %v2514
      %5084 = vmatprep.subr.bf16.mxu0 %v3272
      %5085 = vmatpush1.bf16.msra.mxu0 %v3269
      %5086 = vmatprep.subr.bf16.mxu0 0
      %5087 = vmatpush1.bf16.msra.mxu0 0
      %5088 = vmatprep.subr.bf16.mxu0 0
      %5089 = vmatpush1.bf16.msra.mxu0 0
      %5090 = vmatprep.subr.bf16.mxu0 0
      %5091 = vmatpush1.bf16.msra.mxu0 0
      %5092 = vmatprep.subr.bf16.mxu0 0
      %5093 = vmatpush1.bf16.msra.mxu0 0
      %5094 = vmatprep.subr.bf16.mxu0 0
      %5095 = vmatpush1.bf16.msra.mxu0 0
      %5096 = vmatprep.subr.bf16.mxu0 0
      %5097 = vmatpush1.bf16.msra.mxu0 0
      %5098 = vmatprep.subr.bf16.mxu0 0
      %5099 = vmatpush1.bf16.msra.mxu0 0
      %5100 = vmatprep.subr.bf16.mxu0 0
      %5101 = vmatpush1.bf16.msra.mxu0 0
      %5102 = vmatprep.subr.bf16.mxu0 0
      %5103 = vmatpush1.bf16.msra.mxu0 0
      %5104 = vmatprep.subr.bf16.mxu0 0
      %5105 = vmatpush1.bf16.msra.mxu0 0
      %5106 = vmatprep.subr.bf16.mxu0 0
      %5107 = vmatpush1.bf16.msra.mxu0 0
      %5108 = vmatprep.mubr.bf16.mxu0 0
      %5109 = vmatmul.mubr.bf16.gmra.mrb[0].mxu0 %v3016
      %v5110 = vpop.f32.mrb[0].mxu0
      %v5111 = vadd.f32 %v669, %v5110
      %v5112 = vpop.f32.mrb[0].mxu0
      %v5113 = vadd.f32 %v669, %v5112
      %v5114 = vpop.f32.mrb[0].mxu0
      %v5115 = vadd.f32 %v674, %v5114
      %v5116 = vpop.f32.mrb[0].mxu0
      %v5117 = vadd.f32 %v674, %v5116
      %5118 = vdwg.mxu0
      %5119 = vmatprep.subr.bf16.mxu0 %v2226
      %5120 = vmatpush1.bf16.msra.mxu0 %v2225
      %5121 = vmatprep.subr.bf16.mxu0 %v2323
      %5122 = vmatpush1.bf16.msra.mxu0 %v2322
      %5123 = vmatprep.subr.bf16.mxu0 %v2420
      %5124 = vmatpush1.bf16.msra.mxu0 %v2419
      %5125 = vmatprep.subr.bf16.mxu0 %v2517
      %5126 = vmatpush1.bf16.msra.mxu0 %v2516
      %5127 = vmatprep.subr.bf16.mxu0 %v3278
      %5128 = vmatpush1.bf16.msra.mxu0 %v3275
      %5129 = vmatprep.subr.bf16.mxu0 0
      %5130 = vmatpush1.bf16.msra.mxu0 0
      %5131 = vmatprep.subr.bf16.mxu0 0
      %5132 = vmatpush1.bf16.msra.mxu0 0
      %5133 = vmatprep.subr.bf16.mxu0 0
      %5134 = vmatpush1.bf16.msra.mxu0 0
      %5135 = vmatprep.subr.bf16.mxu0 0
      %5136 = vmatpush1.bf16.msra.mxu0 0
      %5137 = vmatprep.subr.bf16.mxu0 0
      %5138 = vmatpush1.bf16.msra.mxu0 0
      %5139 = vmatprep.subr.bf16.mxu0 0
      %5140 = vmatpush1.bf16.msra.mxu0 0
      %5141 = vmatprep.subr.bf16.mxu0 0
      %5142 = vmatpush1.bf16.msra.mxu0 0
      %5143 = vmatprep.subr.bf16.mxu0 0
      %5144 = vmatpush1.bf16.msra.mxu0 0
      %5145 = vmatprep.subr.bf16.mxu0 0
      %5146 = vmatpush1.bf16.msra.mxu0 0
      %5147 = vmatprep.subr.bf16.mxu0 0
      %5148 = vmatpush1.bf16.msra.mxu0 0
      %5149 = vmatprep.subr.bf16.mxu0 0
      %5150 = vmatpush1.bf16.msra.mxu0 0
      %5151 = vmatprep.mubr.bf16.mxu0 0
      %5152 = vmatmul.mubr.bf16.gmra.mrb[0].mxu0 %v3016
      %v5153 = vpop.f32.mrb[0].mxu0
      %v5154 = vadd.f32 %v669, %v5153
      %v5155 = vpop.f32.mrb[0].mxu0
      %v5156 = vadd.f32 %v669, %v5155
      %v5157 = vpop.f32.mrb[0].mxu0
      %v5158 = vadd.f32 %v674, %v5157
      %v5159 = vpop.f32.mrb[0].mxu0
      %v5160 = vadd.f32 %v674, %v5159
      %5161 = vdwg.mxu0
      %5162 = vmatprep.subr.bf16.mxu0 %v2228
      %5163 = vmatpush1.bf16.msra.mxu0 %v2227
      %5164 = vmatprep.subr.bf16.mxu0 %v2325
      %5165 = vmatpush1.bf16.msra.mxu0 %v2324
      %5166 = vmatprep.subr.bf16.mxu0 %v2422
      %5167 = vmatpush1.bf16.msra.mxu0 %v2421
      %5168 = vmatprep.subr.bf16.mxu0 %v2519
      %5169 = vmatpush1.bf16.msra.mxu0 %v2518
      %5170 = vmatprep.subr.bf16.mxu0 %v3284
      %5171 = vmatpush1.bf16.msra.mxu0 %v3281
      %5172 = vmatprep.subr.bf16.mxu0 0
      %5173 = vmatpush1.bf16.msra.mxu0 0
      %5174 = vmatprep.subr.bf16.mxu0 0
      %5175 = vmatpush1.bf16.msra.mxu0 0
      %5176 = vmatprep.subr.bf16.mxu0 0
      %5177 = vmatpush1.bf16.msra.mxu0 0
      %5178 = vmatprep.subr.bf16.mxu0 0
      %5179 = vmatpush1.bf16.msra.mxu0 0
      %5180 = vmatprep.subr.bf16.mxu0 0
      %5181 = vmatpush1.bf16.msra.mxu0 0
      %5182 = vmatprep.subr.bf16.mxu0 0
      %5183 = vmatpush1.bf16.msra.mxu0 0
      %5184 = vmatprep.subr.bf16.mxu0 0
      %5185 = vmatpush1.bf16.msra.mxu0 0
      %5186 = vmatprep.subr.bf16.mxu0 0
      %5187 = vmatpush1.bf16.msra.mxu0 0
      %5188 = vmatprep.subr.bf16.mxu0 0
      %5189 = vmatpush1.bf16.msra.mxu0 0
      %5190 = vmatprep.subr.bf16.mxu0 0
      %5191 = vmatpush1.bf16.msra.mxu0 0
      %5192 = vmatprep.subr.bf16.mxu0 0
      %5193 = vmatpush1.bf16.msra.mxu0 0
      %5194 = vmatprep.mubr.bf16.mxu0 0
      %5195 = vmatmul.mubr.bf16.gmra.mrb[0].mxu0 %v3016
      %v5196 = vpop.f32.mrb[0].mxu0
      %v5197 = vadd.f32 %v669, %v5196
      %v5198 = vpop.f32.mrb[0].mxu0
      %v5199 = vadd.f32 %v669, %v5198
      %v5200 = vpop.f32.mrb[0].mxu0
      %v5201 = vadd.f32 %v674, %v5200
      %v5202 = vpop.f32.mrb[0].mxu0
      %v5203 = vadd.f32 %v674, %v5202
      %5204 = vdwg.mxu0
      %5205 = vmatprep.subr.bf16.mxu0 %v2230
      %5206 = vmatpush1.bf16.msra.mxu0 %v2229
      %5207 = vmatprep.subr.bf16.mxu0 %v2327
      %5208 = vmatpush1.bf16.msra.mxu0 %v2326
      %5209 = vmatprep.subr.bf16.mxu0 %v2424
      %5210 = vmatpush1.bf16.msra.mxu0 %v2423
      %5211 = vmatprep.subr.bf16.mxu0 %v2521
      %5212 = vmatpush1.bf16.msra.mxu0 %v2520
      %5213 = vmatprep.subr.bf16.mxu0 %v3290
      %5214 = vmatpush1.bf16.msra.mxu0 %v3287
      %5215 = vmatprep.subr.bf16.mxu0 0
      %5216 = vmatpush1.bf16.msra.mxu0 0
      %5217 = vmatprep.subr.bf16.mxu0 0
      %5218 = vmatpush1.bf16.msra.mxu0 0
      %5219 = vmatprep.subr.bf16.mxu0 0
      %5220 = vmatpush1.bf16.msra.mxu0 0
      %5221 = vmatprep.subr.bf16.mxu0 0
      %5222 = vmatpush1.bf16.msra.mxu0 0
      %5223 = vmatprep.subr.bf16.mxu0 0
      %5224 = vmatpush1.bf16.msra.mxu0 0
      %5225 = vmatprep.subr.bf16.mxu0 0
      %5226 = vmatpush1.bf16.msra.mxu0 0
      %5227 = vmatprep.subr.bf16.mxu0 0
      %5228 = vmatpush1.bf16.msra.mxu0 0
      %5229 = vmatprep.subr.bf16.mxu0 0
      %5230 = vmatpush1.bf16.msra.mxu0 0
      %5231 = vmatprep.subr.bf16.mxu0 0
      %5232 = vmatpush1.bf16.msra.mxu0 0
      %5233 = vmatprep.subr.bf16.mxu0 0
      %5234 = vmatpush1.bf16.msra.mxu0 0
      %5235 = vmatprep.subr.bf16.mxu0 0
      %5236 = vmatpush1.bf16.msra.mxu0 0
      %5237 = vmatprep.mubr.bf16.mxu0 0
      %5238 = vmatmul.mubr.bf16.gmra.mrb[0].mxu0 %v3016
      %v5239 = vpop.f32.mrb[0].mxu0
      %v5240 = vadd.f32 %v669, %v5239
      %v5241 = vpop.f32.mrb[0].mxu0
      %v5242 = vadd.f32 %v669, %v5241
      %v5243 = vpop.f32.mrb[0].mxu0
      %v5244 = vadd.f32 %v674, %v5243
      %v5245 = vpop.f32.mrb[0].mxu0
      %v5246 = vadd.f32 %v674, %v5245
      %5247 = vdwg.mxu0
      %5248 = vmatprep.subr.bf16.mxu0 %v2232
      %5249 = vmatpush1.bf16.msra.mxu0 %v2231
      %5250 = vmatprep.subr.bf16.mxu0 %v2329
      %5251 = vmatpush1.bf16.msra.mxu0 %v2328
      %5252 = vmatprep.subr.bf16.mxu0 %v2426
      %5253 = vmatpush1.bf16.msra.mxu0 %v2425
      %5254 = vmatprep.subr.bf16.mxu0 %v2523
      %5255 = vmatpush1.bf16.msra.mxu0 %v2522
      %5256 = vmatprep.subr.bf16.mxu0 %v3296
      %5257 = vmatpush1.bf16.msra.mxu0 %v3293
      %5258 = vmatprep.subr.bf16.mxu0 0
      %5259 = vmatpush1.bf16.msra.mxu0 0
      %5260 = vmatprep.subr.bf16.mxu0 0
      %5261 = vmatpush1.bf16.msra.mxu0 0
      %5262 = vmatprep.subr.bf16.mxu0 0
      %5263 = vmatpush1.bf16.msra.mxu0 0
      %5264 = vmatprep.subr.bf16.mxu0 0
      %5265 = vmatpush1.bf16.msra.mxu0 0
      %5266 = vmatprep.subr.bf16.mxu0 0
      %5267 = vmatpush1.bf16.msra.mxu0 0
      %5268 = vmatprep.subr.bf16.mxu0 0
      %5269 = vmatpush1.bf16.msra.mxu0 0
      %5270 = vmatprep.subr.bf16.mxu0 0
      %5271 = vmatpush1.bf16.msra.mxu0 0
      %5272 = vmatprep.subr.bf16.mxu0 0
      %5273 = vmatpush1.bf16.msra.mxu0 0
      %5274 = vmatprep.subr.bf16.mxu0 0
      %5275 = vmatpush1.bf16.msra.mxu0 0
      %5276 = vmatprep.subr.bf16.mxu0 0
      %5277 = vmatpush1.bf16.msra.mxu0 0
      %5278 = vmatprep.subr.bf16.mxu0 0
      %5279 = vmatpush1.bf16.msra.mxu0 0
      %5280 = vmatprep.mubr.bf16.mxu0 0
      %5281 = vmatmul.mubr.bf16.gmra.mrb[0].mxu0 %v3016
      %v5282 = vpop.f32.mrb[0].mxu0
      %v5283 = vadd.f32 %v669, %v5282
      %v5284 = vpop.f32.mrb[0].mxu0
      %v5285 = vadd.f32 %v669, %v5284
      %v5286 = vpop.f32.mrb[0].mxu0
      %v5287 = vadd.f32 %v674, %v5286
      %v5288 = vpop.f32.mrb[0].mxu0
      %v5289 = vadd.f32 %v674, %v5288
      %5290 = vdwg.mxu0
      %5291 = vmatprep.subr.bf16.mxu0 %v2234
      %5292 = vmatpush1.bf16.msra.mxu0 %v2233
      %5293 = vmatprep.subr.bf16.mxu0 %v2331
      %5294 = vmatpush1.bf16.msra.mxu0 %v2330
      %5295 = vmatprep.subr.bf16.mxu0 %v2428
      %5296 = vmatpush1.bf16.msra.mxu0 %v2427
      %5297 = vmatprep.subr.bf16.mxu0 %v2525
      %5298 = vmatpush1.bf16.msra.mxu0 %v2524
      %5299 = vmatprep.subr.bf16.mxu0 %v3302
      %5300 = vmatpush1.bf16.msra.mxu0 %v3299
      %5301 = vmatprep.subr.bf16.mxu0 0
      %5302 = vmatpush1.bf16.msra.mxu0 0
      %5303 = vmatprep.subr.bf16.mxu0 0
      %5304 = vmatpush1.bf16.msra.mxu0 0
      %5305 = vmatprep.subr.bf16.mxu0 0
      %5306 = vmatpush1.bf16.msra.mxu0 0
      %5307 = vmatprep.subr.bf16.mxu0 0
      %5308 = vmatpush1.bf16.msra.mxu0 0
      %5309 = vmatprep.subr.bf16.mxu0 0
      %5310 = vmatpush1.bf16.msra.mxu0 0
      %5311 = vmatprep.subr.bf16.mxu0 0
      %5312 = vmatpush1.bf16.msra.mxu0 0
      %5313 = vmatprep.subr.bf16.mxu0 0
      %5314 = vmatpush1.bf16.msra.mxu0 0
      %5315 = vmatprep.subr.bf16.mxu0 0
      %5316 = vmatpush1.bf16.msra.mxu0 0
      %5317 = vmatprep.subr.bf16.mxu0 0
      %5318 = vmatpush1.bf16.msra.mxu0 0
      %5319 = vmatprep.subr.bf16.mxu0 0
      %5320 = vmatpush1.bf16.msra.mxu0 0
      %5321 = vmatprep.subr.bf16.mxu0 0
      %5322 = vmatpush1.bf16.msra.mxu0 0
      %5323 = vmatprep.mubr.bf16.mxu0 0
      %5324 = vmatmul.mubr.bf16.gmra.mrb[0].mxu0 %v3016
      %v5325 = vpop.f32.mrb[0].mxu0
      %v5326 = vadd.f32 %v669, %v5325
      %v5327 = vpop.f32.mrb[0].mxu0
      %v5328 = vadd.f32 %v669, %v5327
      %v5329 = vpop.f32.mrb[0].mxu0
      %v5330 = vadd.f32 %v674, %v5329
      %v5331 = vpop.f32.mrb[0].mxu0
      %v5332 = vadd.f32 %v674, %v5331
      %5333 = vdwg.mxu0
      %5334 = vmatprep.subr.bf16.mxu0 %v2236
      %5335 = vmatpush1.bf16.msra.mxu0 %v2235
      %5336 = vmatprep.subr.bf16.mxu0 %v2333
      %5337 = vmatpush1.bf16.msra.mxu0 %v2332
      %5338 = vmatprep.subr.bf16.mxu0 %v2430
      %5339 = vmatpush1.bf16.msra.mxu0 %v2429
      %5340 = vmatprep.subr.bf16.mxu0 %v2527
      %5341 = vmatpush1.bf16.msra.mxu0 %v2526
      %5342 = vmatprep.subr.bf16.mxu0 %v3308
      %5343 = vmatpush1.bf16.msra.mxu0 %v3305
      %5344 = vmatprep.subr.bf16.mxu0 0
      %5345 = vmatpush1.bf16.msra.mxu0 0
      %5346 = vmatprep.subr.bf16.mxu0 0
      %5347 = vmatpush1.bf16.msra.mxu0 0
      %5348 = vmatprep.subr.bf16.mxu0 0
      %5349 = vmatpush1.bf16.msra.mxu0 0
      %5350 = vmatprep.subr.bf16.mxu0 0
      %5351 = vmatpush1.bf16.msra.mxu0 0
      %5352 = vmatprep.subr.bf16.mxu0 0
      %5353 = vmatpush1.bf16.msra.mxu0 0
      %5354 = vmatprep.subr.bf16.mxu0 0
      %5355 = vmatpush1.bf16.msra.mxu0 0
      %5356 = vmatprep.subr.bf16.mxu0 0
      %5357 = vmatpush1.bf16.msra.mxu0 0
      %5358 = vmatprep.subr.bf16.mxu0 0
      %5359 = vmatpush1.bf16.msra.mxu0 0
      %5360 = vmatprep.subr.bf16.mxu0 0
      %5361 = vmatpush1.bf16.msra.mxu0 0
      %5362 = vmatprep.subr.bf16.mxu0 0
      %5363 = vmatpush1.bf16.msra.mxu0 0
      %5364 = vmatprep.subr.bf16.mxu0 0
      %5365 = vmatpush1.bf16.msra.mxu0 0
      %5366 = vmatprep.mubr.bf16.mxu0 0
      %5367 = vmatmul.mubr.bf16.gmra.mrb[0].mxu0 %v3016
      %v5368 = vpop.f32.mrb[0].mxu0
      %v5369 = vadd.f32 %v669, %v5368
      %v5370 = vpop.f32.mrb[0].mxu0
      %v5371 = vadd.f32 %v669, %v5370
      %v5372 = vpop.f32.mrb[0].mxu0
      %v5373 = vadd.f32 %v674, %v5372
      %v5374 = vpop.f32.mrb[0].mxu0
      %v5375 = vadd.f32 %v674, %v5374
      %5376 = vdwg.mxu0
      %5377 = vmatprep.subr.bf16.mxu0 0
      %5378 = vmatpush1.bf16.msra.mxu0 %v2237
      %5379 = vmatprep.subr.bf16.mxu0 0
      %5380 = vmatpush1.bf16.msra.mxu0 %v2334
      %5381 = vmatprep.subr.bf16.mxu0 0
      %5382 = vmatpush1.bf16.msra.mxu0 %v2431
      %5383 = vmatprep.subr.bf16.mxu0 0
      %5384 = vmatpush1.bf16.msra.mxu0 %v2528
      %5385 = vmatprep.subr.bf16.mxu0 0
      %5386 = vmatpush1.bf16.msra.mxu0 %v3311
      %5387 = vmatprep.subr.bf16.mxu0 0
      %5388 = vmatpush1.bf16.msra.mxu0 0
      %5389 = vmatprep.subr.bf16.mxu0 0
      %5390 = vmatpush1.bf16.msra.mxu0 0
      %5391 = vmatprep.subr.bf16.mxu0 0
      %5392 = vmatpush1.bf16.msra.mxu0 0
      %5393 = vmatprep.subr.bf16.mxu0 0
      %5394 = vmatpush1.bf16.msra.mxu0 0
      %5395 = vmatprep.subr.bf16.mxu0 0
      %5396 = vmatpush1.bf16.msra.mxu0 0
      %5397 = vmatprep.subr.bf16.mxu0 0
      %5398 = vmatpush1.bf16.msra.mxu0 0
      %5399 = vmatprep.subr.bf16.mxu0 0
      %5400 = vmatpush1.bf16.msra.mxu0 0
      %5401 = vmatprep.subr.bf16.mxu0 0
      %5402 = vmatpush1.bf16.msra.mxu0 0
      %5403 = vmatprep.subr.bf16.mxu0 0
      %5404 = vmatpush1.bf16.msra.mxu0 0
      %5405 = vmatprep.subr.bf16.mxu0 0
      %5406 = vmatpush1.bf16.msra.mxu0 0
      %5407 = vmatprep.subr.bf16.mxu0 0
      %5408 = vmatpush1.bf16.msra.mxu0 0
      %5409 = vmatprep.mubr.bf16.mxu0 0
      %5410 = vmatmul.mubr.bf16.gmra.mrb[0].mxu0 %v3016
      %v5411 = vpop.f32.mrb[0].mxu0
      %v5412 = vadd.f32 %v669, %v5411
      %v5413 = vpop.f32.mrb[0].mxu0
      %v5414 = vpop.f32.mrb[0].mxu0
      %v5415 = vadd.f32 %v674, %v5414
      %v5416 = vpop.f32.mrb[0].mxu0
      %5417 = vdwg.mxu0
      %v5418 = vpack.c.bf16 %v3352, %v3348
      %v5419 = vpack.c.bf16 %v3354, %v3350
      %v5420 = vpack.c.bf16 %v3395, %v3391
      %v5421 = vpack.c.bf16 %v3397, %v3393
      %v5422 = vpack.c.bf16 %v3438, %v3434
      %v5423 = vpack.c.bf16 %v3440, %v3436
      %v5424 = vpack.c.bf16 %v3481, %v3477
      %v5425 = vpack.c.bf16 %v3483, %v3479
      %v5426 = vpack.c.bf16 %v3524, %v3520
      %v5427 = vpack.c.bf16 %v3526, %v3522
      %v5428 = vpack.c.bf16 %v3567, %v3563
      %v5429 = vpack.c.bf16 %v3569, %v3565
      %v5430 = vpack.c.bf16 %v3610, %v3606
      %v5431 = vpack.c.bf16 %v3612, %v3608
      %v5432 = vpack.c.bf16 %v3653, %v3649
      %v5433 = vpack.c.bf16 %v3655, %v3651
      %v5434 = vpack.c.bf16 %v3696, %v3692
      %v5435 = vpack.c.bf16 %v3698, %v3694
      %v5436 = vpack.c.bf16 %v3739, %v3735
      %v5437 = vpack.c.bf16 %v3741, %v3737
      %v5438 = vpack.c.bf16 %v3782, %v3778
      %v5439 = vpack.c.bf16 %v3784, %v3780
      %v5440 = vpack.c.bf16 %v3825, %v3821
      %v5441 = vpack.c.bf16 %v3827, %v3823
      %v5442 = vpack.c.bf16 %v3868, %v3864
      %v5443 = vpack.c.bf16 %v3870, %v3866
      %v5444 = vpack.c.bf16 %v3911, %v3907
      %v5445 = vpack.c.bf16 %v3913, %v3909
      %v5446 = vpack.c.bf16 %v3954, %v3950
      %v5447 = vpack.c.bf16 %v3956, %v3952
      %v5448 = vpack.c.bf16 %v3997, %v3993
      %v5449 = vpack.c.bf16 %v3999, %v3995
      %v5450 = vpack.c.bf16 %v4040, %v4036
      %v5451 = vpack.c.bf16 %v4042, %v4038
      %v5452 = vpack.c.bf16 %v4083, %v4079
      %v5453 = vpack.c.bf16 %v4085, %v4081
      %v5454 = vpack.c.bf16 %v4126, %v4122
      %v5455 = vpack.c.bf16 %v4128, %v4124
      %v5456 = vpack.c.bf16 %v4169, %v4165
      %v5457 = vpack.c.bf16 %v4171, %v4167
      %v5458 = vpack.c.bf16 %v4212, %v4208
      %v5459 = vpack.c.bf16 %v4214, %v4210
      %v5460 = vpack.c.bf16 %v4255, %v4251
      %v5461 = vpack.c.bf16 %v4257, %v4253
      %v5462 = vpack.c.bf16 %v4298, %v4294
      %v5463 = vpack.c.bf16 %v4300, %v4296
      %v5464 = vpack.c.bf16 %v4341, %v4337
      %v5465 = vpack.c.bf16 %v4343, %v4339
      %v5466 = vpack.c.bf16 %v4384, %v4380
      %v5467 = vpack.c.bf16 %v4386, %v4382
      %v5468 = vpack.c.bf16 %v4427, %v4423
      %v5469 = vpack.c.bf16 %v4429, %v4425
      %v5470 = vpack.c.bf16 %v4470, %v4466
      %v5471 = vpack.c.bf16 %v4472, %v4468
      %v5472 = vpack.c.bf16 %v4513, %v4509
      %v5473 = vpack.c.bf16 %v4515, %v4511
      %v5474 = vpack.c.bf16 %v4556, %v4552
      %v5475 = vpack.c.bf16 %v4558, %v4554
      %v5476 = vpack.c.bf16 %v4599, %v4595
      %v5477 = vpack.c.bf16 %v4601, %v4597
      %v5478 = vpack.c.bf16 %v4642, %v4638
      %v5479 = vpack.c.bf16 %v4644, %v4640
      %v5480 = vpack.c.bf16 %v4685, %v4681
      %v5481 = vpack.c.bf16 %v4687, %v4683
      %v5482 = vpack.c.bf16 %v4728, %v4724
      %v5483 = vpack.c.bf16 %v4730, %v4726
      %v5484 = vpack.c.bf16 %v4771, %v4767
      %v5485 = vpack.c.bf16 %v4773, %v4769
      %v5486 = vpack.c.bf16 %v4814, %v4810
      %v5487 = vpack.c.bf16 %v4816, %v4812
      %v5488 = vpack.c.bf16 %v4857, %v4853
      %v5489 = vpack.c.bf16 %v4859, %v4855
      %v5490 = vpack.c.bf16 %v4900, %v4896
      %v5491 = vpack.c.bf16 %v4902, %v4898
      %v5492 = vpack.c.bf16 %v4943, %v4939
      %v5493 = vpack.c.bf16 %v4945, %v4941
      %v5494 = vpack.c.bf16 %v4986, %v4982
      %v5495 = vpack.c.bf16 %v4988, %v4984
      %v5496 = vpack.c.bf16 %v5029, %v5025
      %v5497 = vpack.c.bf16 %v5031, %v5027
      %v5498 = vpack.c.bf16 %v5072, %v5068
      %v5499 = vpack.c.bf16 %v5074, %v5070
      %v5500 = vpack.c.bf16 %v5115, %v5111
      %v5501 = vpack.c.bf16 %v5117, %v5113
      %v5502 = vpack.c.bf16 %v5158, %v5154
      %v5503 = vpack.c.bf16 %v5160, %v5156
      %v5504 = vpack.c.bf16 %v5201, %v5197
      %v5505 = vpack.c.bf16 %v5203, %v5199
      %v5506 = vpack.c.bf16 %v5244, %v5240
      %v5507 = vpack.c.bf16 %v5246, %v5242
      %v5508 = vpack.c.bf16 %v5287, %v5283
      %v5509 = vpack.c.bf16 %v5289, %v5285
      %v5510 = vpack.c.bf16 %v5330, %v5326
      %v5511 = vpack.c.bf16 %v5332, %v5328
      %v5512 = vpack.c.bf16 %v5373, %v5369
      %v5513 = vpack.c.bf16 %v5375, %v5371
      %v5514 = vpack.c.bf16 %v5415, %v5412
      %v5612 = vunpack.c.l.b16 %v5418
      %v5613 = vunpack.c.l.b16 %v5419
      %v5614 = vunpack.c.l.b16 %v5420
      %v5615 = vunpack.c.l.b16 %v5421
      %v5616 = vunpack.c.l.b16 %v5422
      %v5617 = vunpack.c.l.b16 %v5423
      %v5618 = vunpack.c.l.b16 %v5424
      %v5619 = vunpack.c.l.b16 %v5425
      %v5620 = vunpack.c.l.b16 %v5426
      %v5621 = vunpack.c.l.b16 %v5427
      %v5622 = vunpack.c.l.b16 %v5428
      %v5623 = vunpack.c.l.b16 %v5429
      %v5624 = vunpack.c.l.b16 %v5430
      %v5625 = vunpack.c.l.b16 %v5431
      %v5626 = vunpack.c.l.b16 %v5432
      %v5627 = vunpack.c.l.b16 %v5433
      %v5628 = vunpack.c.l.b16 %v5434
      %v5629 = vunpack.c.l.b16 %v5435
      %v5630 = vunpack.c.l.b16 %v5436
      %v5631 = vunpack.c.l.b16 %v5437
      %v5632 = vunpack.c.l.b16 %v5438
      %v5633 = vunpack.c.l.b16 %v5439
      %v5634 = vunpack.c.l.b16 %v5440
      %v5635 = vunpack.c.l.b16 %v5441
      %v5636 = vunpack.c.l.b16 %v5442
      %v5637 = vunpack.c.l.b16 %v5443
      %v5638 = vunpack.c.l.b16 %v5444
      %v5639 = vunpack.c.l.b16 %v5445
      %v5640 = vunpack.c.l.b16 %v5446
      %v5641 = vunpack.c.l.b16 %v5447
      %v5642 = vunpack.c.l.b16 %v5448
      %v5643 = vunpack.c.l.b16 %v5449
      %v5644 = vunpack.c.l.b16 %v5450
      %v5645 = vunpack.c.l.b16 %v5451
      %v5646 = vunpack.c.l.b16 %v5452
      %v5647 = vunpack.c.l.b16 %v5453
      %v5648 = vunpack.c.l.b16 %v5454
      %v5649 = vunpack.c.l.b16 %v5455
      %v5650 = vunpack.c.l.b16 %v5456
      %v5651 = vunpack.c.l.b16 %v5457
      %v5652 = vunpack.c.l.b16 %v5458
      %v5653 = vunpack.c.l.b16 %v5459
      %v5654 = vunpack.c.l.b16 %v5460
      %v5655 = vunpack.c.l.b16 %v5461
      %v5656 = vunpack.c.l.b16 %v5462
      %v5657 = vunpack.c.l.b16 %v5463
      %v5658 = vunpack.c.l.b16 %v5464
      %v5659 = vunpack.c.l.b16 %v5465
      %v5660 = vunpack.c.l.b16 %v5466
      %v5661 = vunpack.c.l.b16 %v5467
      %v5662 = vunpack.c.l.b16 %v5468
      %v5663 = vunpack.c.l.b16 %v5469
      %v5664 = vunpack.c.l.b16 %v5470
      %v5665 = vunpack.c.l.b16 %v5471
      %v5666 = vunpack.c.l.b16 %v5472
      %v5667 = vunpack.c.l.b16 %v5473
      %v5668 = vunpack.c.l.b16 %v5474
      %v5669 = vunpack.c.l.b16 %v5475
      %v5670 = vunpack.c.l.b16 %v5476
      %v5671 = vunpack.c.l.b16 %v5477
      %v5672 = vunpack.c.l.b16 %v5478
      %v5673 = vunpack.c.l.b16 %v5479
      %v5674 = vunpack.c.l.b16 %v5480
      %v5675 = vunpack.c.l.b16 %v5481
      %v5676 = vunpack.c.l.b16 %v5482
      %v5677 = vunpack.c.l.b16 %v5483
      %v5678 = vunpack.c.l.b16 %v5484
      %v5679 = vunpack.c.l.b16 %v5485
      %v5680 = vunpack.c.l.b16 %v5486
      %v5681 = vunpack.c.l.b16 %v5487
      %v5682 = vunpack.c.l.b16 %v5488
      %v5683 = vunpack.c.l.b16 %v5489
      %v5684 = vunpack.c.l.b16 %v5490
      %v5685 = vunpack.c.l.b16 %v5491
      %v5686 = vunpack.c.l.b16 %v5492
      %v5687 = vunpack.c.l.b16 %v5493
      %v5688 = vunpack.c.l.b16 %v5494
      %v5689 = vunpack.c.l.b16 %v5495
      %v5690 = vunpack.c.l.b16 %v5496
      %v5691 = vunpack.c.l.b16 %v5497
      %v5692 = vunpack.c.l.b16 %v5498
      %v5693 = vunpack.c.l.b16 %v5499
      %v5694 = vunpack.c.l.b16 %v5500
      %v5695 = vunpack.c.l.b16 %v5501
      %v5696 = vunpack.c.l.b16 %v5502
      %v5697 = vunpack.c.l.b16 %v5503
      %v5698 = vunpack.c.l.b16 %v5504
      %v5699 = vunpack.c.l.b16 %v5505
      %v5700 = vunpack.c.l.b16 %v5506
      %v5701 = vunpack.c.l.b16 %v5507
      %v5702 = vunpack.c.l.b16 %v5508
      %v5703 = vunpack.c.l.b16 %v5509
      %v5704 = vunpack.c.l.b16 %v5510
      %v5705 = vunpack.c.l.b16 %v5511
      %v5706 = vunpack.c.l.b16 %v5512
      %v5707 = vunpack.c.l.b16 %v5513
      %v5708 = vunpack.c.l.b16 %v5514
      %v5709 = vunpack.c.h.b16 %v5418
      %v5710 = vunpack.c.h.b16 %v5419
      %v5711 = vunpack.c.h.b16 %v5420
      %v5712 = vunpack.c.h.b16 %v5421
      %v5713 = vunpack.c.h.b16 %v5422
      %v5714 = vunpack.c.h.b16 %v5423
      %v5715 = vunpack.c.h.b16 %v5424
      %v5716 = vunpack.c.h.b16 %v5425
      %v5717 = vunpack.c.h.b16 %v5426
      %v5718 = vunpack.c.h.b16 %v5427
      %v5719 = vunpack.c.h.b16 %v5428
      %v5720 = vunpack.c.h.b16 %v5429
      %v5721 = vunpack.c.h.b16 %v5430
      %v5722 = vunpack.c.h.b16 %v5431
      %v5723 = vunpack.c.h.b16 %v5432
      %v5724 = vunpack.c.h.b16 %v5433
      %v5725 = vunpack.c.h.b16 %v5434
      %v5726 = vunpack.c.h.b16 %v5435
      %v5727 = vunpack.c.h.b16 %v5436
      %v5728 = vunpack.c.h.b16 %v5437
      %v5729 = vunpack.c.h.b16 %v5438
      %v5730 = vunpack.c.h.b16 %v5439
      %v5731 = vunpack.c.h.b16 %v5440
      %v5732 = vunpack.c.h.b16 %v5441
      %v5733 = vunpack.c.h.b16 %v5442
      %v5734 = vunpack.c.h.b16 %v5443
      %v5735 = vunpack.c.h.b16 %v5444
      %v5736 = vunpack.c.h.b16 %v5445
      %v5737 = vunpack.c.h.b16 %v5446
      %v5738 = vunpack.c.h.b16 %v5447
      %v5739 = vunpack.c.h.b16 %v5448
      %v5740 = vunpack.c.h.b16 %v5449
      %v5741 = vunpack.c.h.b16 %v5450
      %v5742 = vunpack.c.h.b16 %v5451
      %v5743 = vunpack.c.h.b16 %v5452
      %v5744 = vunpack.c.h.b16 %v5453
      %v5745 = vunpack.c.h.b16 %v5454
      %v5746 = vunpack.c.h.b16 %v5455
      %v5747 = vunpack.c.h.b16 %v5456
      %v5748 = vunpack.c.h.b16 %v5457
      %v5749 = vunpack.c.h.b16 %v5458
      %v5750 = vunpack.c.h.b16 %v5459
      %v5751 = vunpack.c.h.b16 %v5460
      %v5752 = vunpack.c.h.b16 %v5461
      %v5753 = vunpack.c.h.b16 %v5462
      %v5754 = vunpack.c.h.b16 %v5463
      %v5755 = vunpack.c.h.b16 %v5464
      %v5756 = vunpack.c.h.b16 %v5465
      %v5757 = vunpack.c.h.b16 %v5466
      %v5758 = vunpack.c.h.b16 %v5467
      %v5759 = vunpack.c.h.b16 %v5468
      %v5760 = vunpack.c.h.b16 %v5469
      %v5761 = vunpack.c.h.b16 %v5470
      %v5762 = vunpack.c.h.b16 %v5471
      %v5763 = vunpack.c.h.b16 %v5472
      %v5764 = vunpack.c.h.b16 %v5473
      %v5765 = vunpack.c.h.b16 %v5474
      %v5766 = vunpack.c.h.b16 %v5475
      %v5767 = vunpack.c.h.b16 %v5476
      %v5768 = vunpack.c.h.b16 %v5477
      %v5769 = vunpack.c.h.b16 %v5478
      %v5770 = vunpack.c.h.b16 %v5479
      %v5771 = vunpack.c.h.b16 %v5480
      %v5772 = vunpack.c.h.b16 %v5481
      %v5773 = vunpack.c.h.b16 %v5482
      %v5774 = vunpack.c.h.b16 %v5483
      %v5775 = vunpack.c.h.b16 %v5484
      %v5776 = vunpack.c.h.b16 %v5485
      %v5777 = vunpack.c.h.b16 %v5486
      %v5778 = vunpack.c.h.b16 %v5487
      %v5779 = vunpack.c.h.b16 %v5488
      %v5780 = vunpack.c.h.b16 %v5489
      %v5781 = vunpack.c.h.b16 %v5490
      %v5782 = vunpack.c.h.b16 %v5491
      %v5783 = vunpack.c.h.b16 %v5492
      %v5784 = vunpack.c.h.b16 %v5493
      %v5785 = vunpack.c.h.b16 %v5494
      %v5786 = vunpack.c.h.b16 %v5495
      %v5787 = vunpack.c.h.b16 %v5496
      %v5788 = vunpack.c.h.b16 %v5497
      %v5789 = vunpack.c.h.b16 %v5498
      %v5790 = vunpack.c.h.b16 %v5499
      %v5791 = vunpack.c.h.b16 %v5500
      %v5792 = vunpack.c.h.b16 %v5501
      %v5793 = vunpack.c.h.b16 %v5502
      %v5794 = vunpack.c.h.b16 %v5503
      %v5795 = vunpack.c.h.b16 %v5504
      %v5796 = vunpack.c.h.b16 %v5505
      %v5797 = vunpack.c.h.b16 %v5506
      %v5798 = vunpack.c.h.b16 %v5507
      %v5799 = vunpack.c.h.b16 %v5508
      %v5800 = vunpack.c.h.b16 %v5509
      %v5801 = vunpack.c.h.b16 %v5510
      %v5802 = vunpack.c.h.b16 %v5511
      %v5803 = vunpack.c.h.b16 %v5512
      %v5804 = vunpack.c.h.b16 %v5513
      %v5805 = vunpack.c.h.b16 %v5514
      %v5806 = vpack.c.b16 %v5613, %v5612
      %v5807 = vpack.c.b16 %v5615, %v5614
      %v5808 = vpack.c.b16 %v5617, %v5616
      %v5809 = vpack.c.b16 %v5619, %v5618
      %v5810 = vpack.c.b16 %v5621, %v5620
      %v5811 = vpack.c.b16 %v5623, %v5622
      %v5812 = vpack.c.b16 %v5625, %v5624
      %v5813 = vpack.c.b16 %v5627, %v5626
      %v5814 = vpack.c.b16 %v5629, %v5628
      %v5815 = vpack.c.b16 %v5631, %v5630
      %v5816 = vpack.c.b16 %v5633, %v5632
      %v5817 = vpack.c.b16 %v5635, %v5634
      %v5818 = vpack.c.b16 %v5637, %v5636
      %v5819 = vpack.c.b16 %v5639, %v5638
      %v5820 = vpack.c.b16 %v5641, %v5640
      %v5821 = vpack.c.b16 %v5643, %v5642
      %v5822 = vpack.c.b16 %v5645, %v5644
      %v5823 = vpack.c.b16 %v5647, %v5646
      %v5824 = vpack.c.b16 %v5649, %v5648
      %v5825 = vpack.c.b16 %v5651, %v5650
      %v5826 = vpack.c.b16 %v5653, %v5652
      %v5827 = vpack.c.b16 %v5655, %v5654
      %v5828 = vpack.c.b16 %v5657, %v5656
      %v5829 = vpack.c.b16 %v5659, %v5658
      %v5830 = vpack.c.b16 %v5661, %v5660
      %v5831 = vpack.c.b16 %v5663, %v5662
      %v5832 = vpack.c.b16 %v5665, %v5664
      %v5833 = vpack.c.b16 %v5667, %v5666
      %v5834 = vpack.c.b16 %v5669, %v5668
      %v5835 = vpack.c.b16 %v5671, %v5670
      %v5836 = vpack.c.b16 %v5673, %v5672
      %v5837 = vpack.c.b16 %v5675, %v5674
      %v5838 = vpack.c.b16 %v5677, %v5676
      %v5839 = vpack.c.b16 %v5679, %v5678
      %v5840 = vpack.c.b16 %v5681, %v5680
      %v5841 = vpack.c.b16 %v5683, %v5682
      %v5842 = vpack.c.b16 %v5685, %v5684
      %v5843 = vpack.c.b16 %v5687, %v5686
      %v5844 = vpack.c.b16 %v5689, %v5688
      %v5845 = vpack.c.b16 %v5691, %v5690
      %v5846 = vpack.c.b16 %v5693, %v5692
      %v5847 = vpack.c.b16 %v5695, %v5694
      %v5848 = vpack.c.b16 %v5697, %v5696
      %v5849 = vpack.c.b16 %v5699, %v5698
      %v5850 = vpack.c.b16 %v5701, %v5700
      %v5851 = vpack.c.b16 %v5703, %v5702
      %v5852 = vpack.c.b16 %v5705, %v5704
      %v5853 = vpack.c.b16 %v5707, %v5706
      %v5854 = vpack.c.b16 %v5708, %v5708
      %v5855 = vpack.c.b16 %v5710, %v5709
      %v5856 = vpack.c.b16 %v5712, %v5711
      %v5857 = vpack.c.b16 %v5714, %v5713
      %v5858 = vpack.c.b16 %v5716, %v5715
      %v5859 = vpack.c.b16 %v5718, %v5717
      %v5860 = vpack.c.b16 %v5720, %v5719
      %v5861 = vpack.c.b16 %v5722, %v5721
      %v5862 = vpack.c.b16 %v5724, %v5723
      %v5863 = vpack.c.b16 %v5726, %v5725
      %v5864 = vpack.c.b16 %v5728, %v5727
      %v5865 = vpack.c.b16 %v5730, %v5729
      %v5866 = vpack.c.b16 %v5732, %v5731
      %v5867 = vpack.c.b16 %v5734, %v5733
      %v5868 = vpack.c.b16 %v5736, %v5735
      %v5869 = vpack.c.b16 %v5738, %v5737
      %v5870 = vpack.c.b16 %v5740, %v5739
      %v5871 = vpack.c.b16 %v5742, %v5741
      %v5872 = vpack.c.b16 %v5744, %v5743
      %v5873 = vpack.c.b16 %v5746, %v5745
      %v5874 = vpack.c.b16 %v5748, %v5747
      %v5875 = vpack.c.b16 %v5750, %v5749
      %v5876 = vpack.c.b16 %v5752, %v5751
      %v5877 = vpack.c.b16 %v5754, %v5753
      %v5878 = vpack.c.b16 %v5756, %v5755
      %v5879 = vpack.c.b16 %v5758, %v5757
      %v5880 = vpack.c.b16 %v5760, %v5759
      %v5881 = vpack.c.b16 %v5762, %v5761
      %v5882 = vpack.c.b16 %v5764, %v5763
      %v5883 = vpack.c.b16 %v5766, %v5765
      %v5884 = vpack.c.b16 %v5768, %v5767
      %v5885 = vpack.c.b16 %v5770, %v5769
      %v5886 = vpack.c.b16 %v5772, %v5771
      %v5887 = vpack.c.b16 %v5774, %v5773
      %v5888 = vpack.c.b16 %v5776, %v5775
      %v5889 = vpack.c.b16 %v5778, %v5777
      %v5890 = vpack.c.b16 %v5780, %v5779
      %v5891 = vpack.c.b16 %v5782, %v5781
      %v5892 = vpack.c.b16 %v5784, %v5783
      %v5893 = vpack.c.b16 %v5786, %v5785
      %v5894 = vpack.c.b16 %v5788, %v5787
      %v5895 = vpack.c.b16 %v5790, %v5789
      %v5896 = vpack.c.b16 %v5792, %v5791
      %v5897 = vpack.c.b16 %v5794, %v5793
      %v5898 = vpack.c.b16 %v5796, %v5795
      %v5899 = vpack.c.b16 %v5798, %v5797
      %v5900 = vpack.c.b16 %v5800, %v5799
      %v5901 = vpack.c.b16 %v5802, %v5801
      %v5902 = vpack.c.b16 %v5804, %v5803
      %v5903 = vpack.c.b16 %v5805, %v5805
      %6002 = vst [vmem:[%s170] sm:$0xff] %v5806
      %6003 = vst [vmem:[%s170 + $0x8] sm:$0xff] %v5807
      %6004 = vst [vmem:[%s170 + $0x10] sm:$0xff] %v5808
      %6005 = vst [vmem:[%s170 + $0x18] sm:$0xff] %v5809
      %6006 = vst [vmem:[%s170 + $0x20] sm:$0xff] %v5810
      %6007 = vst [vmem:[%s170 + $0x28] sm:$0xff] %v5811
      %6008 = vst [vmem:[%s170 + $0x30] sm:$0xff] %v5812
      %6009 = vst [vmem:[%s170 + $0x38] sm:$0xff] %v5813
      %6010 = vst [vmem:[%s170 + $0x40] sm:$0xff] %v5814
      %6011 = vst [vmem:[%s170 + $0x48] sm:$0xff] %v5815
      %6012 = vst [vmem:[%s170 + $0x50] sm:$0xff] %v5816
      %6013 = vst [vmem:[%s170 + $0x58] sm:$0xff] %v5817
      %6014 = vst [vmem:[%s170 + $0x60] sm:$0xff] %v5818
      %6015 = vst [vmem:[%s170 + $0x68] sm:$0xff] %v5819
      %6016 = vst [vmem:[%s170 + $0x70] sm:$0xff] %v5820
      %6017 = vst [vmem:[%s170 + $0x78] sm:$0xff] %v5821
      %6018 = vst [vmem:[%s170 + $0x80] sm:$0xff] %v5822
      %6019 = vst [vmem:[%s170 + $0x88] sm:$0xff] %v5823
      %6020 = vst [vmem:[%s170 + $0x90] sm:$0xff] %v5824
      %6021 = vst [vmem:[%s170 + $0x98] sm:$0xff] %v5825
      %6022 = vst [vmem:[%s170 + $0xa0] sm:$0xff] %v5826
      %6023 = vst [vmem:[%s170 + $0xa8] sm:$0xff] %v5827
      %6024 = vst [vmem:[%s170 + $0xb0] sm:$0xff] %v5828
      %6025 = vst [vmem:[%s170 + $0xb8] sm:$0xff] %v5829
      %6026 = vst [vmem:[%s170 + $0xc0] sm:$0xff] %v5830
      %6027 = vst [vmem:[%s170 + $0xc8] sm:$0xff] %v5831
      %6028 = vst [vmem:[%s170 + $0xd0] sm:$0xff] %v5832
      %6029 = vst [vmem:[%s170 + $0xd8] sm:$0xff] %v5833
      %6030 = vst [vmem:[%s170 + $0xe0] sm:$0xff] %v5834
      %6031 = vst [vmem:[%s170 + $0xe8] sm:$0xff] %v5835
      %6032 = vst [vmem:[%s170 + $0xf0] sm:$0xff] %v5836
      %6033 = vst [vmem:[%s170 + $0xf8] sm:$0xff] %v5837
      %6034 = vst [vmem:[%s170 + $0x100] sm:$0xff] %v5838
      %6035 = vst [vmem:[%s170 + $0x108] sm:$0xff] %v5839
      %6036 = vst [vmem:[%s170 + $0x110] sm:$0xff] %v5840
      %6037 = vst [vmem:[%s170 + $0x118] sm:$0xff] %v5841
      %6038 = vst [vmem:[%s170 + $0x120] sm:$0xff] %v5842
      %6039 = vst [vmem:[%s170 + $0x128] sm:$0xff] %v5843
      %6040 = vst [vmem:[%s170 + $0x130] sm:$0xff] %v5844
      %6041 = vst [vmem:[%s170 + $0x138] sm:$0xff] %v5845
      %6042 = vst [vmem:[%s170 + $0x140] sm:$0xff] %v5846
      %6043 = vst [vmem:[%s170 + $0x148] sm:$0xff] %v5847
      %6044 = vst [vmem:[%s170 + $0x150] sm:$0xff] %v5848
      %6045 = vst [vmem:[%s170 + $0x158] sm:$0xff] %v5849
      %6046 = vst [vmem:[%s170 + $0x160] sm:$0xff] %v5850
      %6047 = vst [vmem:[%s170 + $0x168] sm:$0xff] %v5851
      %6048 = vst [vmem:[%s170 + $0x170] sm:$0xff] %v5852
      %6049 = vst [vmem:[%s170 + $0x178] sm:$0xff] %v5853
      %vm6050 = vcmask 265216
      %6051 = vst.msk [vmem:[%s170 + $0x180] sm:$0xf] %vm6050, %v5854
      %6052 = vst [vmem:[%s170 + $0x184] sm:$0xff] %v5855
      %6053 = vst [vmem:[%s170 + $0x18c] sm:$0xff] %v5856
      %6054 = vst [vmem:[%s170 + $0x194] sm:$0xff] %v5857
      %6055 = vst [vmem:[%s170 + $0x19c] sm:$0xff] %v5858
      %6056 = vst [vmem:[%s170 + $0x1a4] sm:$0xff] %v5859
      %6057 = vst [vmem:[%s170 + $0x1ac] sm:$0xff] %v5860
      %6058 = vst [vmem:[%s170 + $0x1b4] sm:$0xff] %v5861
      %6059 = vst [vmem:[%s170 + $0x1bc] sm:$0xff] %v5862
      %6060 = vst [vmem:[%s170 + $0x1c4] sm:$0xff] %v5863
      %6061 = vst [vmem:[%s170 + $0x1cc] sm:$0xff] %v5864
      %6062 = vst [vmem:[%s170 + $0x1d4] sm:$0xff] %v5865
      %6063 = vst [vmem:[%s170 + $0x1dc] sm:$0xff] %v5866
      %6064 = vst [vmem:[%s170 + $0x1e4] sm:$0xff] %v5867
      %6065 = vst [vmem:[%s170 + $0x1ec] sm:$0xff] %v5868
      %6066 = vst [vmem:[%s170 + $0x1f4] sm:$0xff] %v5869
      %6067 = vst [vmem:[%s170 + $0x1fc] sm:$0xff] %v5870
      %6068 = vst [vmem:[%s170 + $0x204] sm:$0xff] %v5871
      %6069 = vst [vmem:[%s170 + $0x20c] sm:$0xff] %v5872
      %6070 = vst [vmem:[%s170 + $0x214] sm:$0xff] %v5873
      %6071 = vst [vmem:[%s170 + $0x21c] sm:$0xff] %v5874
      %6072 = vst [vmem:[%s170 + $0x224] sm:$0xff] %v5875
      %6073 = vst [vmem:[%s170 + $0x22c] sm:$0xff] %v5876
      %6074 = vst [vmem:[%s170 + $0x234] sm:$0xff] %v5877
      %6075 = vst [vmem:[%s170 + $0x23c] sm:$0xff] %v5878
      %6076 = vst [vmem:[%s170 + $0x244] sm:$0xff] %v5879
      %6077 = vst [vmem:[%s170 + $0x24c] sm:$0xff] %v5880
      %6078 = vst [vmem:[%s170 + $0x254] sm:$0xff] %v5881
      %6079 = vst [vmem:[%s170 + $0x25c] sm:$0xff] %v5882
      %6080 = vst [vmem:[%s170 + $0x264] sm:$0xff] %v5883
      %6081 = vst [vmem:[%s170 + $0x26c] sm:$0xff] %v5884
      %6082 = vst [vmem:[%s170 + $0x274] sm:$0xff] %v5885
      %6083 = vst [vmem:[%s170 + $0x27c] sm:$0xff] %v5886
      %6084 = vst [vmem:[%s170 + $0x284] sm:$0xff] %v5887
      %6085 = vst [vmem:[%s170 + $0x28c] sm:$0xff] %v5888
      %6086 = vst [vmem:[%s170 + $0x294] sm:$0xff] %v5889
      %6087 = vst [vmem:[%s170 + $0x29c] sm:$0xff] %v5890
      %6088 = vst [vmem:[%s170 + $0x2a4] sm:$0xff] %v5891
      %6089 = vst [vmem:[%s170 + $0x2ac] sm:$0xff] %v5892
      %6090 = vst [vmem:[%s170 + $0x2b4] sm:$0xff] %v5893
      %6091 = vst [vmem:[%s170 + $0x2bc] sm:$0xff] %v5894
      %6092 = vst [vmem:[%s170 + $0x2c4] sm:$0xff] %v5895
      %6093 = vst [vmem:[%s170 + $0x2cc] sm:$0xff] %v5896
      %6094 = vst [vmem:[%s170 + $0x2d4] sm:$0xff] %v5897
      %6095 = vst [vmem:[%s170 + $0x2dc] sm:$0xff] %v5898
      %6096 = vst [vmem:[%s170 + $0x2e4] sm:$0xff] %v5899
      %6097 = vst [vmem:[%s170 + $0x2ec] sm:$0xff] %v5900
      %6098 = vst [vmem:[%s170 + $0x2f4] sm:$0xff] %v5901
      %6099 = vst [vmem:[%s170 + $0x2fc] sm:$0xff] %v5902
      %6100 = vst.msk [vmem:[%s170 + $0x304] sm:$0xf] %vm6050, %v5903
      %p6101 = scmp.lt.s32.totalorder %s14, 1
      %s6102 = scalar_select %p6101, %s14, 1
      %s6103 = smul.addr %s6102, 194
      %s6104 = smul.addr %s6103, 4
      %s6105 = scalar_lea.vmem %s3, %s6104
      // Predicated region
      $region33: #{cnn_classifier_forward.7} parent=31 // pred_check
        %p6106 = pneg %p100
      $region34: #{cnn_classifier_forward.7} parent=31 // pred_check_branch
        %6108 = sbr.rel (%p6106) target = $region36
      $region35: #{cnn_classifier_forward.7} parent=31 // pred_region
        _
      $region36: #{cnn_classifier_forward.7} parent=31 // pred_fallthru
        _
    $region32: #{cnn_classifier_forward.7} parent=5 // pred_fallthru
      _
    %p6109 = scmp.le.s32.totalorder 2, %s9
    // Predicated region
    $region37: #{cnn_classifier_forward.7} parent=5 // pred_check
      %p6110 = pneg %p6109
    $region38: #{cnn_classifier_forward.7} parent=5 // pred_check_branch
      %6112 = sbr.rel (%p6110) target = $region40
    $region39: #{cnn_classifier_forward.7} parent=5 // pred_region
      %s6113 = ssub.s32 %s9, 2
      // Predicated region
      $region41: #{cnn_classifier_forward.7} parent=39 // pred_check
        %p6114 = pneg %p106
      $region42: #{cnn_classifier_forward.7} parent=39 // pred_check_branch
        %6116 = sbr.rel (%p6114) target = $region44
      $region43: #{cnn_classifier_forward.7} parent=39 // pred_region
        %p6117 = scmp.lt.s32.totalorder %s15, 1
        %s6118 = scalar_select %p6117, %s15, 1
        %s6119 = smul.addr %s6118, 194
        %s6120 = smul.addr %s6119, 4
        %s6121 = scalar_lea.vmem %s3, %s6120
      $region44: #{cnn_classifier_forward.7} parent=39 // pred_fallthru
        _
    $region40: #{cnn_classifier_forward.7} parent=5 // pred_fallthru
      _
  $region6: #{cnn_classifier_forward.7} parent=0 // loop_footer
    %s13 = sadd.s32 1, %s9
  $region7: #{cnn_classifier_forward.7} parent=0 // loop_footer_branch
    %8 = sbr.rel target = $region3
  $region8: #{cnn_classifier_forward.7} parent=0 // loop_exit
    _

// kernel: cnn_classifier_forward.8
$region0: #{cnn_classifier_forward.8}
  #allocation0 [shape = 'u32[]', space=smem, size = 0x4, offset = 0x4, fixed_abs, tag = 'smem constant byte address 0x4 - core index']
  #allocation1 [shape = 'u32[144,128]{1,0:T(1,128)}', space=vmem, size = 0x12000, scoped, tag = 'internal scratch']
  %s0 = inlined_call_operand.vmem [shape: bf16[32,3025], index: 0, kind: input, shape index: {}]
  %s1 = inlined_call_operand.vmem [shape: bf16[32,3025], index: 1, kind: input, shape index: {}]
  %s2 = inlined_call_operand.vmem [shape: bf16[32,3025], index: 2, kind: input, shape index: {}]
  %s3 = inlined_call_operand.vmem [shape: bf16[32,3025], index: 3, kind: input, shape index: {}]
  %s4 = inlined_call_operand.vmem [shape: bf16[32,3025], index: 4, kind: output, shape index: {}]
  %s5 = sld [smem:[#allocation0]]
  $region26: #{cnn_classifier_forward.8} parent=0
    _
  %s7 = ssub.s32 1, %s5
  %s8 = scalar_select 0, %s7, %s5
  // Predicated region
  $region2: #{cnn_classifier_forward.8} parent=0 // pred_check
    _
  $region3: #{cnn_classifier_forward.8} parent=0 // pred_check_branch
    %10 = sbr.rel (0) target = $region5
  $region4: #{cnn_classifier_forward.8} parent=0 // pred_region
    _
  $region5: #{cnn_classifier_forward.8} parent=0 // pred_fallthru
    _
  // Predicated region
  $region6: #{cnn_classifier_forward.8} parent=0 // pred_check
    _
  $region7: #{cnn_classifier_forward.8} parent=0 // pred_check_branch
    %12 = sbr.rel (0) target = $region9
  $region8: #{cnn_classifier_forward.8} parent=0 // pred_region
    _
  $region9: #{cnn_classifier_forward.8} parent=0 // pred_fallthru
    _
  // Predicated region
  $region10: #{cnn_classifier_forward.8} parent=0 // pred_check
    _
  $region11: #{cnn_classifier_forward.8} parent=0 // pred_check_branch
    %14 = sbr.rel (0) target = $region13
  $region12: #{cnn_classifier_forward.8} parent=0 // pred_region
    _
  $region13: #{cnn_classifier_forward.8} parent=0 // pred_fallthru
    _
  // Predicated region
  $region14: #{cnn_classifier_forward.8} parent=0 // pred_check
    _
  $region15: #{cnn_classifier_forward.8} parent=0 // pred_check_branch
    %16 = sbr.rel (0) target = $region17
  $region16: #{cnn_classifier_forward.8} parent=0 // pred_region
    _
  $region17: #{cnn_classifier_forward.8} parent=0 // pred_fallthru
    _
  %v17 = vld [vmem:[%s0] sm:$0xff]
  %v18 = vld [vmem:[%s0 + $0x8] sm:$0xff]
  %v19 = vld [vmem:[%s0 + $0x10] sm:$0xff]
  %v20 = vld [vmem:[%s0 + $0x18] sm:$0xff]
  %v21 = vld [vmem:[%s0 + $0x20] sm:$0xff]
  %v22 = vld [vmem:[%s0 + $0x28] sm:$0xff]
  %v23 = vld [vmem:[%s0 + $0x30] sm:$0xff]
  %v24 = vld [vmem:[%s0 + $0x38] sm:$0xff]
  %v25 = vld [vmem:[%s0 + $0x40] sm:$0xff]
  %v26 = vld [vmem:[%s0 + $0x48] sm:$0xff]
  %v27 = vld [vmem:[%s0 + $0x50] sm:$0xff]
  %v28 = vld [vmem:[%s0 + $0x58] sm:$0xff]
  %v29 = vld [vmem:[%s0 + $0x60] sm:$0xff]
  %v30 = vld [vmem:[%s0 + $0x68] sm:$0xff]
  %v31 = vld [vmem:[%s0 + $0x70] sm:$0xff]
  %v32 = vld [vmem:[%s0 + $0x78] sm:$0xff]
  %v33 = vld [vmem:[%s0 + $0x80] sm:$0xff]
  %v34 = vld [vmem:[%s0 + $0x88] sm:$0xff]
  %v35 = vld [vmem:[%s0 + $0x90] sm:$0xff]
  %v36 = vld [vmem:[%s0 + $0x98] sm:$0xff]
  %v37 = vld [vmem:[%s0 + $0xa0] sm:$0xff]
  %v38 = vld [vmem:[%s0 + $0xa8] sm:$0xff]
  %v39 = vld [vmem:[%s0 + $0xb0] sm:$0xff]
  %v40 = vld [vmem:[%s0 + $0xb8] sm:$0xff]
  %v41 = vld [vmem:[%s0 + $0xc0] sm:$0xff]
  %v42 = vld [vmem:[%s0 + $0xc8] sm:$0xff]
  %v43 = vld [vmem:[%s0 + $0xd0] sm:$0xff]
  %v44 = vld [vmem:[%s0 + $0xd8] sm:$0xff]
  %v45 = vld [vmem:[%s0 + $0xe0] sm:$0xff]
  %v46 = vld [vmem:[%s0 + $0xe8] sm:$0xff]
  %v47 = vld [vmem:[%s0 + $0xf0] sm:$0xff]
  %v48 = vld [vmem:[%s0 + $0xf8] sm:$0xff]
  %v49 = vld [vmem:[%s0 + $0x100] sm:$0xff]
  %v50 = vld [vmem:[%s0 + $0x108] sm:$0xff]
  %v51 = vld [vmem:[%s0 + $0x110] sm:$0xff]
  %v52 = vld [vmem:[%s0 + $0x118] sm:$0xff]
  %v53 = vld [vmem:[%s0 + $0x120] sm:$0xff]
  %v54 = vld [vmem:[%s0 + $0x128] sm:$0xff]
  %v55 = vld [vmem:[%s0 + $0x130] sm:$0xff]
  %v56 = vld [vmem:[%s0 + $0x138] sm:$0xff]
  %v57 = vld [vmem:[%s0 + $0x140] sm:$0xff]
  %v58 = vld [vmem:[%s0 + $0x148] sm:$0xff]
  %v59 = vld [vmem:[%s0 + $0x150] sm:$0xff]
  %v60 = vld [vmem:[%s0 + $0x158] sm:$0xff]
  %v61 = vld [vmem:[%s0 + $0x160] sm:$0xff]
  %v62 = vld [vmem:[%s0 + $0x168] sm:$0xff]
  %v63 = vld [vmem:[%s0 + $0x170] sm:$0xff]
  %v64 = vld [vmem:[%s0 + $0x178] sm:$0xff]
  %v65 = vld [vmem:[%s1] sm:$0xff]
  %v66 = vld [vmem:[%s1 + $0x8] sm:$0xff]
  %v67 = vld [vmem:[%s1 + $0x10] sm:$0xff]
  %v68 = vld [vmem:[%s1 + $0x18] sm:$0xff]
  %v69 = vld [vmem:[%s1 + $0x20] sm:$0xff]
  %v70 = vld [vmem:[%s1 + $0x28] sm:$0xff]
  %v71 = vld [vmem:[%s1 + $0x30] sm:$0xff]
  %v72 = vld [vmem:[%s1 + $0x38] sm:$0xff]
  %v73 = vld [vmem:[%s1 + $0x40] sm:$0xff]
  %v74 = vld [vmem:[%s1 + $0x48] sm:$0xff]
  %v75 = vld [vmem:[%s1 + $0x50] sm:$0xff]
  %v76 = vld [vmem:[%s1 + $0x58] sm:$0xff]
  %v77 = vld [vmem:[%s1 + $0x60] sm:$0xff]
  %v78 = vld [vmem:[%s1 + $0x68] sm:$0xff]
  %v79 = vld [vmem:[%s1 + $0x70] sm:$0xff]
  %v80 = vld [vmem:[%s1 + $0x78] sm:$0xff]
  %v81 = vld [vmem:[%s1 + $0x80] sm:$0xff]
  %v82 = vld [vmem:[%s1 + $0x88] sm:$0xff]
  %v83 = vld [vmem:[%s1 + $0x90] sm:$0xff]
  %v84 = vld [vmem:[%s1 + $0x98] sm:$0xff]
  %v85 = vld [vmem:[%s1 + $0xa0] sm:$0xff]
  %v86 = vld [vmem:[%s1 + $0xa8] sm:$0xff]
  %v87 = vld [vmem:[%s1 + $0xb0] sm:$0xff]
  %v88 = vld [vmem:[%s1 + $0xb8] sm:$0xff]
  %v89 = vld [vmem:[%s1 + $0xc0] sm:$0xff]
  %v90 = vld [vmem:[%s1 + $0xc8] sm:$0xff]
  %v91 = vld [vmem:[%s1 + $0xd0] sm:$0xff]
  %v92 = vld [vmem:[%s1 + $0xd8] sm:$0xff]
  %v93 = vld [vmem:[%s1 + $0xe0] sm:$0xff]
  %v94 = vld [vmem:[%s1 + $0xe8] sm:$0xff]
  %v95 = vld [vmem:[%s1 + $0xf0] sm:$0xff]
  %v96 = vld [vmem:[%s1 + $0xf8] sm:$0xff]
  %v97 = vld [vmem:[%s1 + $0x100] sm:$0xff]
  %v98 = vld [vmem:[%s1 + $0x108] sm:$0xff]
  %v99 = vld [vmem:[%s1 + $0x110] sm:$0xff]
  %v100 = vld [vmem:[%s1 + $0x118] sm:$0xff]
  %v101 = vld [vmem:[%s1 + $0x120] sm:$0xff]
  %v102 = vld [vmem:[%s1 + $0x128] sm:$0xff]
  %v103 = vld [vmem:[%s1 + $0x130] sm:$0xff]
  %v104 = vld [vmem:[%s1 + $0x138] sm:$0xff]
  %v105 = vld [vmem:[%s1 + $0x140] sm:$0xff]
  %v106 = vld [vmem:[%s1 + $0x148] sm:$0xff]
  %v107 = vld [vmem:[%s1 + $0x150] sm:$0xff]
  %v108 = vld [vmem:[%s1 + $0x158] sm:$0xff]
  %v109 = vld [vmem:[%s1 + $0x160] sm:$0xff]
  %v110 = vld [vmem:[%s1 + $0x168] sm:$0xff]
  %v111 = vld [vmem:[%s1 + $0x170] sm:$0xff]
  %v112 = vld [vmem:[%s1 + $0x178] sm:$0xff]
  %v113 = vmax.bf16 %v17, %v65
  %v114 = vmax.bf16 %v18, %v66
  %v115 = vmax.bf16 %v19, %v67
  %v116 = vmax.bf16 %v20, %v68
  %v117 = vmax.bf16 %v21, %v69
  %v118 = vmax.bf16 %v22, %v70
  %v119 = vmax.bf16 %v23, %v71
  %v120 = vmax.bf16 %v24, %v72
  %v121 = vmax.bf16 %v25, %v73
  %v122 = vmax.bf16 %v26, %v74
  %v123 = vmax.bf16 %v27, %v75
  %v124 = vmax.bf16 %v28, %v76
  %v125 = vmax.bf16 %v29, %v77
  %v126 = vmax.bf16 %v30, %v78
  %v127 = vmax.bf16 %v31, %v79
  %v128 = vmax.bf16 %v32, %v80
  %v129 = vmax.bf16 %v33, %v81
  %v130 = vmax.bf16 %v34, %v82
  %v131 = vmax.bf16 %v35, %v83
  %v132 = vmax.bf16 %v36, %v84
  %v133 = vmax.bf16 %v37, %v85
  %v134 = vmax.bf16 %v38, %v86
  %v135 = vmax.bf16 %v39, %v87
  %v136 = vmax.bf16 %v40, %v88
  %v137 = vmax.bf16 %v41, %v89
  %v138 = vmax.bf16 %v42, %v90
  %v139 = vmax.bf16 %v43, %v91
  %v140 = vmax.bf16 %v44, %v92
  %v141 = vmax.bf16 %v45, %v93
  %v142 = vmax.bf16 %v46, %v94
  %v143 = vmax.bf16 %v47, %v95
  %v144 = vmax.bf16 %v48, %v96
  %v145 = vmax.bf16 %v49, %v97
  %v146 = vmax.bf16 %v50, %v98
  %v147 = vmax.bf16 %v51, %v99
  %v148 = vmax.bf16 %v52, %v100
  %v149 = vmax.bf16 %v53, %v101
  %v150 = vmax.bf16 %v54, %v102
  %v151 = vmax.bf16 %v55, %v103
  %v152 = vmax.bf16 %v56, %v104
  %v153 = vmax.bf16 %v57, %v105
  %v154 = vmax.bf16 %v58, %v106
  %v155 = vmax.bf16 %v59, %v107
  %v156 = vmax.bf16 %v60, %v108
  %v157 = vmax.bf16 %v61, %v109
  %v158 = vmax.bf16 %v62, %v110
  %v159 = vmax.bf16 %v63, %v111
  %v160 = vmax.bf16 %v64, %v112
  %v161 = vld [vmem:[%s2] sm:$0xff]
  %v162 = vld [vmem:[%s2 + $0x8] sm:$0xff]
  %v163 = vld [vmem:[%s2 + $0x10] sm:$0xff]
  %v164 = vld [vmem:[%s2 + $0x18] sm:$0xff]
  %v165 = vld [vmem:[%s2 + $0x20] sm:$0xff]
  %v166 = vld [vmem:[%s2 + $0x28] sm:$0xff]
  %v167 = vld [vmem:[%s2 + $0x30] sm:$0xff]
  %v168 = vld [vmem:[%s2 + $0x38] sm:$0xff]
  %v169 = vld [vmem:[%s2 + $0x40] sm:$0xff]
  %v170 = vld [vmem:[%s2 + $0x48] sm:$0xff]
  %v171 = vld [vmem:[%s2 + $0x50] sm:$0xff]
  %v172 = vld [vmem:[%s2 + $0x58] sm:$0xff]
  %v173 = vld [vmem:[%s2 + $0x60] sm:$0xff]
  %v174 = vld [vmem:[%s2 + $0x68] sm:$0xff]
  %v175 = vld [vmem:[%s2 + $0x70] sm:$0xff]
  %v176 = vld [vmem:[%s2 + $0x78] sm:$0xff]
  %v177 = vld [vmem:[%s2 + $0x80] sm:$0xff]
  %v178 = vld [vmem:[%s2 + $0x88] sm:$0xff]
  %v179 = vld [vmem:[%s2 + $0x90] sm:$0xff]
  %v180 = vld [vmem:[%s2 + $0x98] sm:$0xff]
  %v181 = vld [vmem:[%s2 + $0xa0] sm:$0xff]
  %v182 = vld [vmem:[%s2 + $0xa8] sm:$0xff]
  %v183 = vld [vmem:[%s2 + $0xb0] sm:$0xff]
  %v184 = vld [vmem:[%s2 + $0xb8] sm:$0xff]
  %v185 = vld [vmem:[%s2 + $0xc0] sm:$0xff]
  %v186 = vld [vmem:[%s2 + $0xc8] sm:$0xff]
  %v187 = vld [vmem:[%s2 + $0xd0] sm:$0xff]
  %v188 = vld [vmem:[%s2 + $0xd8] sm:$0xff]
  %v189 = vld [vmem:[%s2 + $0xe0] sm:$0xff]
  %v190 = vld [vmem:[%s2 + $0xe8] sm:$0xff]
  %v191 = vld [vmem:[%s2 + $0xf0] sm:$0xff]
  %v192 = vld [vmem:[%s2 + $0xf8] sm:$0xff]
  %v193 = vld [vmem:[%s2 + $0x100] sm:$0xff]
  %v194 = vld [vmem:[%s2 + $0x108] sm:$0xff]
  %v195 = vld [vmem:[%s2 + $0x110] sm:$0xff]
  %v196 = vld [vmem:[%s2 + $0x118] sm:$0xff]
  %v197 = vld [vmem:[%s2 + $0x120] sm:$0xff]
  %v198 = vld [vmem:[%s2 + $0x128] sm:$0xff]
  %v199 = vld [vmem:[%s2 + $0x130] sm:$0xff]
  %v200 = vld [vmem:[%s2 + $0x138] sm:$0xff]
  %v201 = vld [vmem:[%s2 + $0x140] sm:$0xff]
  %v202 = vld [vmem:[%s2 + $0x148] sm:$0xff]
  %v203 = vld [vmem:[%s2 + $0x150] sm:$0xff]
  %v204 = vld [vmem:[%s2 + $0x158] sm:$0xff]
  %v205 = vld [vmem:[%s2 + $0x160] sm:$0xff]
  %v206 = vld [vmem:[%s2 + $0x168] sm:$0xff]
  %v207 = vld [vmem:[%s2 + $0x170] sm:$0xff]
  %v208 = vld [vmem:[%s2 + $0x178] sm:$0xff]
  %v209 = vld [vmem:[%s3] sm:$0xff]
  %v210 = vld [vmem:[%s3 + $0x8] sm:$0xff]
  %v211 = vld [vmem:[%s3 + $0x10] sm:$0xff]
  %v212 = vld [vmem:[%s3 + $0x18] sm:$0xff]
  %v213 = vld [vmem:[%s3 + $0x20] sm:$0xff]
  %v214 = vld [vmem:[%s3 + $0x28] sm:$0xff]
  %v215 = vld [vmem:[%s3 + $0x30] sm:$0xff]
  %v216 = vld [vmem:[%s3 + $0x38] sm:$0xff]
  %v217 = vld [vmem:[%s3 + $0x40] sm:$0xff]
  %v218 = vld [vmem:[%s3 + $0x48] sm:$0xff]
  %v219 = vld [vmem:[%s3 + $0x50] sm:$0xff]
  %v220 = vld [vmem:[%s3 + $0x58] sm:$0xff]
  %v221 = vld [vmem:[%s3 + $0x60] sm:$0xff]
  %v222 = vld [vmem:[%s3 + $0x68] sm:$0xff]
  %v223 = vld [vmem:[%s3 + $0x70] sm:$0xff]
  %v224 = vld [vmem:[%s3 + $0x78] sm:$0xff]
  %v225 = vld [vmem:[%s3 + $0x80] sm:$0xff]
  %v226 = vld [vmem:[%s3 + $0x88] sm:$0xff]
  %v227 = vld [vmem:[%s3 + $0x90] sm:$0xff]
  %v228 = vld [vmem:[%s3 + $0x98] sm:$0xff]
  %v229 = vld [vmem:[%s3 + $0xa0] sm:$0xff]
  %v230 = vld [vmem:[%s3 + $0xa8] sm:$0xff]
  %v231 = vld [vmem:[%s3 + $0xb0] sm:$0xff]
  %v232 = vld [vmem:[%s3 + $0xb8] sm:$0xff]
  %v233 = vld [vmem:[%s3 + $0xc0] sm:$0xff]
  %v234 = vld [vmem:[%s3 + $0xc8] sm:$0xff]
  %v235 = vld [vmem:[%s3 + $0xd0] sm:$0xff]
  %v236 = vld [vmem:[%s3 + $0xd8] sm:$0xff]
  %v237 = vld [vmem:[%s3 + $0xe0] sm:$0xff]
  %v238 = vld [vmem:[%s3 + $0xe8] sm:$0xff]
  %v239 = vld [vmem:[%s3 + $0xf0] sm:$0xff]
  %v240 = vld [vmem:[%s3 + $0xf8] sm:$0xff]
  %v241 = vld [vmem:[%s3 + $0x100] sm:$0xff]
  %v242 = vld [vmem:[%s3 + $0x108] sm:$0xff]
  %v243 = vld [vmem:[%s3 + $0x110] sm:$0xff]
  %v244 = vld [vmem:[%s3 + $0x118] sm:$0xff]
  %v245 = vld [vmem:[%s3 + $0x120] sm:$0xff]
  %v246 = vld [vmem:[%s3 + $0x128] sm:$0xff]
  %v247 = vld [vmem:[%s3 + $0x130] sm:$0xff]
  %v248 = vld [vmem:[%s3 + $0x138] sm:$0xff]
  %v249 = vld [vmem:[%s3 + $0x140] sm:$0xff]
  %v250 = vld [vmem:[%s3 + $0x148] sm:$0xff]
  %v251 = vld [vmem:[%s3 + $0x150] sm:$0xff]
  %v252 = vld [vmem:[%s3 + $0x158] sm:$0xff]
  %v253 = vld [vmem:[%s3 + $0x160] sm:$0xff]
  %v254 = vld [vmem:[%s3 + $0x168] sm:$0xff]
  %v255 = vld [vmem:[%s3 + $0x170] sm:$0xff]
  %v256 = vld [vmem:[%s3 + $0x178] sm:$0xff]
  %v257 = vmax.bf16 %v161, %v209
  %v258 = vmax.bf16 %v162, %v210
  %v259 = vmax.bf16 %v163, %v211
  %v260 = vmax.bf16 %v164, %v212
  %v261 = vmax.bf16 %v165, %v213
  %v262 = vmax.bf16 %v166, %v214
  %v263 = vmax.bf16 %v167, %v215
  %v264 = vmax.bf16 %v168, %v216
  %v265 = vmax.bf16 %v169, %v217
  %v266 = vmax.bf16 %v170, %v218
  %v267 = vmax.bf16 %v171, %v219
  %v268 = vmax.bf16 %v172, %v220
  %v269 = vmax.bf16 %v173, %v221
  %v270 = vmax.bf16 %v174, %v222
  %v271 = vmax.bf16 %v175, %v223
  %v272 = vmax.bf16 %v176, %v224
  %v273 = vmax.bf16 %v177, %v225
  %v274 = vmax.bf16 %v178, %v226
  %v275 = vmax.bf16 %v179, %v227
  %v276 = vmax.bf16 %v180, %v228
  %v277 = vmax.bf16 %v181, %v229
  %v278 = vmax.bf16 %v182, %v230
  %v279 = vmax.bf16 %v183, %v231
  %v280 = vmax.bf16 %v184, %v232
  %v281 = vmax.bf16 %v185, %v233
  %v282 = vmax.bf16 %v186, %v234
  %v283 = vmax.bf16 %v187, %v235
  %v284 = vmax.bf16 %v188, %v236
  %v285 = vmax.bf16 %v189, %v237
  %v286 = vmax.bf16 %v190, %v238
  %v287 = vmax.bf16 %v191, %v239
  %v288 = vmax.bf16 %v192, %v240
  %v289 = vmax.bf16 %v193, %v241
  %v290 = vmax.bf16 %v194, %v242
  %v291 = vmax.bf16 %v195, %v243
  %v292 = vmax.bf16 %v196, %v244
  %v293 = vmax.bf16 %v197, %v245
  %v294 = vmax.bf16 %v198, %v246
  %v295 = vmax.bf16 %v199, %v247
  %v296 = vmax.bf16 %v200, %v248
  %v297 = vmax.bf16 %v201, %v249
  %v298 = vmax.bf16 %v202, %v250
  %v299 = vmax.bf16 %v203, %v251
  %v300 = vmax.bf16 %v204, %v252
  %v301 = vmax.bf16 %v205, %v253
  %v302 = vmax.bf16 %v206, %v254
  %v303 = vmax.bf16 %v207, %v255
  %v304 = vmax.bf16 %v208, %v256
  %v305 = vmax.bf16 %v113, %v257
  %v306 = vmax.bf16 %v114, %v258
  %v307 = vmax.bf16 %v115, %v259
  %v308 = vmax.bf16 %v116, %v260
  %v309 = vmax.bf16 %v117, %v261
  %v310 = vmax.bf16 %v118, %v262
  %v311 = vmax.bf16 %v119, %v263
  %v312 = vmax.bf16 %v120, %v264
  %v313 = vmax.bf16 %v121, %v265
  %v314 = vmax.bf16 %v122, %v266
  %v315 = vmax.bf16 %v123, %v267
  %v316 = vmax.bf16 %v124, %v268
  %v317 = vmax.bf16 %v125, %v269
  %v318 = vmax.bf16 %v126, %v270
  %v319 = vmax.bf16 %v127, %v271
  %v320 = vmax.bf16 %v128, %v272
  %v321 = vmax.bf16 %v129, %v273
  %v322 = vmax.bf16 %v130, %v274
  %v323 = vmax.bf16 %v131, %v275
  %v324 = vmax.bf16 %v132, %v276
  %v325 = vmax.bf16 %v133, %v277
  %v326 = vmax.bf16 %v134, %v278
  %v327 = vmax.bf16 %v135, %v279
  %v328 = vmax.bf16 %v136, %v280
  %v329 = vmax.bf16 %v137, %v281
  %v330 = vmax.bf16 %v138, %v282
  %v331 = vmax.bf16 %v139, %v283
  %v332 = vmax.bf16 %v140, %v284
  %v333 = vmax.bf16 %v141, %v285
  %v334 = vmax.bf16 %v142, %v286
  %v335 = vmax.bf16 %v143, %v287
  %v336 = vmax.bf16 %v144, %v288
  %v337 = vmax.bf16 %v145, %v289
  %v338 = vmax.bf16 %v146, %v290
  %v339 = vmax.bf16 %v147, %v291
  %v340 = vmax.bf16 %v148, %v292
  %v341 = vmax.bf16 %v149, %v293
  %v342 = vmax.bf16 %v150, %v294
  %v343 = vmax.bf16 %v151, %v295
  %v344 = vmax.bf16 %v152, %v296
  %v345 = vmax.bf16 %v153, %v297
  %v346 = vmax.bf16 %v154, %v298
  %v347 = vmax.bf16 %v155, %v299
  %v348 = vmax.bf16 %v156, %v300
  %v349 = vmax.bf16 %v157, %v301
  %v350 = vmax.bf16 %v158, %v302
  %v351 = vmax.bf16 %v159, %v303
  %v352 = vmax.bf16 %v160, %v304
  %353 = vst [vmem:[%s4] sm:$0xff] %v305
  %354 = vst [vmem:[%s4 + $0x8] sm:$0xff] %v306
  %355 = vst [vmem:[%s4 + $0x10] sm:$0xff] %v307
  %356 = vst [vmem:[%s4 + $0x18] sm:$0xff] %v308
  %357 = vst [vmem:[%s4 + $0x20] sm:$0xff] %v309
  %358 = vst [vmem:[%s4 + $0x28] sm:$0xff] %v310
  %359 = vst [vmem:[%s4 + $0x30] sm:$0xff] %v311
  %360 = vst [vmem:[%s4 + $0x38] sm:$0xff] %v312
  %361 = vst [vmem:[%s4 + $0x40] sm:$0xff] %v313
  %362 = vst [vmem:[%s4 + $0x48] sm:$0xff] %v314
  %363 = vst [vmem:[%s4 + $0x50] sm:$0xff] %v315
  %vm364 = vcmask 1043456
  %vm365 = vcmask 662532
  %vm366 = vmor %vm365, %vm364
  %367 = vst.msk [vmem:[%s4 + $0x58] sm:$0xff] %vm366, %v316
  %368 = vst [vmem:[%s4 + $0x60] sm:$0xff] %v317
  %369 = vst [vmem:[%s4 + $0x68] sm:$0xff] %v318
  %370 = vst [vmem:[%s4 + $0x70] sm:$0xff] %v319
  %371 = vst [vmem:[%s4 + $0x78] sm:$0xff] %v320
  %372 = vst [vmem:[%s4 + $0x80] sm:$0xff] %v321
  %373 = vst [vmem:[%s4 + $0x88] sm:$0xff] %v322
  %374 = vst [vmem:[%s4 + $0x90] sm:$0xff] %v323
  %375 = vst [vmem:[%s4 + $0x98] sm:$0xff] %v324
  %376 = vst [vmem:[%s4 + $0xa0] sm:$0xff] %v325
  %377 = vst [vmem:[%s4 + $0xa8] sm:$0xff] %v326
  %378 = vst [vmem:[%s4 + $0xb0] sm:$0xff] %v327
  %379 = vst.msk [vmem:[%s4 + $0xb8] sm:$0xff] %vm366, %v328
  %380 = vst [vmem:[%s4 + $0xc0] sm:$0xff] %v329
  %381 = vst [vmem:[%s4 + $0xc8] sm:$0xff] %v330
  %382 = vst [vmem:[%s4 + $0xd0] sm:$0xff] %v331
  %383 = vst [vmem:[%s4 + $0xd8] sm:$0xff] %v332
  %384 = vst [vmem:[%s4 + $0xe0] sm:$0xff] %v333
  %385 = vst [vmem:[%s4 + $0xe8] sm:$0xff] %v334
  %386 = vst [vmem:[%s4 + $0xf0] sm:$0xff] %v335
  %387 = vst [vmem:[%s4 + $0xf8] sm:$0xff] %v336
  %388 = vst [vmem:[%s4 + $0x100] sm:$0xff] %v337
  %389 = vst [vmem:[%s4 + $0x108] sm:$0xff] %v338
  %390 = vst [vmem:[%s4 + $0x110] sm:$0xff] %v339
  %391 = vst.msk [vmem:[%s4 + $0x118] sm:$0xff] %vm366, %v340
  %392 = vst [vmem:[%s4 + $0x120] sm:$0xff] %v341
  %393 = vst [vmem:[%s4 + $0x128] sm:$0xff] %v342
  %394 = vst [vmem:[%s4 + $0x130] sm:$0xff] %v343
  %395 = vst [vmem:[%s4 + $0x138] sm:$0xff] %v344
  %396 = vst [vmem:[%s4 + $0x140] sm:$0xff] %v345
  %397 = vst [vmem:[%s4 + $0x148] sm:$0xff] %v346
  %398 = vst [vmem:[%s4 + $0x150] sm:$0xff] %v347
  %399 = vst [vmem:[%s4 + $0x158] sm:$0xff] %v348
  %400 = vst [vmem:[%s4 + $0x160] sm:$0xff] %v349
  %401 = vst [vmem:[%s4 + $0x168] sm:$0xff] %v350
  %402 = vst [vmem:[%s4 + $0x170] sm:$0xff] %v351
  %403 = vst.msk [vmem:[%s4 + $0x178] sm:$0xff] %vm366, %v352
  // Predicated region
  $region18: #{cnn_classifier_forward.8} parent=0 // pred_check
    _
  $region19: #{cnn_classifier_forward.8} parent=0 // pred_check_branch
    %405 = sbr.rel (0) target = $region21
  $region20: #{cnn_classifier_forward.8} parent=0 // pred_region
    _
  $region21: #{cnn_classifier_forward.8} parent=0 // pred_fallthru
    _
  // Predicated region
  $region22: #{cnn_classifier_forward.8} parent=0 // pred_check
    _
  $region23: #{cnn_classifier_forward.8} parent=0 // pred_check_branch
    %407 = sbr.rel (0) target = $region25
  $region24: #{cnn_classifier_forward.8} parent=0 // pred_region
    _
  $region25: #{cnn_classifier_forward.8} parent=0 // pred_fallthru
    _

// kernel: cnn_classifier_forward.9
$region0: #{cnn_classifier_forward.9}
  #allocation0 [shape = 'u32[]', space=smem, size = 0x4, offset = 0x4, fixed_abs, tag = 'smem constant byte address 0x4 - core index']
  #allocation1 [shape = 'u32[144,128]{1,0:T(1,128)}', space=vmem, size = 0x12000, scoped, tag = 'internal scratch']
  %s0 = inlined_call_operand.vmem [shape: bf16[2,400,729], index: 0, kind: input, shape index: {}]
  %s1 = inlined_call_operand.vmem [shape: bf16[32,400], index: 1, kind: input, shape index: {}]
  %s2 = inlined_call_operand.vmem [shape: f32[32,1], index: 2, kind: input, shape index: {}]
  %s3 = inlined_call_operand.vmem [shape: bf16[2,32,729], index: 3, kind: output, shape index: {}]
  %s4 = sld [smem:[#allocation0]]
  $region45: #{cnn_classifier_forward.9} parent=0
    _
  %s6 = ssub.s32 1, %s4
  %s7 = scalar_select 0, %s6, %s4
  loop: start=0, step=1, limit=4
  $region2: #{cnn_classifier_forward.9} parent=0 // loop_pre_header
    _
  $region3: #{cnn_classifier_forward.9} parent=0 // loop_header
    %s9 = sphi 0, %s13
    %p10 = scmp.ge.s32.totalorder %s9, 4
    %s19 = sphi 0, %s21
    %s22 = sphi 0, %s19
    %s23 = sphi 0, %s22
    %s39 = sphi 0, %s23
    %s43 = sphi 0, %s43
    %s45 = sphi 0, %s43
    %s46 = sphi 0, %s45
    %s60 = sphi 0, %s46
    %s64 = sphi 0, %s64
    %s66 = sphi 0, %s64
    %s67 = sphi 0, %s66
    %s81 = sphi 0, %s67
    %s87 = sphi 0, %s89
    %s90 = sphi 0, %s87
    %s91 = sphi 0, %s90
    %s107 = sphi 0, %s91
  $region4: #{cnn_classifier_forward.9} parent=0 // loop_header_branch
    %12 = sbr.rel (%p10) target = $region8
  $region5: #{cnn_classifier_forward.9} parent=0 // loop_body
    %s14 = ssub.s32 %s9, 1
    %s15 = ssub.s32 %s9, 2
    %s16 = sadd.s32 %s9, 1
    %s17 = ssub.s32 %s9, %s16
    %p18 = scmp.eq.s32.totalorder %s17, 0
    %s20 = sadd.s32 %s19, 1
    %s21 = scalar_select %p18, %s19, %s20
    %p24 = pneg %p18
    %p25 = scmp.eq.s32.totalorder %s9, 1
    %p26 = por %p24, %p25
    %p27 = scmp.ne.s32.totalorder %s19, %s22
    %p28 = scmp.eq.s32.totalorder %s9, 0
    %p29 = por %p27, %p28
    %p30 = scmp.ne.s32.totalorder %s19, %s22
    %p31 = scmp.eq.s32.totalorder %s14, 1
    %p32 = por %p30, %p31
    %p33 = scmp.ne.s32.totalorder %s22, %s23
    %p34 = scmp.eq.s32.totalorder %s14, 0
    %p35 = por %p33, %p34
    %p36 = scmp.ne.s32.totalorder %s22, %s23
    %p37 = scmp.eq.s32.totalorder %s15, 1
    %p38 = por %p36, %p37
    %p40 = scmp.ne.s32.totalorder %s23, %s39
    %p41 = scmp.eq.s32.totalorder %s15, 0
    %p42 = por %p40, %p41
    %s44 = sadd.s32 %s43, 1
    %p47 = scmp.eq.s32.totalorder %s9, 1
    %p48 = scmp.ne.s32.totalorder %s43, %s45
    %p49 = scmp.eq.s32.totalorder %s9, 0
    %p50 = por %p48, %p49
    %p51 = scmp.ne.s32.totalorder %s43, %s45
    %p52 = scmp.eq.s32.totalorder %s14, 1
    %p53 = por %p51, %p52
    %p54 = scmp.ne.s32.totalorder %s45, %s46
    %p55 = scmp.eq.s32.totalorder %s14, 0
    %p56 = por %p54, %p55
    %p57 = scmp.ne.s32.totalorder %s45, %s46
    %p58 = scmp.eq.s32.totalorder %s15, 1
    %p59 = por %p57, %p58
    %p61 = scmp.ne.s32.totalorder %s46, %s60
    %p62 = scmp.eq.s32.totalorder %s15, 0
    %p63 = por %p61, %p62
    %s65 = sadd.s32 %s64, 1
    %p68 = scmp.eq.s32.totalorder %s9, 1
    %p69 = scmp.ne.s32.totalorder %s64, %s66
    %p70 = scmp.eq.s32.totalorder %s9, 0
    %p71 = por %p69, %p70
    %p72 = scmp.ne.s32.totalorder %s64, %s66
    %p73 = scmp.eq.s32.totalorder %s14, 1
    %p74 = por %p72, %p73
    %p75 = scmp.ne.s32.totalorder %s66, %s67
    %p76 = scmp.eq.s32.totalorder %s14, 0
    %p77 = por %p75, %p76
    %p78 = scmp.ne.s32.totalorder %s66, %s67
    %p79 = scmp.eq.s32.totalorder %s15, 1
    %p80 = por %p78, %p79
    %p82 = scmp.ne.s32.totalorder %s67, %s81
    %p83 = scmp.eq.s32.totalorder %s15, 0
    %p84 = por %p82, %p83
    %s85 = ssub.s32 %s9, %s16
    %p86 = scmp.eq.s32.totalorder %s85, 0
    %s88 = sadd.s32 %s87, 1
    %s89 = scalar_select %p86, %s87, %s88
    %p92 = pneg %p86
    %p93 = scmp.eq.s32.totalorder %s9, 1
    %p94 = por %p92, %p93
    %p95 = scmp.ne.s32.totalorder %s87, %s90
    %p96 = scmp.eq.s32.totalorder %s9, 0
    %p97 = por %p95, %p96
    %p98 = scmp.ne.s32.totalorder %s87, %s90
    %p99 = scmp.eq.s32.totalorder %s14, 1
    %p100 = por %p98, %p99
    %p101 = scmp.ne.s32.totalorder %s90, %s91
    %p102 = scmp.eq.s32.totalorder %s14, 0
    %p103 = por %p101, %p102
    %p104 = scmp.ne.s32.totalorder %s90, %s91
    %p105 = scmp.eq.s32.totalorder %s15, 1
    %p106 = por %p104, %p105
    %p108 = scmp.ne.s32.totalorder %s91, %s107
    %p109 = scmp.eq.s32.totalorder %s15, 0
    %p110 = por %p108, %p109
    %p111 = scmp.le.s32.totalorder 1, %s9
    %p112 = scmp.lt.s32.totalorder %s9, 3
    %p113 = pnand %p111, %p112
    %p114 = pneg %p113
    // Predicated region
    $region9: #{cnn_classifier_forward.9} parent=5 // pred_check
      _
    $region10: #{cnn_classifier_forward.9} parent=5 // pred_check_branch
      %116 = sbr.rel (%p113) target = $region12
    $region11: #{cnn_classifier_forward.9} parent=5 // pred_region
      %s117 = ssub.s32 %s9, 1
      // Predicated region
      $region13: #{cnn_classifier_forward.9} parent=11 // pred_check
        %p118 = pneg %p56
      $region14: #{cnn_classifier_forward.9} parent=11 // pred_check_branch
        %120 = sbr.rel (%p118) target = $region16
      $region15: #{cnn_classifier_forward.9} parent=11 // pred_region
        _
      $region16: #{cnn_classifier_forward.9} parent=11 // pred_fallthru
        _
      // Predicated region
      $region17: #{cnn_classifier_forward.9} parent=11 // pred_check
        %p121 = pneg %p77
      $region18: #{cnn_classifier_forward.9} parent=11 // pred_check_branch
        %123 = sbr.rel (%p121) target = $region20
      $region19: #{cnn_classifier_forward.9} parent=11 // pred_region
        _
      $region20: #{cnn_classifier_forward.9} parent=11 // pred_fallthru
        _
    $region12: #{cnn_classifier_forward.9} parent=5 // pred_fallthru
      _
    %p124 = scmp.lt.s32.totalorder %s9, 2
    // Predicated region
    $region21: #{cnn_classifier_forward.9} parent=5 // pred_check
      %p125 = pneg %p124
    $region22: #{cnn_classifier_forward.9} parent=5 // pred_check_branch
      %127 = sbr.rel (%p125) target = $region24
    $region23: #{cnn_classifier_forward.9} parent=5 // pred_region
      // Predicated region
      $region25: #{cnn_classifier_forward.9} parent=23 // pred_check
        %p128 = pneg %p29
      $region26: #{cnn_classifier_forward.9} parent=23 // pred_check_branch
        %130 = sbr.rel (%p128) target = $region28
      $region27: #{cnn_classifier_forward.9} parent=23 // pred_region
        %p131 = scmp.lt.s32.totalorder %s9, 1
        %s132 = scalar_select %p131, %s9, 1
        %s133 = smul.addr %s132, 300
        %s134 = smul.addr %s133, 4
        %s135 = scalar_lea.vmem %s0, %s134
      $region28: #{cnn_classifier_forward.9} parent=23 // pred_fallthru
        _
    $region24: #{cnn_classifier_forward.9} parent=5 // pred_fallthru
      _
    %p136 = scmp.le.s32.totalorder 1, %s9
    %p137 = scmp.lt.s32.totalorder %s9, 3
    %p138 = pnand %p136, %p137
    %p139 = pneg %p138
    // Predicated region
    $region29: #{cnn_classifier_forward.9} parent=5 // pred_check
      _
    $region30: #{cnn_classifier_forward.9} parent=5 // pred_check_branch
      %141 = sbr.rel (%p138) target = $region32
    $region31: #{cnn_classifier_forward.9} parent=5 // pred_region
      %s142 = ssub.s32 %s9, 1
      %p143 = scmp.lt.s32.totalorder %s14, 1
      %s144 = scalar_select %p143, %s14, 1
      %s145 = smul.addr %s144, 300
      %s146 = smul.addr %s145, 4
      %s147 = scalar_lea.vmem %s0, %s146
      %p148 = pneg %p35
      %p149 = pneg %p32
      %p150 = pneg %p56
      %p151 = pneg %p53
      %p152 = pneg %p77
      %p153 = pneg %p74
      %p154 = pneg %p103
      %p155 = pneg %p100
      %p156 = scmp.lt.s32.totalorder %s14, 1
      %s157 = scalar_select %p156, %s14, 1
      %s158 = smul.addr %s157, 24
      %s159 = smul.addr %s158, 4
      %s160 = scalar_lea.vmem %s3, %s159
      %p161 = scmp.lt.s32.totalorder %s14, 1
      %s162 = scalar_select %p161, %s14, 1
      %s163 = smul.addr %s162, 300
      %s164 = smul.addr %s163, 4
      %s165 = scalar_lea.vmem %s0, %s164
      %p166 = scmp.lt.s32.totalorder %s14, 1
      %s167 = scalar_select %p166, %s14, 1
      %s168 = smul.addr %s167, 24
      %s169 = smul.addr %s168, 4
      %s170 = scalar_lea.vmem %s3, %s169
      %v172 = vld [vmem:[%s1] sm:$0xff]
      %v173 = vld [vmem:[%s1 + $0x8] sm:$0xff]
      %v174 = vld [vmem:[%s1 + $0x10] sm:$0xff]
      %v175 = vld [vmem:[%s1 + $0x18] sm:$0xff]
      %v176 = vld [vmem:[%s1 + $0x20] sm:$0xff]
      %v177 = vld [vmem:[%s1 + $0x28] sm:$0xff]
      %v178 = vld [vmem:[%s1 + $0x30] sm:$0xff]
      %v179 = vld [vmem:[%s1 + $0x38] sm:$0xff]
      %v180 = vld [vmem:[%s165] sm:$0xff]
      %v181 = vld [vmem:[%s165 + $0x8] sm:$0xff]
      %v182 = vld [vmem:[%s165 + $0x10] sm:$0xff]
      %v183 = vld [vmem:[%s165 + $0x18] sm:$0xff]
      %v184 = vld [vmem:[%s165 + $0x20] sm:$0xff]
      %v185 = vld [vmem:[%s165 + $0x28] sm:$0xff]
      %v186 = vld [vmem:[%s165 + $0x30] sm:$0xff]
      %v187 = vld [vmem:[%s165 + $0x38] sm:$0xff]
      %v188 = vld [vmem:[%s165 + $0x40] sm:$0xff]
      %v189 = vld [vmem:[%s165 + $0x48] sm:$0xff]
      %v190 = vld [vmem:[%s165 + $0x50] sm:$0xff]
      %v191 = vld [vmem:[%s165 + $0x58] sm:$0xff]
      %v192 = vld [vmem:[%s165 + $0x60] sm:$0xff]
      %v193 = vld [vmem:[%s165 + $0x68] sm:$0xff]
      %v194 = vld [vmem:[%s165 + $0x70] sm:$0xff]
      %v195 = vld [vmem:[%s165 + $0x78] sm:$0xff]
      %v196 = vld [vmem:[%s165 + $0x80] sm:$0xff]
      %v197 = vld [vmem:[%s165 + $0x88] sm:$0xff]
      %v198 = vld [vmem:[%s165 + $0x90] sm:$0xff]
      %v199 = vld [vmem:[%s165 + $0x98] sm:$0xff]
      %v200 = vld [vmem:[%s165 + $0xa0] sm:$0xff]
      %v201 = vld [vmem:[%s165 + $0xa8] sm:$0xff]
      %v202 = vld [vmem:[%s165 + $0xb0] sm:$0xff]
      %v203 = vld [vmem:[%s165 + $0xb8] sm:$0xff]
      %v204 = vld [vmem:[%s165 + $0xc0] sm:$0xff]
      %v205 = vld [vmem:[%s165 + $0xc8] sm:$0xff]
      %v206 = vld [vmem:[%s165 + $0xd0] sm:$0xff]
      %v207 = vld [vmem:[%s165 + $0xd8] sm:$0xff]
      %v208 = vld [vmem:[%s165 + $0xe0] sm:$0xff]
      %v209 = vld [vmem:[%s165 + $0xe8] sm:$0xff]
      %v210 = vld [vmem:[%s165 + $0xf0] sm:$0xff]
      %v211 = vld [vmem:[%s165 + $0xf8] sm:$0xff]
      %v212 = vld [vmem:[%s165 + $0x100] sm:$0xff]
      %v213 = vld [vmem:[%s165 + $0x108] sm:$0xff]
      %v214 = vld [vmem:[%s165 + $0x110] sm:$0xff]
      %v215 = vld [vmem:[%s165 + $0x118] sm:$0xff]
      %v216 = vld [vmem:[%s165 + $0x120] sm:$0xff]
      %v217 = vld [vmem:[%s165 + $0x128] sm:$0xff]
      %v218 = vld [vmem:[%s165 + $0x130] sm:$0xff]
      %v219 = vld [vmem:[%s165 + $0x138] sm:$0xff]
      %v220 = vld [vmem:[%s165 + $0x140] sm:$0xff]
      %v221 = vld [vmem:[%s165 + $0x148] sm:$0xff]
      %v222 = vld [vmem:[%s165 + $0x150] sm:$0xff]
      %v223 = vld [vmem:[%s165 + $0x158] sm:$0xff]
      %v224 = vld [vmem:[%s165 + $0x160] sm:$0xff]
      %v225 = vld [vmem:[%s165 + $0x168] sm:$0xff]
      %v226 = vld [vmem:[%s165 + $0x170] sm:$0xff]
      %v227 = vld [vmem:[%s165 + $0x178] sm:$0xff]
      %v228 = vld [vmem:[%s165 + $0x180] sm:$0xff]
      %v229 = vld [vmem:[%s165 + $0x188] sm:$0xff]
      %v230 = vld [vmem:[%s165 + $0x190] sm:$0xff]
      %v231 = vld [vmem:[%s165 + $0x198] sm:$0xff]
      %v232 = vld [vmem:[%s165 + $0x1a0] sm:$0xff]
      %v233 = vld [vmem:[%s165 + $0x1a8] sm:$0xff]
      %v234 = vld [vmem:[%s165 + $0x1b0] sm:$0xff]
      %v235 = vld [vmem:[%s165 + $0x1b8] sm:$0xff]
      %v236 = vld [vmem:[%s165 + $0x1c0] sm:$0xff]
      %v237 = vld [vmem:[%s165 + $0x1c8] sm:$0xff]
      %v238 = vld [vmem:[%s165 + $0x1d0] sm:$0xff]
      %v239 = vld [vmem:[%s165 + $0x1d8] sm:$0xff]
      %v240 = vld [vmem:[%s165 + $0x1e0] sm:$0xff]
      %v241 = vld [vmem:[%s165 + $0x1e8] sm:$0xff]
      %v242 = vld [vmem:[%s165 + $0x1f0] sm:$0xff]
      %v243 = vld [vmem:[%s165 + $0x1f8] sm:$0xff]
      %v244 = vld [vmem:[%s165 + $0x200] sm:$0xff]
      %v245 = vld [vmem:[%s165 + $0x208] sm:$0xff]
      %v246 = vld [vmem:[%s165 + $0x210] sm:$0xff]
      %v247 = vld [vmem:[%s165 + $0x218] sm:$0xff]
      %v248 = vld [vmem:[%s165 + $0x220] sm:$0xff]
      %v249 = vld [vmem:[%s165 + $0x228] sm:$0xff]
      %v250 = vld [vmem:[%s165 + $0x230] sm:$0xff]
      %v251 = vld [vmem:[%s165 + $0x238] sm:$0xff]
      %v252 = vld [vmem:[%s165 + $0x240] sm:$0xff]
      %v253 = vld [vmem:[%s165 + $0x248] sm:$0xff]
      %v254 = vld [vmem:[%s165 + $0x250] sm:$0xff]
      %v255 = vld [vmem:[%s165 + $0x258] sm:$0xff]
      %v256 = vld [vmem:[%s165 + $0x260] sm:$0xff]
      %v257 = vld [vmem:[%s165 + $0x268] sm:$0xff]
      %v258 = vld [vmem:[%s165 + $0x270] sm:$0xff]
      %v259 = vld [vmem:[%s165 + $0x278] sm:$0xff]
      %v260 = vld [vmem:[%s165 + $0x280] sm:$0xff]
      %v261 = vld [vmem:[%s165 + $0x288] sm:$0xff]
      %v262 = vld [vmem:[%s165 + $0x290] sm:$0xff]
      %v263 = vld [vmem:[%s165 + $0x298] sm:$0xff]
      %v264 = vld [vmem:[%s165 + $0x2a0] sm:$0xff]
      %v265 = vld [vmem:[%s165 + $0x2a8] sm:$0xff]
      %v266 = vld [vmem:[%s165 + $0x2b0] sm:$0xff]
      %v267 = vld [vmem:[%s165 + $0x2b8] sm:$0xff]
      %v268 = vld [vmem:[%s165 + $0x2c0] sm:$0xff]
      %v269 = vld [vmem:[%s165 + $0x2c8] sm:$0xff]
      %v270 = vld [vmem:[%s165 + $0x2d0] sm:$0xff]
      %v271 = vld [vmem:[%s165 + $0x2d8] sm:$0xff]
      %v272 = vld [vmem:[%s165 + $0x2e0] sm:$0xff]
      %v273 = vld [vmem:[%s165 + $0x2e8] sm:$0xff]
      %v274 = vld [vmem:[%s165 + $0x2f0] sm:$0xff]
      %v275 = vld [vmem:[%s165 + $0x2f8] sm:$0xff]
      %v276 = vld [vmem:[%s165 + $0x300] sm:$0xff]
      %v277 = vld [vmem:[%s165 + $0x308] sm:$0xff]
      %v278 = vld [vmem:[%s165 + $0x310] sm:$0xff]
      %v279 = vld [vmem:[%s165 + $0x318] sm:$0xff]
      %v280 = vld [vmem:[%s165 + $0x320] sm:$0xff]
      %v281 = vld [vmem:[%s165 + $0x328] sm:$0xff]
      %v282 = vld [vmem:[%s165 + $0x330] sm:$0xff]
      %v283 = vld [vmem:[%s165 + $0x338] sm:$0xff]
      %v284 = vld [vmem:[%s165 + $0x340] sm:$0xff]
      %v285 = vld [vmem:[%s165 + $0x348] sm:$0xff]
      %v286 = vld [vmem:[%s165 + $0x350] sm:$0xff]
      %v287 = vld [vmem:[%s165 + $0x358] sm:$0xff]
      %v288 = vld [vmem:[%s165 + $0x360] sm:$0xff]
      %v289 = vld [vmem:[%s165 + $0x368] sm:$0xff]
      %v290 = vld [vmem:[%s165 + $0x370] sm:$0xff]
      %v291 = vld [vmem:[%s165 + $0x378] sm:$0xff]
      %v292 = vld [vmem:[%s165 + $0x380] sm:$0xff]
      %v293 = vld [vmem:[%s165 + $0x388] sm:$0xff]
      %v294 = vld [vmem:[%s165 + $0x390] sm:$0xff]
      %v295 = vld [vmem:[%s165 + $0x398] sm:$0xff]
      %v296 = vld [vmem:[%s165 + $0x3a0] sm:$0xff]
      %v297 = vld [vmem:[%s165 + $0x3a8] sm:$0xff]
      %v298 = vld [vmem:[%s165 + $0x3b0] sm:$0xff]
      %v299 = vld [vmem:[%s165 + $0x3b8] sm:$0xff]
      %v300 = vld [vmem:[%s165 + $0x3c0] sm:$0xff]
      %v301 = vld [vmem:[%s165 + $0x3c8] sm:$0xff]
      %v302 = vld [vmem:[%s165 + $0x3d0] sm:$0xff]
      %v303 = vld [vmem:[%s165 + $0x3d8] sm:$0xff]
      %v304 = vld [vmem:[%s165 + $0x3e0] sm:$0xff]
      %v305 = vld [vmem:[%s165 + $0x3e8] sm:$0xff]
      %v306 = vld [vmem:[%s165 + $0x3f0] sm:$0xff]
      %v307 = vld [vmem:[%s165 + $0x3f8] sm:$0xff]
      %v308 = vld [vmem:[%s165 + $0x400] sm:$0xff]
      %v309 = vld [vmem:[%s165 + $0x408] sm:$0xff]
      %v310 = vld [vmem:[%s165 + $0x410] sm:$0xff]
      %v311 = vld [vmem:[%s165 + $0x418] sm:$0xff]
      %v312 = vld [vmem:[%s165 + $0x420] sm:$0xff]
      %v313 = vld [vmem:[%s165 + $0x428] sm:$0xff]
      %v314 = vld [vmem:[%s165 + $0x430] sm:$0xff]
      %v315 = vld [vmem:[%s165 + $0x438] sm:$0xff]
      %v316 = vld [vmem:[%s165 + $0x440] sm:$0xff]
      %v317 = vld [vmem:[%s165 + $0x448] sm:$0xff]
      %v318 = vld [vmem:[%s165 + $0x450] sm:$0xff]
      %v319 = vld [vmem:[%s165 + $0x458] sm:$0xff]
      %v320 = vld [vmem:[%s165 + $0x460] sm:$0xff]
      %v321 = vld [vmem:[%s165 + $0x468] sm:$0xff]
      %v322 = vld [vmem:[%s165 + $0x470] sm:$0xff]
      %v323 = vld [vmem:[%s165 + $0x478] sm:$0xff]
      %v324 = vld [vmem:[%s165 + $0x480] sm:$0xff]
      %v325 = vld [vmem:[%s165 + $0x488] sm:$0xff]
      %v326 = vld [vmem:[%s165 + $0x490] sm:$0xff]
      %v327 = vld [vmem:[%s165 + $0x498] sm:$0xff]
      %v328 = vld [vmem:[%s165 + $0x4a0] sm:$0xff]
      %v329 = vld [vmem:[%s165 + $0x4a8] sm:$0xff]
      %v330 = vld [vmem:[%s2] sm:$0xff]
      %v331 = vld [vmem:[%s2 + $0x8] sm:$0xff]
      %v332 = vld [vmem:[%s2 + $0x10] sm:$0xff]
      %v333 = vld [vmem:[%s2 + $0x18] sm:$0xff]
      %335 = vset.pattern.permute.xlu0 0
      %336 = vperm.xlu0 %335, %v330
      %v337 = vpop.permute.xlu0 %336
      %340 = vset.pattern.permute.xlu0 0
      %341 = vperm.xlu0 %340, %v331
      %v342 = vpop.permute.xlu0 %341
      %345 = vset.pattern.permute.xlu0 0
      %346 = vperm.xlu0 %345, %v332
      %v347 = vpop.permute.xlu0 %346
      %350 = vset.pattern.permute.xlu0 0
      %351 = vperm.xlu0 %350, %v333
      %v352 = vpop.permute.xlu0 %351
      %v362 = vunpack.c.l.b16 %v172
      %v363 = vunpack.c.h.b16 %v172
      %v364 = vunpack.c.l.b16 %v173
      %v365 = vunpack.c.h.b16 %v173
      %v366 = vunpack.c.l.b16 %v174
      %v367 = vunpack.c.h.b16 %v174
      %v368 = vunpack.c.l.b16 %v175
      %v369 = vunpack.c.h.b16 %v175
      %v370 = vunpack.c.l.b16 %v176
      %v371 = vunpack.c.h.b16 %v176
      %v372 = vunpack.c.l.b16 %v177
      %v373 = vunpack.c.h.b16 %v177
      %v374 = vunpack.c.l.b16 %v178
      %v375 = vunpack.c.h.b16 %v178
      %v376 = vunpack.c.l.b16 %v179
      %v377 = vunpack.c.h.b16 %v179
      %v378 = vpack.c.b16 %v366, %v362
      %v379 = vpack.c.b16 %v367, %v363
      %v380 = vpack.c.b16 %v368, %v364
      %v381 = vpack.c.b16 %v369, %v365
      %v382 = vpack.c.b16 %v374, %v370
      %v383 = vpack.c.b16 %v375, %v371
      %v384 = vpack.c.b16 %v376, %v372
      %v385 = vpack.c.b16 %v377, %v373
      %v542 = vunpack.c.l.b16 %v180
      %v543 = vunpack.c.h.b16 %v180
      %v544 = vunpack.c.l.b16 %v181
      %v545 = vunpack.c.h.b16 %v181
      %v546 = vunpack.c.l.b16 %v182
      %v547 = vunpack.c.h.b16 %v182
      %v548 = vunpack.c.l.b16 %v183
      %v549 = vunpack.c.h.b16 %v183
      %v550 = vunpack.c.l.b16 %v184
      %v551 = vunpack.c.h.b16 %v184
      %v552 = vunpack.c.l.b16 %v185
      %v553 = vunpack.c.h.b16 %v185
      %v554 = vunpack.c.l.b16 %v186
      %v555 = vunpack.c.h.b16 %v186
      %v556 = vunpack.c.l.b16 %v187
      %v557 = vunpack.c.h.b16 %v187
      %v558 = vunpack.c.l.b16 %v188
      %v559 = vunpack.c.h.b16 %v188
      %v560 = vunpack.c.l.b16 %v189
      %v561 = vunpack.c.h.b16 %v189
      %v562 = vunpack.c.l.b16 %v190
      %v563 = vunpack.c.h.b16 %v190
      %v564 = vunpack.c.l.b16 %v191
      %v565 = vunpack.c.h.b16 %v191
      %v566 = vunpack.c.l.b16 %v192
      %v567 = vunpack.c.h.b16 %v192
      %v568 = vunpack.c.l.b16 %v193
      %v569 = vunpack.c.h.b16 %v193
      %v570 = vunpack.c.l.b16 %v194
      %v571 = vunpack.c.h.b16 %v194
      %v572 = vunpack.c.l.b16 %v195
      %v573 = vunpack.c.h.b16 %v195
      %v574 = vunpack.c.l.b16 %v196
      %v575 = vunpack.c.h.b16 %v196
      %v576 = vunpack.c.l.b16 %v197
      %v577 = vunpack.c.h.b16 %v197
      %v578 = vunpack.c.l.b16 %v198
      %v579 = vunpack.c.h.b16 %v198
      %v580 = vunpack.c.l.b16 %v199
      %v581 = vunpack.c.h.b16 %v199
      %v582 = vunpack.c.l.b16 %v200
      %v583 = vunpack.c.h.b16 %v200
      %v584 = vunpack.c.l.b16 %v201
      %v585 = vunpack.c.h.b16 %v201
      %v586 = vunpack.c.l.b16 %v202
      %v587 = vunpack.c.h.b16 %v202
      %v588 = vunpack.c.l.b16 %v203
      %v589 = vunpack.c.h.b16 %v203
      %v590 = vunpack.c.l.b16 %v204
      %v591 = vunpack.c.h.b16 %v204
      %v592 = vunpack.c.l.b16 %v205
      %v593 = vunpack.c.h.b16 %v205
      %v594 = vunpack.c.l.b16 %v206
      %v595 = vunpack.c.h.b16 %v206
      %v596 = vunpack.c.l.b16 %v207
      %v597 = vunpack.c.h.b16 %v207
      %v598 = vunpack.c.l.b16 %v208
      %v599 = vunpack.c.h.b16 %v208
      %v600 = vunpack.c.l.b16 %v209
      %v601 = vunpack.c.h.b16 %v209
      %v602 = vunpack.c.l.b16 %v210
      %v603 = vunpack.c.h.b16 %v210
      %v604 = vunpack.c.l.b16 %v211
      %v605 = vunpack.c.h.b16 %v211
      %v606 = vunpack.c.l.b16 %v212
      %v607 = vunpack.c.h.b16 %v212
      %v608 = vunpack.c.l.b16 %v213
      %v609 = vunpack.c.h.b16 %v213
      %v610 = vunpack.c.l.b16 %v214
      %v611 = vunpack.c.h.b16 %v214
      %v612 = vunpack.c.l.b16 %v215
      %v613 = vunpack.c.h.b16 %v215
      %v614 = vunpack.c.l.b16 %v216
      %v615 = vunpack.c.h.b16 %v216
      %v616 = vunpack.c.l.b16 %v217
      %v617 = vunpack.c.h.b16 %v217
      %v618 = vunpack.c.l.b16 %v218
      %v619 = vunpack.c.h.b16 %v218
      %v620 = vunpack.c.l.b16 %v219
      %v621 = vunpack.c.h.b16 %v219
      %v622 = vunpack.c.l.b16 %v220
      %v623 = vunpack.c.h.b16 %v220
      %v624 = vunpack.c.l.b16 %v221
      %v625 = vunpack.c.h.b16 %v221
      %v626 = vunpack.c.l.b16 %v222
      %v627 = vunpack.c.h.b16 %v222
      %v628 = vunpack.c.l.b16 %v223
      %v629 = vunpack.c.h.b16 %v223
      %v630 = vunpack.c.l.b16 %v224
      %v631 = vunpack.c.h.b16 %v224
      %v632 = vunpack.c.l.b16 %v225
      %v633 = vunpack.c.h.b16 %v225
      %v634 = vunpack.c.l.b16 %v226
      %v635 = vunpack.c.h.b16 %v226
      %v636 = vunpack.c.l.b16 %v227
      %v637 = vunpack.c.h.b16 %v227
      %v638 = vunpack.c.l.b16 %v228
      %v639 = vunpack.c.h.b16 %v228
      %v640 = vunpack.c.l.b16 %v229
      %v641 = vunpack.c.h.b16 %v229
      %v642 = vunpack.c.l.b16 %v230
      %v643 = vunpack.c.h.b16 %v230
      %v644 = vunpack.c.l.b16 %v231
      %v645 = vunpack.c.h.b16 %v231
      %v646 = vunpack.c.l.b16 %v232
      %v647 = vunpack.c.h.b16 %v232
      %v648 = vunpack.c.l.b16 %v233
      %v649 = vunpack.c.h.b16 %v233
      %v650 = vunpack.c.l.b16 %v234
      %v651 = vunpack.c.h.b16 %v234
      %v652 = vunpack.c.l.b16 %v235
      %v653 = vunpack.c.h.b16 %v235
      %v654 = vunpack.c.l.b16 %v236
      %v655 = vunpack.c.h.b16 %v236
      %v656 = vunpack.c.l.b16 %v237
      %v657 = vunpack.c.h.b16 %v237
      %v658 = vunpack.c.l.b16 %v238
      %v659 = vunpack.c.h.b16 %v238
      %v660 = vunpack.c.l.b16 %v239
      %v661 = vunpack.c.h.b16 %v239
      %v662 = vunpack.c.l.b16 %v240
      %v663 = vunpack.c.h.b16 %v240
      %v664 = vunpack.c.l.b16 %v241
      %v665 = vunpack.c.h.b16 %v241
      %v666 = vunpack.c.l.b16 %v242
      %v667 = vunpack.c.h.b16 %v242
      %v668 = vunpack.c.l.b16 %v243
      %v669 = vunpack.c.h.b16 %v243
      %v670 = vunpack.c.l.b16 %v244
      %v671 = vunpack.c.h.b16 %v244
      %v672 = vunpack.c.l.b16 %v245
      %v673 = vunpack.c.h.b16 %v245
      %v674 = vunpack.c.l.b16 %v246
      %v675 = vunpack.c.h.b16 %v246
      %v676 = vunpack.c.l.b16 %v247
      %v677 = vunpack.c.h.b16 %v247
      %v678 = vunpack.c.l.b16 %v248
      %v679 = vunpack.c.h.b16 %v248
      %v680 = vunpack.c.l.b16 %v249
      %v681 = vunpack.c.h.b16 %v249
      %v682 = vunpack.c.l.b16 %v250
      %v683 = vunpack.c.h.b16 %v250
      %v684 = vunpack.c.l.b16 %v251
      %v685 = vunpack.c.h.b16 %v251
      %v686 = vunpack.c.l.b16 %v252
      %v687 = vunpack.c.h.b16 %v252
      %v688 = vunpack.c.l.b16 %v253
      %v689 = vunpack.c.h.b16 %v253
      %v690 = vunpack.c.l.b16 %v254
      %v691 = vunpack.c.h.b16 %v254
      %v692 = vunpack.c.l.b16 %v255
      %v693 = vunpack.c.h.b16 %v255
      %v694 = vunpack.c.l.b16 %v256
      %v695 = vunpack.c.h.b16 %v256
      %v696 = vunpack.c.l.b16 %v257
      %v697 = vunpack.c.h.b16 %v257
      %v698 = vunpack.c.l.b16 %v258
      %v699 = vunpack.c.h.b16 %v258
      %v700 = vunpack.c.l.b16 %v259
      %v701 = vunpack.c.h.b16 %v259
      %v702 = vunpack.c.l.b16 %v260
      %v703 = vunpack.c.h.b16 %v260
      %v704 = vunpack.c.l.b16 %v261
      %v705 = vunpack.c.h.b16 %v261
      %v706 = vunpack.c.l.b16 %v262
      %v707 = vunpack.c.h.b16 %v262
      %v708 = vunpack.c.l.b16 %v263
      %v709 = vunpack.c.h.b16 %v263
      %v710 = vunpack.c.l.b16 %v264
      %v711 = vunpack.c.h.b16 %v264
      %v712 = vunpack.c.l.b16 %v265
      %v713 = vunpack.c.h.b16 %v265
      %v714 = vunpack.c.l.b16 %v266
      %v715 = vunpack.c.h.b16 %v266
      %v716 = vunpack.c.l.b16 %v267
      %v717 = vunpack.c.h.b16 %v267
      %v718 = vunpack.c.l.b16 %v268
      %v719 = vunpack.c.h.b16 %v268
      %v720 = vunpack.c.l.b16 %v269
      %v721 = vunpack.c.h.b16 %v269
      %v722 = vunpack.c.l.b16 %v270
      %v723 = vunpack.c.h.b16 %v270
      %v724 = vunpack.c.l.b16 %v271
      %v725 = vunpack.c.h.b16 %v271
      %v726 = vunpack.c.l.b16 %v272
      %v727 = vunpack.c.h.b16 %v272
      %v728 = vunpack.c.l.b16 %v273
      %v729 = vunpack.c.h.b16 %v273
      %v730 = vunpack.c.l.b16 %v274
      %v731 = vunpack.c.h.b16 %v274
      %v732 = vunpack.c.l.b16 %v275
      %v733 = vunpack.c.h.b16 %v275
      %v734 = vunpack.c.l.b16 %v276
      %v735 = vunpack.c.h.b16 %v276
      %v736 = vunpack.c.l.b16 %v277
      %v737 = vunpack.c.h.b16 %v277
      %v738 = vunpack.c.l.b16 %v278
      %v739 = vunpack.c.h.b16 %v278
      %v740 = vunpack.c.l.b16 %v279
      %v741 = vunpack.c.h.b16 %v279
      %v742 = vunpack.c.l.b16 %v280
      %v743 = vunpack.c.h.b16 %v280
      %v744 = vunpack.c.l.b16 %v281
      %v745 = vunpack.c.h.b16 %v281
      %v746 = vunpack.c.l.b16 %v282
      %v747 = vunpack.c.h.b16 %v282
      %v748 = vunpack.c.l.b16 %v283
      %v749 = vunpack.c.h.b16 %v283
      %v750 = vunpack.c.l.b16 %v284
      %v751 = vunpack.c.h.b16 %v284
      %v752 = vunpack.c.l.b16 %v285
      %v753 = vunpack.c.h.b16 %v285
      %v754 = vunpack.c.l.b16 %v286
      %v755 = vunpack.c.h.b16 %v286
      %v756 = vunpack.c.l.b16 %v287
      %v757 = vunpack.c.h.b16 %v287
      %v758 = vunpack.c.l.b16 %v288
      %v759 = vunpack.c.h.b16 %v288
      %v760 = vunpack.c.l.b16 %v289
      %v761 = vunpack.c.h.b16 %v289
      %v762 = vunpack.c.l.b16 %v290
      %v763 = vunpack.c.h.b16 %v290
      %v764 = vunpack.c.l.b16 %v291
      %v765 = vunpack.c.h.b16 %v291
      %v766 = vunpack.c.l.b16 %v292
      %v767 = vunpack.c.h.b16 %v292
      %v768 = vunpack.c.l.b16 %v293
      %v769 = vunpack.c.h.b16 %v293
      %v770 = vunpack.c.l.b16 %v294
      %v771 = vunpack.c.h.b16 %v294
      %v772 = vunpack.c.l.b16 %v295
      %v773 = vunpack.c.h.b16 %v295
      %v774 = vunpack.c.l.b16 %v296
      %v775 = vunpack.c.h.b16 %v296
      %v776 = vunpack.c.l.b16 %v297
      %v777 = vunpack.c.h.b16 %v297
      %v778 = vunpack.c.l.b16 %v298
      %v779 = vunpack.c.h.b16 %v298
      %v780 = vunpack.c.l.b16 %v299
      %v781 = vunpack.c.h.b16 %v299
      %v782 = vunpack.c.l.b16 %v300
      %v783 = vunpack.c.h.b16 %v300
      %v784 = vunpack.c.l.b16 %v301
      %v785 = vunpack.c.h.b16 %v301
      %v786 = vunpack.c.l.b16 %v302
      %v787 = vunpack.c.h.b16 %v302
      %v788 = vunpack.c.l.b16 %v303
      %v789 = vunpack.c.h.b16 %v303
      %v790 = vunpack.c.l.b16 %v304
      %v791 = vunpack.c.h.b16 %v304
      %v792 = vunpack.c.l.b16 %v305
      %v793 = vunpack.c.h.b16 %v305
      %v794 = vunpack.c.l.b16 %v306
      %v795 = vunpack.c.h.b16 %v306
      %v796 = vunpack.c.l.b16 %v307
      %v797 = vunpack.c.h.b16 %v307
      %v798 = vunpack.c.l.b16 %v308
      %v799 = vunpack.c.h.b16 %v308
      %v800 = vunpack.c.l.b16 %v309
      %v801 = vunpack.c.h.b16 %v309
      %v802 = vunpack.c.l.b16 %v310
      %v803 = vunpack.c.h.b16 %v310
      %v804 = vunpack.c.l.b16 %v311
      %v805 = vunpack.c.h.b16 %v311
      %v806 = vunpack.c.l.b16 %v312
      %v807 = vunpack.c.h.b16 %v312
      %v808 = vunpack.c.l.b16 %v313
      %v809 = vunpack.c.h.b16 %v313
      %v810 = vunpack.c.l.b16 %v314
      %v811 = vunpack.c.h.b16 %v314
      %v812 = vunpack.c.l.b16 %v315
      %v813 = vunpack.c.h.b16 %v315
      %v814 = vunpack.c.l.b16 %v316
      %v815 = vunpack.c.h.b16 %v316
      %v816 = vunpack.c.l.b16 %v317
      %v817 = vunpack.c.h.b16 %v317
      %v818 = vunpack.c.l.b16 %v318
      %v819 = vunpack.c.h.b16 %v318
      %v820 = vunpack.c.l.b16 %v319
      %v821 = vunpack.c.h.b16 %v319
      %v822 = vunpack.c.l.b16 %v320
      %v823 = vunpack.c.h.b16 %v320
      %v824 = vunpack.c.l.b16 %v321
      %v825 = vunpack.c.h.b16 %v321
      %v826 = vunpack.c.l.b16 %v322
      %v827 = vunpack.c.h.b16 %v322
      %v828 = vunpack.c.l.b16 %v323
      %v829 = vunpack.c.h.b16 %v323
      %v830 = vunpack.c.l.b16 %v324
      %v831 = vunpack.c.h.b16 %v324
      %v832 = vunpack.c.l.b16 %v325
      %v833 = vunpack.c.h.b16 %v325
      %v834 = vunpack.c.l.b16 %v326
      %v835 = vunpack.c.h.b16 %v326
      %v836 = vunpack.c.l.b16 %v327
      %v837 = vunpack.c.h.b16 %v327
      %v838 = vunpack.c.l.b16 %v328
      %v839 = vunpack.c.h.b16 %v328
      %v840 = vunpack.c.l.b16 %v329
      %v841 = vunpack.c.h.b16 %v329
      %v842 = vpack.c.b16 %v548, %v542
      %v843 = vpack.c.b16 %v549, %v543
      %v844 = vpack.c.b16 %v550, %v544
      %v845 = vpack.c.b16 %v551, %v545
      %v846 = vpack.c.b16 %v552, %v546
      %v847 = vpack.c.b16 %v553, %v547
      %v848 = vpack.c.b16 %v560, %v554
      %v849 = vpack.c.b16 %v561, %v555
      %v850 = vpack.c.b16 %v562, %v556
      %v851 = vpack.c.b16 %v563, %v557
      %v852 = vpack.c.b16 %v564, %v558
      %v853 = vpack.c.b16 %v565, %v559
      %v854 = vpack.c.b16 %v572, %v566
      %v855 = vpack.c.b16 %v573, %v567
      %v856 = vpack.c.b16 %v574, %v568
      %v857 = vpack.c.b16 %v575, %v569
      %v858 = vpack.c.b16 %v576, %v570
      %v859 = vpack.c.b16 %v577, %v571
      %v860 = vpack.c.b16 %v584, %v578
      %v861 = vpack.c.b16 %v585, %v579
      %v862 = vpack.c.b16 %v586, %v580
      %v863 = vpack.c.b16 %v587, %v581
      %v864 = vpack.c.b16 %v588, %v582
      %v865 = vpack.c.b16 %v589, %v583
      %v866 = vpack.c.b16 %v596, %v590
      %v867 = vpack.c.b16 %v597, %v591
      %v868 = vpack.c.b16 %v598, %v592
      %v869 = vpack.c.b16 %v599, %v593
      %v870 = vpack.c.b16 %v600, %v594
      %v871 = vpack.c.b16 %v601, %v595
      %v872 = vpack.c.b16 %v608, %v602
      %v873 = vpack.c.b16 %v609, %v603
      %v874 = vpack.c.b16 %v610, %v604
      %v875 = vpack.c.b16 %v611, %v605
      %v876 = vpack.c.b16 %v612, %v606
      %v877 = vpack.c.b16 %v613, %v607
      %v878 = vpack.c.b16 %v620, %v614
      %v879 = vpack.c.b16 %v621, %v615
      %v880 = vpack.c.b16 %v622, %v616
      %v881 = vpack.c.b16 %v623, %v617
      %v882 = vpack.c.b16 %v624, %v618
      %v883 = vpack.c.b16 %v625, %v619
      %v884 = vpack.c.b16 %v632, %v626
      %v885 = vpack.c.b16 %v633, %v627
      %v886 = vpack.c.b16 %v634, %v628
      %v887 = vpack.c.b16 %v635, %v629
      %v888 = vpack.c.b16 %v636, %v630
      %v889 = vpack.c.b16 %v637, %v631
      %v890 = vpack.c.b16 %v644, %v638
      %v891 = vpack.c.b16 %v645, %v639
      %v892 = vpack.c.b16 %v646, %v640
      %v893 = vpack.c.b16 %v647, %v641
      %v894 = vpack.c.b16 %v648, %v642
      %v895 = vpack.c.b16 %v649, %v643
      %v896 = vpack.c.b16 %v656, %v650
      %v897 = vpack.c.b16 %v657, %v651
      %v898 = vpack.c.b16 %v658, %v652
      %v899 = vpack.c.b16 %v659, %v653
      %v900 = vpack.c.b16 %v660, %v654
      %v901 = vpack.c.b16 %v661, %v655
      %v902 = vpack.c.b16 %v668, %v662
      %v903 = vpack.c.b16 %v669, %v663
      %v904 = vpack.c.b16 %v670, %v664
      %v905 = vpack.c.b16 %v671, %v665
      %v906 = vpack.c.b16 %v672, %v666
      %v907 = vpack.c.b16 %v673, %v667
      %v908 = vpack.c.b16 %v680, %v674
      %v909 = vpack.c.b16 %v681, %v675
      %v910 = vpack.c.b16 %v682, %v676
      %v911 = vpack.c.b16 %v683, %v677
      %v912 = vpack.c.b16 %v684, %v678
      %v913 = vpack.c.b16 %v685, %v679
      %v914 = vpack.c.b16 %v692, %v686
      %v915 = vpack.c.b16 %v693, %v687
      %v916 = vpack.c.b16 %v694, %v688
      %v917 = vpack.c.b16 %v695, %v689
      %v918 = vpack.c.b16 %v696, %v690
      %v919 = vpack.c.b16 %v697, %v691
      %v920 = vpack.c.b16 %v704, %v698
      %v921 = vpack.c.b16 %v705, %v699
      %v922 = vpack.c.b16 %v706, %v700
      %v923 = vpack.c.b16 %v707, %v701
      %v924 = vpack.c.b16 %v708, %v702
      %v925 = vpack.c.b16 %v709, %v703
      %v926 = vpack.c.b16 %v716, %v710
      %v927 = vpack.c.b16 %v717, %v711
      %v928 = vpack.c.b16 %v718, %v712
      %v929 = vpack.c.b16 %v719, %v713
      %v930 = vpack.c.b16 %v720, %v714
      %v931 = vpack.c.b16 %v721, %v715
      %v932 = vpack.c.b16 %v728, %v722
      %v933 = vpack.c.b16 %v729, %v723
      %v934 = vpack.c.b16 %v730, %v724
      %v935 = vpack.c.b16 %v731, %v725
      %v936 = vpack.c.b16 %v732, %v726
      %v937 = vpack.c.b16 %v733, %v727
      %v938 = vpack.c.b16 %v740, %v734
      %v939 = vpack.c.b16 %v741, %v735
      %v940 = vpack.c.b16 %v742, %v736
      %v941 = vpack.c.b16 %v743, %v737
      %v942 = vpack.c.b16 %v744, %v738
      %v943 = vpack.c.b16 %v745, %v739
      %v944 = vpack.c.b16 %v752, %v746
      %v945 = vpack.c.b16 %v753, %v747
      %v946 = vpack.c.b16 %v754, %v748
      %v947 = vpack.c.b16 %v755, %v749
      %v948 = vpack.c.b16 %v756, %v750
      %v949 = vpack.c.b16 %v757, %v751
      %v950 = vpack.c.b16 %v764, %v758
      %v951 = vpack.c.b16 %v765, %v759
      %v952 = vpack.c.b16 %v766, %v760
      %v953 = vpack.c.b16 %v767, %v761
      %v954 = vpack.c.b16 %v768, %v762
      %v955 = vpack.c.b16 %v769, %v763
      %v956 = vpack.c.b16 %v776, %v770
      %v957 = vpack.c.b16 %v777, %v771
      %v958 = vpack.c.b16 %v778, %v772
      %v959 = vpack.c.b16 %v779, %v773
      %v960 = vpack.c.b16 %v780, %v774
      %v961 = vpack.c.b16 %v781, %v775
      %v962 = vpack.c.b16 %v788, %v782
      %v963 = vpack.c.b16 %v789, %v783
      %v964 = vpack.c.b16 %v790, %v784
      %v965 = vpack.c.b16 %v791, %v785
      %v966 = vpack.c.b16 %v792, %v786
      %v967 = vpack.c.b16 %v793, %v787
      %v968 = vpack.c.b16 %v800, %v794
      %v969 = vpack.c.b16 %v801, %v795
      %v970 = vpack.c.b16 %v802, %v796
      %v971 = vpack.c.b16 %v803, %v797
      %v972 = vpack.c.b16 %v804, %v798
      %v973 = vpack.c.b16 %v805, %v799
      %v974 = vpack.c.b16 %v812, %v806
      %v975 = vpack.c.b16 %v813, %v807
      %v976 = vpack.c.b16 %v814, %v808
      %v977 = vpack.c.b16 %v815, %v809
      %v978 = vpack.c.b16 %v816, %v810
      %v979 = vpack.c.b16 %v817, %v811
      %v980 = vpack.c.b16 %v824, %v818
      %v981 = vpack.c.b16 %v825, %v819
      %v982 = vpack.c.b16 %v826, %v820
      %v983 = vpack.c.b16 %v827, %v821
      %v984 = vpack.c.b16 %v828, %v822
      %v985 = vpack.c.b16 %v829, %v823
      %v986 = vpack.c.b16 %v836, %v830
      %v987 = vpack.c.b16 %v837, %v831
      %v988 = vpack.c.b16 %v838, %v832
      %v989 = vpack.c.b16 %v839, %v833
      %v990 = vpack.c.b16 %v840, %v834
      %v991 = vpack.c.b16 %v841, %v835
      %vm1142 = vcmask 130048
      %v1144 = vsel %vm1142, %v381, 0
      %v1147 = vsel %vm1142, %v385, 0
      %1149 = vmatprep.subr.bf16.mxu0 %v843
      %1150 = vmatpush1.bf16.msra.mxu0 %v842
      %1151 = vmatprep.subr.bf16.mxu0 %v849
      %1152 = vmatpush1.bf16.msra.mxu0 %v848
      %1153 = vmatprep.subr.bf16.mxu0 %v855
      %1154 = vmatpush1.bf16.msra.mxu0 %v854
      %1155 = vmatprep.subr.bf16.mxu0 %v861
      %1156 = vmatpush1.bf16.msra.mxu0 %v860
      %1157 = vmatprep.subr.bf16.mxu0 %v867
      %1158 = vmatpush1.bf16.msra.mxu0 %v866
      %1159 = vmatprep.subr.bf16.mxu0 %v873
      %1160 = vmatpush1.bf16.msra.mxu0 %v872
      %1161 = vmatprep.subr.bf16.mxu0 %v879
      %1162 = vmatpush1.bf16.msra.mxu0 %v878
      %1163 = vmatprep.subr.bf16.mxu0 %v885
      %1164 = vmatpush1.bf16.msra.mxu0 %v884
      %1165 = vmatprep.subr.bf16.mxu0 %v891
      %1166 = vmatpush1.bf16.msra.mxu0 %v890
      %1167 = vmatprep.subr.bf16.mxu0 %v897
      %1168 = vmatpush1.bf16.msra.mxu0 %v896
      %1169 = vmatprep.subr.bf16.mxu0 %v903
      %1170 = vmatpush1.bf16.msra.mxu0 %v902
      %1171 = vmatprep.subr.bf16.mxu0 %v909
      %1172 = vmatpush1.bf16.msra.mxu0 %v908
      %1173 = vmatprep.subr.bf16.mxu0 %v915
      %1174 = vmatpush1.bf16.msra.mxu0 %v914
      %1175 = vmatprep.subr.bf16.mxu0 %v921
      %1176 = vmatpush1.bf16.msra.mxu0 %v920
      %1177 = vmatprep.subr.bf16.mxu0 %v927
      %1178 = vmatpush1.bf16.msra.mxu0 %v926
      %1179 = vmatprep.subr.bf16.mxu0 %v933
      %1180 = vmatpush1.bf16.msra.mxu0 %v932
      %1181 = vmatprep.mubr.bf16.mxu0 %v379
      %1182 = vmatmul.mubr.bf16.gmra.mrb[0].mxu0 %v378
      %v1183 = vpop.f32.mrb[0].mxu0
      %v1184 = vadd.f32 %v337, %v1183
      %v1185 = vpop.f32.mrb[0].mxu0
      %v1186 = vadd.f32 %v337, %v1185
      %v1187 = vpop.f32.mrb[0].mxu0
      %v1188 = vadd.f32 %v342, %v1187
      %v1189 = vpop.f32.mrb[0].mxu0
      %v1190 = vadd.f32 %v342, %v1189
      %1191 = vmatprep.mubr.bf16.mxu0 %v383
      %1192 = vmatmul.mubr.bf16.gmra.mrb[0].mxu0 %v382
      %v1193 = vpop.f32.mrb[0].mxu0
      %v1194 = vadd.f32 %v347, %v1193
      %v1195 = vpop.f32.mrb[0].mxu0
      %v1196 = vadd.f32 %v347, %v1195
      %v1197 = vpop.f32.mrb[0].mxu0
      %v1198 = vadd.f32 %v352, %v1197
      %v1199 = vpop.f32.mrb[0].mxu0
      %v1200 = vadd.f32 %v352, %v1199
      %1201 = vdwg.mxu0
      %1202 = vmatprep.subr.bf16.mxu0 %v939
      %1203 = vmatpush1.bf16.msra.mxu0 %v938
      %1204 = vmatprep.subr.bf16.mxu0 %v945
      %1205 = vmatpush1.bf16.msra.mxu0 %v944
      %1206 = vmatprep.subr.bf16.mxu0 %v951
      %1207 = vmatpush1.bf16.msra.mxu0 %v950
      %1208 = vmatprep.subr.bf16.mxu0 %v957
      %1209 = vmatpush1.bf16.msra.mxu0 %v956
      %1210 = vmatprep.subr.bf16.mxu0 %v963
      %1211 = vmatpush1.bf16.msra.mxu0 %v962
      %1212 = vmatprep.subr.bf16.mxu0 %v969
      %1213 = vmatpush1.bf16.msra.mxu0 %v968
      %1214 = vmatprep.subr.bf16.mxu0 %v975
      %1215 = vmatpush1.bf16.msra.mxu0 %v974
      %1216 = vmatprep.subr.bf16.mxu0 %v981
      %1217 = vmatpush1.bf16.msra.mxu0 %v980
      %1218 = vmatprep.subr.bf16.mxu0 %v987
      %1219 = vmatpush1.bf16.msra.mxu0 %v986
      %1220 = vmatprep.subr.bf16.mxu0 0
      %1221 = vmatpush1.bf16.msra.mxu0 0
      %1222 = vmatprep.subr.bf16.mxu0 0
      %1223 = vmatpush1.bf16.msra.mxu0 0
      %1224 = vmatprep.subr.bf16.mxu0 0
      %1225 = vmatpush1.bf16.msra.mxu0 0
      %1226 = vmatprep.subr.bf16.mxu0 0
      %1227 = vmatpush1.bf16.msra.mxu0 0
      %1228 = vmatprep.subr.bf16.mxu0 0
      %1229 = vmatpush1.bf16.msra.mxu0 0
      %1230 = vmatprep.subr.bf16.mxu0 0
      %1231 = vmatpush1.bf16.msra.mxu0 0
      %1232 = vmatprep.subr.bf16.mxu0 0
      %1233 = vmatpush1.bf16.msra.mxu0 0
      %1234 = vmatprep.mubr.bf16.mxu0 %v1144
      %1235 = vmatmul.mubr.bf16.gmra.mrb[0].mxu0 %v380
      %v1236 = vpop.f32.mrb[0].mxu0
      %v1237 = vadd.f32 %v1184, %v1236
      %v1238 = vpop.f32.mrb[0].mxu0
      %v1239 = vadd.f32 %v1186, %v1238
      %v1240 = vpop.f32.mrb[0].mxu0
      %v1241 = vadd.f32 %v1188, %v1240
      %v1242 = vpop.f32.mrb[0].mxu0
      %v1243 = vadd.f32 %v1190, %v1242
      %1244 = vmatprep.mubr.bf16.mxu0 %v1147
      %1245 = vmatmul.mubr.bf16.gmra.mrb[0].mxu0 %v384
      %v1246 = vpop.f32.mrb[0].mxu0
      %v1247 = vadd.f32 %v1194, %v1246
      %v1248 = vpop.f32.mrb[0].mxu0
      %v1249 = vadd.f32 %v1196, %v1248
      %v1250 = vpop.f32.mrb[0].mxu0
      %v1251 = vadd.f32 %v1198, %v1250
      %v1252 = vpop.f32.mrb[0].mxu0
      %v1253 = vadd.f32 %v1200, %v1252
      %1254 = vdwg.mxu0
      %1255 = vmatprep.subr.bf16.mxu0 %v845
      %1256 = vmatpush1.bf16.msra.mxu0 %v844
      %1257 = vmatprep.subr.bf16.mxu0 %v851
      %1258 = vmatpush1.bf16.msra.mxu0 %v850
      %1259 = vmatprep.subr.bf16.mxu0 %v857
      %1260 = vmatpush1.bf16.msra.mxu0 %v856
      %1261 = vmatprep.subr.bf16.mxu0 %v863
      %1262 = vmatpush1.bf16.msra.mxu0 %v862
      %1263 = vmatprep.subr.bf16.mxu0 %v869
      %1264 = vmatpush1.bf16.msra.mxu0 %v868
      %1265 = vmatprep.subr.bf16.mxu0 %v875
      %1266 = vmatpush1.bf16.msra.mxu0 %v874
      %1267 = vmatprep.subr.bf16.mxu0 %v881
      %1268 = vmatpush1.bf16.msra.mxu0 %v880
      %1269 = vmatprep.subr.bf16.mxu0 %v887
      %1270 = vmatpush1.bf16.msra.mxu0 %v886
      %1271 = vmatprep.subr.bf16.mxu0 %v893
      %1272 = vmatpush1.bf16.msra.mxu0 %v892
      %1273 = vmatprep.subr.bf16.mxu0 %v899
      %1274 = vmatpush1.bf16.msra.mxu0 %v898
      %1275 = vmatprep.subr.bf16.mxu0 %v905
      %1276 = vmatpush1.bf16.msra.mxu0 %v904
      %1277 = vmatprep.subr.bf16.mxu0 %v911
      %1278 = vmatpush1.bf16.msra.mxu0 %v910
      %1279 = vmatprep.subr.bf16.mxu0 %v917
      %1280 = vmatpush1.bf16.msra.mxu0 %v916
      %1281 = vmatprep.subr.bf16.mxu0 %v923
      %1282 = vmatpush1.bf16.msra.mxu0 %v922
      %1283 = vmatprep.subr.bf16.mxu0 %v929
      %1284 = vmatpush1.bf16.msra.mxu0 %v928
      %1285 = vmatprep.subr.bf16.mxu0 %v935
      %1286 = vmatpush1.bf16.msra.mxu0 %v934
      %1287 = vmatprep.mubr.bf16.mxu0 %v379
      %1288 = vmatmul.mubr.bf16.gmra.mrb[0].mxu0 %v378
      %v1289 = vpop.f32.mrb[0].mxu0
      %v1290 = vadd.f32 %v337, %v1289
      %v1291 = vpop.f32.mrb[0].mxu0
      %v1292 = vadd.f32 %v337, %v1291
      %v1293 = vpop.f32.mrb[0].mxu0
      %v1294 = vadd.f32 %v342, %v1293
      %v1295 = vpop.f32.mrb[0].mxu0
      %v1296 = vadd.f32 %v342, %v1295
      %1297 = vmatprep.mubr.bf16.mxu0 %v383
      %1298 = vmatmul.mubr.bf16.gmra.mrb[0].mxu0 %v382
      %v1299 = vpop.f32.mrb[0].mxu0
      %v1300 = vadd.f32 %v347, %v1299
      %v1301 = vpop.f32.mrb[0].mxu0
      %v1302 = vadd.f32 %v347, %v1301
      %v1303 = vpop.f32.mrb[0].mxu0
      %v1304 = vadd.f32 %v352, %v1303
      %v1305 = vpop.f32.mrb[0].mxu0
      %v1306 = vadd.f32 %v352, %v1305
      %1307 = vdwg.mxu0
      %1308 = vmatprep.subr.bf16.mxu0 %v941
      %1309 = vmatpush1.bf16.msra.mxu0 %v940
      %1310 = vmatprep.subr.bf16.mxu0 %v947
      %1311 = vmatpush1.bf16.msra.mxu0 %v946
      %1312 = vmatprep.subr.bf16.mxu0 %v953
      %1313 = vmatpush1.bf16.msra.mxu0 %v952
      %1314 = vmatprep.subr.bf16.mxu0 %v959
      %1315 = vmatpush1.bf16.msra.mxu0 %v958
      %1316 = vmatprep.subr.bf16.mxu0 %v965
      %1317 = vmatpush1.bf16.msra.mxu0 %v964
      %1318 = vmatprep.subr.bf16.mxu0 %v971
      %1319 = vmatpush1.bf16.msra.mxu0 %v970
      %1320 = vmatprep.subr.bf16.mxu0 %v977
      %1321 = vmatpush1.bf16.msra.mxu0 %v976
      %1322 = vmatprep.subr.bf16.mxu0 %v983
      %1323 = vmatpush1.bf16.msra.mxu0 %v982
      %1324 = vmatprep.subr.bf16.mxu0 %v989
      %1325 = vmatpush1.bf16.msra.mxu0 %v988
      %1326 = vmatprep.subr.bf16.mxu0 0
      %1327 = vmatpush1.bf16.msra.mxu0 0
      %1328 = vmatprep.subr.bf16.mxu0 0
      %1329 = vmatpush1.bf16.msra.mxu0 0
      %1330 = vmatprep.subr.bf16.mxu0 0
      %1331 = vmatpush1.bf16.msra.mxu0 0
      %1332 = vmatprep.subr.bf16.mxu0 0
      %1333 = vmatpush1.bf16.msra.mxu0 0
      %1334 = vmatprep.subr.bf16.mxu0 0
      %1335 = vmatpush1.bf16.msra.mxu0 0
      %1336 = vmatprep.subr.bf16.mxu0 0
      %1337 = vmatpush1.bf16.msra.mxu0 0
      %1338 = vmatprep.subr.bf16.mxu0 0
      %1339 = vmatpush1.bf16.msra.mxu0 0
      %1340 = vmatprep.mubr.bf16.mxu0 %v1144
      %1341 = vmatmul.mubr.bf16.gmra.mrb[0].mxu0 %v380
      %v1342 = vpop.f32.mrb[0].mxu0
      %v1343 = vadd.f32 %v1290, %v1342
      %v1344 = vpop.f32.mrb[0].mxu0
      %v1345 = vadd.f32 %v1292, %v1344
      %v1346 = vpop.f32.mrb[0].mxu0
      %v1347 = vadd.f32 %v1294, %v1346
      %v1348 = vpop.f32.mrb[0].mxu0
      %v1349 = vadd.f32 %v1296, %v1348
      %1350 = vmatprep.mubr.bf16.mxu0 %v1147
      %1351 = vmatmul.mubr.bf16.gmra.mrb[0].mxu0 %v384
      %v1352 = vpop.f32.mrb[0].mxu0
      %v1353 = vadd.f32 %v1300, %v1352
      %v1354 = vpop.f32.mrb[0].mxu0
      %v1355 = vadd.f32 %v1302, %v1354
      %v1356 = vpop.f32.mrb[0].mxu0
      %v1357 = vadd.f32 %v1304, %v1356
      %v1358 = vpop.f32.mrb[0].mxu0
      %v1359 = vadd.f32 %v1306, %v1358
      %1360 = vdwg.mxu0
      %1361 = vmatprep.subr.bf16.mxu0 %v847
      %1362 = vmatpush1.bf16.msra.mxu0 %v846
      %1363 = vmatprep.subr.bf16.mxu0 %v853
      %1364 = vmatpush1.bf16.msra.mxu0 %v852
      %1365 = vmatprep.subr.bf16.mxu0 %v859
      %1366 = vmatpush1.bf16.msra.mxu0 %v858
      %1367 = vmatprep.subr.bf16.mxu0 %v865
      %1368 = vmatpush1.bf16.msra.mxu0 %v864
      %1369 = vmatprep.subr.bf16.mxu0 %v871
      %1370 = vmatpush1.bf16.msra.mxu0 %v870
      %1371 = vmatprep.subr.bf16.mxu0 %v877
      %1372 = vmatpush1.bf16.msra.mxu0 %v876
      %1373 = vmatprep.subr.bf16.mxu0 %v883
      %1374 = vmatpush1.bf16.msra.mxu0 %v882
      %1375 = vmatprep.subr.bf16.mxu0 %v889
      %1376 = vmatpush1.bf16.msra.mxu0 %v888
      %1377 = vmatprep.subr.bf16.mxu0 %v895
      %1378 = vmatpush1.bf16.msra.mxu0 %v894
      %1379 = vmatprep.subr.bf16.mxu0 %v901
      %1380 = vmatpush1.bf16.msra.mxu0 %v900
      %1381 = vmatprep.subr.bf16.mxu0 %v907
      %1382 = vmatpush1.bf16.msra.mxu0 %v906
      %1383 = vmatprep.subr.bf16.mxu0 %v913
      %1384 = vmatpush1.bf16.msra.mxu0 %v912
      %1385 = vmatprep.subr.bf16.mxu0 %v919
      %1386 = vmatpush1.bf16.msra.mxu0 %v918
      %1387 = vmatprep.subr.bf16.mxu0 %v925
      %1388 = vmatpush1.bf16.msra.mxu0 %v924
      %1389 = vmatprep.subr.bf16.mxu0 %v931
      %1390 = vmatpush1.bf16.msra.mxu0 %v930
      %1391 = vmatprep.subr.bf16.mxu0 %v937
      %1392 = vmatpush1.bf16.msra.mxu0 %v936
      %1393 = vmatprep.mubr.bf16.mxu0 %v379
      %1394 = vmatmul.mubr.bf16.gmra.mrb[0].mxu0 %v378
      %v1395 = vpop.f32.mrb[0].mxu0
      %v1396 = vadd.f32 %v337, %v1395
      %v1397 = vpop.f32.mrb[0].mxu0
      %v1398 = vadd.f32 %v337, %v1397
      %v1399 = vpop.f32.mrb[0].mxu0
      %v1400 = vadd.f32 %v342, %v1399
      %v1401 = vpop.f32.mrb[0].mxu0
      %v1402 = vadd.f32 %v342, %v1401
      %1403 = vmatprep.mubr.bf16.mxu0 %v383
      %1404 = vmatmul.mubr.bf16.gmra.mrb[0].mxu0 %v382
      %v1405 = vpop.f32.mrb[0].mxu0
      %v1406 = vadd.f32 %v347, %v1405
      %v1407 = vpop.f32.mrb[0].mxu0
      %v1408 = vadd.f32 %v347, %v1407
      %v1409 = vpop.f32.mrb[0].mxu0
      %v1410 = vadd.f32 %v352, %v1409
      %v1411 = vpop.f32.mrb[0].mxu0
      %v1412 = vadd.f32 %v352, %v1411
      %1413 = vdwg.mxu0
      %1414 = vmatprep.subr.bf16.mxu0 %v943
      %1415 = vmatpush1.bf16.msra.mxu0 %v942
      %1416 = vmatprep.subr.bf16.mxu0 %v949
      %1417 = vmatpush1.bf16.msra.mxu0 %v948
      %1418 = vmatprep.subr.bf16.mxu0 %v955
      %1419 = vmatpush1.bf16.msra.mxu0 %v954
      %1420 = vmatprep.subr.bf16.mxu0 %v961
      %1421 = vmatpush1.bf16.msra.mxu0 %v960
      %1422 = vmatprep.subr.bf16.mxu0 %v967
      %1423 = vmatpush1.bf16.msra.mxu0 %v966
      %1424 = vmatprep.subr.bf16.mxu0 %v973
      %1425 = vmatpush1.bf16.msra.mxu0 %v972
      %1426 = vmatprep.subr.bf16.mxu0 %v979
      %1427 = vmatpush1.bf16.msra.mxu0 %v978
      %1428 = vmatprep.subr.bf16.mxu0 %v985
      %1429 = vmatpush1.bf16.msra.mxu0 %v984
      %1430 = vmatprep.subr.bf16.mxu0 %v991
      %1431 = vmatpush1.bf16.msra.mxu0 %v990
      %1432 = vmatprep.subr.bf16.mxu0 0
      %1433 = vmatpush1.bf16.msra.mxu0 0
      %1434 = vmatprep.subr.bf16.mxu0 0
      %1435 = vmatpush1.bf16.msra.mxu0 0
      %1436 = vmatprep.subr.bf16.mxu0 0
      %1437 = vmatpush1.bf16.msra.mxu0 0
      %1438 = vmatprep.subr.bf16.mxu0 0
      %1439 = vmatpush1.bf16.msra.mxu0 0
      %1440 = vmatprep.subr.bf16.mxu0 0
      %1441 = vmatpush1.bf16.msra.mxu0 0
      %1442 = vmatprep.subr.bf16.mxu0 0
      %1443 = vmatpush1.bf16.msra.mxu0 0
      %1444 = vmatprep.subr.bf16.mxu0 0
      %1445 = vmatpush1.bf16.msra.mxu0 0
      %1446 = vmatprep.mubr.bf16.mxu0 %v1144
      %1447 = vmatmul.mubr.bf16.gmra.mrb[0].mxu0 %v380
      %v1448 = vpop.f32.mrb[0].mxu0
      %v1449 = vadd.f32 %v1396, %v1448
      %v1450 = vpop.f32.mrb[0].mxu0
      %v1451 = vadd.f32 %v1398, %v1450
      %v1452 = vpop.f32.mrb[0].mxu0
      %v1453 = vadd.f32 %v1400, %v1452
      %v1454 = vpop.f32.mrb[0].mxu0
      %v1455 = vadd.f32 %v1402, %v1454
      %1456 = vmatprep.mubr.bf16.mxu0 %v1147
      %1457 = vmatmul.mubr.bf16.gmra.mrb[0].mxu0 %v384
      %v1458 = vpop.f32.mrb[0].mxu0
      %v1459 = vadd.f32 %v1406, %v1458
      %v1460 = vpop.f32.mrb[0].mxu0
      %v1461 = vadd.f32 %v1408, %v1460
      %v1462 = vpop.f32.mrb[0].mxu0
      %v1463 = vadd.f32 %v1410, %v1462
      %v1464 = vpop.f32.mrb[0].mxu0
      %v1465 = vadd.f32 %v1412, %v1464
      %1466 = vdwg.mxu0
      %v1467 = vpack.c.bf16 %v1241, %v1237
      %v1468 = vpack.c.bf16 %v1243, %v1239
      %v1469 = vpack.c.bf16 %v1347, %v1343
      %v1470 = vpack.c.bf16 %v1349, %v1345
      %v1471 = vpack.c.bf16 %v1453, %v1449
      %v1472 = vpack.c.bf16 %v1455, %v1451
      %v1473 = vpack.c.bf16 %v1251, %v1247
      %v1474 = vpack.c.bf16 %v1253, %v1249
      %v1475 = vpack.c.bf16 %v1357, %v1353
      %v1476 = vpack.c.bf16 %v1359, %v1355
      %v1477 = vpack.c.bf16 %v1463, %v1459
      %v1478 = vpack.c.bf16 %v1465, %v1461
      %v1491 = vunpack.c.l.b16 %v1467
      %v1492 = vunpack.c.l.b16 %v1468
      %v1493 = vunpack.c.l.b16 %v1469
      %v1494 = vunpack.c.l.b16 %v1470
      %v1495 = vunpack.c.l.b16 %v1471
      %v1496 = vunpack.c.l.b16 %v1472
      %v1497 = vunpack.c.h.b16 %v1467
      %v1498 = vunpack.c.h.b16 %v1468
      %v1499 = vunpack.c.h.b16 %v1469
      %v1500 = vunpack.c.h.b16 %v1470
      %v1501 = vunpack.c.h.b16 %v1471
      %v1502 = vunpack.c.h.b16 %v1472
      %v1503 = vunpack.c.l.b16 %v1473
      %v1504 = vunpack.c.l.b16 %v1474
      %v1505 = vunpack.c.l.b16 %v1475
      %v1506 = vunpack.c.l.b16 %v1476
      %v1507 = vunpack.c.l.b16 %v1477
      %v1508 = vunpack.c.l.b16 %v1478
      %v1509 = vunpack.c.h.b16 %v1473
      %v1510 = vunpack.c.h.b16 %v1474
      %v1511 = vunpack.c.h.b16 %v1475
      %v1512 = vunpack.c.h.b16 %v1476
      %v1513 = vunpack.c.h.b16 %v1477
      %v1514 = vunpack.c.h.b16 %v1478
      %v1515 = vpack.c.b16 %v1492, %v1491
      %v1516 = vpack.c.b16 %v1494, %v1493
      %v1517 = vpack.c.b16 %v1496, %v1495
      %v1518 = vpack.c.b16 %v1498, %v1497
      %v1519 = vpack.c.b16 %v1500, %v1499
      %v1520 = vpack.c.b16 %v1502, %v1501
      %v1521 = vpack.c.b16 %v1504, %v1503
      %v1522 = vpack.c.b16 %v1506, %v1505
      %v1523 = vpack.c.b16 %v1508, %v1507
      %v1524 = vpack.c.b16 %v1510, %v1509
      %v1525 = vpack.c.b16 %v1512, %v1511
      %v1526 = vpack.c.b16 %v1514, %v1513
      %1539 = vst [vmem:[%s170] sm:$0xff] %v1515
      %1540 = vst [vmem:[%s170 + $0x8] sm:$0xff] %v1516
      %vm1541 = vcmask 1043456
      %vm1542 = vcmask 728068
      %vm1543 = vmor %vm1542, %vm1541
      %1544 = vst.msk [vmem:[%s170 + $0x10] sm:$0xff] %vm1543, %v1517
      %1545 = vst [vmem:[%s170 + $0x18] sm:$0xff] %v1518
      %1546 = vst [vmem:[%s170 + $0x20] sm:$0xff] %v1519
      %1547 = vst.msk [vmem:[%s170 + $0x28] sm:$0xff] %vm1543, %v1520
      %1548 = vst [vmem:[%s170 + $0x30] sm:$0xff] %v1521
      %1549 = vst [vmem:[%s170 + $0x38] sm:$0xff] %v1522
      %1550 = vst.msk [vmem:[%s170 + $0x40] sm:$0xff] %vm1543, %v1523
      %1551 = vst [vmem:[%s170 + $0x48] sm:$0xff] %v1524
      %1552 = vst [vmem:[%s170 + $0x50] sm:$0xff] %v1525
      %1553 = vst.msk [vmem:[%s170 + $0x58] sm:$0xff] %vm1543, %v1526
      %p1554 = scmp.lt.s32.totalorder %s14, 1
      %s1555 = scalar_select %p1554, %s14, 1
      %s1556 = smul.addr %s1555, 24
      %s1557 = smul.addr %s1556, 4
      %s1558 = scalar_lea.vmem %s3, %s1557
      // Predicated region
      $region33: #{cnn_classifier_forward.9} parent=31 // pred_check
        %p1559 = pneg %p100
      $region34: #{cnn_classifier_forward.9} parent=31 // pred_check_branch
        %1561 = sbr.rel (%p1559) target = $region36
      $region35: #{cnn_classifier_forward.9} parent=31 // pred_region
        _
      $region36: #{cnn_classifier_forward.9} parent=31 // pred_fallthru
        _
    $region32: #{cnn_classifier_forward.9} parent=5 // pred_fallthru
      _
    %p1562 = scmp.le.s32.totalorder 2, %s9
    // Predicated region
    $region37: #{cnn_classifier_forward.9} parent=5 // pred_check
      %p1563 = pneg %p1562
    $region38: #{cnn_classifier_forward.9} parent=5 // pred_check_branch
      %1565 = sbr.rel (%p1563) target = $region40
    $region39: #{cnn_classifier_forward.9} parent=5 // pred_region
      %s1566 = ssub.s32 %s9, 2
      // Predicated region
      $region41: #{cnn_classifier_forward.9} parent=39 // pred_check
        %p1567 = pneg %p106
      $region42: #{cnn_classifier_forward.9} parent=39 // pred_check_branch
        %1569 = sbr.rel (%p1567) target = $region44
      $region43: #{cnn_classifier_forward.9} parent=39 // pred_region
        %p1570 = scmp.lt.s32.totalorder %s15, 1
        %s1571 = scalar_select %p1570, %s15, 1
        %s1572 = smul.addr %s1571, 24
        %s1573 = smul.addr %s1572, 4
        %s1574 = scalar_lea.vmem %s3, %s1573
      $region44: #{cnn_classifier_forward.9} parent=39 // pred_fallthru
        _
    $region40: #{cnn_classifier_forward.9} parent=5 // pred_fallthru
      _
  $region6: #{cnn_classifier_forward.9} parent=0 // loop_footer
    %s13 = sadd.s32 1, %s9
  $region7: #{cnn_classifier_forward.9} parent=0 // loop_footer_branch
    %8 = sbr.rel target = $region3
  $region8: #{cnn_classifier_forward.9} parent=0 // loop_exit
    _

// kernel: cnn_classifier_forward.10
$region0: #{cnn_classifier_forward.10}
  #allocation0 [shape = 'u32[]', space=smem, size = 0x4, offset = 0x4, fixed_abs, tag = 'smem constant byte address 0x4 - core index']
  #allocation1 [shape = 'u32[144,128]{1,0:T(1,128)}', space=vmem, size = 0x12000, scoped, tag = 'internal scratch']
  %s0 = inlined_call_operand.vmem [shape: bf16[64,169], index: 0, kind: input, shape index: {}]
  %s1 = inlined_call_operand.vmem [shape: bf16[64,169], index: 1, kind: input, shape index: {}]
  %s2 = inlined_call_operand.vmem [shape: bf16[64,169], index: 2, kind: input, shape index: {}]
  %s3 = inlined_call_operand.vmem [shape: bf16[64,169], index: 3, kind: input, shape index: {}]
  %s4 = inlined_call_operand.vmem [shape: bf16[64,169], index: 4, kind: output, shape index: {}]
  %s5 = sld [smem:[#allocation0]]
  $region26: #{cnn_classifier_forward.10} parent=0
    _
  %s7 = ssub.s32 1, %s5
  %s8 = scalar_select 0, %s7, %s5
  // Predicated region
  $region2: #{cnn_classifier_forward.10} parent=0 // pred_check
    _
  $region3: #{cnn_classifier_forward.10} parent=0 // pred_check_branch
    %10 = sbr.rel (0) target = $region5
  $region4: #{cnn_classifier_forward.10} parent=0 // pred_region
    _
  $region5: #{cnn_classifier_forward.10} parent=0 // pred_fallthru
    _
  // Predicated region
  $region6: #{cnn_classifier_forward.10} parent=0 // pred_check
    _
  $region7: #{cnn_classifier_forward.10} parent=0 // pred_check_branch
    %12 = sbr.rel (0) target = $region9
  $region8: #{cnn_classifier_forward.10} parent=0 // pred_region
    _
  $region9: #{cnn_classifier_forward.10} parent=0 // pred_fallthru
    _
  // Predicated region
  $region10: #{cnn_classifier_forward.10} parent=0 // pred_check
    _
  $region11: #{cnn_classifier_forward.10} parent=0 // pred_check_branch
    %14 = sbr.rel (0) target = $region13
  $region12: #{cnn_classifier_forward.10} parent=0 // pred_region
    _
  $region13: #{cnn_classifier_forward.10} parent=0 // pred_fallthru
    _
  // Predicated region
  $region14: #{cnn_classifier_forward.10} parent=0 // pred_check
    _
  $region15: #{cnn_classifier_forward.10} parent=0 // pred_check_branch
    %16 = sbr.rel (0) target = $region17
  $region16: #{cnn_classifier_forward.10} parent=0 // pred_region
    _
  $region17: #{cnn_classifier_forward.10} parent=0 // pred_fallthru
    _
  %v17 = vld [vmem:[%s0] sm:$0xff]
  %v18 = vld [vmem:[%s0 + $0x8] sm:$0xff]
  %v19 = vld [vmem:[%s0 + $0x10] sm:$0xff]
  %v20 = vld [vmem:[%s0 + $0x18] sm:$0xff]
  %v21 = vld [vmem:[%s0 + $0x20] sm:$0xff]
  %v22 = vld [vmem:[%s0 + $0x28] sm:$0xff]
  %v23 = vld [vmem:[%s0 + $0x30] sm:$0xff]
  %v24 = vld [vmem:[%s0 + $0x38] sm:$0xff]
  %v25 = vld [vmem:[%s1] sm:$0xff]
  %v26 = vld [vmem:[%s1 + $0x8] sm:$0xff]
  %v27 = vld [vmem:[%s1 + $0x10] sm:$0xff]
  %v28 = vld [vmem:[%s1 + $0x18] sm:$0xff]
  %v29 = vld [vmem:[%s1 + $0x20] sm:$0xff]
  %v30 = vld [vmem:[%s1 + $0x28] sm:$0xff]
  %v31 = vld [vmem:[%s1 + $0x30] sm:$0xff]
  %v32 = vld [vmem:[%s1 + $0x38] sm:$0xff]
  %v33 = vmax.bf16 %v17, %v25
  %v34 = vmax.bf16 %v18, %v26
  %v35 = vmax.bf16 %v19, %v27
  %v36 = vmax.bf16 %v20, %v28
  %v37 = vmax.bf16 %v21, %v29
  %v38 = vmax.bf16 %v22, %v30
  %v39 = vmax.bf16 %v23, %v31
  %v40 = vmax.bf16 %v24, %v32
  %v41 = vld [vmem:[%s2] sm:$0xff]
  %v42 = vld [vmem:[%s2 + $0x8] sm:$0xff]
  %v43 = vld [vmem:[%s2 + $0x10] sm:$0xff]
  %v44 = vld [vmem:[%s2 + $0x18] sm:$0xff]
  %v45 = vld [vmem:[%s2 + $0x20] sm:$0xff]
  %v46 = vld [vmem:[%s2 + $0x28] sm:$0xff]
  %v47 = vld [vmem:[%s2 + $0x30] sm:$0xff]
  %v48 = vld [vmem:[%s2 + $0x38] sm:$0xff]
  %v49 = vld [vmem:[%s3] sm:$0xff]
  %v50 = vld [vmem:[%s3 + $0x8] sm:$0xff]
  %v51 = vld [vmem:[%s3 + $0x10] sm:$0xff]
  %v52 = vld [vmem:[%s3 + $0x18] sm:$0xff]
  %v53 = vld [vmem:[%s3 + $0x20] sm:$0xff]
  %v54 = vld [vmem:[%s3 + $0x28] sm:$0xff]
  %v55 = vld [vmem:[%s3 + $0x30] sm:$0xff]
  %v56 = vld [vmem:[%s3 + $0x38] sm:$0xff]
  %v57 = vmax.bf16 %v41, %v49
  %v58 = vmax.bf16 %v42, %v50
  %v59 = vmax.bf16 %v43, %v51
  %v60 = vmax.bf16 %v44, %v52
  %v61 = vmax.bf16 %v45, %v53
  %v62 = vmax.bf16 %v46, %v54
  %v63 = vmax.bf16 %v47, %v55
  %v64 = vmax.bf16 %v48, %v56
  %v65 = vmax.bf16 %v33, %v57
  %v66 = vmax.bf16 %v34, %v58
  %v67 = vmax.bf16 %v35, %v59
  %v68 = vmax.bf16 %v36, %v60
  %v69 = vmax.bf16 %v37, %v61
  %v70 = vmax.bf16 %v38, %v62
  %v71 = vmax.bf16 %v39, %v63
  %v72 = vmax.bf16 %v40, %v64
  %vm73 = vcmask 1043456
  %vm74 = vcmask 334852
  %vm75 = vmor %vm74, %vm73
  %76 = vst.msk [vmem:[%s4] sm:$0xff] %vm75, %v65
  %77 = vst.msk [vmem:[%s4 + $0x8] sm:$0xff] %vm75, %v66
  %78 = vst.msk [vmem:[%s4 + $0x10] sm:$0xff] %vm75, %v67
  %79 = vst.msk [vmem:[%s4 + $0x18] sm:$0xff] %vm75, %v68
  %80 = vst.msk [vmem:[%s4 + $0x20] sm:$0xff] %vm75, %v69
  %81 = vst.msk [vmem:[%s4 + $0x28] sm:$0xff] %vm75, %v70
  %82 = vst.msk [vmem:[%s4 + $0x30] sm:$0xff] %vm75, %v71
  %83 = vst.msk [vmem:[%s4 + $0x38] sm:$0xff] %vm75, %v72
  // Predicated region
  $region18: #{cnn_classifier_forward.10} parent=0 // pred_check
    _
  $region19: #{cnn_classifier_forward.10} parent=0 // pred_check_branch
    %85 = sbr.rel (0) target = $region21
  $region20: #{cnn_classifier_forward.10} parent=0 // pred_region
    _
  $region21: #{cnn_classifier_forward.10} parent=0 // pred_fallthru
    _
  // Predicated region
  $region22: #{cnn_classifier_forward.10} parent=0 // pred_check
    _
  $region23: #{cnn_classifier_forward.10} parent=0 // pred_check_branch
    %87 = sbr.rel (0) target = $region25
  $region24: #{cnn_classifier_forward.10} parent=0 // pred_region
    _
  $region25: #{cnn_classifier_forward.10} parent=0 // pred_fallthru
    _

// kernel: cnn_classifier_forward.11
$region0: #{cnn_classifier_forward.11}
  #allocation0 [shape = 'u32[]', space=smem, size = 0x4, offset = 0x4, fixed_abs, tag = 'smem constant byte address 0x4 - core index']
  #allocation1 [shape = 'u32[144,128]{1,0:T(1,128)}', space=vmem, size = 0x12000, scoped, tag = 'internal scratch']
  %s0 = inlined_call_operand.vmem [shape: bf16[2,288,169], index: 0, kind: input, shape index: {}]
  %s1 = inlined_call_operand.vmem [shape: bf16[64,288], index: 1, kind: input, shape index: {}]
  %s2 = inlined_call_operand.vmem [shape: f32[64,1], index: 2, kind: input, shape index: {}]
  %s3 = inlined_call_operand.vmem [shape: bf16[2,64,169], index: 3, kind: output, shape index: {}]
  %s4 = sld [smem:[#allocation0]]
  $region45: #{cnn_classifier_forward.11} parent=0
    _
  %s6 = ssub.s32 1, %s4
  %s7 = scalar_select 0, %s6, %s4
  loop: start=0, step=1, limit=4
  $region2: #{cnn_classifier_forward.11} parent=0 // loop_pre_header
    _
  $region3: #{cnn_classifier_forward.11} parent=0 // loop_header
    %s9 = sphi 0, %s13
    %p10 = scmp.ge.s32.totalorder %s9, 4
    %s19 = sphi 0, %s21
    %s22 = sphi 0, %s19
    %s23 = sphi 0, %s22
    %s39 = sphi 0, %s23
    %s43 = sphi 0, %s43
    %s45 = sphi 0, %s43
    %s46 = sphi 0, %s45
    %s60 = sphi 0, %s46
    %s64 = sphi 0, %s64
    %s66 = sphi 0, %s64
    %s67 = sphi 0, %s66
    %s81 = sphi 0, %s67
    %s87 = sphi 0, %s89
    %s90 = sphi 0, %s87
    %s91 = sphi 0, %s90
    %s107 = sphi 0, %s91
  $region4: #{cnn_classifier_forward.11} parent=0 // loop_header_branch
    %12 = sbr.rel (%p10) target = $region8
  $region5: #{cnn_classifier_forward.11} parent=0 // loop_body
    %s14 = ssub.s32 %s9, 1
    %s15 = ssub.s32 %s9, 2
    %s16 = sadd.s32 %s9, 1
    %s17 = ssub.s32 %s9, %s16
    %p18 = scmp.eq.s32.totalorder %s17, 0
    %s20 = sadd.s32 %s19, 1
    %s21 = scalar_select %p18, %s19, %s20
    %p24 = pneg %p18
    %p25 = scmp.eq.s32.totalorder %s9, 1
    %p26 = por %p24, %p25
    %p27 = scmp.ne.s32.totalorder %s19, %s22
    %p28 = scmp.eq.s32.totalorder %s9, 0
    %p29 = por %p27, %p28
    %p30 = scmp.ne.s32.totalorder %s19, %s22
    %p31 = scmp.eq.s32.totalorder %s14, 1
    %p32 = por %p30, %p31
    %p33 = scmp.ne.s32.totalorder %s22, %s23
    %p34 = scmp.eq.s32.totalorder %s14, 0
    %p35 = por %p33, %p34
    %p36 = scmp.ne.s32.totalorder %s22, %s23
    %p37 = scmp.eq.s32.totalorder %s15, 1
    %p38 = por %p36, %p37
    %p40 = scmp.ne.s32.totalorder %s23, %s39
    %p41 = scmp.eq.s32.totalorder %s15, 0
    %p42 = por %p40, %p41
    %s44 = sadd.s32 %s43, 1
    %p47 = scmp.eq.s32.totalorder %s9, 1
    %p48 = scmp.ne.s32.totalorder %s43, %s45
    %p49 = scmp.eq.s32.totalorder %s9, 0
    %p50 = por %p48, %p49
    %p51 = scmp.ne.s32.totalorder %s43, %s45
    %p52 = scmp.eq.s32.totalorder %s14, 1
    %p53 = por %p51, %p52
    %p54 = scmp.ne.s32.totalorder %s45, %s46
    %p55 = scmp.eq.s32.totalorder %s14, 0
    %p56 = por %p54, %p55
    %p57 = scmp.ne.s32.totalorder %s45, %s46
    %p58 = scmp.eq.s32.totalorder %s15, 1
    %p59 = por %p57, %p58
    %p61 = scmp.ne.s32.totalorder %s46, %s60
    %p62 = scmp.eq.s32.totalorder %s15, 0
    %p63 = por %p61, %p62
    %s65 = sadd.s32 %s64, 1
    %p68 = scmp.eq.s32.totalorder %s9, 1
    %p69 = scmp.ne.s32.totalorder %s64, %s66
    %p70 = scmp.eq.s32.totalorder %s9, 0
    %p71 = por %p69, %p70
    %p72 = scmp.ne.s32.totalorder %s64, %s66
    %p73 = scmp.eq.s32.totalorder %s14, 1
    %p74 = por %p72, %p73
    %p75 = scmp.ne.s32.totalorder %s66, %s67
    %p76 = scmp.eq.s32.totalorder %s14, 0
    %p77 = por %p75, %p76
    %p78 = scmp.ne.s32.totalorder %s66, %s67
    %p79 = scmp.eq.s32.totalorder %s15, 1
    %p80 = por %p78, %p79
    %p82 = scmp.ne.s32.totalorder %s67, %s81
    %p83 = scmp.eq.s32.totalorder %s15, 0
    %p84 = por %p82, %p83
    %s85 = ssub.s32 %s9, %s16
    %p86 = scmp.eq.s32.totalorder %s85, 0
    %s88 = sadd.s32 %s87, 1
    %s89 = scalar_select %p86, %s87, %s88
    %p92 = pneg %p86
    %p93 = scmp.eq.s32.totalorder %s9, 1
    %p94 = por %p92, %p93
    %p95 = scmp.ne.s32.totalorder %s87, %s90
    %p96 = scmp.eq.s32.totalorder %s9, 0
    %p97 = por %p95, %p96
    %p98 = scmp.ne.s32.totalorder %s87, %s90
    %p99 = scmp.eq.s32.totalorder %s14, 1
    %p100 = por %p98, %p99
    %p101 = scmp.ne.s32.totalorder %s90, %s91
    %p102 = scmp.eq.s32.totalorder %s14, 0
    %p103 = por %p101, %p102
    %p104 = scmp.ne.s32.totalorder %s90, %s91
    %p105 = scmp.eq.s32.totalorder %s15, 1
    %p106 = por %p104, %p105
    %p108 = scmp.ne.s32.totalorder %s91, %s107
    %p109 = scmp.eq.s32.totalorder %s15, 0
    %p110 = por %p108, %p109
    %p111 = scmp.le.s32.totalorder 1, %s9
    %p112 = scmp.lt.s32.totalorder %s9, 3
    %p113 = pnand %p111, %p112
    %p114 = pneg %p113
    // Predicated region
    $region9: #{cnn_classifier_forward.11} parent=5 // pred_check
      _
    $region10: #{cnn_classifier_forward.11} parent=5 // pred_check_branch
      %116 = sbr.rel (%p113) target = $region12
    $region11: #{cnn_classifier_forward.11} parent=5 // pred_region
      %s117 = ssub.s32 %s9, 1
      // Predicated region
      $region13: #{cnn_classifier_forward.11} parent=11 // pred_check
        %p118 = pneg %p56
      $region14: #{cnn_classifier_forward.11} parent=11 // pred_check_branch
        %120 = sbr.rel (%p118) target = $region16
      $region15: #{cnn_classifier_forward.11} parent=11 // pred_region
        _
      $region16: #{cnn_classifier_forward.11} parent=11 // pred_fallthru
        _
      // Predicated region
      $region17: #{cnn_classifier_forward.11} parent=11 // pred_check
        %p121 = pneg %p77
      $region18: #{cnn_classifier_forward.11} parent=11 // pred_check_branch
        %123 = sbr.rel (%p121) target = $region20
      $region19: #{cnn_classifier_forward.11} parent=11 // pred_region
        _
      $region20: #{cnn_classifier_forward.11} parent=11 // pred_fallthru
        _
    $region12: #{cnn_classifier_forward.11} parent=5 // pred_fallthru
      _
    %p124 = scmp.lt.s32.totalorder %s9, 2
    // Predicated region
    $region21: #{cnn_classifier_forward.11} parent=5 // pred_check
      %p125 = pneg %p124
    $region22: #{cnn_classifier_forward.11} parent=5 // pred_check_branch
      %127 = sbr.rel (%p125) target = $region24
    $region23: #{cnn_classifier_forward.11} parent=5 // pred_region
      // Predicated region
      $region25: #{cnn_classifier_forward.11} parent=23 // pred_check
        %p128 = pneg %p29
      $region26: #{cnn_classifier_forward.11} parent=23 // pred_check_branch
        %130 = sbr.rel (%p128) target = $region28
      $region27: #{cnn_classifier_forward.11} parent=23 // pred_region
        %p131 = scmp.lt.s32.totalorder %s9, 1
        %s132 = scalar_select %p131, %s9, 1
        %s133 = smul.addr %s132, 72
        %s134 = smul.addr %s133, 4
        %s135 = scalar_lea.vmem %s0, %s134
      $region28: #{cnn_classifier_forward.11} parent=23 // pred_fallthru
        _
    $region24: #{cnn_classifier_forward.11} parent=5 // pred_fallthru
      _
    %p136 = scmp.le.s32.totalorder 1, %s9
    %p137 = scmp.lt.s32.totalorder %s9, 3
    %p138 = pnand %p136, %p137
    %p139 = pneg %p138
    // Predicated region
    $region29: #{cnn_classifier_forward.11} parent=5 // pred_check
      _
    $region30: #{cnn_classifier_forward.11} parent=5 // pred_check_branch
      %141 = sbr.rel (%p138) target = $region32
    $region31: #{cnn_classifier_forward.11} parent=5 // pred_region
      %s142 = ssub.s32 %s9, 1
      %p143 = scmp.lt.s32.totalorder %s14, 1
      %s144 = scalar_select %p143, %s14, 1
      %s145 = smul.addr %s144, 72
      %s146 = smul.addr %s145, 4
      %s147 = scalar_lea.vmem %s0, %s146
      %p148 = pneg %p35
      %p149 = pneg %p32
      %p150 = pneg %p56
      %p151 = pneg %p53
      %p152 = pneg %p77
      %p153 = pneg %p74
      %p154 = pneg %p103
      %p155 = pneg %p100
      %p156 = scmp.lt.s32.totalorder %s14, 1
      %s157 = scalar_select %p156, %s14, 1
      %s158 = smul.addr %s157, 16
      %s159 = smul.addr %s158, 4
      %s160 = scalar_lea.vmem %s3, %s159
      %p161 = scmp.lt.s32.totalorder %s14, 1
      %s162 = scalar_select %p161, %s14, 1
      %s163 = smul.addr %s162, 72
      %s164 = smul.addr %s163, 4
      %s165 = scalar_lea.vmem %s0, %s164
      %p166 = scmp.lt.s32.totalorder %s14, 1
      %s167 = scalar_select %p166, %s14, 1
      %s168 = smul.addr %s167, 16
      %s169 = smul.addr %s168, 4
      %s170 = scalar_lea.vmem %s3, %s169
      %v172 = vld [vmem:[%s1] sm:$0xff]
      %v173 = vld [vmem:[%s1 + $0x8] sm:$0xf]
      %v174 = vld [vmem:[%s1 + $0xc] sm:$0xff]
      %v175 = vld [vmem:[%s1 + $0x14] sm:$0xf]
      %v176 = vld [vmem:[%s1 + $0x18] sm:$0xff]
      %v177 = vld [vmem:[%s1 + $0x20] sm:$0xf]
      %v178 = vld [vmem:[%s1 + $0x24] sm:$0xff]
      %v179 = vld [vmem:[%s1 + $0x2c] sm:$0xf]
      %v180 = vld [vmem:[%s1 + $0x30] sm:$0xff]
      %v181 = vld [vmem:[%s1 + $0x38] sm:$0xf]
      %v182 = vld [vmem:[%s1 + $0x3c] sm:$0xff]
      %v183 = vld [vmem:[%s1 + $0x44] sm:$0xf]
      %v184 = vld [vmem:[%s1 + $0x48] sm:$0xff]
      %v185 = vld [vmem:[%s1 + $0x50] sm:$0xf]
      %v186 = vld [vmem:[%s1 + $0x54] sm:$0xff]
      %v187 = vld [vmem:[%s1 + $0x5c] sm:$0xf]
      %v188 = vld [vmem:[%s165] sm:$0xff]
      %v189 = vld [vmem:[%s165 + $0x8] sm:$0xff]
      %v190 = vld [vmem:[%s165 + $0x10] sm:$0xff]
      %v191 = vld [vmem:[%s165 + $0x18] sm:$0xff]
      %v192 = vld [vmem:[%s165 + $0x20] sm:$0xff]
      %v193 = vld [vmem:[%s165 + $0x28] sm:$0xff]
      %v194 = vld [vmem:[%s165 + $0x30] sm:$0xff]
      %v195 = vld [vmem:[%s165 + $0x38] sm:$0xff]
      %v196 = vld [vmem:[%s165 + $0x40] sm:$0xff]
      %v197 = vld [vmem:[%s165 + $0x48] sm:$0xff]
      %v198 = vld [vmem:[%s165 + $0x50] sm:$0xff]
      %v199 = vld [vmem:[%s165 + $0x58] sm:$0xff]
      %v200 = vld [vmem:[%s165 + $0x60] sm:$0xff]
      %v201 = vld [vmem:[%s165 + $0x68] sm:$0xff]
      %v202 = vld [vmem:[%s165 + $0x70] sm:$0xff]
      %v203 = vld [vmem:[%s165 + $0x78] sm:$0xff]
      %v204 = vld [vmem:[%s165 + $0x80] sm:$0xff]
      %v205 = vld [vmem:[%s165 + $0x88] sm:$0xff]
      %v206 = vld [vmem:[%s165 + $0x90] sm:$0xff]
      %v207 = vld [vmem:[%s165 + $0x98] sm:$0xff]
      %v208 = vld [vmem:[%s165 + $0xa0] sm:$0xff]
      %v209 = vld [vmem:[%s165 + $0xa8] sm:$0xff]
      %v210 = vld [vmem:[%s165 + $0xb0] sm:$0xff]
      %v211 = vld [vmem:[%s165 + $0xb8] sm:$0xff]
      %v212 = vld [vmem:[%s165 + $0xc0] sm:$0xff]
      %v213 = vld [vmem:[%s165 + $0xc8] sm:$0xff]
      %v214 = vld [vmem:[%s165 + $0xd0] sm:$0xff]
      %v215 = vld [vmem:[%s165 + $0xd8] sm:$0xff]
      %v216 = vld [vmem:[%s165 + $0xe0] sm:$0xff]
      %v217 = vld [vmem:[%s165 + $0xe8] sm:$0xff]
      %v218 = vld [vmem:[%s165 + $0xf0] sm:$0xff]
      %v219 = vld [vmem:[%s165 + $0xf8] sm:$0xff]
      %v220 = vld [vmem:[%s165 + $0x100] sm:$0xff]
      %v221 = vld [vmem:[%s165 + $0x108] sm:$0xff]
      %v222 = vld [vmem:[%s165 + $0x110] sm:$0xff]
      %v223 = vld [vmem:[%s165 + $0x118] sm:$0xff]
      %v224 = vld [vmem:[%s2] sm:$0xff]
      %v225 = vld [vmem:[%s2 + $0x8] sm:$0xff]
      %v226 = vld [vmem:[%s2 + $0x10] sm:$0xff]
      %v227 = vld [vmem:[%s2 + $0x18] sm:$0xff]
      %v228 = vld [vmem:[%s2 + $0x20] sm:$0xff]
      %v229 = vld [vmem:[%s2 + $0x28] sm:$0xff]
      %v230 = vld [vmem:[%s2 + $0x30] sm:$0xff]
      %v231 = vld [vmem:[%s2 + $0x38] sm:$0xff]
      %233 = vset.pattern.permute.xlu0 0
      %234 = vperm.xlu0 %233, %v224
      %v235 = vpop.permute.xlu0 %234
      %238 = vset.pattern.permute.xlu0 0
      %239 = vperm.xlu0 %238, %v225
      %v240 = vpop.permute.xlu0 %239
      %243 = vset.pattern.permute.xlu0 0
      %244 = vperm.xlu0 %243, %v226
      %v245 = vpop.permute.xlu0 %244
      %248 = vset.pattern.permute.xlu0 0
      %249 = vperm.xlu0 %248, %v227
      %v250 = vpop.permute.xlu0 %249
      %253 = vset.pattern.permute.xlu0 0
      %254 = vperm.xlu0 %253, %v228
      %v255 = vpop.permute.xlu0 %254
      %258 = vset.pattern.permute.xlu0 0
      %259 = vperm.xlu0 %258, %v229
      %v260 = vpop.permute.xlu0 %259
      %263 = vset.pattern.permute.xlu0 0
      %264 = vperm.xlu0 %263, %v230
      %v265 = vpop.permute.xlu0 %264
      %268 = vset.pattern.permute.xlu0 0
      %269 = vperm.xlu0 %268, %v231
      %v270 = vpop.permute.xlu0 %269
      %v288 = vunpack.c.l.b16 %v172
      %v289 = vunpack.c.h.b16 %v172
      %v290 = vunpack.c.l.b16 %v173
      %v291 = vunpack.c.l.b16 %v174
      %v292 = vunpack.c.h.b16 %v174
      %v293 = vunpack.c.l.b16 %v175
      %v294 = vunpack.c.l.b16 %v176
      %v295 = vunpack.c.h.b16 %v176
      %v296 = vunpack.c.l.b16 %v177
      %v297 = vunpack.c.l.b16 %v178
      %v298 = vunpack.c.h.b16 %v178
      %v299 = vunpack.c.l.b16 %v179
      %v300 = vunpack.c.l.b16 %v180
      %v301 = vunpack.c.h.b16 %v180
      %v302 = vunpack.c.l.b16 %v181
      %v303 = vunpack.c.l.b16 %v182
      %v304 = vunpack.c.h.b16 %v182
      %v305 = vunpack.c.l.b16 %v183
      %v306 = vunpack.c.l.b16 %v184
      %v307 = vunpack.c.h.b16 %v184
      %v308 = vunpack.c.l.b16 %v185
      %v309 = vunpack.c.l.b16 %v186
      %v310 = vunpack.c.h.b16 %v186
      %v311 = vunpack.c.l.b16 %v187
      %v312 = vpack.c.b16 %v291, %v288
      %v313 = vpack.c.b16 %v292, %v289
      %v314 = vpack.c.b16 %v293, %v290
      %v315 = vpack.c.b16 %v297, %v294
      %v316 = vpack.c.b16 %v298, %v295
      %v317 = vpack.c.b16 %v299, %v296
      %v318 = vpack.c.b16 %v303, %v300
      %v319 = vpack.c.b16 %v304, %v301
      %v320 = vpack.c.b16 %v305, %v302
      %v321 = vpack.c.b16 %v309, %v306
      %v322 = vpack.c.b16 %v310, %v307
      %v323 = vpack.c.b16 %v311, %v308
      %v368 = vunpack.c.l.b16 %v188
      %v369 = vunpack.c.h.b16 %v188
      %v370 = vunpack.c.l.b16 %v189
      %v371 = vunpack.c.h.b16 %v189
      %v372 = vunpack.c.l.b16 %v190
      %v373 = vunpack.c.h.b16 %v190
      %v374 = vunpack.c.l.b16 %v191
      %v375 = vunpack.c.h.b16 %v191
      %v376 = vunpack.c.l.b16 %v192
      %v377 = vunpack.c.h.b16 %v192
      %v378 = vunpack.c.l.b16 %v193
      %v379 = vunpack.c.h.b16 %v193
      %v380 = vunpack.c.l.b16 %v194
      %v381 = vunpack.c.h.b16 %v194
      %v382 = vunpack.c.l.b16 %v195
      %v383 = vunpack.c.h.b16 %v195
      %v384 = vunpack.c.l.b16 %v196
      %v385 = vunpack.c.h.b16 %v196
      %v386 = vunpack.c.l.b16 %v197
      %v387 = vunpack.c.h.b16 %v197
      %v388 = vunpack.c.l.b16 %v198
      %v389 = vunpack.c.h.b16 %v198
      %v390 = vunpack.c.l.b16 %v199
      %v391 = vunpack.c.h.b16 %v199
      %v392 = vunpack.c.l.b16 %v200
      %v393 = vunpack.c.h.b16 %v200
      %v394 = vunpack.c.l.b16 %v201
      %v395 = vunpack.c.h.b16 %v201
      %v396 = vunpack.c.l.b16 %v202
      %v397 = vunpack.c.h.b16 %v202
      %v398 = vunpack.c.l.b16 %v203
      %v399 = vunpack.c.h.b16 %v203
      %v400 = vunpack.c.l.b16 %v204
      %v401 = vunpack.c.h.b16 %v204
      %v402 = vunpack.c.l.b16 %v205
      %v403 = vunpack.c.h.b16 %v205
      %v404 = vunpack.c.l.b16 %v206
      %v405 = vunpack.c.h.b16 %v206
      %v406 = vunpack.c.l.b16 %v207
      %v407 = vunpack.c.h.b16 %v207
      %v408 = vunpack.c.l.b16 %v208
      %v409 = vunpack.c.h.b16 %v208
      %v410 = vunpack.c.l.b16 %v209
      %v411 = vunpack.c.h.b16 %v209
      %v412 = vunpack.c.l.b16 %v210
      %v413 = vunpack.c.h.b16 %v210
      %v414 = vunpack.c.l.b16 %v211
      %v415 = vunpack.c.h.b16 %v211
      %v416 = vunpack.c.l.b16 %v212
      %v417 = vunpack.c.h.b16 %v212
      %v418 = vunpack.c.l.b16 %v213
      %v419 = vunpack.c.h.b16 %v213
      %v420 = vunpack.c.l.b16 %v214
      %v421 = vunpack.c.h.b16 %v214
      %v422 = vunpack.c.l.b16 %v215
      %v423 = vunpack.c.h.b16 %v215
      %v424 = vunpack.c.l.b16 %v216
      %v425 = vunpack.c.h.b16 %v216
      %v426 = vunpack.c.l.b16 %v217
      %v427 = vunpack.c.h.b16 %v217
      %v428 = vunpack.c.l.b16 %v218
      %v429 = vunpack.c.h.b16 %v218
      %v430 = vunpack.c.l.b16 %v219
      %v431 = vunpack.c.h.b16 %v219
      %v432 = vunpack.c.l.b16 %v220
      %v433 = vunpack.c.h.b16 %v220
      %v434 = vunpack.c.l.b16 %v221
      %v435 = vunpack.c.h.b16 %v221
      %v436 = vunpack.c.l.b16 %v222
      %v437 = vunpack.c.h.b16 %v222
      %v438 = vunpack.c.l.b16 %v223
      %v439 = vunpack.c.h.b16 %v223
      %v440 = vpack.c.b16 %v370, %v368
      %v441 = vpack.c.b16 %v371, %v369
      %v442 = vpack.c.b16 %v374, %v372
      %v443 = vpack.c.b16 %v375, %v373
      %v444 = vpack.c.b16 %v378, %v376
      %v445 = vpack.c.b16 %v379, %v377
      %v446 = vpack.c.b16 %v382, %v380
      %v447 = vpack.c.b16 %v383, %v381
      %v448 = vpack.c.b16 %v386, %v384
      %v449 = vpack.c.b16 %v387, %v385
      %v450 = vpack.c.b16 %v390, %v388
      %v451 = vpack.c.b16 %v391, %v389
      %v452 = vpack.c.b16 %v394, %v392
      %v453 = vpack.c.b16 %v395, %v393
      %v454 = vpack.c.b16 %v398, %v396
      %v455 = vpack.c.b16 %v399, %v397
      %v456 = vpack.c.b16 %v402, %v400
      %v457 = vpack.c.b16 %v403, %v401
      %v458 = vpack.c.b16 %v406, %v404
      %v459 = vpack.c.b16 %v407, %v405
      %v460 = vpack.c.b16 %v410, %v408
      %v461 = vpack.c.b16 %v411, %v409
      %v462 = vpack.c.b16 %v414, %v412
      %v463 = vpack.c.b16 %v415, %v413
      %v464 = vpack.c.b16 %v418, %v416
      %v465 = vpack.c.b16 %v419, %v417
      %v466 = vpack.c.b16 %v422, %v420
      %v467 = vpack.c.b16 %v423, %v421
      %v468 = vpack.c.b16 %v426, %v424
      %v469 = vpack.c.b16 %v427, %v425
      %v470 = vpack.c.b16 %v430, %v428
      %v471 = vpack.c.b16 %v431, %v429
      %v472 = vpack.c.b16 %v434, %v432
      %v473 = vpack.c.b16 %v435, %v433
      %v474 = vpack.c.b16 %v438, %v436
      %v475 = vpack.c.b16 %v439, %v437
      %vm512 = vcmask 261120
      %v514 = vsel %vm512, %v314, 0
      %v517 = vsel %vm512, %v317, 0
      %v520 = vsel %vm512, %v320, 0
      %v523 = vsel %vm512, %v323, 0
      %525 = vmatprep.subr.bf16.mxu0 %v441
      %526 = vmatpush1.bf16.msra.mxu0 %v440
      %527 = vmatprep.subr.bf16.mxu0 %v443
      %528 = vmatpush1.bf16.msra.mxu0 %v442
      %529 = vmatprep.subr.bf16.mxu0 %v445
      %530 = vmatpush1.bf16.msra.mxu0 %v444
      %531 = vmatprep.subr.bf16.mxu0 %v447
      %532 = vmatpush1.bf16.msra.mxu0 %v446
      %533 = vmatprep.subr.bf16.mxu0 %v449
      %534 = vmatpush1.bf16.msra.mxu0 %v448
      %535 = vmatprep.subr.bf16.mxu0 %v451
      %536 = vmatpush1.bf16.msra.mxu0 %v450
      %537 = vmatprep.subr.bf16.mxu0 %v453
      %538 = vmatpush1.bf16.msra.mxu0 %v452
      %539 = vmatprep.subr.bf16.mxu0 %v455
      %540 = vmatpush1.bf16.msra.mxu0 %v454
      %541 = vmatprep.subr.bf16.mxu0 %v457
      %542 = vmatpush1.bf16.msra.mxu0 %v456
      %543 = vmatprep.subr.bf16.mxu0 %v459
      %544 = vmatpush1.bf16.msra.mxu0 %v458
      %545 = vmatprep.subr.bf16.mxu0 %v461
      %546 = vmatpush1.bf16.msra.mxu0 %v460
      %547 = vmatprep.subr.bf16.mxu0 %v463
      %548 = vmatpush1.bf16.msra.mxu0 %v462
      %549 = vmatprep.subr.bf16.mxu0 %v465
      %550 = vmatpush1.bf16.msra.mxu0 %v464
      %551 = vmatprep.subr.bf16.mxu0 %v467
      %552 = vmatpush1.bf16.msra.mxu0 %v466
      %553 = vmatprep.subr.bf16.mxu0 %v469
      %554 = vmatpush1.bf16.msra.mxu0 %v468
      %555 = vmatprep.subr.bf16.mxu0 %v471
      %556 = vmatpush1.bf16.msra.mxu0 %v470
      %557 = vmatprep.mubr.bf16.mxu0 %v313
      %558 = vmatmul.mubr.bf16.gmra.mrb[0].mxu0 %v312
      %v559 = vpop.f32.mrb[0].mxu0
      %v560 = vadd.f32 %v235, %v559
      %v561 = vpop.f32.mrb[0].mxu0
      %v562 = vadd.f32 %v235, %v561
      %v563 = vpop.f32.mrb[0].mxu0
      %v564 = vadd.f32 %v240, %v563
      %v565 = vpop.f32.mrb[0].mxu0
      %v566 = vadd.f32 %v240, %v565
      %567 = vmatprep.mubr.bf16.mxu0 %v316
      %568 = vmatmul.mubr.bf16.gmra.mrb[0].mxu0 %v315
      %v569 = vpop.f32.mrb[0].mxu0
      %v570 = vadd.f32 %v245, %v569
      %v571 = vpop.f32.mrb[0].mxu0
      %v572 = vadd.f32 %v245, %v571
      %v573 = vpop.f32.mrb[0].mxu0
      %v574 = vadd.f32 %v250, %v573
      %v575 = vpop.f32.mrb[0].mxu0
      %v576 = vadd.f32 %v250, %v575
      %577 = vmatprep.mubr.bf16.mxu0 %v319
      %578 = vmatmul.mubr.bf16.gmra.mrb[0].mxu0 %v318
      %v579 = vpop.f32.mrb[0].mxu0
      %v580 = vadd.f32 %v255, %v579
      %v581 = vpop.f32.mrb[0].mxu0
      %v582 = vadd.f32 %v255, %v581
      %v583 = vpop.f32.mrb[0].mxu0
      %v584 = vadd.f32 %v260, %v583
      %v585 = vpop.f32.mrb[0].mxu0
      %v586 = vadd.f32 %v260, %v585
      %587 = vmatprep.mubr.bf16.mxu0 %v322
      %588 = vmatmul.mubr.bf16.gmra.mrb[0].mxu0 %v321
      %v589 = vpop.f32.mrb[0].mxu0
      %v590 = vadd.f32 %v265, %v589
      %v591 = vpop.f32.mrb[0].mxu0
      %v592 = vadd.f32 %v265, %v591
      %v593 = vpop.f32.mrb[0].mxu0
      %v594 = vadd.f32 %v270, %v593
      %v595 = vpop.f32.mrb[0].mxu0
      %v596 = vadd.f32 %v270, %v595
      %597 = vdwg.mxu0
      %598 = vmatprep.subr.bf16.mxu0 %v473
      %599 = vmatpush1.bf16.msra.mxu0 %v472
      %600 = vmatprep.subr.bf16.mxu0 %v475
      %601 = vmatpush1.bf16.msra.mxu0 %v474
      %602 = vmatprep.subr.bf16.mxu0 0
      %603 = vmatpush1.bf16.msra.mxu0 0
      %604 = vmatprep.subr.bf16.mxu0 0
      %605 = vmatpush1.bf16.msra.mxu0 0
      %606 = vmatprep.subr.bf16.mxu0 0
      %607 = vmatpush1.bf16.msra.mxu0 0
      %608 = vmatprep.subr.bf16.mxu0 0
      %609 = vmatpush1.bf16.msra.mxu0 0
      %610 = vmatprep.subr.bf16.mxu0 0
      %611 = vmatpush1.bf16.msra.mxu0 0
      %612 = vmatprep.subr.bf16.mxu0 0
      %613 = vmatpush1.bf16.msra.mxu0 0
      %614 = vmatprep.subr.bf16.mxu0 0
      %615 = vmatpush1.bf16.msra.mxu0 0
      %616 = vmatprep.subr.bf16.mxu0 0
      %617 = vmatpush1.bf16.msra.mxu0 0
      %618 = vmatprep.subr.bf16.mxu0 0
      %619 = vmatpush1.bf16.msra.mxu0 0
      %620 = vmatprep.subr.bf16.mxu0 0
      %621 = vmatpush1.bf16.msra.mxu0 0
      %622 = vmatprep.subr.bf16.mxu0 0
      %623 = vmatpush1.bf16.msra.mxu0 0
      %624 = vmatprep.subr.bf16.mxu0 0
      %625 = vmatpush1.bf16.msra.mxu0 0
      %626 = vmatprep.subr.bf16.mxu0 0
      %627 = vmatpush1.bf16.msra.mxu0 0
      %628 = vmatprep.subr.bf16.mxu0 0
      %629 = vmatpush1.bf16.msra.mxu0 0
      %630 = vmatprep.mubr.bf16.mxu0 0
      %631 = vmatmul.mubr.bf16.gmra.mrb[0].mxu0 %v514
      %v632 = vpop.f32.mrb[0].mxu0
      %v633 = vadd.f32 %v560, %v632
      %v634 = vpop.f32.mrb[0].mxu0
      %v635 = vadd.f32 %v562, %v634
      %v636 = vpop.f32.mrb[0].mxu0
      %v637 = vadd.f32 %v564, %v636
      %v638 = vpop.f32.mrb[0].mxu0
      %v639 = vadd.f32 %v566, %v638
      %640 = vmatprep.mubr.bf16.mxu0 0
      %641 = vmatmul.mubr.bf16.gmra.mrb[0].mxu0 %v517
      %v642 = vpop.f32.mrb[0].mxu0
      %v643 = vadd.f32 %v570, %v642
      %v644 = vpop.f32.mrb[0].mxu0
      %v645 = vadd.f32 %v572, %v644
      %v646 = vpop.f32.mrb[0].mxu0
      %v647 = vadd.f32 %v574, %v646
      %v648 = vpop.f32.mrb[0].mxu0
      %v649 = vadd.f32 %v576, %v648
      %650 = vmatprep.mubr.bf16.mxu0 0
      %651 = vmatmul.mubr.bf16.gmra.mrb[0].mxu0 %v520
      %v652 = vpop.f32.mrb[0].mxu0
      %v653 = vadd.f32 %v580, %v652
      %v654 = vpop.f32.mrb[0].mxu0
      %v655 = vadd.f32 %v582, %v654
      %v656 = vpop.f32.mrb[0].mxu0
      %v657 = vadd.f32 %v584, %v656
      %v658 = vpop.f32.mrb[0].mxu0
      %v659 = vadd.f32 %v586, %v658
      %660 = vmatprep.mubr.bf16.mxu0 0
      %661 = vmatmul.mubr.bf16.gmra.mrb[0].mxu0 %v523
      %v662 = vpop.f32.mrb[0].mxu0
      %v663 = vadd.f32 %v590, %v662
      %v664 = vpop.f32.mrb[0].mxu0
      %v665 = vadd.f32 %v592, %v664
      %v666 = vpop.f32.mrb[0].mxu0
      %v667 = vadd.f32 %v594, %v666
      %v668 = vpop.f32.mrb[0].mxu0
      %v669 = vadd.f32 %v596, %v668
      %670 = vdwg.mxu0
      %v671 = vpack.c.bf16 %v637, %v633
      %v672 = vpack.c.bf16 %v639, %v635
      %v673 = vpack.c.bf16 %v647, %v643
      %v674 = vpack.c.bf16 %v649, %v645
      %v675 = vpack.c.bf16 %v657, %v653
      %v676 = vpack.c.bf16 %v659, %v655
      %v677 = vpack.c.bf16 %v667, %v663
      %v678 = vpack.c.bf16 %v669, %v665
      %v687 = vunpack.c.l.b16 %v671
      %v688 = vunpack.c.l.b16 %v672
      %v689 = vunpack.c.h.b16 %v671
      %v690 = vunpack.c.h.b16 %v672
      %v691 = vunpack.c.l.b16 %v673
      %v692 = vunpack.c.l.b16 %v674
      %v693 = vunpack.c.h.b16 %v673
      %v694 = vunpack.c.h.b16 %v674
      %v695 = vunpack.c.l.b16 %v675
      %v696 = vunpack.c.l.b16 %v676
      %v697 = vunpack.c.h.b16 %v675
      %v698 = vunpack.c.h.b16 %v676
      %v699 = vunpack.c.l.b16 %v677
      %v700 = vunpack.c.l.b16 %v678
      %v701 = vunpack.c.h.b16 %v677
      %v702 = vunpack.c.h.b16 %v678
      %v703 = vpack.c.b16 %v688, %v687
      %v704 = vpack.c.b16 %v690, %v689
      %v705 = vpack.c.b16 %v692, %v691
      %v706 = vpack.c.b16 %v694, %v693
      %v707 = vpack.c.b16 %v696, %v695
      %v708 = vpack.c.b16 %v698, %v697
      %v709 = vpack.c.b16 %v700, %v699
      %v710 = vpack.c.b16 %v702, %v701
      %vm719 = vcmask 1043456
      %vm720 = vcmask 334852
      %vm721 = vmor %vm720, %vm719
      %722 = vst.msk [vmem:[%s170] sm:$0xff] %vm721, %v703
      %723 = vst.msk [vmem:[%s170 + $0x8] sm:$0xff] %vm721, %v704
      %724 = vst.msk [vmem:[%s170 + $0x10] sm:$0xff] %vm721, %v705
      %725 = vst.msk [vmem:[%s170 + $0x18] sm:$0xff] %vm721, %v706
      %726 = vst.msk [vmem:[%s170 + $0x20] sm:$0xff] %vm721, %v707
      %727 = vst.msk [vmem:[%s170 + $0x28] sm:$0xff] %vm721, %v708
      %728 = vst.msk [vmem:[%s170 + $0x30] sm:$0xff] %vm721, %v709
      %729 = vst.msk [vmem:[%s170 + $0x38] sm:$0xff] %vm721, %v710
      %p730 = scmp.lt.s32.totalorder %s14, 1
      %s731 = scalar_select %p730, %s14, 1
      %s732 = smul.addr %s731, 16
      %s733 = smul.addr %s732, 4
      %s734 = scalar_lea.vmem %s3, %s733
      // Predicated region
      $region33: #{cnn_classifier_forward.11} parent=31 // pred_check
        %p735 = pneg %p100
      $region34: #{cnn_classifier_forward.11} parent=31 // pred_check_branch
        %737 = sbr.rel (%p735) target = $region36
      $region35: #{cnn_classifier_forward.11} parent=31 // pred_region
        _
      $region36: #{cnn_classifier_forward.11} parent=31 // pred_fallthru
        _
    $region32: #{cnn_classifier_forward.11} parent=5 // pred_fallthru
      _
    %p738 = scmp.le.s32.totalorder 2, %s9
    // Predicated region
    $region37: #{cnn_classifier_forward.11} parent=5 // pred_check
      %p739 = pneg %p738
    $region38: #{cnn_classifier_forward.11} parent=5 // pred_check_branch
      %741 = sbr.rel (%p739) target = $region40
    $region39: #{cnn_classifier_forward.11} parent=5 // pred_region
      %s742 = ssub.s32 %s9, 2
      // Predicated region
      $region41: #{cnn_classifier_forward.11} parent=39 // pred_check
        %p743 = pneg %p106
      $region42: #{cnn_classifier_forward.11} parent=39 // pred_check_branch
        %745 = sbr.rel (%p743) target = $region44
      $region43: #{cnn_classifier_forward.11} parent=39 // pred_region
        %p746 = scmp.lt.s32.totalorder %s15, 1
        %s747 = scalar_select %p746, %s15, 1
        %s748 = smul.addr %s747, 16
        %s749 = smul.addr %s748, 4
        %s750 = scalar_lea.vmem %s3, %s749
      $region44: #{cnn_classifier_forward.11} parent=39 // pred_fallthru
        _
    $region40: #{cnn_classifier_forward.11} parent=5 // pred_fallthru
      _
  $region6: #{cnn_classifier_forward.11} parent=0 // loop_footer
    %s13 = sadd.s32 1, %s9
  $region7: #{cnn_classifier_forward.11} parent=0 // loop_footer_branch
    %8 = sbr.rel target = $region3
  $region8: #{cnn_classifier_forward.11} parent=0 // loop_exit
    _

// kernel: cnn_classifier_forward.12
$region0: #{cnn_classifier_forward.12}
  #allocation0 [shape = 'u32[]', space=smem, size = 0x4, offset = 0x4, fixed_abs, tag = 'smem constant byte address 0x4 - core index']
  #allocation1 [shape = 'u32[144,128]{1,0:T(1,128)}', space=vmem, size = 0x12000, scoped, tag = 'internal scratch']
  %s0 = inlined_call_operand.vmem [shape: bf16[128,36], index: 0, kind: input, shape index: {}]
  %s1 = inlined_call_operand.vmem [shape: bf16[128,36], index: 1, kind: input, shape index: {}]
  %s2 = inlined_call_operand.vmem [shape: bf16[128,36], index: 2, kind: input, shape index: {}]
  %s3 = inlined_call_operand.vmem [shape: bf16[128,36], index: 3, kind: input, shape index: {}]
  %s4 = inlined_call_operand.vmem [shape: bf16[128,36], index: 4, kind: output, shape index: {}]
  %s5 = sld [smem:[#allocation0]]
  $region26: #{cnn_classifier_forward.12} parent=0
    _
  %s7 = ssub.s32 1, %s5
  %s8 = scalar_select 0, %s7, %s5
  // Predicated region
  $region2: #{cnn_classifier_forward.12} parent=0 // pred_check
    _
  $region3: #{cnn_classifier_forward.12} parent=0 // pred_check_branch
    %10 = sbr.rel (0) target = $region5
  $region4: #{cnn_classifier_forward.12} parent=0 // pred_region
    _
  $region5: #{cnn_classifier_forward.12} parent=0 // pred_fallthru
    _
  // Predicated region
  $region6: #{cnn_classifier_forward.12} parent=0 // pred_check
    _
  $region7: #{cnn_classifier_forward.12} parent=0 // pred_check_branch
    %12 = sbr.rel (0) target = $region9
  $region8: #{cnn_classifier_forward.12} parent=0 // pred_region
    _
  $region9: #{cnn_classifier_forward.12} parent=0 // pred_fallthru
    _
  // Predicated region
  $region10: #{cnn_classifier_forward.12} parent=0 // pred_check
    _
  $region11: #{cnn_classifier_forward.12} parent=0 // pred_check_branch
    %14 = sbr.rel (0) target = $region13
  $region12: #{cnn_classifier_forward.12} parent=0 // pred_region
    _
  $region13: #{cnn_classifier_forward.12} parent=0 // pred_fallthru
    _
  // Predicated region
  $region14: #{cnn_classifier_forward.12} parent=0 // pred_check
    _
  $region15: #{cnn_classifier_forward.12} parent=0 // pred_check_branch
    %16 = sbr.rel (0) target = $region17
  $region16: #{cnn_classifier_forward.12} parent=0 // pred_region
    _
  $region17: #{cnn_classifier_forward.12} parent=0 // pred_fallthru
    _
  %v17 = vld [vmem:[%s0] sm:$0xf]
  %v18 = vld [vmem:[%s0 + $0x4] sm:$0xf]
  %v19 = vld [vmem:[%s0 + $0x8] sm:$0xf]
  %v20 = vld [vmem:[%s0 + $0xc] sm:$0xf]
  %v21 = vld [vmem:[%s0 + $0x10] sm:$0xf]
  %v22 = vld [vmem:[%s0 + $0x14] sm:$0xf]
  %v23 = vld [vmem:[%s0 + $0x18] sm:$0xf]
  %v24 = vld [vmem:[%s0 + $0x1c] sm:$0xf]
  %v25 = vld [vmem:[%s0 + $0x20] sm:$0xf]
  %v26 = vld [vmem:[%s0 + $0x24] sm:$0xf]
  %v27 = vld [vmem:[%s0 + $0x28] sm:$0xf]
  %v28 = vld [vmem:[%s0 + $0x2c] sm:$0xf]
  %v29 = vld [vmem:[%s0 + $0x30] sm:$0xf]
  %v30 = vld [vmem:[%s0 + $0x34] sm:$0xf]
  %v31 = vld [vmem:[%s0 + $0x38] sm:$0xf]
  %v32 = vld [vmem:[%s0 + $0x3c] sm:$0xf]
  %v33 = vld [vmem:[%s1] sm:$0xf]
  %v34 = vld [vmem:[%s1 + $0x4] sm:$0xf]
  %v35 = vld [vmem:[%s1 + $0x8] sm:$0xf]
  %v36 = vld [vmem:[%s1 + $0xc] sm:$0xf]
  %v37 = vld [vmem:[%s1 + $0x10] sm:$0xf]
  %v38 = vld [vmem:[%s1 + $0x14] sm:$0xf]
  %v39 = vld [vmem:[%s1 + $0x18] sm:$0xf]
  %v40 = vld [vmem:[%s1 + $0x1c] sm:$0xf]
  %v41 = vld [vmem:[%s1 + $0x20] sm:$0xf]
  %v42 = vld [vmem:[%s1 + $0x24] sm:$0xf]
  %v43 = vld [vmem:[%s1 + $0x28] sm:$0xf]
  %v44 = vld [vmem:[%s1 + $0x2c] sm:$0xf]
  %v45 = vld [vmem:[%s1 + $0x30] sm:$0xf]
  %v46 = vld [vmem:[%s1 + $0x34] sm:$0xf]
  %v47 = vld [vmem:[%s1 + $0x38] sm:$0xf]
  %v48 = vld [vmem:[%s1 + $0x3c] sm:$0xf]
  %v49 = vmax.bf16 %v17, %v33
  %v50 = vmax.bf16 %v18, %v34
  %v51 = vmax.bf16 %v19, %v35
  %v52 = vmax.bf16 %v20, %v36
  %v53 = vmax.bf16 %v21, %v37
  %v54 = vmax.bf16 %v22, %v38
  %v55 = vmax.bf16 %v23, %v39
  %v56 = vmax.bf16 %v24, %v40
  %v57 = vmax.bf16 %v25, %v41
  %v58 = vmax.bf16 %v26, %v42
  %v59 = vmax.bf16 %v27, %v43
  %v60 = vmax.bf16 %v28, %v44
  %v61 = vmax.bf16 %v29, %v45
  %v62 = vmax.bf16 %v30, %v46
  %v63 = vmax.bf16 %v31, %v47
  %v64 = vmax.bf16 %v32, %v48
  %v65 = vld [vmem:[%s2] sm:$0xf]
  %v66 = vld [vmem:[%s2 + $0x4] sm:$0xf]
  %v67 = vld [vmem:[%s2 + $0x8] sm:$0xf]
  %v68 = vld [vmem:[%s2 + $0xc] sm:$0xf]
  %v69 = vld [vmem:[%s2 + $0x10] sm:$0xf]
  %v70 = vld [vmem:[%s2 + $0x14] sm:$0xf]
  %v71 = vld [vmem:[%s2 + $0x18] sm:$0xf]
  %v72 = vld [vmem:[%s2 + $0x1c] sm:$0xf]
  %v73 = vld [vmem:[%s2 + $0x20] sm:$0xf]
  %v74 = vld [vmem:[%s2 + $0x24] sm:$0xf]
  %v75 = vld [vmem:[%s2 + $0x28] sm:$0xf]
  %v76 = vld [vmem:[%s2 + $0x2c] sm:$0xf]
  %v77 = vld [vmem:[%s2 + $0x30] sm:$0xf]
  %v78 = vld [vmem:[%s2 + $0x34] sm:$0xf]
  %v79 = vld [vmem:[%s2 + $0x38] sm:$0xf]
  %v80 = vld [vmem:[%s2 + $0x3c] sm:$0xf]
  %v81 = vld [vmem:[%s3] sm:$0xf]
  %v82 = vld [vmem:[%s3 + $0x4] sm:$0xf]
  %v83 = vld [vmem:[%s3 + $0x8] sm:$0xf]
  %v84 = vld [vmem:[%s3 + $0xc] sm:$0xf]
  %v85 = vld [vmem:[%s3 + $0x10] sm:$0xf]
  %v86 = vld [vmem:[%s3 + $0x14] sm:$0xf]
  %v87 = vld [vmem:[%s3 + $0x18] sm:$0xf]
  %v88 = vld [vmem:[%s3 + $0x1c] sm:$0xf]
  %v89 = vld [vmem:[%s3 + $0x20] sm:$0xf]
  %v90 = vld [vmem:[%s3 + $0x24] sm:$0xf]
  %v91 = vld [vmem:[%s3 + $0x28] sm:$0xf]
  %v92 = vld [vmem:[%s3 + $0x2c] sm:$0xf]
  %v93 = vld [vmem:[%s3 + $0x30] sm:$0xf]
  %v94 = vld [vmem:[%s3 + $0x34] sm:$0xf]
  %v95 = vld [vmem:[%s3 + $0x38] sm:$0xf]
  %v96 = vld [vmem:[%s3 + $0x3c] sm:$0xf]
  %v97 = vmax.bf16 %v65, %v81
  %v98 = vmax.bf16 %v66, %v82
  %v99 = vmax.bf16 %v67, %v83
  %v100 = vmax.bf16 %v68, %v84
  %v101 = vmax.bf16 %v69, %v85
  %v102 = vmax.bf16 %v70, %v86
  %v103 = vmax.bf16 %v71, %v87
  %v104 = vmax.bf16 %v72, %v88
  %v105 = vmax.bf16 %v73, %v89
  %v106 = vmax.bf16 %v74, %v90
  %v107 = vmax.bf16 %v75, %v91
  %v108 = vmax.bf16 %v76, %v92
  %v109 = vmax.bf16 %v77, %v93
  %v110 = vmax.bf16 %v78, %v94
  %v111 = vmax.bf16 %v79, %v95
  %v112 = vmax.bf16 %v80, %v96
  %v113 = vmax.bf16 %v49, %v97
  %v114 = vmax.bf16 %v50, %v98
  %v115 = vmax.bf16 %v51, %v99
  %v116 = vmax.bf16 %v52, %v100
  %v117 = vmax.bf16 %v53, %v101
  %v118 = vmax.bf16 %v54, %v102
  %v119 = vmax.bf16 %v55, %v103
  %v120 = vmax.bf16 %v56, %v104
  %v121 = vmax.bf16 %v57, %v105
  %v122 = vmax.bf16 %v58, %v106
  %v123 = vmax.bf16 %v59, %v107
  %v124 = vmax.bf16 %v60, %v108
  %v125 = vmax.bf16 %v61, %v109
  %v126 = vmax.bf16 %v62, %v110
  %v127 = vmax.bf16 %v63, %v111
  %v128 = vmax.bf16 %v64, %v112
  %vm129 = vcmask 289792
  %130 = vst.msk [vmem:[%s4] sm:$0xf] %vm129, %v113
  %131 = vst.msk [vmem:[%s4 + $0x4] sm:$0xf] %vm129, %v114
  %132 = vst.msk [vmem:[%s4 + $0x8] sm:$0xf] %vm129, %v115
  %133 = vst.msk [vmem:[%s4 + $0xc] sm:$0xf] %vm129, %v116
  %134 = vst.msk [vmem:[%s4 + $0x10] sm:$0xf] %vm129, %v117
  %135 = vst.msk [vmem:[%s4 + $0x14] sm:$0xf] %vm129, %v118
  %136 = vst.msk [vmem:[%s4 + $0x18] sm:$0xf] %vm129, %v119
  %137 = vst.msk [vmem:[%s4 + $0x1c] sm:$0xf] %vm129, %v120
  %138 = vst.msk [vmem:[%s4 + $0x20] sm:$0xf] %vm129, %v121
  %139 = vst.msk [vmem:[%s4 + $0x24] sm:$0xf] %vm129, %v122
  %140 = vst.msk [vmem:[%s4 + $0x28] sm:$0xf] %vm129, %v123
  %141 = vst.msk [vmem:[%s4 + $0x2c] sm:$0xf] %vm129, %v124
  %142 = vst.msk [vmem:[%s4 + $0x30] sm:$0xf] %vm129, %v125
  %143 = vst.msk [vmem:[%s4 + $0x34] sm:$0xf] %vm129, %v126
  %144 = vst.msk [vmem:[%s4 + $0x38] sm:$0xf] %vm129, %v127
  %145 = vst.msk [vmem:[%s4 + $0x3c] sm:$0xf] %vm129, %v128
  // Predicated region
  $region18: #{cnn_classifier_forward.12} parent=0 // pred_check
    _
  $region19: #{cnn_classifier_forward.12} parent=0 // pred_check_branch
    %147 = sbr.rel (0) target = $region21
  $region20: #{cnn_classifier_forward.12} parent=0 // pred_region
    _
  $region21: #{cnn_classifier_forward.12} parent=0 // pred_fallthru
    _
  // Predicated region
  $region22: #{cnn_classifier_forward.12} parent=0 // pred_check
    _
  $region23: #{cnn_classifier_forward.12} parent=0 // pred_check_branch
    %149 = sbr.rel (0) target = $region25
  $region24: #{cnn_classifier_forward.12} parent=0 // pred_region
    _
  $region25: #{cnn_classifier_forward.12} parent=0 // pred_fallthru
    _

// kernel: cnn_classifier_forward.13
$region0: #{cnn_classifier_forward.13}
  #allocation0 [shape = 'u32[]', space=smem, size = 0x4, offset = 0x4, fixed_abs, tag = 'smem constant byte address 0x4 - core index']
  #allocation1 [shape = 'u32[144,128]{1,0:T(1,128)}', space=vmem, size = 0x12000, scoped, tag = 'internal scratch']
  %s0 = inlined_call_operand.vmem [shape: bf16[2,2304], index: 0, kind: input, shape index: {}]
  %s1 = inlined_call_operand.vmem [shape: bf16[2304,500], index: 1, kind: input, shape index: {}]
  %s2 = inlined_call_operand.vmem [shape: f32[1,500], index: 2, kind: input, shape index: {}]
  %s3 = inlined_call_operand.vmem [shape: bf16[500,50], index: 3, kind: input, shape index: {}]
  %s4 = inlined_call_operand.vmem [shape: f32[1,50], index: 4, kind: input, shape index: {}]
  %s5 = inlined_call_operand.vmem [shape: bf16[50,10], index: 5, kind: input, shape index: {}]
  %s6 = inlined_call_operand.vmem [shape: f32[1,10], index: 6, kind: input, shape index: {}]
  %s7 = inlined_call_operand.hbm [shape: f32[2,10], index: 7, kind: output, shape index: {}]
  %s8 = sld [smem:[#allocation0]]
  $region38: #{cnn_classifier_forward.13} parent=0
    _
  %s10 = ssub.s32 1, %s8
  %s11 = scalar_select 0, %s10, %s8
  $region1: #{cnn_classifier_forward.13} parent=0
    #allocation2 [shape = 'u8[1024]{0}', space=vmem, size = 0x400, scoped, tag = 'output window, operand 0, single buffered']
    #allocation3 [shape = 's32[1]{0}', space=sflag, size = 0x4, scoped, tag = 'scoped memory for cnn_classifier_forward.13']
    %12 = vsyncpa [#allocation3], 0
    // Predicated region
    $region2: #{cnn_classifier_forward.13} parent=1 // pred_check
      _
    $region3: #{cnn_classifier_forward.13} parent=1 // pred_check_branch
      %14 = sbr.rel (0) target = $region5
    $region4: #{cnn_classifier_forward.13} parent=1 // pred_region
      _
    $region5: #{cnn_classifier_forward.13} parent=1 // pred_fallthru
      _
    // Predicated region
    $region6: #{cnn_classifier_forward.13} parent=1 // pred_check
      _
    $region7: #{cnn_classifier_forward.13} parent=1 // pred_check_branch
      %16 = sbr.rel (0) target = $region9
    $region8: #{cnn_classifier_forward.13} parent=1 // pred_region
      _
    $region9: #{cnn_classifier_forward.13} parent=1 // pred_fallthru
      _
    // Predicated region
    $region10: #{cnn_classifier_forward.13} parent=1 // pred_check
      _
    $region11: #{cnn_classifier_forward.13} parent=1 // pred_check_branch
      %18 = sbr.rel (0) target = $region13
    $region12: #{cnn_classifier_forward.13} parent=1 // pred_region
      _
    $region13: #{cnn_classifier_forward.13} parent=1 // pred_fallthru
      _
    // Predicated region
    $region14: #{cnn_classifier_forward.13} parent=1 // pred_check
      _
    $region15: #{cnn_classifier_forward.13} parent=1 // pred_check_branch
      %20 = sbr.rel (0) target = $region17
    $region16: #{cnn_classifier_forward.13} parent=1 // pred_region
      _
    $region17: #{cnn_classifier_forward.13} parent=1 // pred_fallthru
      _
    // Predicated region
    $region18: #{cnn_classifier_forward.13} parent=1 // pred_check
      _
    $region19: #{cnn_classifier_forward.13} parent=1 // pred_check_branch
      %22 = sbr.rel (0) target = $region21
    $region20: #{cnn_classifier_forward.13} parent=1 // pred_region
      _
    $region21: #{cnn_classifier_forward.13} parent=1 // pred_fallthru
      _
    // Predicated region
    $region22: #{cnn_classifier_forward.13} parent=1 // pred_check
      _
    $region23: #{cnn_classifier_forward.13} parent=1 // pred_check_branch
      %24 = sbr.rel (0) target = $region25
    $region24: #{cnn_classifier_forward.13} parent=1 // pred_region
      _
    $region25: #{cnn_classifier_forward.13} parent=1 // pred_fallthru
      _
    // Predicated region
    $region26: #{cnn_classifier_forward.13} parent=1 // pred_check
      _
    $region27: #{cnn_classifier_forward.13} parent=1 // pred_check_branch
      %26 = sbr.rel (0) target = $region29
    $region28: #{cnn_classifier_forward.13} parent=1 // pred_region
      _
    $region29: #{cnn_classifier_forward.13} parent=1 // pred_fallthru
      _
    %v28 = vld [vmem:[%s0] sm:$0xff]
    %v29 = vld [vmem:[%s0 + $0x8] sm:$0xff]
    %v30 = vld [vmem:[%s0 + $0x10] sm:$0x3]
    %v31 = vld [vmem:[%s1] sm:$0xff]
    %v32 = vld [vmem:[%s1 + $0x8] sm:$0xff]
    %v33 = vld [vmem:[%s1 + $0x10] sm:$0xff]
    %v34 = vld [vmem:[%s1 + $0x18] sm:$0xff]
    %v35 = vld [vmem:[%s1 + $0x20] sm:$0xff]
    %v36 = vld [vmem:[%s1 + $0x28] sm:$0xff]
    %v37 = vld [vmem:[%s1 + $0x30] sm:$0xff]
    %v38 = vld [vmem:[%s1 + $0x38] sm:$0xff]
    %v39 = vld [vmem:[%s1 + $0x40] sm:$0xff]
    %v40 = vld [vmem:[%s1 + $0x48] sm:$0xff]
    %v41 = vld [vmem:[%s1 + $0x50] sm:$0xff]
    %v42 = vld [vmem:[%s1 + $0x58] sm:$0xff]
    %v43 = vld [vmem:[%s1 + $0x60] sm:$0xff]
    %v44 = vld [vmem:[%s1 + $0x68] sm:$0xff]
    %v45 = vld [vmem:[%s1 + $0x70] sm:$0xff]
    %v46 = vld [vmem:[%s1 + $0x78] sm:$0xff]
    %v47 = vld [vmem:[%s1 + $0x80] sm:$0xff]
    %v48 = vld [vmem:[%s1 + $0x88] sm:$0xff]
    %v49 = vld [vmem:[%s1 + $0x90] sm:$0xff]
    %v50 = vld [vmem:[%s1 + $0x98] sm:$0xff]
    %v51 = vld [vmem:[%s1 + $0xa0] sm:$0xff]
    %v52 = vld [vmem:[%s1 + $0xa8] sm:$0xff]
    %v53 = vld [vmem:[%s1 + $0xb0] sm:$0xff]
    %v54 = vld [vmem:[%s1 + $0xb8] sm:$0xff]
    %v55 = vld [vmem:[%s1 + $0xc0] sm:$0xff]
    %v56 = vld [vmem:[%s1 + $0xc8] sm:$0xff]
    %v57 = vld [vmem:[%s1 + $0xd0] sm:$0xff]
    %v58 = vld [vmem:[%s1 + $0xd8] sm:$0xff]
    %v59 = vld [vmem:[%s1 + $0xe0] sm:$0xff]
    %v60 = vld [vmem:[%s1 + $0xe8] sm:$0xff]
    %v61 = vld [vmem:[%s1 + $0xf0] sm:$0xff]
    %v62 = vld [vmem:[%s1 + $0xf8] sm:$0xff]
    %v63 = vld [vmem:[%s1 + $0x100] sm:$0xff]
    %v64 = vld [vmem:[%s1 + $0x108] sm:$0xff]
    %v65 = vld [vmem:[%s1 + $0x110] sm:$0xff]
    %v66 = vld [vmem:[%s1 + $0x118] sm:$0xff]
    %v67 = vld [vmem:[%s1 + $0x120] sm:$0xff]
    %v68 = vld [vmem:[%s1 + $0x128] sm:$0xff]
    %v69 = vld [vmem:[%s1 + $0x130] sm:$0xff]
    %v70 = vld [vmem:[%s1 + $0x138] sm:$0xff]
    %v71 = vld [vmem:[%s1 + $0x140] sm:$0xff]
    %v72 = vld [vmem:[%s1 + $0x148] sm:$0xff]
    %v73 = vld [vmem:[%s1 + $0x150] sm:$0xff]
    %v74 = vld [vmem:[%s1 + $0x158] sm:$0xff]
    %v75 = vld [vmem:[%s1 + $0x160] sm:$0xff]
    %v76 = vld [vmem:[%s1 + $0x168] sm:$0xff]
    %v77 = vld [vmem:[%s1 + $0x170] sm:$0xff]
    %v78 = vld [vmem:[%s1 + $0x178] sm:$0xff]
    %v79 = vld [vmem:[%s1 + $0x180] sm:$0xff]
    %v80 = vld [vmem:[%s1 + $0x188] sm:$0xff]
    %v81 = vld [vmem:[%s1 + $0x190] sm:$0xff]
    %v82 = vld [vmem:[%s1 + $0x198] sm:$0xff]
    %v83 = vld [vmem:[%s1 + $0x1a0] sm:$0xff]
    %v84 = vld [vmem:[%s1 + $0x1a8] sm:$0xff]
    %v85 = vld [vmem:[%s1 + $0x1b0] sm:$0xff]
    %v86 = vld [vmem:[%s1 + $0x1b8] sm:$0xff]
    %v87 = vld [vmem:[%s1 + $0x1c0] sm:$0xff]
    %v88 = vld [vmem:[%s1 + $0x1c8] sm:$0xff]
    %v89 = vld [vmem:[%s1 + $0x1d0] sm:$0xff]
    %v90 = vld [vmem:[%s1 + $0x1d8] sm:$0xff]
    %v91 = vld [vmem:[%s1 + $0x1e0] sm:$0xff]
    %v92 = vld [vmem:[%s1 + $0x1e8] sm:$0xff]
    %v93 = vld [vmem:[%s1 + $0x1f0] sm:$0xff]
    %v94 = vld [vmem:[%s1 + $0x1f8] sm:$0xff]
    %v95 = vld [vmem:[%s1 + $0x200] sm:$0xff]
    %v96 = vld [vmem:[%s1 + $0x208] sm:$0xff]
    %v97 = vld [vmem:[%s1 + $0x210] sm:$0xff]
    %v98 = vld [vmem:[%s1 + $0x218] sm:$0xff]
    %v99 = vld [vmem:[%s1 + $0x220] sm:$0xff]
    %v100 = vld [vmem:[%s1 + $0x228] sm:$0xff]
    %v101 = vld [vmem:[%s1 + $0x230] sm:$0xff]
    %v102 = vld [vmem:[%s1 + $0x238] sm:$0xff]
    %v103 = vld [vmem:[%s1 + $0x240] sm:$0xff]
    %v104 = vld [vmem:[%s1 + $0x248] sm:$0xff]
    %v105 = vld [vmem:[%s1 + $0x250] sm:$0xff]
    %v106 = vld [vmem:[%s1 + $0x258] sm:$0xff]
    %v107 = vld [vmem:[%s1 + $0x260] sm:$0xff]
    %v108 = vld [vmem:[%s1 + $0x268] sm:$0xff]
    %v109 = vld [vmem:[%s1 + $0x270] sm:$0xff]
    %v110 = vld [vmem:[%s1 + $0x278] sm:$0xff]
    %v111 = vld [vmem:[%s1 + $0x280] sm:$0xff]
    %v112 = vld [vmem:[%s1 + $0x288] sm:$0xff]
    %v113 = vld [vmem:[%s1 + $0x290] sm:$0xff]
    %v114 = vld [vmem:[%s1 + $0x298] sm:$0xff]
    %v115 = vld [vmem:[%s1 + $0x2a0] sm:$0xff]
    %v116 = vld [vmem:[%s1 + $0x2a8] sm:$0xff]
    %v117 = vld [vmem:[%s1 + $0x2b0] sm:$0xff]
    %v118 = vld [vmem:[%s1 + $0x2b8] sm:$0xff]
    %v119 = vld [vmem:[%s1 + $0x2c0] sm:$0xff]
    %v120 = vld [vmem:[%s1 + $0x2c8] sm:$0xff]
    %v121 = vld [vmem:[%s1 + $0x2d0] sm:$0xff]
    %v122 = vld [vmem:[%s1 + $0x2d8] sm:$0xff]
    %v123 = vld [vmem:[%s1 + $0x2e0] sm:$0xff]
    %v124 = vld [vmem:[%s1 + $0x2e8] sm:$0xff]
    %v125 = vld [vmem:[%s1 + $0x2f0] sm:$0xff]
    %v126 = vld [vmem:[%s1 + $0x2f8] sm:$0xff]
    %v127 = vld [vmem:[%s1 + $0x300] sm:$0xff]
    %v128 = vld [vmem:[%s1 + $0x308] sm:$0xff]
    %v129 = vld [vmem:[%s1 + $0x310] sm:$0xff]
    %v130 = vld [vmem:[%s1 + $0x318] sm:$0xff]
    %v131 = vld [vmem:[%s1 + $0x320] sm:$0xff]
    %v132 = vld [vmem:[%s1 + $0x328] sm:$0xff]
    %v133 = vld [vmem:[%s1 + $0x330] sm:$0xff]
    %v134 = vld [vmem:[%s1 + $0x338] sm:$0xff]
    %v135 = vld [vmem:[%s1 + $0x340] sm:$0xff]
    %v136 = vld [vmem:[%s1 + $0x348] sm:$0xff]
    %v137 = vld [vmem:[%s1 + $0x350] sm:$0xff]
    %v138 = vld [vmem:[%s1 + $0x358] sm:$0xff]
    %v139 = vld [vmem:[%s1 + $0x360] sm:$0xff]
    %v140 = vld [vmem:[%s1 + $0x368] sm:$0xff]
    %v141 = vld [vmem:[%s1 + $0x370] sm:$0xff]
    %v142 = vld [vmem:[%s1 + $0x378] sm:$0xff]
    %v143 = vld [vmem:[%s1 + $0x380] sm:$0xff]
    %v144 = vld [vmem:[%s1 + $0x388] sm:$0xff]
    %v145 = vld [vmem:[%s1 + $0x390] sm:$0xff]
    %v146 = vld [vmem:[%s1 + $0x398] sm:$0xff]
    %v147 = vld [vmem:[%s1 + $0x3a0] sm:$0xff]
    %v148 = vld [vmem:[%s1 + $0x3a8] sm:$0xff]
    %v149 = vld [vmem:[%s1 + $0x3b0] sm:$0xff]
    %v150 = vld [vmem:[%s1 + $0x3b8] sm:$0xff]
    %v151 = vld [vmem:[%s1 + $0x3c0] sm:$0xff]
    %v152 = vld [vmem:[%s1 + $0x3c8] sm:$0xff]
    %v153 = vld [vmem:[%s1 + $0x3d0] sm:$0xff]
    %v154 = vld [vmem:[%s1 + $0x3d8] sm:$0xff]
    %v155 = vld [vmem:[%s1 + $0x3e0] sm:$0xff]
    %v156 = vld [vmem:[%s1 + $0x3e8] sm:$0xff]
    %v157 = vld [vmem:[%s1 + $0x3f0] sm:$0xff]
    %v158 = vld [vmem:[%s1 + $0x3f8] sm:$0xff]
    %v159 = vld [vmem:[%s1 + $0x400] sm:$0xff]
    %v160 = vld [vmem:[%s1 + $0x408] sm:$0xff]
    %v161 = vld [vmem:[%s1 + $0x410] sm:$0xff]
    %v162 = vld [vmem:[%s1 + $0x418] sm:$0xff]
    %v163 = vld [vmem:[%s1 + $0x420] sm:$0xff]
    %v164 = vld [vmem:[%s1 + $0x428] sm:$0xff]
    %v165 = vld [vmem:[%s1 + $0x430] sm:$0xff]
    %v166 = vld [vmem:[%s1 + $0x438] sm:$0xff]
    %v167 = vld [vmem:[%s1 + $0x440] sm:$0xff]
    %v168 = vld [vmem:[%s1 + $0x448] sm:$0xff]
    %v169 = vld [vmem:[%s1 + $0x450] sm:$0xff]
    %v170 = vld [vmem:[%s1 + $0x458] sm:$0xff]
    %v171 = vld [vmem:[%s1 + $0x460] sm:$0xff]
    %v172 = vld [vmem:[%s1 + $0x468] sm:$0xff]
    %v173 = vld [vmem:[%s1 + $0x470] sm:$0xff]
    %v174 = vld [vmem:[%s1 + $0x478] sm:$0xff]
    %v175 = vld [vmem:[%s1 + $0x480] sm:$0xff]
    %v176 = vld [vmem:[%s1 + $0x488] sm:$0xff]
    %v177 = vld [vmem:[%s1 + $0x490] sm:$0xff]
    %v178 = vld [vmem:[%s1 + $0x498] sm:$0xff]
    %v179 = vld [vmem:[%s1 + $0x4a0] sm:$0xff]
    %v180 = vld [vmem:[%s1 + $0x4a8] sm:$0xff]
    %v181 = vld [vmem:[%s1 + $0x4b0] sm:$0xff]
    %v182 = vld [vmem:[%s1 + $0x4b8] sm:$0xff]
    %v183 = vld [vmem:[%s1 + $0x4c0] sm:$0xff]
    %v184 = vld [vmem:[%s1 + $0x4c8] sm:$0xff]
    %v185 = vld [vmem:[%s1 + $0x4d0] sm:$0xff]
    %v186 = vld [vmem:[%s1 + $0x4d8] sm:$0xff]
    %v187 = vld [vmem:[%s1 + $0x4e0] sm:$0xff]
    %v188 = vld [vmem:[%s1 + $0x4e8] sm:$0xff]
    %v189 = vld [vmem:[%s1 + $0x4f0] sm:$0xff]
    %v190 = vld [vmem:[%s1 + $0x4f8] sm:$0xff]
    %v191 = vld [vmem:[%s1 + $0x500] sm:$0xff]
    %v192 = vld [vmem:[%s1 + $0x508] sm:$0xff]
    %v193 = vld [vmem:[%s1 + $0x510] sm:$0xff]
    %v194 = vld [vmem:[%s1 + $0x518] sm:$0xff]
    %v195 = vld [vmem:[%s1 + $0x520] sm:$0xff]
    %v196 = vld [vmem:[%s1 + $0x528] sm:$0xff]
    %v197 = vld [vmem:[%s1 + $0x530] sm:$0xff]
    %v198 = vld [vmem:[%s1 + $0x538] sm:$0xff]
    %v199 = vld [vmem:[%s1 + $0x540] sm:$0xff]
    %v200 = vld [vmem:[%s1 + $0x548] sm:$0xff]
    %v201 = vld [vmem:[%s1 + $0x550] sm:$0xff]
    %v202 = vld [vmem:[%s1 + $0x558] sm:$0xff]
    %v203 = vld [vmem:[%s1 + $0x560] sm:$0xff]
    %v204 = vld [vmem:[%s1 + $0x568] sm:$0xff]
    %v205 = vld [vmem:[%s1 + $0x570] sm:$0xff]
    %v206 = vld [vmem:[%s1 + $0x578] sm:$0xff]
    %v207 = vld [vmem:[%s1 + $0x580] sm:$0xff]
    %v208 = vld [vmem:[%s1 + $0x588] sm:$0xff]
    %v209 = vld [vmem:[%s1 + $0x590] sm:$0xff]
    %v210 = vld [vmem:[%s1 + $0x598] sm:$0xff]
    %v211 = vld [vmem:[%s1 + $0x5a0] sm:$0xff]
    %v212 = vld [vmem:[%s1 + $0x5a8] sm:$0xff]
    %v213 = vld [vmem:[%s1 + $0x5b0] sm:$0xff]
    %v214 = vld [vmem:[%s1 + $0x5b8] sm:$0xff]
    %v215 = vld [vmem:[%s1 + $0x5c0] sm:$0xff]
    %v216 = vld [vmem:[%s1 + $0x5c8] sm:$0xff]
    %v217 = vld [vmem:[%s1 + $0x5d0] sm:$0xff]
    %v218 = vld [vmem:[%s1 + $0x5d8] sm:$0xff]
    %v219 = vld [vmem:[%s1 + $0x5e0] sm:$0xff]
    %v220 = vld [vmem:[%s1 + $0x5e8] sm:$0xff]
    %v221 = vld [vmem:[%s1 + $0x5f0] sm:$0xff]
    %v222 = vld [vmem:[%s1 + $0x5f8] sm:$0xff]
    %v223 = vld [vmem:[%s1 + $0x600] sm:$0xff]
    %v224 = vld [vmem:[%s1 + $0x608] sm:$0xff]
    %v225 = vld [vmem:[%s1 + $0x610] sm:$0xff]
    %v226 = vld [vmem:[%s1 + $0x618] sm:$0xff]
    %v227 = vld [vmem:[%s1 + $0x620] sm:$0xff]
    %v228 = vld [vmem:[%s1 + $0x628] sm:$0xff]
    %v229 = vld [vmem:[%s1 + $0x630] sm:$0xff]
    %v230 = vld [vmem:[%s1 + $0x638] sm:$0xff]
    %v231 = vld [vmem:[%s1 + $0x640] sm:$0xff]
    %v232 = vld [vmem:[%s1 + $0x648] sm:$0xff]
    %v233 = vld [vmem:[%s1 + $0x650] sm:$0xff]
    %v234 = vld [vmem:[%s1 + $0x658] sm:$0xff]
    %v235 = vld [vmem:[%s1 + $0x660] sm:$0xff]
    %v236 = vld [vmem:[%s1 + $0x668] sm:$0xff]
    %v237 = vld [vmem:[%s1 + $0x670] sm:$0xff]
    %v238 = vld [vmem:[%s1 + $0x678] sm:$0xff]
    %v239 = vld [vmem:[%s1 + $0x680] sm:$0xff]
    %v240 = vld [vmem:[%s1 + $0x688] sm:$0xff]
    %v241 = vld [vmem:[%s1 + $0x690] sm:$0xff]
    %v242 = vld [vmem:[%s1 + $0x698] sm:$0xff]
    %v243 = vld [vmem:[%s1 + $0x6a0] sm:$0xff]
    %v244 = vld [vmem:[%s1 + $0x6a8] sm:$0xff]
    %v245 = vld [vmem:[%s1 + $0x6b0] sm:$0xff]
    %v246 = vld [vmem:[%s1 + $0x6b8] sm:$0xff]
    %v247 = vld [vmem:[%s1 + $0x6c0] sm:$0xff]
    %v248 = vld [vmem:[%s1 + $0x6c8] sm:$0xff]
    %v249 = vld [vmem:[%s1 + $0x6d0] sm:$0xff]
    %v250 = vld [vmem:[%s1 + $0x6d8] sm:$0xff]
    %v251 = vld [vmem:[%s1 + $0x6e0] sm:$0xff]
    %v252 = vld [vmem:[%s1 + $0x6e8] sm:$0xff]
    %v253 = vld [vmem:[%s1 + $0x6f0] sm:$0xff]
    %v254 = vld [vmem:[%s1 + $0x6f8] sm:$0xff]
    %v255 = vld [vmem:[%s1 + $0x700] sm:$0xff]
    %v256 = vld [vmem:[%s1 + $0x708] sm:$0xff]
    %v257 = vld [vmem:[%s1 + $0x710] sm:$0xff]
    %v258 = vld [vmem:[%s1 + $0x718] sm:$0xff]
    %v259 = vld [vmem:[%s1 + $0x720] sm:$0xff]
    %v260 = vld [vmem:[%s1 + $0x728] sm:$0xff]
    %v261 = vld [vmem:[%s1 + $0x730] sm:$0xff]
    %v262 = vld [vmem:[%s1 + $0x738] sm:$0xff]
    %v263 = vld [vmem:[%s1 + $0x740] sm:$0xff]
    %v264 = vld [vmem:[%s1 + $0x748] sm:$0xff]
    %v265 = vld [vmem:[%s1 + $0x750] sm:$0xff]
    %v266 = vld [vmem:[%s1 + $0x758] sm:$0xff]
    %v267 = vld [vmem:[%s1 + $0x760] sm:$0xff]
    %v268 = vld [vmem:[%s1 + $0x768] sm:$0xff]
    %v269 = vld [vmem:[%s1 + $0x770] sm:$0xff]
    %v270 = vld [vmem:[%s1 + $0x778] sm:$0xff]
    %v271 = vld [vmem:[%s1 + $0x780] sm:$0xff]
    %v272 = vld [vmem:[%s1 + $0x788] sm:$0xff]
    %v273 = vld [vmem:[%s1 + $0x790] sm:$0xff]
    %v274 = vld [vmem:[%s1 + $0x798] sm:$0xff]
    %v275 = vld [vmem:[%s1 + $0x7a0] sm:$0xff]
    %v276 = vld [vmem:[%s1 + $0x7a8] sm:$0xff]
    %v277 = vld [vmem:[%s1 + $0x7b0] sm:$0xff]
    %v278 = vld [vmem:[%s1 + $0x7b8] sm:$0xff]
    %v279 = vld [vmem:[%s1 + $0x7c0] sm:$0xff]
    %v280 = vld [vmem:[%s1 + $0x7c8] sm:$0xff]
    %v281 = vld [vmem:[%s1 + $0x7d0] sm:$0xff]
    %v282 = vld [vmem:[%s1 + $0x7d8] sm:$0xff]
    %v283 = vld [vmem:[%s1 + $0x7e0] sm:$0xff]
    %v284 = vld [vmem:[%s1 + $0x7e8] sm:$0xff]
    %v285 = vld [vmem:[%s1 + $0x7f0] sm:$0xff]
    %v286 = vld [vmem:[%s1 + $0x7f8] sm:$0xff]
    %v287 = vld [vmem:[%s1 + $0x800] sm:$0xff]
    %v288 = vld [vmem:[%s1 + $0x808] sm:$0xff]
    %v289 = vld [vmem:[%s1 + $0x810] sm:$0xff]
    %v290 = vld [vmem:[%s1 + $0x818] sm:$0xff]
    %v291 = vld [vmem:[%s1 + $0x820] sm:$0xff]
    %v292 = vld [vmem:[%s1 + $0x828] sm:$0xff]
    %v293 = vld [vmem:[%s1 + $0x830] sm:$0xff]
    %v294 = vld [vmem:[%s1 + $0x838] sm:$0xff]
    %v295 = vld [vmem:[%s1 + $0x840] sm:$0xff]
    %v296 = vld [vmem:[%s1 + $0x848] sm:$0xff]
    %v297 = vld [vmem:[%s1 + $0x850] sm:$0xff]
    %v298 = vld [vmem:[%s1 + $0x858] sm:$0xff]
    %v299 = vld [vmem:[%s1 + $0x860] sm:$0xff]
    %v300 = vld [vmem:[%s1 + $0x868] sm:$0xff]
    %v301 = vld [vmem:[%s1 + $0x870] sm:$0xff]
    %v302 = vld [vmem:[%s1 + $0x878] sm:$0xff]
    %v303 = vld [vmem:[%s1 + $0x880] sm:$0xff]
    %v304 = vld [vmem:[%s1 + $0x888] sm:$0xff]
    %v305 = vld [vmem:[%s1 + $0x890] sm:$0xff]
    %v306 = vld [vmem:[%s1 + $0x898] sm:$0xff]
    %v307 = vld [vmem:[%s1 + $0x8a0] sm:$0xff]
    %v308 = vld [vmem:[%s1 + $0x8a8] sm:$0xff]
    %v309 = vld [vmem:[%s1 + $0x8b0] sm:$0xff]
    %v310 = vld [vmem:[%s1 + $0x8b8] sm:$0xff]
    %v311 = vld [vmem:[%s1 + $0x8c0] sm:$0xff]
    %v312 = vld [vmem:[%s1 + $0x8c8] sm:$0xff]
    %v313 = vld [vmem:[%s1 + $0x8d0] sm:$0xff]
    %v314 = vld [vmem:[%s1 + $0x8d8] sm:$0xff]
    %v315 = vld [vmem:[%s1 + $0x8e0] sm:$0xff]
    %v316 = vld [vmem:[%s1 + $0x8e8] sm:$0xff]
    %v317 = vld [vmem:[%s1 + $0x8f0] sm:$0xff]
    %v318 = vld [vmem:[%s1 + $0x8f8] sm:$0xff]
    %v319 = vld [vmem:[%s1 + $0x900] sm:$0xff]
    %v320 = vld [vmem:[%s1 + $0x908] sm:$0xff]
    %v321 = vld [vmem:[%s1 + $0x910] sm:$0xff]
    %v322 = vld [vmem:[%s1 + $0x918] sm:$0xff]
    %v323 = vld [vmem:[%s1 + $0x920] sm:$0xff]
    %v324 = vld [vmem:[%s1 + $0x928] sm:$0xff]
    %v325 = vld [vmem:[%s1 + $0x930] sm:$0xff]
    %v326 = vld [vmem:[%s1 + $0x938] sm:$0xff]
    %v327 = vld [vmem:[%s1 + $0x940] sm:$0xff]
    %v328 = vld [vmem:[%s1 + $0x948] sm:$0xff]
    %v329 = vld [vmem:[%s1 + $0x950] sm:$0xff]
    %v330 = vld [vmem:[%s1 + $0x958] sm:$0xff]
    %v331 = vld [vmem:[%s1 + $0x960] sm:$0xff]
    %v332 = vld [vmem:[%s1 + $0x968] sm:$0xff]
    %v333 = vld [vmem:[%s1 + $0x970] sm:$0xff]
    %v334 = vld [vmem:[%s1 + $0x978] sm:$0xff]
    %v335 = vld [vmem:[%s1 + $0x980] sm:$0xff]
    %v336 = vld [vmem:[%s1 + $0x988] sm:$0xff]
    %v337 = vld [vmem:[%s1 + $0x990] sm:$0xff]
    %v338 = vld [vmem:[%s1 + $0x998] sm:$0xff]
    %v339 = vld [vmem:[%s1 + $0x9a0] sm:$0xff]
    %v340 = vld [vmem:[%s1 + $0x9a8] sm:$0xff]
    %v341 = vld [vmem:[%s1 + $0x9b0] sm:$0xff]
    %v342 = vld [vmem:[%s1 + $0x9b8] sm:$0xff]
    %v343 = vld [vmem:[%s1 + $0x9c0] sm:$0xff]
    %v344 = vld [vmem:[%s1 + $0x9c8] sm:$0xff]
    %v345 = vld [vmem:[%s1 + $0x9d0] sm:$0xff]
    %v346 = vld [vmem:[%s1 + $0x9d8] sm:$0xff]
    %v347 = vld [vmem:[%s1 + $0x9e0] sm:$0xff]
    %v348 = vld [vmem:[%s1 + $0x9e8] sm:$0xff]
    %v349 = vld [vmem:[%s1 + $0x9f0] sm:$0xff]
    %v350 = vld [vmem:[%s1 + $0x9f8] sm:$0xff]
    %v351 = vld [vmem:[%s1 + $0xa00] sm:$0xff]
    %v352 = vld [vmem:[%s1 + $0xa08] sm:$0xff]
    %v353 = vld [vmem:[%s1 + $0xa10] sm:$0xff]
    %v354 = vld [vmem:[%s1 + $0xa18] sm:$0xff]
    %v355 = vld [vmem:[%s1 + $0xa20] sm:$0xff]
    %v356 = vld [vmem:[%s1 + $0xa28] sm:$0xff]
    %v357 = vld [vmem:[%s1 + $0xa30] sm:$0xff]
    %v358 = vld [vmem:[%s1 + $0xa38] sm:$0xff]
    %v359 = vld [vmem:[%s1 + $0xa40] sm:$0xff]
    %v360 = vld [vmem:[%s1 + $0xa48] sm:$0xff]
    %v361 = vld [vmem:[%s1 + $0xa50] sm:$0xff]
    %v362 = vld [vmem:[%s1 + $0xa58] sm:$0xff]
    %v363 = vld [vmem:[%s1 + $0xa60] sm:$0xff]
    %v364 = vld [vmem:[%s1 + $0xa68] sm:$0xff]
    %v365 = vld [vmem:[%s1 + $0xa70] sm:$0xff]
    %v366 = vld [vmem:[%s1 + $0xa78] sm:$0xff]
    %v367 = vld [vmem:[%s1 + $0xa80] sm:$0xff]
    %v368 = vld [vmem:[%s1 + $0xa88] sm:$0xff]
    %v369 = vld [vmem:[%s1 + $0xa90] sm:$0xff]
    %v370 = vld [vmem:[%s1 + $0xa98] sm:$0xff]
    %v371 = vld [vmem:[%s1 + $0xaa0] sm:$0xff]
    %v372 = vld [vmem:[%s1 + $0xaa8] sm:$0xff]
    %v373 = vld [vmem:[%s1 + $0xab0] sm:$0xff]
    %v374 = vld [vmem:[%s1 + $0xab8] sm:$0xff]
    %v375 = vld [vmem:[%s1 + $0xac0] sm:$0xff]
    %v376 = vld [vmem:[%s1 + $0xac8] sm:$0xff]
    %v377 = vld [vmem:[%s1 + $0xad0] sm:$0xff]
    %v378 = vld [vmem:[%s1 + $0xad8] sm:$0xff]
    %v379 = vld [vmem:[%s1 + $0xae0] sm:$0xff]
    %v380 = vld [vmem:[%s1 + $0xae8] sm:$0xff]
    %v381 = vld [vmem:[%s1 + $0xaf0] sm:$0xff]
    %v382 = vld [vmem:[%s1 + $0xaf8] sm:$0xff]
    %v383 = vld [vmem:[%s1 + $0xb00] sm:$0xff]
    %v384 = vld [vmem:[%s1 + $0xb08] sm:$0xff]
    %v385 = vld [vmem:[%s1 + $0xb10] sm:$0xff]
    %v386 = vld [vmem:[%s1 + $0xb18] sm:$0xff]
    %v387 = vld [vmem:[%s1 + $0xb20] sm:$0xff]
    %v388 = vld [vmem:[%s1 + $0xb28] sm:$0xff]
    %v389 = vld [vmem:[%s1 + $0xb30] sm:$0xff]
    %v390 = vld [vmem:[%s1 + $0xb38] sm:$0xff]
    %v391 = vld [vmem:[%s1 + $0xb40] sm:$0xff]
    %v392 = vld [vmem:[%s1 + $0xb48] sm:$0xff]
    %v393 = vld [vmem:[%s1 + $0xb50] sm:$0xff]
    %v394 = vld [vmem:[%s1 + $0xb58] sm:$0xff]
    %v395 = vld [vmem:[%s1 + $0xb60] sm:$0xff]
    %v396 = vld [vmem:[%s1 + $0xb68] sm:$0xff]
    %v397 = vld [vmem:[%s1 + $0xb70] sm:$0xff]
    %v398 = vld [vmem:[%s1 + $0xb78] sm:$0xff]
    %v399 = vld [vmem:[%s1 + $0xb80] sm:$0xff]
    %v400 = vld [vmem:[%s1 + $0xb88] sm:$0xff]
    %v401 = vld [vmem:[%s1 + $0xb90] sm:$0xff]
    %v402 = vld [vmem:[%s1 + $0xb98] sm:$0xff]
    %v403 = vld [vmem:[%s1 + $0xba0] sm:$0xff]
    %v404 = vld [vmem:[%s1 + $0xba8] sm:$0xff]
    %v405 = vld [vmem:[%s1 + $0xbb0] sm:$0xff]
    %v406 = vld [vmem:[%s1 + $0xbb8] sm:$0xff]
    %v407 = vld [vmem:[%s1 + $0xbc0] sm:$0xff]
    %v408 = vld [vmem:[%s1 + $0xbc8] sm:$0xff]
    %v409 = vld [vmem:[%s1 + $0xbd0] sm:$0xff]
    %v410 = vld [vmem:[%s1 + $0xbd8] sm:$0xff]
    %v411 = vld [vmem:[%s1 + $0xbe0] sm:$0xff]
    %v412 = vld [vmem:[%s1 + $0xbe8] sm:$0xff]
    %v413 = vld [vmem:[%s1 + $0xbf0] sm:$0xff]
    %v414 = vld [vmem:[%s1 + $0xbf8] sm:$0xff]
    %v415 = vld [vmem:[%s1 + $0xc00] sm:$0xff]
    %v416 = vld [vmem:[%s1 + $0xc08] sm:$0xff]
    %v417 = vld [vmem:[%s1 + $0xc10] sm:$0xff]
    %v418 = vld [vmem:[%s1 + $0xc18] sm:$0xff]
    %v419 = vld [vmem:[%s1 + $0xc20] sm:$0xff]
    %v420 = vld [vmem:[%s1 + $0xc28] sm:$0xff]
    %v421 = vld [vmem:[%s1 + $0xc30] sm:$0xff]
    %v422 = vld [vmem:[%s1 + $0xc38] sm:$0xff]
    %v423 = vld [vmem:[%s1 + $0xc40] sm:$0xff]
    %v424 = vld [vmem:[%s1 + $0xc48] sm:$0xff]
    %v425 = vld [vmem:[%s1 + $0xc50] sm:$0xff]
    %v426 = vld [vmem:[%s1 + $0xc58] sm:$0xff]
    %v427 = vld [vmem:[%s1 + $0xc60] sm:$0xff]
    %v428 = vld [vmem:[%s1 + $0xc68] sm:$0xff]
    %v429 = vld [vmem:[%s1 + $0xc70] sm:$0xff]
    %v430 = vld [vmem:[%s1 + $0xc78] sm:$0xff]
    %v431 = vld [vmem:[%s1 + $0xc80] sm:$0xff]
    %v432 = vld [vmem:[%s1 + $0xc88] sm:$0xff]
    %v433 = vld [vmem:[%s1 + $0xc90] sm:$0xff]
    %v434 = vld [vmem:[%s1 + $0xc98] sm:$0xff]
    %v435 = vld [vmem:[%s1 + $0xca0] sm:$0xff]
    %v436 = vld [vmem:[%s1 + $0xca8] sm:$0xff]
    %v437 = vld [vmem:[%s1 + $0xcb0] sm:$0xff]
    %v438 = vld [vmem:[%s1 + $0xcb8] sm:$0xff]
    %v439 = vld [vmem:[%s1 + $0xcc0] sm:$0xff]
    %v440 = vld [vmem:[%s1 + $0xcc8] sm:$0xff]
    %v441 = vld [vmem:[%s1 + $0xcd0] sm:$0xff]
    %v442 = vld [vmem:[%s1 + $0xcd8] sm:$0xff]
    %v443 = vld [vmem:[%s1 + $0xce0] sm:$0xff]
    %v444 = vld [vmem:[%s1 + $0xce8] sm:$0xff]
    %v445 = vld [vmem:[%s1 + $0xcf0] sm:$0xff]
    %v446 = vld [vmem:[%s1 + $0xcf8] sm:$0xff]
    %v447 = vld [vmem:[%s1 + $0xd00] sm:$0xff]
    %v448 = vld [vmem:[%s1 + $0xd08] sm:$0xff]
    %v449 = vld [vmem:[%s1 + $0xd10] sm:$0xff]
    %v450 = vld [vmem:[%s1 + $0xd18] sm:$0xff]
    %v451 = vld [vmem:[%s1 + $0xd20] sm:$0xff]
    %v452 = vld [vmem:[%s1 + $0xd28] sm:$0xff]
    %v453 = vld [vmem:[%s1 + $0xd30] sm:$0xff]
    %v454 = vld [vmem:[%s1 + $0xd38] sm:$0xff]
    %v455 = vld [vmem:[%s1 + $0xd40] sm:$0xff]
    %v456 = vld [vmem:[%s1 + $0xd48] sm:$0xff]
    %v457 = vld [vmem:[%s1 + $0xd50] sm:$0xff]
    %v458 = vld [vmem:[%s1 + $0xd58] sm:$0xff]
    %v459 = vld [vmem:[%s1 + $0xd60] sm:$0xff]
    %v460 = vld [vmem:[%s1 + $0xd68] sm:$0xff]
    %v461 = vld [vmem:[%s1 + $0xd70] sm:$0xff]
    %v462 = vld [vmem:[%s1 + $0xd78] sm:$0xff]
    %v463 = vld [vmem:[%s1 + $0xd80] sm:$0xff]
    %v464 = vld [vmem:[%s1 + $0xd88] sm:$0xff]
    %v465 = vld [vmem:[%s1 + $0xd90] sm:$0xff]
    %v466 = vld [vmem:[%s1 + $0xd98] sm:$0xff]
    %v467 = vld [vmem:[%s1 + $0xda0] sm:$0xff]
    %v468 = vld [vmem:[%s1 + $0xda8] sm:$0xff]
    %v469 = vld [vmem:[%s1 + $0xdb0] sm:$0xff]
    %v470 = vld [vmem:[%s1 + $0xdb8] sm:$0xff]
    %v471 = vld [vmem:[%s1 + $0xdc0] sm:$0xff]
    %v472 = vld [vmem:[%s1 + $0xdc8] sm:$0xff]
    %v473 = vld [vmem:[%s1 + $0xdd0] sm:$0xff]
    %v474 = vld [vmem:[%s1 + $0xdd8] sm:$0xff]
    %v475 = vld [vmem:[%s1 + $0xde0] sm:$0xff]
    %v476 = vld [vmem:[%s1 + $0xde8] sm:$0xff]
    %v477 = vld [vmem:[%s1 + $0xdf0] sm:$0xff]
    %v478 = vld [vmem:[%s1 + $0xdf8] sm:$0xff]
    %v479 = vld [vmem:[%s1 + $0xe00] sm:$0xff]
    %v480 = vld [vmem:[%s1 + $0xe08] sm:$0xff]
    %v481 = vld [vmem:[%s1 + $0xe10] sm:$0xff]
    %v482 = vld [vmem:[%s1 + $0xe18] sm:$0xff]
    %v483 = vld [vmem:[%s1 + $0xe20] sm:$0xff]
    %v484 = vld [vmem:[%s1 + $0xe28] sm:$0xff]
    %v485 = vld [vmem:[%s1 + $0xe30] sm:$0xff]
    %v486 = vld [vmem:[%s1 + $0xe38] sm:$0xff]
    %v487 = vld [vmem:[%s1 + $0xe40] sm:$0xff]
    %v488 = vld [vmem:[%s1 + $0xe48] sm:$0xff]
    %v489 = vld [vmem:[%s1 + $0xe50] sm:$0xff]
    %v490 = vld [vmem:[%s1 + $0xe58] sm:$0xff]
    %v491 = vld [vmem:[%s1 + $0xe60] sm:$0xff]
    %v492 = vld [vmem:[%s1 + $0xe68] sm:$0xff]
    %v493 = vld [vmem:[%s1 + $0xe70] sm:$0xff]
    %v494 = vld [vmem:[%s1 + $0xe78] sm:$0xff]
    %v495 = vld [vmem:[%s1 + $0xe80] sm:$0xff]
    %v496 = vld [vmem:[%s1 + $0xe88] sm:$0xff]
    %v497 = vld [vmem:[%s1 + $0xe90] sm:$0xff]
    %v498 = vld [vmem:[%s1 + $0xe98] sm:$0xff]
    %v499 = vld [vmem:[%s1 + $0xea0] sm:$0xff]
    %v500 = vld [vmem:[%s1 + $0xea8] sm:$0xff]
    %v501 = vld [vmem:[%s1 + $0xeb0] sm:$0xff]
    %v502 = vld [vmem:[%s1 + $0xeb8] sm:$0xff]
    %v503 = vld [vmem:[%s1 + $0xec0] sm:$0xff]
    %v504 = vld [vmem:[%s1 + $0xec8] sm:$0xff]
    %v505 = vld [vmem:[%s1 + $0xed0] sm:$0xff]
    %v506 = vld [vmem:[%s1 + $0xed8] sm:$0xff]
    %v507 = vld [vmem:[%s1 + $0xee0] sm:$0xff]
    %v508 = vld [vmem:[%s1 + $0xee8] sm:$0xff]
    %v509 = vld [vmem:[%s1 + $0xef0] sm:$0xff]
    %v510 = vld [vmem:[%s1 + $0xef8] sm:$0xff]
    %v511 = vld [vmem:[%s1 + $0xf00] sm:$0xff]
    %v512 = vld [vmem:[%s1 + $0xf08] sm:$0xff]
    %v513 = vld [vmem:[%s1 + $0xf10] sm:$0xff]
    %v514 = vld [vmem:[%s1 + $0xf18] sm:$0xff]
    %v515 = vld [vmem:[%s1 + $0xf20] sm:$0xff]
    %v516 = vld [vmem:[%s1 + $0xf28] sm:$0xff]
    %v517 = vld [vmem:[%s1 + $0xf30] sm:$0xff]
    %v518 = vld [vmem:[%s1 + $0xf38] sm:$0xff]
    %v519 = vld [vmem:[%s1 + $0xf40] sm:$0xff]
    %v520 = vld [vmem:[%s1 + $0xf48] sm:$0xff]
    %v521 = vld [vmem:[%s1 + $0xf50] sm:$0xff]
    %v522 = vld [vmem:[%s1 + $0xf58] sm:$0xff]
    %v523 = vld [vmem:[%s1 + $0xf60] sm:$0xff]
    %v524 = vld [vmem:[%s1 + $0xf68] sm:$0xff]
    %v525 = vld [vmem:[%s1 + $0xf70] sm:$0xff]
    %v526 = vld [vmem:[%s1 + $0xf78] sm:$0xff]
    %v527 = vld [vmem:[%s1 + $0xf80] sm:$0xff]
    %v528 = vld [vmem:[%s1 + $0xf88] sm:$0xff]
    %v529 = vld [vmem:[%s1 + $0xf90] sm:$0xff]
    %v530 = vld [vmem:[%s1 + $0xf98] sm:$0xff]
    %v531 = vld [vmem:[%s1 + $0xfa0] sm:$0xff]
    %v532 = vld [vmem:[%s1 + $0xfa8] sm:$0xff]
    %v533 = vld [vmem:[%s1 + $0xfb0] sm:$0xff]
    %v534 = vld [vmem:[%s1 + $0xfb8] sm:$0xff]
    %v535 = vld [vmem:[%s1 + $0xfc0] sm:$0xff]
    %v536 = vld [vmem:[%s1 + $0xfc8] sm:$0xff]
    %v537 = vld [vmem:[%s1 + $0xfd0] sm:$0xff]
    %v538 = vld [vmem:[%s1 + $0xfd8] sm:$0xff]
    %v539 = vld [vmem:[%s1 + $0xfe0] sm:$0xff]
    %v540 = vld [vmem:[%s1 + $0xfe8] sm:$0xff]
    %v541 = vld [vmem:[%s1 + $0xff0] sm:$0xff]
    %v542 = vld [vmem:[%s1 + $0xff8] sm:$0xff]
    %v543 = vld [vmem:[%s1 + $0x1000] sm:$0xff]
    %v544 = vld [vmem:[%s1 + $0x1008] sm:$0xff]
    %v545 = vld [vmem:[%s1 + $0x1010] sm:$0xff]
    %v546 = vld [vmem:[%s1 + $0x1018] sm:$0xff]
    %v547 = vld [vmem:[%s1 + $0x1020] sm:$0xff]
    %v548 = vld [vmem:[%s1 + $0x1028] sm:$0xff]
    %v549 = vld [vmem:[%s1 + $0x1030] sm:$0xff]
    %v550 = vld [vmem:[%s1 + $0x1038] sm:$0xff]
    %v551 = vld [vmem:[%s1 + $0x1040] sm:$0xff]
    %v552 = vld [vmem:[%s1 + $0x1048] sm:$0xff]
    %v553 = vld [vmem:[%s1 + $0x1050] sm:$0xff]
    %v554 = vld [vmem:[%s1 + $0x1058] sm:$0xff]
    %v555 = vld [vmem:[%s1 + $0x1060] sm:$0xff]
    %v556 = vld [vmem:[%s1 + $0x1068] sm:$0xff]
    %v557 = vld [vmem:[%s1 + $0x1070] sm:$0xff]
    %v558 = vld [vmem:[%s1 + $0x1078] sm:$0xff]
    %v559 = vld [vmem:[%s1 + $0x1080] sm:$0xff]
    %v560 = vld [vmem:[%s1 + $0x1088] sm:$0xff]
    %v561 = vld [vmem:[%s1 + $0x1090] sm:$0xff]
    %v562 = vld [vmem:[%s1 + $0x1098] sm:$0xff]
    %v563 = vld [vmem:[%s1 + $0x10a0] sm:$0xff]
    %v564 = vld [vmem:[%s1 + $0x10a8] sm:$0xff]
    %v565 = vld [vmem:[%s1 + $0x10b0] sm:$0xff]
    %v566 = vld [vmem:[%s1 + $0x10b8] sm:$0xff]
    %v567 = vld [vmem:[%s1 + $0x10c0] sm:$0xff]
    %v568 = vld [vmem:[%s1 + $0x10c8] sm:$0xff]
    %v569 = vld [vmem:[%s1 + $0x10d0] sm:$0xff]
    %v570 = vld [vmem:[%s1 + $0x10d8] sm:$0xff]
    %v571 = vld [vmem:[%s1 + $0x10e0] sm:$0xff]
    %v572 = vld [vmem:[%s1 + $0x10e8] sm:$0xff]
    %v573 = vld [vmem:[%s1 + $0x10f0] sm:$0xff]
    %v574 = vld [vmem:[%s1 + $0x10f8] sm:$0xff]
    %v575 = vld [vmem:[%s1 + $0x1100] sm:$0xff]
    %v576 = vld [vmem:[%s1 + $0x1108] sm:$0xff]
    %v577 = vld [vmem:[%s1 + $0x1110] sm:$0xff]
    %v578 = vld [vmem:[%s1 + $0x1118] sm:$0xff]
    %v579 = vld [vmem:[%s1 + $0x1120] sm:$0xff]
    %v580 = vld [vmem:[%s1 + $0x1128] sm:$0xff]
    %v581 = vld [vmem:[%s1 + $0x1130] sm:$0xff]
    %v582 = vld [vmem:[%s1 + $0x1138] sm:$0xff]
    %v583 = vld [vmem:[%s1 + $0x1140] sm:$0xff]
    %v584 = vld [vmem:[%s1 + $0x1148] sm:$0xff]
    %v585 = vld [vmem:[%s1 + $0x1150] sm:$0xff]
    %v586 = vld [vmem:[%s1 + $0x1158] sm:$0xff]
    %v587 = vld [vmem:[%s1 + $0x1160] sm:$0xff]
    %v588 = vld [vmem:[%s1 + $0x1168] sm:$0xff]
    %v589 = vld [vmem:[%s1 + $0x1170] sm:$0xff]
    %v590 = vld [vmem:[%s1 + $0x1178] sm:$0xff]
    %v591 = vld [vmem:[%s1 + $0x1180] sm:$0xff]
    %v592 = vld [vmem:[%s1 + $0x1188] sm:$0xff]
    %v593 = vld [vmem:[%s1 + $0x1190] sm:$0xff]
    %v594 = vld [vmem:[%s1 + $0x1198] sm:$0xff]
    %v595 = vld [vmem:[%s1 + $0x11a0] sm:$0xff]
    %v596 = vld [vmem:[%s1 + $0x11a8] sm:$0xff]
    %v597 = vld [vmem:[%s1 + $0x11b0] sm:$0xff]
    %v598 = vld [vmem:[%s1 + $0x11b8] sm:$0xff]
    %v599 = vld [vmem:[%s1 + $0x11c0] sm:$0xff]
    %v600 = vld [vmem:[%s1 + $0x11c8] sm:$0xff]
    %v601 = vld [vmem:[%s1 + $0x11d0] sm:$0xff]
    %v602 = vld [vmem:[%s1 + $0x11d8] sm:$0xff]
    %v603 = vld [vmem:[%s1 + $0x11e0] sm:$0xff]
    %v604 = vld [vmem:[%s1 + $0x11e8] sm:$0xff]
    %v605 = vld [vmem:[%s1 + $0x11f0] sm:$0xff]
    %v606 = vld [vmem:[%s1 + $0x11f8] sm:$0xff]
    %v607 = vld [vmem:[%s2] sm:$0xf]
    %v609 = vlaneseq
    %v610 = vshrl.u32 %v609, 7
    %v611 = vsub.s32 0, %v610
    %v612 = vrot.slane %v607, %v611
    %v613 = vlaneseq
    %v614 = vshrl.u32 %v613, 7
    %v615 = vsub.s32 1, %v614
    %v616 = vrot.slane %v607, %v615
    %v617 = vlaneseq
    %v618 = vshrl.u32 %v617, 7
    %v619 = vsub.s32 2, %v618
    %v620 = vrot.slane %v607, %v619
    %v621 = vlaneseq
    %v622 = vshrl.u32 %v621, 7
    %v623 = vsub.s32 3, %v622
    %v624 = vrot.slane %v607, %v623
    %v632 = vcombine.high %v28, %v28
    %v634 = vunpack.c.l.s4 1966171168
    %v635 = vunpack.c.0.s8 %v634
    %v636 = vlaneseq
    %v637 = vshrl.u32 %v636, 7
    %v638 = vsub.s32 %v635, %v637
    %v639 = vrot.slane %v28, %v638
    %v641 = vunpack.c.l.s4 1966171168
    %v642 = vunpack.c.0.s8 %v641
    %v643 = vlaneseq
    %v644 = vshrl.u32 %v643, 7
    %v645 = vsub.s32 %v642, %v644
    %v646 = vrot.slane %v632, %v645
    %v647 = vcombine.high %v639, %v639
    %v648 = vcombine.high %v646, %v646
    %v650 = vunpack.c.l.s4 1966171168
    %v651 = vunpack.c.0.s8 %v650
    %v652 = vlaneseq
    %v653 = vshrl.u32 %v652, 7
    %v654 = vsub.s32 %v651, %v653
    %v655 = vrot.slane %v639, %v654
    %v657 = vunpack.c.l.s4 1966171168
    %v658 = vunpack.c.0.s8 %v657
    %v659 = vlaneseq
    %v660 = vshrl.u32 %v659, 7
    %v661 = vsub.s32 %v658, %v660
    %v662 = vrot.slane %v646, %v661
    %v664 = vunpack.c.l.s4 1966171168
    %v665 = vunpack.c.0.s8 %v664
    %v666 = vlaneseq
    %v667 = vshrl.u32 %v666, 7
    %v668 = vsub.s32 %v665, %v667
    %v669 = vrot.slane %v647, %v668
    %v671 = vunpack.c.l.s4 1966171168
    %v672 = vunpack.c.0.s8 %v671
    %v673 = vlaneseq
    %v674 = vshrl.u32 %v673, 7
    %v675 = vsub.s32 %v672, %v674
    %v676 = vrot.slane %v648, %v675
    %v677 = vcombine.high %v655, %v655
    %v678 = vcombine.high %v662, %v662
    %v679 = vcombine.high %v669, %v669
    %v680 = vcombine.high %v676, %v676
    %v681 = vcombine.high %v29, %v29
    %v683 = vunpack.c.l.s4 1966171168
    %v684 = vunpack.c.0.s8 %v683
    %v685 = vlaneseq
    %v686 = vshrl.u32 %v685, 7
    %v687 = vsub.s32 %v684, %v686
    %v688 = vrot.slane %v29, %v687
    %v690 = vunpack.c.l.s4 1966171168
    %v691 = vunpack.c.0.s8 %v690
    %v692 = vlaneseq
    %v693 = vshrl.u32 %v692, 7
    %v694 = vsub.s32 %v691, %v693
    %v695 = vrot.slane %v681, %v694
    %v696 = vcombine.high %v688, %v688
    %v697 = vcombine.high %v695, %v695
    %v699 = vunpack.c.l.s4 1966171168
    %v700 = vunpack.c.0.s8 %v699
    %v701 = vlaneseq
    %v702 = vshrl.u32 %v701, 7
    %v703 = vsub.s32 %v700, %v702
    %v704 = vrot.slane %v688, %v703
    %v706 = vunpack.c.l.s4 1966171168
    %v707 = vunpack.c.0.s8 %v706
    %v708 = vlaneseq
    %v709 = vshrl.u32 %v708, 7
    %v710 = vsub.s32 %v707, %v709
    %v711 = vrot.slane %v695, %v710
    %v713 = vunpack.c.l.s4 1966171168
    %v714 = vunpack.c.0.s8 %v713
    %v715 = vlaneseq
    %v716 = vshrl.u32 %v715, 7
    %v717 = vsub.s32 %v714, %v716
    %v718 = vrot.slane %v696, %v717
    %v720 = vunpack.c.l.s4 1966171168
    %v721 = vunpack.c.0.s8 %v720
    %v722 = vlaneseq
    %v723 = vshrl.u32 %v722, 7
    %v724 = vsub.s32 %v721, %v723
    %v725 = vrot.slane %v697, %v724
    %v726 = vcombine.high %v704, %v704
    %v727 = vcombine.high %v711, %v711
    %v728 = vcombine.high %v718, %v718
    %v729 = vcombine.high %v725, %v725
    %v731 = vunpack.c.l.s4 1966171168
    %v732 = vunpack.c.0.s8 %v731
    %v733 = vlaneseq
    %v734 = vshrl.u32 %v733, 7
    %v735 = vsub.s32 %v732, %v734
    %v736 = vrot.slane %v30, %v735
    %v737 = vcombine.high %v736, %v736
    %v739 = vunpack.c.l.s4 1966171168
    %v740 = vunpack.c.0.s8 %v739
    %v741 = vlaneseq
    %v742 = vshrl.u32 %v741, 7
    %v743 = vsub.s32 %v740, %v742
    %v744 = vrot.slane %v736, %v743
    %v746 = vunpack.c.l.s4 1966171168
    %v747 = vunpack.c.0.s8 %v746
    %v748 = vlaneseq
    %v749 = vshrl.u32 %v748, 7
    %v750 = vsub.s32 %v747, %v749
    %v751 = vrot.slane %v737, %v750
    %v1346 = vunpack.c.l.b16 %v31
    %v1347 = vunpack.c.h.b16 %v31
    %v1348 = vunpack.c.l.b16 %v32
    %v1349 = vunpack.c.h.b16 %v32
    %v1350 = vunpack.c.l.b16 %v33
    %v1351 = vunpack.c.h.b16 %v33
    %v1352 = vunpack.c.l.b16 %v34
    %v1353 = vunpack.c.h.b16 %v34
    %v1354 = vunpack.c.l.b16 %v35
    %v1355 = vunpack.c.h.b16 %v35
    %v1356 = vunpack.c.l.b16 %v36
    %v1357 = vunpack.c.h.b16 %v36
    %v1358 = vunpack.c.l.b16 %v37
    %v1359 = vunpack.c.h.b16 %v37
    %v1360 = vunpack.c.l.b16 %v38
    %v1361 = vunpack.c.h.b16 %v38
    %v1362 = vunpack.c.l.b16 %v39
    %v1363 = vunpack.c.h.b16 %v39
    %v1364 = vunpack.c.l.b16 %v40
    %v1365 = vunpack.c.h.b16 %v40
    %v1366 = vunpack.c.l.b16 %v41
    %v1367 = vunpack.c.h.b16 %v41
    %v1368 = vunpack.c.l.b16 %v42
    %v1369 = vunpack.c.h.b16 %v42
    %v1370 = vunpack.c.l.b16 %v43
    %v1371 = vunpack.c.h.b16 %v43
    %v1372 = vunpack.c.l.b16 %v44
    %v1373 = vunpack.c.h.b16 %v44
    %v1374 = vunpack.c.l.b16 %v45
    %v1375 = vunpack.c.h.b16 %v45
    %v1376 = vunpack.c.l.b16 %v46
    %v1377 = vunpack.c.h.b16 %v46
    %v1378 = vunpack.c.l.b16 %v47
    %v1379 = vunpack.c.h.b16 %v47
    %v1380 = vunpack.c.l.b16 %v48
    %v1381 = vunpack.c.h.b16 %v48
    %v1382 = vunpack.c.l.b16 %v49
    %v1383 = vunpack.c.h.b16 %v49
    %v1384 = vunpack.c.l.b16 %v50
    %v1385 = vunpack.c.h.b16 %v50
    %v1386 = vunpack.c.l.b16 %v51
    %v1387 = vunpack.c.h.b16 %v51
    %v1388 = vunpack.c.l.b16 %v52
    %v1389 = vunpack.c.h.b16 %v52
    %v1390 = vunpack.c.l.b16 %v53
    %v1391 = vunpack.c.h.b16 %v53
    %v1392 = vunpack.c.l.b16 %v54
    %v1393 = vunpack.c.h.b16 %v54
    %v1394 = vunpack.c.l.b16 %v55
    %v1395 = vunpack.c.h.b16 %v55
    %v1396 = vunpack.c.l.b16 %v56
    %v1397 = vunpack.c.h.b16 %v56
    %v1398 = vunpack.c.l.b16 %v57
    %v1399 = vunpack.c.h.b16 %v57
    %v1400 = vunpack.c.l.b16 %v58
    %v1401 = vunpack.c.h.b16 %v58
    %v1402 = vunpack.c.l.b16 %v59
    %v1403 = vunpack.c.h.b16 %v59
    %v1404 = vunpack.c.l.b16 %v60
    %v1405 = vunpack.c.h.b16 %v60
    %v1406 = vunpack.c.l.b16 %v61
    %v1407 = vunpack.c.h.b16 %v61
    %v1408 = vunpack.c.l.b16 %v62
    %v1409 = vunpack.c.h.b16 %v62
    %v1410 = vunpack.c.l.b16 %v63
    %v1411 = vunpack.c.h.b16 %v63
    %v1412 = vunpack.c.l.b16 %v64
    %v1413 = vunpack.c.h.b16 %v64
    %v1414 = vunpack.c.l.b16 %v65
    %v1415 = vunpack.c.h.b16 %v65
    %v1416 = vunpack.c.l.b16 %v66
    %v1417 = vunpack.c.h.b16 %v66
    %v1418 = vunpack.c.l.b16 %v67
    %v1419 = vunpack.c.h.b16 %v67
    %v1420 = vunpack.c.l.b16 %v68
    %v1421 = vunpack.c.h.b16 %v68
    %v1422 = vunpack.c.l.b16 %v69
    %v1423 = vunpack.c.h.b16 %v69
    %v1424 = vunpack.c.l.b16 %v70
    %v1425 = vunpack.c.h.b16 %v70
    %v1426 = vunpack.c.l.b16 %v71
    %v1427 = vunpack.c.h.b16 %v71
    %v1428 = vunpack.c.l.b16 %v72
    %v1429 = vunpack.c.h.b16 %v72
    %v1430 = vunpack.c.l.b16 %v73
    %v1431 = vunpack.c.h.b16 %v73
    %v1432 = vunpack.c.l.b16 %v74
    %v1433 = vunpack.c.h.b16 %v74
    %v1434 = vunpack.c.l.b16 %v75
    %v1435 = vunpack.c.h.b16 %v75
    %v1436 = vunpack.c.l.b16 %v76
    %v1437 = vunpack.c.h.b16 %v76
    %v1438 = vunpack.c.l.b16 %v77
    %v1439 = vunpack.c.h.b16 %v77
    %v1440 = vunpack.c.l.b16 %v78
    %v1441 = vunpack.c.h.b16 %v78
    %v1442 = vunpack.c.l.b16 %v79
    %v1443 = vunpack.c.h.b16 %v79
    %v1444 = vunpack.c.l.b16 %v80
    %v1445 = vunpack.c.h.b16 %v80
    %v1446 = vunpack.c.l.b16 %v81
    %v1447 = vunpack.c.h.b16 %v81
    %v1448 = vunpack.c.l.b16 %v82
    %v1449 = vunpack.c.h.b16 %v82
    %v1450 = vunpack.c.l.b16 %v83
    %v1451 = vunpack.c.h.b16 %v83
    %v1452 = vunpack.c.l.b16 %v84
    %v1453 = vunpack.c.h.b16 %v84
    %v1454 = vunpack.c.l.b16 %v85
    %v1455 = vunpack.c.h.b16 %v85
    %v1456 = vunpack.c.l.b16 %v86
    %v1457 = vunpack.c.h.b16 %v86
    %v1458 = vunpack.c.l.b16 %v87
    %v1459 = vunpack.c.h.b16 %v87
    %v1460 = vunpack.c.l.b16 %v88
    %v1461 = vunpack.c.h.b16 %v88
    %v1462 = vunpack.c.l.b16 %v89
    %v1463 = vunpack.c.h.b16 %v89
    %v1464 = vunpack.c.l.b16 %v90
    %v1465 = vunpack.c.h.b16 %v90
    %v1466 = vunpack.c.l.b16 %v91
    %v1467 = vunpack.c.h.b16 %v91
    %v1468 = vunpack.c.l.b16 %v92
    %v1469 = vunpack.c.h.b16 %v92
    %v1470 = vunpack.c.l.b16 %v93
    %v1471 = vunpack.c.h.b16 %v93
    %v1472 = vunpack.c.l.b16 %v94
    %v1473 = vunpack.c.h.b16 %v94
    %v1474 = vunpack.c.l.b16 %v95
    %v1475 = vunpack.c.h.b16 %v95
    %v1476 = vunpack.c.l.b16 %v96
    %v1477 = vunpack.c.h.b16 %v96
    %v1478 = vunpack.c.l.b16 %v97
    %v1479 = vunpack.c.h.b16 %v97
    %v1480 = vunpack.c.l.b16 %v98
    %v1481 = vunpack.c.h.b16 %v98
    %v1482 = vunpack.c.l.b16 %v99
    %v1483 = vunpack.c.h.b16 %v99
    %v1484 = vunpack.c.l.b16 %v100
    %v1485 = vunpack.c.h.b16 %v100
    %v1486 = vunpack.c.l.b16 %v101
    %v1487 = vunpack.c.h.b16 %v101
    %v1488 = vunpack.c.l.b16 %v102
    %v1489 = vunpack.c.h.b16 %v102
    %v1490 = vunpack.c.l.b16 %v103
    %v1491 = vunpack.c.h.b16 %v103
    %v1492 = vunpack.c.l.b16 %v104
    %v1493 = vunpack.c.h.b16 %v104
    %v1494 = vunpack.c.l.b16 %v105
    %v1495 = vunpack.c.h.b16 %v105
    %v1496 = vunpack.c.l.b16 %v106
    %v1497 = vunpack.c.h.b16 %v106
    %v1498 = vunpack.c.l.b16 %v107
    %v1499 = vunpack.c.h.b16 %v107
    %v1500 = vunpack.c.l.b16 %v108
    %v1501 = vunpack.c.h.b16 %v108
    %v1502 = vunpack.c.l.b16 %v109
    %v1503 = vunpack.c.h.b16 %v109
    %v1504 = vunpack.c.l.b16 %v110
    %v1505 = vunpack.c.h.b16 %v110
    %v1506 = vunpack.c.l.b16 %v111
    %v1507 = vunpack.c.h.b16 %v111
    %v1508 = vunpack.c.l.b16 %v112
    %v1509 = vunpack.c.h.b16 %v112
    %v1510 = vunpack.c.l.b16 %v113
    %v1511 = vunpack.c.h.b16 %v113
    %v1512 = vunpack.c.l.b16 %v114
    %v1513 = vunpack.c.h.b16 %v114
    %v1514 = vunpack.c.l.b16 %v115
    %v1515 = vunpack.c.h.b16 %v115
    %v1516 = vunpack.c.l.b16 %v116
    %v1517 = vunpack.c.h.b16 %v116
    %v1518 = vunpack.c.l.b16 %v117
    %v1519 = vunpack.c.h.b16 %v117
    %v1520 = vunpack.c.l.b16 %v118
    %v1521 = vunpack.c.h.b16 %v118
    %v1522 = vunpack.c.l.b16 %v119
    %v1523 = vunpack.c.h.b16 %v119
    %v1524 = vunpack.c.l.b16 %v120
    %v1525 = vunpack.c.h.b16 %v120
    %v1526 = vunpack.c.l.b16 %v121
    %v1527 = vunpack.c.h.b16 %v121
    %v1528 = vunpack.c.l.b16 %v122
    %v1529 = vunpack.c.h.b16 %v122
    %v1530 = vunpack.c.l.b16 %v123
    %v1531 = vunpack.c.h.b16 %v123
    %v1532 = vunpack.c.l.b16 %v124
    %v1533 = vunpack.c.h.b16 %v124
    %v1534 = vunpack.c.l.b16 %v125
    %v1535 = vunpack.c.h.b16 %v125
    %v1536 = vunpack.c.l.b16 %v126
    %v1537 = vunpack.c.h.b16 %v126
    %v1538 = vunpack.c.l.b16 %v127
    %v1539 = vunpack.c.h.b16 %v127
    %v1540 = vunpack.c.l.b16 %v128
    %v1541 = vunpack.c.h.b16 %v128
    %v1542 = vunpack.c.l.b16 %v129
    %v1543 = vunpack.c.h.b16 %v129
    %v1544 = vunpack.c.l.b16 %v130
    %v1545 = vunpack.c.h.b16 %v130
    %v1546 = vunpack.c.l.b16 %v131
    %v1547 = vunpack.c.h.b16 %v131
    %v1548 = vunpack.c.l.b16 %v132
    %v1549 = vunpack.c.h.b16 %v132
    %v1550 = vunpack.c.l.b16 %v133
    %v1551 = vunpack.c.h.b16 %v133
    %v1552 = vunpack.c.l.b16 %v134
    %v1553 = vunpack.c.h.b16 %v134
    %v1554 = vunpack.c.l.b16 %v135
    %v1555 = vunpack.c.h.b16 %v135
    %v1556 = vunpack.c.l.b16 %v136
    %v1557 = vunpack.c.h.b16 %v136
    %v1558 = vunpack.c.l.b16 %v137
    %v1559 = vunpack.c.h.b16 %v137
    %v1560 = vunpack.c.l.b16 %v138
    %v1561 = vunpack.c.h.b16 %v138
    %v1562 = vunpack.c.l.b16 %v139
    %v1563 = vunpack.c.h.b16 %v139
    %v1564 = vunpack.c.l.b16 %v140
    %v1565 = vunpack.c.h.b16 %v140
    %v1566 = vunpack.c.l.b16 %v141
    %v1567 = vunpack.c.h.b16 %v141
    %v1568 = vunpack.c.l.b16 %v142
    %v1569 = vunpack.c.h.b16 %v142
    %v1570 = vunpack.c.l.b16 %v143
    %v1571 = vunpack.c.h.b16 %v143
    %v1572 = vunpack.c.l.b16 %v144
    %v1573 = vunpack.c.h.b16 %v144
    %v1574 = vunpack.c.l.b16 %v145
    %v1575 = vunpack.c.h.b16 %v145
    %v1576 = vunpack.c.l.b16 %v146
    %v1577 = vunpack.c.h.b16 %v146
    %v1578 = vunpack.c.l.b16 %v147
    %v1579 = vunpack.c.h.b16 %v147
    %v1580 = vunpack.c.l.b16 %v148
    %v1581 = vunpack.c.h.b16 %v148
    %v1582 = vunpack.c.l.b16 %v149
    %v1583 = vunpack.c.h.b16 %v149
    %v1584 = vunpack.c.l.b16 %v150
    %v1585 = vunpack.c.h.b16 %v150
    %v1586 = vunpack.c.l.b16 %v151
    %v1587 = vunpack.c.h.b16 %v151
    %v1588 = vunpack.c.l.b16 %v152
    %v1589 = vunpack.c.h.b16 %v152
    %v1590 = vunpack.c.l.b16 %v153
    %v1591 = vunpack.c.h.b16 %v153
    %v1592 = vunpack.c.l.b16 %v154
    %v1593 = vunpack.c.h.b16 %v154
    %v1594 = vunpack.c.l.b16 %v155
    %v1595 = vunpack.c.h.b16 %v155
    %v1596 = vunpack.c.l.b16 %v156
    %v1597 = vunpack.c.h.b16 %v156
    %v1598 = vunpack.c.l.b16 %v157
    %v1599 = vunpack.c.h.b16 %v157
    %v1600 = vunpack.c.l.b16 %v158
    %v1601 = vunpack.c.h.b16 %v158
    %v1602 = vunpack.c.l.b16 %v159
    %v1603 = vunpack.c.h.b16 %v159
    %v1604 = vunpack.c.l.b16 %v160
    %v1605 = vunpack.c.h.b16 %v160
    %v1606 = vunpack.c.l.b16 %v161
    %v1607 = vunpack.c.h.b16 %v161
    %v1608 = vunpack.c.l.b16 %v162
    %v1609 = vunpack.c.h.b16 %v162
    %v1610 = vunpack.c.l.b16 %v163
    %v1611 = vunpack.c.h.b16 %v163
    %v1612 = vunpack.c.l.b16 %v164
    %v1613 = vunpack.c.h.b16 %v164
    %v1614 = vunpack.c.l.b16 %v165
    %v1615 = vunpack.c.h.b16 %v165
    %v1616 = vunpack.c.l.b16 %v166
    %v1617 = vunpack.c.h.b16 %v166
    %v1618 = vunpack.c.l.b16 %v167
    %v1619 = vunpack.c.h.b16 %v167
    %v1620 = vunpack.c.l.b16 %v168
    %v1621 = vunpack.c.h.b16 %v168
    %v1622 = vunpack.c.l.b16 %v169
    %v1623 = vunpack.c.h.b16 %v169
    %v1624 = vunpack.c.l.b16 %v170
    %v1625 = vunpack.c.h.b16 %v170
    %v1626 = vunpack.c.l.b16 %v171
    %v1627 = vunpack.c.h.b16 %v171
    %v1628 = vunpack.c.l.b16 %v172
    %v1629 = vunpack.c.h.b16 %v172
    %v1630 = vunpack.c.l.b16 %v173
    %v1631 = vunpack.c.h.b16 %v173
    %v1632 = vunpack.c.l.b16 %v174
    %v1633 = vunpack.c.h.b16 %v174
    %v1634 = vunpack.c.l.b16 %v175
    %v1635 = vunpack.c.h.b16 %v175
    %v1636 = vunpack.c.l.b16 %v176
    %v1637 = vunpack.c.h.b16 %v176
    %v1638 = vunpack.c.l.b16 %v177
    %v1639 = vunpack.c.h.b16 %v177
    %v1640 = vunpack.c.l.b16 %v178
    %v1641 = vunpack.c.h.b16 %v178
    %v1642 = vunpack.c.l.b16 %v179
    %v1643 = vunpack.c.h.b16 %v179
    %v1644 = vunpack.c.l.b16 %v180
    %v1645 = vunpack.c.h.b16 %v180
    %v1646 = vunpack.c.l.b16 %v181
    %v1647 = vunpack.c.h.b16 %v181
    %v1648 = vunpack.c.l.b16 %v182
    %v1649 = vunpack.c.h.b16 %v182
    %v1650 = vunpack.c.l.b16 %v183
    %v1651 = vunpack.c.h.b16 %v183
    %v1652 = vunpack.c.l.b16 %v184
    %v1653 = vunpack.c.h.b16 %v184
    %v1654 = vunpack.c.l.b16 %v185
    %v1655 = vunpack.c.h.b16 %v185
    %v1656 = vunpack.c.l.b16 %v186
    %v1657 = vunpack.c.h.b16 %v186
    %v1658 = vunpack.c.l.b16 %v187
    %v1659 = vunpack.c.h.b16 %v187
    %v1660 = vunpack.c.l.b16 %v188
    %v1661 = vunpack.c.h.b16 %v188
    %v1662 = vunpack.c.l.b16 %v189
    %v1663 = vunpack.c.h.b16 %v189
    %v1664 = vunpack.c.l.b16 %v190
    %v1665 = vunpack.c.h.b16 %v190
    %v1666 = vunpack.c.l.b16 %v191
    %v1667 = vunpack.c.h.b16 %v191
    %v1668 = vunpack.c.l.b16 %v192
    %v1669 = vunpack.c.h.b16 %v192
    %v1670 = vunpack.c.l.b16 %v193
    %v1671 = vunpack.c.h.b16 %v193
    %v1672 = vunpack.c.l.b16 %v194
    %v1673 = vunpack.c.h.b16 %v194
    %v1674 = vunpack.c.l.b16 %v195
    %v1675 = vunpack.c.h.b16 %v195
    %v1676 = vunpack.c.l.b16 %v196
    %v1677 = vunpack.c.h.b16 %v196
    %v1678 = vunpack.c.l.b16 %v197
    %v1679 = vunpack.c.h.b16 %v197
    %v1680 = vunpack.c.l.b16 %v198
    %v1681 = vunpack.c.h.b16 %v198
    %v1682 = vunpack.c.l.b16 %v199
    %v1683 = vunpack.c.h.b16 %v199
    %v1684 = vunpack.c.l.b16 %v200
    %v1685 = vunpack.c.h.b16 %v200
    %v1686 = vunpack.c.l.b16 %v201
    %v1687 = vunpack.c.h.b16 %v201
    %v1688 = vunpack.c.l.b16 %v202
    %v1689 = vunpack.c.h.b16 %v202
    %v1690 = vunpack.c.l.b16 %v203
    %v1691 = vunpack.c.h.b16 %v203
    %v1692 = vunpack.c.l.b16 %v204
    %v1693 = vunpack.c.h.b16 %v204
    %v1694 = vunpack.c.l.b16 %v205
    %v1695 = vunpack.c.h.b16 %v205
    %v1696 = vunpack.c.l.b16 %v206
    %v1697 = vunpack.c.h.b16 %v206
    %v1698 = vunpack.c.l.b16 %v207
    %v1699 = vunpack.c.h.b16 %v207
    %v1700 = vunpack.c.l.b16 %v208
    %v1701 = vunpack.c.h.b16 %v208
    %v1702 = vunpack.c.l.b16 %v209
    %v1703 = vunpack.c.h.b16 %v209
    %v1704 = vunpack.c.l.b16 %v210
    %v1705 = vunpack.c.h.b16 %v210
    %v1706 = vunpack.c.l.b16 %v211
    %v1707 = vunpack.c.h.b16 %v211
    %v1708 = vunpack.c.l.b16 %v212
    %v1709 = vunpack.c.h.b16 %v212
    %v1710 = vunpack.c.l.b16 %v213
    %v1711 = vunpack.c.h.b16 %v213
    %v1712 = vunpack.c.l.b16 %v214
    %v1713 = vunpack.c.h.b16 %v214
    %v1714 = vunpack.c.l.b16 %v215
    %v1715 = vunpack.c.h.b16 %v215
    %v1716 = vunpack.c.l.b16 %v216
    %v1717 = vunpack.c.h.b16 %v216
    %v1718 = vunpack.c.l.b16 %v217
    %v1719 = vunpack.c.h.b16 %v217
    %v1720 = vunpack.c.l.b16 %v218
    %v1721 = vunpack.c.h.b16 %v218
    %v1722 = vunpack.c.l.b16 %v219
    %v1723 = vunpack.c.h.b16 %v219
    %v1724 = vunpack.c.l.b16 %v220
    %v1725 = vunpack.c.h.b16 %v220
    %v1726 = vunpack.c.l.b16 %v221
    %v1727 = vunpack.c.h.b16 %v221
    %v1728 = vunpack.c.l.b16 %v222
    %v1729 = vunpack.c.h.b16 %v222
    %v1730 = vunpack.c.l.b16 %v223
    %v1731 = vunpack.c.h.b16 %v223
    %v1732 = vunpack.c.l.b16 %v224
    %v1733 = vunpack.c.h.b16 %v224
    %v1734 = vunpack.c.l.b16 %v225
    %v1735 = vunpack.c.h.b16 %v225
    %v1736 = vunpack.c.l.b16 %v226
    %v1737 = vunpack.c.h.b16 %v226
    %v1738 = vunpack.c.l.b16 %v227
    %v1739 = vunpack.c.h.b16 %v227
    %v1740 = vunpack.c.l.b16 %v228
    %v1741 = vunpack.c.h.b16 %v228
    %v1742 = vunpack.c.l.b16 %v229
    %v1743 = vunpack.c.h.b16 %v229
    %v1744 = vunpack.c.l.b16 %v230
    %v1745 = vunpack.c.h.b16 %v230
    %v1746 = vunpack.c.l.b16 %v231
    %v1747 = vunpack.c.h.b16 %v231
    %v1748 = vunpack.c.l.b16 %v232
    %v1749 = vunpack.c.h.b16 %v232
    %v1750 = vunpack.c.l.b16 %v233
    %v1751 = vunpack.c.h.b16 %v233
    %v1752 = vunpack.c.l.b16 %v234
    %v1753 = vunpack.c.h.b16 %v234
    %v1754 = vunpack.c.l.b16 %v235
    %v1755 = vunpack.c.h.b16 %v235
    %v1756 = vunpack.c.l.b16 %v236
    %v1757 = vunpack.c.h.b16 %v236
    %v1758 = vunpack.c.l.b16 %v237
    %v1759 = vunpack.c.h.b16 %v237
    %v1760 = vunpack.c.l.b16 %v238
    %v1761 = vunpack.c.h.b16 %v238
    %v1762 = vunpack.c.l.b16 %v239
    %v1763 = vunpack.c.h.b16 %v239
    %v1764 = vunpack.c.l.b16 %v240
    %v1765 = vunpack.c.h.b16 %v240
    %v1766 = vunpack.c.l.b16 %v241
    %v1767 = vunpack.c.h.b16 %v241
    %v1768 = vunpack.c.l.b16 %v242
    %v1769 = vunpack.c.h.b16 %v242
    %v1770 = vunpack.c.l.b16 %v243
    %v1771 = vunpack.c.h.b16 %v243
    %v1772 = vunpack.c.l.b16 %v244
    %v1773 = vunpack.c.h.b16 %v244
    %v1774 = vunpack.c.l.b16 %v245
    %v1775 = vunpack.c.h.b16 %v245
    %v1776 = vunpack.c.l.b16 %v246
    %v1777 = vunpack.c.h.b16 %v246
    %v1778 = vunpack.c.l.b16 %v247
    %v1779 = vunpack.c.h.b16 %v247
    %v1780 = vunpack.c.l.b16 %v248
    %v1781 = vunpack.c.h.b16 %v248
    %v1782 = vunpack.c.l.b16 %v249
    %v1783 = vunpack.c.h.b16 %v249
    %v1784 = vunpack.c.l.b16 %v250
    %v1785 = vunpack.c.h.b16 %v250
    %v1786 = vunpack.c.l.b16 %v251
    %v1787 = vunpack.c.h.b16 %v251
    %v1788 = vunpack.c.l.b16 %v252
    %v1789 = vunpack.c.h.b16 %v252
    %v1790 = vunpack.c.l.b16 %v253
    %v1791 = vunpack.c.h.b16 %v253
    %v1792 = vunpack.c.l.b16 %v254
    %v1793 = vunpack.c.h.b16 %v254
    %v1794 = vunpack.c.l.b16 %v255
    %v1795 = vunpack.c.h.b16 %v255
    %v1796 = vunpack.c.l.b16 %v256
    %v1797 = vunpack.c.h.b16 %v256
    %v1798 = vunpack.c.l.b16 %v257
    %v1799 = vunpack.c.h.b16 %v257
    %v1800 = vunpack.c.l.b16 %v258
    %v1801 = vunpack.c.h.b16 %v258
    %v1802 = vunpack.c.l.b16 %v259
    %v1803 = vunpack.c.h.b16 %v259
    %v1804 = vunpack.c.l.b16 %v260
    %v1805 = vunpack.c.h.b16 %v260
    %v1806 = vunpack.c.l.b16 %v261
    %v1807 = vunpack.c.h.b16 %v261
    %v1808 = vunpack.c.l.b16 %v262
    %v1809 = vunpack.c.h.b16 %v262
    %v1810 = vunpack.c.l.b16 %v263
    %v1811 = vunpack.c.h.b16 %v263
    %v1812 = vunpack.c.l.b16 %v264
    %v1813 = vunpack.c.h.b16 %v264
    %v1814 = vunpack.c.l.b16 %v265
    %v1815 = vunpack.c.h.b16 %v265
    %v1816 = vunpack.c.l.b16 %v266
    %v1817 = vunpack.c.h.b16 %v266
    %v1818 = vunpack.c.l.b16 %v267
    %v1819 = vunpack.c.h.b16 %v267
    %v1820 = vunpack.c.l.b16 %v268
    %v1821 = vunpack.c.h.b16 %v268
    %v1822 = vunpack.c.l.b16 %v269
    %v1823 = vunpack.c.h.b16 %v269
    %v1824 = vunpack.c.l.b16 %v270
    %v1825 = vunpack.c.h.b16 %v270
    %v1826 = vunpack.c.l.b16 %v271
    %v1827 = vunpack.c.h.b16 %v271
    %v1828 = vunpack.c.l.b16 %v272
    %v1829 = vunpack.c.h.b16 %v272
    %v1830 = vunpack.c.l.b16 %v273
    %v1831 = vunpack.c.h.b16 %v273
    %v1832 = vunpack.c.l.b16 %v274
    %v1833 = vunpack.c.h.b16 %v274
    %v1834 = vunpack.c.l.b16 %v275
    %v1835 = vunpack.c.h.b16 %v275
    %v1836 = vunpack.c.l.b16 %v276
    %v1837 = vunpack.c.h.b16 %v276
    %v1838 = vunpack.c.l.b16 %v277
    %v1839 = vunpack.c.h.b16 %v277
    %v1840 = vunpack.c.l.b16 %v278
    %v1841 = vunpack.c.h.b16 %v278
    %v1842 = vunpack.c.l.b16 %v279
    %v1843 = vunpack.c.h.b16 %v279
    %v1844 = vunpack.c.l.b16 %v280
    %v1845 = vunpack.c.h.b16 %v280
    %v1846 = vunpack.c.l.b16 %v281
    %v1847 = vunpack.c.h.b16 %v281
    %v1848 = vunpack.c.l.b16 %v282
    %v1849 = vunpack.c.h.b16 %v282
    %v1850 = vunpack.c.l.b16 %v283
    %v1851 = vunpack.c.h.b16 %v283
    %v1852 = vunpack.c.l.b16 %v284
    %v1853 = vunpack.c.h.b16 %v284
    %v1854 = vunpack.c.l.b16 %v285
    %v1855 = vunpack.c.h.b16 %v285
    %v1856 = vunpack.c.l.b16 %v286
    %v1857 = vunpack.c.h.b16 %v286
    %v1858 = vunpack.c.l.b16 %v287
    %v1859 = vunpack.c.h.b16 %v287
    %v1860 = vunpack.c.l.b16 %v288
    %v1861 = vunpack.c.h.b16 %v288
    %v1862 = vunpack.c.l.b16 %v289
    %v1863 = vunpack.c.h.b16 %v289
    %v1864 = vunpack.c.l.b16 %v290
    %v1865 = vunpack.c.h.b16 %v290
    %v1866 = vunpack.c.l.b16 %v291
    %v1867 = vunpack.c.h.b16 %v291
    %v1868 = vunpack.c.l.b16 %v292
    %v1869 = vunpack.c.h.b16 %v292
    %v1870 = vunpack.c.l.b16 %v293
    %v1871 = vunpack.c.h.b16 %v293
    %v1872 = vunpack.c.l.b16 %v294
    %v1873 = vunpack.c.h.b16 %v294
    %v1874 = vunpack.c.l.b16 %v295
    %v1875 = vunpack.c.h.b16 %v295
    %v1876 = vunpack.c.l.b16 %v296
    %v1877 = vunpack.c.h.b16 %v296
    %v1878 = vunpack.c.l.b16 %v297
    %v1879 = vunpack.c.h.b16 %v297
    %v1880 = vunpack.c.l.b16 %v298
    %v1881 = vunpack.c.h.b16 %v298
    %v1882 = vunpack.c.l.b16 %v299
    %v1883 = vunpack.c.h.b16 %v299
    %v1884 = vunpack.c.l.b16 %v300
    %v1885 = vunpack.c.h.b16 %v300
    %v1886 = vunpack.c.l.b16 %v301
    %v1887 = vunpack.c.h.b16 %v301
    %v1888 = vunpack.c.l.b16 %v302
    %v1889 = vunpack.c.h.b16 %v302
    %v1890 = vunpack.c.l.b16 %v303
    %v1891 = vunpack.c.h.b16 %v303
    %v1892 = vunpack.c.l.b16 %v304
    %v1893 = vunpack.c.h.b16 %v304
    %v1894 = vunpack.c.l.b16 %v305
    %v1895 = vunpack.c.h.b16 %v305
    %v1896 = vunpack.c.l.b16 %v306
    %v1897 = vunpack.c.h.b16 %v306
    %v1898 = vunpack.c.l.b16 %v307
    %v1899 = vunpack.c.h.b16 %v307
    %v1900 = vunpack.c.l.b16 %v308
    %v1901 = vunpack.c.h.b16 %v308
    %v1902 = vunpack.c.l.b16 %v309
    %v1903 = vunpack.c.h.b16 %v309
    %v1904 = vunpack.c.l.b16 %v310
    %v1905 = vunpack.c.h.b16 %v310
    %v1906 = vunpack.c.l.b16 %v311
    %v1907 = vunpack.c.h.b16 %v311
    %v1908 = vunpack.c.l.b16 %v312
    %v1909 = vunpack.c.h.b16 %v312
    %v1910 = vunpack.c.l.b16 %v313
    %v1911 = vunpack.c.h.b16 %v313
    %v1912 = vunpack.c.l.b16 %v314
    %v1913 = vunpack.c.h.b16 %v314
    %v1914 = vunpack.c.l.b16 %v315
    %v1915 = vunpack.c.h.b16 %v315
    %v1916 = vunpack.c.l.b16 %v316
    %v1917 = vunpack.c.h.b16 %v316
    %v1918 = vunpack.c.l.b16 %v317
    %v1919 = vunpack.c.h.b16 %v317
    %v1920 = vunpack.c.l.b16 %v318
    %v1921 = vunpack.c.h.b16 %v318
    %v1922 = vunpack.c.l.b16 %v319
    %v1923 = vunpack.c.h.b16 %v319
    %v1924 = vunpack.c.l.b16 %v320
    %v1925 = vunpack.c.h.b16 %v320
    %v1926 = vunpack.c.l.b16 %v321
    %v1927 = vunpack.c.h.b16 %v321
    %v1928 = vunpack.c.l.b16 %v322
    %v1929 = vunpack.c.h.b16 %v322
    %v1930 = vunpack.c.l.b16 %v323
    %v1931 = vunpack.c.h.b16 %v323
    %v1932 = vunpack.c.l.b16 %v324
    %v1933 = vunpack.c.h.b16 %v324
    %v1934 = vunpack.c.l.b16 %v325
    %v1935 = vunpack.c.h.b16 %v325
    %v1936 = vunpack.c.l.b16 %v326
    %v1937 = vunpack.c.h.b16 %v326
    %v1938 = vunpack.c.l.b16 %v327
    %v1939 = vunpack.c.h.b16 %v327
    %v1940 = vunpack.c.l.b16 %v328
    %v1941 = vunpack.c.h.b16 %v328
    %v1942 = vunpack.c.l.b16 %v329
    %v1943 = vunpack.c.h.b16 %v329
    %v1944 = vunpack.c.l.b16 %v330
    %v1945 = vunpack.c.h.b16 %v330
    %v1946 = vunpack.c.l.b16 %v331
    %v1947 = vunpack.c.h.b16 %v331
    %v1948 = vunpack.c.l.b16 %v332
    %v1949 = vunpack.c.h.b16 %v332
    %v1950 = vunpack.c.l.b16 %v333
    %v1951 = vunpack.c.h.b16 %v333
    %v1952 = vunpack.c.l.b16 %v334
    %v1953 = vunpack.c.h.b16 %v334
    %v1954 = vunpack.c.l.b16 %v335
    %v1955 = vunpack.c.h.b16 %v335
    %v1956 = vunpack.c.l.b16 %v336
    %v1957 = vunpack.c.h.b16 %v336
    %v1958 = vunpack.c.l.b16 %v337
    %v1959 = vunpack.c.h.b16 %v337
    %v1960 = vunpack.c.l.b16 %v338
    %v1961 = vunpack.c.h.b16 %v338
    %v1962 = vunpack.c.l.b16 %v339
    %v1963 = vunpack.c.h.b16 %v339
    %v1964 = vunpack.c.l.b16 %v340
    %v1965 = vunpack.c.h.b16 %v340
    %v1966 = vunpack.c.l.b16 %v341
    %v1967 = vunpack.c.h.b16 %v341
    %v1968 = vunpack.c.l.b16 %v342
    %v1969 = vunpack.c.h.b16 %v342
    %v1970 = vunpack.c.l.b16 %v343
    %v1971 = vunpack.c.h.b16 %v343
    %v1972 = vunpack.c.l.b16 %v344
    %v1973 = vunpack.c.h.b16 %v344
    %v1974 = vunpack.c.l.b16 %v345
    %v1975 = vunpack.c.h.b16 %v345
    %v1976 = vunpack.c.l.b16 %v346
    %v1977 = vunpack.c.h.b16 %v346
    %v1978 = vunpack.c.l.b16 %v347
    %v1979 = vunpack.c.h.b16 %v347
    %v1980 = vunpack.c.l.b16 %v348
    %v1981 = vunpack.c.h.b16 %v348
    %v1982 = vunpack.c.l.b16 %v349
    %v1983 = vunpack.c.h.b16 %v349
    %v1984 = vunpack.c.l.b16 %v350
    %v1985 = vunpack.c.h.b16 %v350
    %v1986 = vunpack.c.l.b16 %v351
    %v1987 = vunpack.c.h.b16 %v351
    %v1988 = vunpack.c.l.b16 %v352
    %v1989 = vunpack.c.h.b16 %v352
    %v1990 = vunpack.c.l.b16 %v353
    %v1991 = vunpack.c.h.b16 %v353
    %v1992 = vunpack.c.l.b16 %v354
    %v1993 = vunpack.c.h.b16 %v354
    %v1994 = vunpack.c.l.b16 %v355
    %v1995 = vunpack.c.h.b16 %v355
    %v1996 = vunpack.c.l.b16 %v356
    %v1997 = vunpack.c.h.b16 %v356
    %v1998 = vunpack.c.l.b16 %v357
    %v1999 = vunpack.c.h.b16 %v357
    %v2000 = vunpack.c.l.b16 %v358
    %v2001 = vunpack.c.h.b16 %v358
    %v2002 = vunpack.c.l.b16 %v359
    %v2003 = vunpack.c.h.b16 %v359
    %v2004 = vunpack.c.l.b16 %v360
    %v2005 = vunpack.c.h.b16 %v360
    %v2006 = vunpack.c.l.b16 %v361
    %v2007 = vunpack.c.h.b16 %v361
    %v2008 = vunpack.c.l.b16 %v362
    %v2009 = vunpack.c.h.b16 %v362
    %v2010 = vunpack.c.l.b16 %v363
    %v2011 = vunpack.c.h.b16 %v363
    %v2012 = vunpack.c.l.b16 %v364
    %v2013 = vunpack.c.h.b16 %v364
    %v2014 = vunpack.c.l.b16 %v365
    %v2015 = vunpack.c.h.b16 %v365
    %v2016 = vunpack.c.l.b16 %v366
    %v2017 = vunpack.c.h.b16 %v366
    %v2018 = vunpack.c.l.b16 %v367
    %v2019 = vunpack.c.h.b16 %v367
    %v2020 = vunpack.c.l.b16 %v368
    %v2021 = vunpack.c.h.b16 %v368
    %v2022 = vunpack.c.l.b16 %v369
    %v2023 = vunpack.c.h.b16 %v369
    %v2024 = vunpack.c.l.b16 %v370
    %v2025 = vunpack.c.h.b16 %v370
    %v2026 = vunpack.c.l.b16 %v371
    %v2027 = vunpack.c.h.b16 %v371
    %v2028 = vunpack.c.l.b16 %v372
    %v2029 = vunpack.c.h.b16 %v372
    %v2030 = vunpack.c.l.b16 %v373
    %v2031 = vunpack.c.h.b16 %v373
    %v2032 = vunpack.c.l.b16 %v374
    %v2033 = vunpack.c.h.b16 %v374
    %v2034 = vunpack.c.l.b16 %v375
    %v2035 = vunpack.c.h.b16 %v375
    %v2036 = vunpack.c.l.b16 %v376
    %v2037 = vunpack.c.h.b16 %v376
    %v2038 = vunpack.c.l.b16 %v377
    %v2039 = vunpack.c.h.b16 %v377
    %v2040 = vunpack.c.l.b16 %v378
    %v2041 = vunpack.c.h.b16 %v378
    %v2042 = vunpack.c.l.b16 %v379
    %v2043 = vunpack.c.h.b16 %v379
    %v2044 = vunpack.c.l.b16 %v380
    %v2045 = vunpack.c.h.b16 %v380
    %v2046 = vunpack.c.l.b16 %v381
    %v2047 = vunpack.c.h.b16 %v381
    %v2048 = vunpack.c.l.b16 %v382
    %v2049 = vunpack.c.h.b16 %v382
    %v2050 = vunpack.c.l.b16 %v383
    %v2051 = vunpack.c.h.b16 %v383
    %v2052 = vunpack.c.l.b16 %v384
    %v2053 = vunpack.c.h.b16 %v384
    %v2054 = vunpack.c.l.b16 %v385
    %v2055 = vunpack.c.h.b16 %v385
    %v2056 = vunpack.c.l.b16 %v386
    %v2057 = vunpack.c.h.b16 %v386
    %v2058 = vunpack.c.l.b16 %v387
    %v2059 = vunpack.c.h.b16 %v387
    %v2060 = vunpack.c.l.b16 %v388
    %v2061 = vunpack.c.h.b16 %v388
    %v2062 = vunpack.c.l.b16 %v389
    %v2063 = vunpack.c.h.b16 %v389
    %v2064 = vunpack.c.l.b16 %v390
    %v2065 = vunpack.c.h.b16 %v390
    %v2066 = vunpack.c.l.b16 %v391
    %v2067 = vunpack.c.h.b16 %v391
    %v2068 = vunpack.c.l.b16 %v392
    %v2069 = vunpack.c.h.b16 %v392
    %v2070 = vunpack.c.l.b16 %v393
    %v2071 = vunpack.c.h.b16 %v393
    %v2072 = vunpack.c.l.b16 %v394
    %v2073 = vunpack.c.h.b16 %v394
    %v2074 = vunpack.c.l.b16 %v395
    %v2075 = vunpack.c.h.b16 %v395
    %v2076 = vunpack.c.l.b16 %v396
    %v2077 = vunpack.c.h.b16 %v396
    %v2078 = vunpack.c.l.b16 %v397
    %v2079 = vunpack.c.h.b16 %v397
    %v2080 = vunpack.c.l.b16 %v398
    %v2081 = vunpack.c.h.b16 %v398
    %v2082 = vunpack.c.l.b16 %v399
    %v2083 = vunpack.c.h.b16 %v399
    %v2084 = vunpack.c.l.b16 %v400
    %v2085 = vunpack.c.h.b16 %v400
    %v2086 = vunpack.c.l.b16 %v401
    %v2087 = vunpack.c.h.b16 %v401
    %v2088 = vunpack.c.l.b16 %v402
    %v2089 = vunpack.c.h.b16 %v402
    %v2090 = vunpack.c.l.b16 %v403
    %v2091 = vunpack.c.h.b16 %v403
    %v2092 = vunpack.c.l.b16 %v404
    %v2093 = vunpack.c.h.b16 %v404
    %v2094 = vunpack.c.l.b16 %v405
    %v2095 = vunpack.c.h.b16 %v405
    %v2096 = vunpack.c.l.b16 %v406
    %v2097 = vunpack.c.h.b16 %v406
    %v2098 = vunpack.c.l.b16 %v407
    %v2099 = vunpack.c.h.b16 %v407
    %v2100 = vunpack.c.l.b16 %v408
    %v2101 = vunpack.c.h.b16 %v408
    %v2102 = vunpack.c.l.b16 %v409
    %v2103 = vunpack.c.h.b16 %v409
    %v2104 = vunpack.c.l.b16 %v410
    %v2105 = vunpack.c.h.b16 %v410
    %v2106 = vunpack.c.l.b16 %v411
    %v2107 = vunpack.c.h.b16 %v411
    %v2108 = vunpack.c.l.b16 %v412
    %v2109 = vunpack.c.h.b16 %v412
    %v2110 = vunpack.c.l.b16 %v413
    %v2111 = vunpack.c.h.b16 %v413
    %v2112 = vunpack.c.l.b16 %v414
    %v2113 = vunpack.c.h.b16 %v414
    %v2114 = vunpack.c.l.b16 %v415
    %v2115 = vunpack.c.h.b16 %v415
    %v2116 = vunpack.c.l.b16 %v416
    %v2117 = vunpack.c.h.b16 %v416
    %v2118 = vunpack.c.l.b16 %v417
    %v2119 = vunpack.c.h.b16 %v417
    %v2120 = vunpack.c.l.b16 %v418
    %v2121 = vunpack.c.h.b16 %v418
    %v2122 = vunpack.c.l.b16 %v419
    %v2123 = vunpack.c.h.b16 %v419
    %v2124 = vunpack.c.l.b16 %v420
    %v2125 = vunpack.c.h.b16 %v420
    %v2126 = vunpack.c.l.b16 %v421
    %v2127 = vunpack.c.h.b16 %v421
    %v2128 = vunpack.c.l.b16 %v422
    %v2129 = vunpack.c.h.b16 %v422
    %v2130 = vunpack.c.l.b16 %v423
    %v2131 = vunpack.c.h.b16 %v423
    %v2132 = vunpack.c.l.b16 %v424
    %v2133 = vunpack.c.h.b16 %v424
    %v2134 = vunpack.c.l.b16 %v425
    %v2135 = vunpack.c.h.b16 %v425
    %v2136 = vunpack.c.l.b16 %v426
    %v2137 = vunpack.c.h.b16 %v426
    %v2138 = vunpack.c.l.b16 %v427
    %v2139 = vunpack.c.h.b16 %v427
    %v2140 = vunpack.c.l.b16 %v428
    %v2141 = vunpack.c.h.b16 %v428
    %v2142 = vunpack.c.l.b16 %v429
    %v2143 = vunpack.c.h.b16 %v429
    %v2144 = vunpack.c.l.b16 %v430
    %v2145 = vunpack.c.h.b16 %v430
    %v2146 = vunpack.c.l.b16 %v431
    %v2147 = vunpack.c.h.b16 %v431
    %v2148 = vunpack.c.l.b16 %v432
    %v2149 = vunpack.c.h.b16 %v432
    %v2150 = vunpack.c.l.b16 %v433
    %v2151 = vunpack.c.h.b16 %v433
    %v2152 = vunpack.c.l.b16 %v434
    %v2153 = vunpack.c.h.b16 %v434
    %v2154 = vunpack.c.l.b16 %v435
    %v2155 = vunpack.c.h.b16 %v435
    %v2156 = vunpack.c.l.b16 %v436
    %v2157 = vunpack.c.h.b16 %v436
    %v2158 = vunpack.c.l.b16 %v437
    %v2159 = vunpack.c.h.b16 %v437
    %v2160 = vunpack.c.l.b16 %v438
    %v2161 = vunpack.c.h.b16 %v438
    %v2162 = vunpack.c.l.b16 %v439
    %v2163 = vunpack.c.h.b16 %v439
    %v2164 = vunpack.c.l.b16 %v440
    %v2165 = vunpack.c.h.b16 %v440
    %v2166 = vunpack.c.l.b16 %v441
    %v2167 = vunpack.c.h.b16 %v441
    %v2168 = vunpack.c.l.b16 %v442
    %v2169 = vunpack.c.h.b16 %v442
    %v2170 = vunpack.c.l.b16 %v443
    %v2171 = vunpack.c.h.b16 %v443
    %v2172 = vunpack.c.l.b16 %v444
    %v2173 = vunpack.c.h.b16 %v444
    %v2174 = vunpack.c.l.b16 %v445
    %v2175 = vunpack.c.h.b16 %v445
    %v2176 = vunpack.c.l.b16 %v446
    %v2177 = vunpack.c.h.b16 %v446
    %v2178 = vunpack.c.l.b16 %v447
    %v2179 = vunpack.c.h.b16 %v447
    %v2180 = vunpack.c.l.b16 %v448
    %v2181 = vunpack.c.h.b16 %v448
    %v2182 = vunpack.c.l.b16 %v449
    %v2183 = vunpack.c.h.b16 %v449
    %v2184 = vunpack.c.l.b16 %v450
    %v2185 = vunpack.c.h.b16 %v450
    %v2186 = vunpack.c.l.b16 %v451
    %v2187 = vunpack.c.h.b16 %v451
    %v2188 = vunpack.c.l.b16 %v452
    %v2189 = vunpack.c.h.b16 %v452
    %v2190 = vunpack.c.l.b16 %v453
    %v2191 = vunpack.c.h.b16 %v453
    %v2192 = vunpack.c.l.b16 %v454
    %v2193 = vunpack.c.h.b16 %v454
    %v2194 = vunpack.c.l.b16 %v455
    %v2195 = vunpack.c.h.b16 %v455
    %v2196 = vunpack.c.l.b16 %v456
    %v2197 = vunpack.c.h.b16 %v456
    %v2198 = vunpack.c.l.b16 %v457
    %v2199 = vunpack.c.h.b16 %v457
    %v2200 = vunpack.c.l.b16 %v458
    %v2201 = vunpack.c.h.b16 %v458
    %v2202 = vunpack.c.l.b16 %v459
    %v2203 = vunpack.c.h.b16 %v459
    %v2204 = vunpack.c.l.b16 %v460
    %v2205 = vunpack.c.h.b16 %v460
    %v2206 = vunpack.c.l.b16 %v461
    %v2207 = vunpack.c.h.b16 %v461
    %v2208 = vunpack.c.l.b16 %v462
    %v2209 = vunpack.c.h.b16 %v462
    %v2210 = vunpack.c.l.b16 %v463
    %v2211 = vunpack.c.h.b16 %v463
    %v2212 = vunpack.c.l.b16 %v464
    %v2213 = vunpack.c.h.b16 %v464
    %v2214 = vunpack.c.l.b16 %v465
    %v2215 = vunpack.c.h.b16 %v465
    %v2216 = vunpack.c.l.b16 %v466
    %v2217 = vunpack.c.h.b16 %v466
    %v2218 = vunpack.c.l.b16 %v467
    %v2219 = vunpack.c.h.b16 %v467
    %v2220 = vunpack.c.l.b16 %v468
    %v2221 = vunpack.c.h.b16 %v468
    %v2222 = vunpack.c.l.b16 %v469
    %v2223 = vunpack.c.h.b16 %v469
    %v2224 = vunpack.c.l.b16 %v470
    %v2225 = vunpack.c.h.b16 %v470
    %v2226 = vunpack.c.l.b16 %v471
    %v2227 = vunpack.c.h.b16 %v471
    %v2228 = vunpack.c.l.b16 %v472
    %v2229 = vunpack.c.h.b16 %v472
    %v2230 = vunpack.c.l.b16 %v473
    %v2231 = vunpack.c.h.b16 %v473
    %v2232 = vunpack.c.l.b16 %v474
    %v2233 = vunpack.c.h.b16 %v474
    %v2234 = vunpack.c.l.b16 %v475
    %v2235 = vunpack.c.h.b16 %v475
    %v2236 = vunpack.c.l.b16 %v476
    %v2237 = vunpack.c.h.b16 %v476
    %v2238 = vunpack.c.l.b16 %v477
    %v2239 = vunpack.c.h.b16 %v477
    %v2240 = vunpack.c.l.b16 %v478
    %v2241 = vunpack.c.h.b16 %v478
    %v2242 = vunpack.c.l.b16 %v479
    %v2243 = vunpack.c.h.b16 %v479
    %v2244 = vunpack.c.l.b16 %v480
    %v2245 = vunpack.c.h.b16 %v480
    %v2246 = vunpack.c.l.b16 %v481
    %v2247 = vunpack.c.h.b16 %v481
    %v2248 = vunpack.c.l.b16 %v482
    %v2249 = vunpack.c.h.b16 %v482
    %v2250 = vunpack.c.l.b16 %v483
    %v2251 = vunpack.c.h.b16 %v483
    %v2252 = vunpack.c.l.b16 %v484
    %v2253 = vunpack.c.h.b16 %v484
    %v2254 = vunpack.c.l.b16 %v485
    %v2255 = vunpack.c.h.b16 %v485
    %v2256 = vunpack.c.l.b16 %v486
    %v2257 = vunpack.c.h.b16 %v486
    %v2258 = vunpack.c.l.b16 %v487
    %v2259 = vunpack.c.h.b16 %v487
    %v2260 = vunpack.c.l.b16 %v488
    %v2261 = vunpack.c.h.b16 %v488
    %v2262 = vunpack.c.l.b16 %v489
    %v2263 = vunpack.c.h.b16 %v489
    %v2264 = vunpack.c.l.b16 %v490
    %v2265 = vunpack.c.h.b16 %v490
    %v2266 = vunpack.c.l.b16 %v491
    %v2267 = vunpack.c.h.b16 %v491
    %v2268 = vunpack.c.l.b16 %v492
    %v2269 = vunpack.c.h.b16 %v492
    %v2270 = vunpack.c.l.b16 %v493
    %v2271 = vunpack.c.h.b16 %v493
    %v2272 = vunpack.c.l.b16 %v494
    %v2273 = vunpack.c.h.b16 %v494
    %v2274 = vunpack.c.l.b16 %v495
    %v2275 = vunpack.c.h.b16 %v495
    %v2276 = vunpack.c.l.b16 %v496
    %v2277 = vunpack.c.h.b16 %v496
    %v2278 = vunpack.c.l.b16 %v497
    %v2279 = vunpack.c.h.b16 %v497
    %v2280 = vunpack.c.l.b16 %v498
    %v2281 = vunpack.c.h.b16 %v498
    %v2282 = vunpack.c.l.b16 %v499
    %v2283 = vunpack.c.h.b16 %v499
    %v2284 = vunpack.c.l.b16 %v500
    %v2285 = vunpack.c.h.b16 %v500
    %v2286 = vunpack.c.l.b16 %v501
    %v2287 = vunpack.c.h.b16 %v501
    %v2288 = vunpack.c.l.b16 %v502
    %v2289 = vunpack.c.h.b16 %v502
    %v2290 = vunpack.c.l.b16 %v503
    %v2291 = vunpack.c.h.b16 %v503
    %v2292 = vunpack.c.l.b16 %v504
    %v2293 = vunpack.c.h.b16 %v504
    %v2294 = vunpack.c.l.b16 %v505
    %v2295 = vunpack.c.h.b16 %v505
    %v2296 = vunpack.c.l.b16 %v506
    %v2297 = vunpack.c.h.b16 %v506
    %v2298 = vunpack.c.l.b16 %v507
    %v2299 = vunpack.c.h.b16 %v507
    %v2300 = vunpack.c.l.b16 %v508
    %v2301 = vunpack.c.h.b16 %v508
    %v2302 = vunpack.c.l.b16 %v509
    %v2303 = vunpack.c.h.b16 %v509
    %v2304 = vunpack.c.l.b16 %v510
    %v2305 = vunpack.c.h.b16 %v510
    %v2306 = vunpack.c.l.b16 %v511
    %v2307 = vunpack.c.h.b16 %v511
    %v2308 = vunpack.c.l.b16 %v512
    %v2309 = vunpack.c.h.b16 %v512
    %v2310 = vunpack.c.l.b16 %v513
    %v2311 = vunpack.c.h.b16 %v513
    %v2312 = vunpack.c.l.b16 %v514
    %v2313 = vunpack.c.h.b16 %v514
    %v2314 = vunpack.c.l.b16 %v515
    %v2315 = vunpack.c.h.b16 %v515
    %v2316 = vunpack.c.l.b16 %v516
    %v2317 = vunpack.c.h.b16 %v516
    %v2318 = vunpack.c.l.b16 %v517
    %v2319 = vunpack.c.h.b16 %v517
    %v2320 = vunpack.c.l.b16 %v518
    %v2321 = vunpack.c.h.b16 %v518
    %v2322 = vunpack.c.l.b16 %v519
    %v2323 = vunpack.c.h.b16 %v519
    %v2324 = vunpack.c.l.b16 %v520
    %v2325 = vunpack.c.h.b16 %v520
    %v2326 = vunpack.c.l.b16 %v521
    %v2327 = vunpack.c.h.b16 %v521
    %v2328 = vunpack.c.l.b16 %v522
    %v2329 = vunpack.c.h.b16 %v522
    %v2330 = vunpack.c.l.b16 %v523
    %v2331 = vunpack.c.h.b16 %v523
    %v2332 = vunpack.c.l.b16 %v524
    %v2333 = vunpack.c.h.b16 %v524
    %v2334 = vunpack.c.l.b16 %v525
    %v2335 = vunpack.c.h.b16 %v525
    %v2336 = vunpack.c.l.b16 %v526
    %v2337 = vunpack.c.h.b16 %v526
    %v2338 = vunpack.c.l.b16 %v527
    %v2339 = vunpack.c.h.b16 %v527
    %v2340 = vunpack.c.l.b16 %v528
    %v2341 = vunpack.c.h.b16 %v528
    %v2342 = vunpack.c.l.b16 %v529
    %v2343 = vunpack.c.h.b16 %v529
    %v2344 = vunpack.c.l.b16 %v530
    %v2345 = vunpack.c.h.b16 %v530
    %v2346 = vunpack.c.l.b16 %v531
    %v2347 = vunpack.c.h.b16 %v531
    %v2348 = vunpack.c.l.b16 %v532
    %v2349 = vunpack.c.h.b16 %v532
    %v2350 = vunpack.c.l.b16 %v533
    %v2351 = vunpack.c.h.b16 %v533
    %v2352 = vunpack.c.l.b16 %v534
    %v2353 = vunpack.c.h.b16 %v534
    %v2354 = vunpack.c.l.b16 %v535
    %v2355 = vunpack.c.h.b16 %v535
    %v2356 = vunpack.c.l.b16 %v536
    %v2357 = vunpack.c.h.b16 %v536
    %v2358 = vunpack.c.l.b16 %v537
    %v2359 = vunpack.c.h.b16 %v537
    %v2360 = vunpack.c.l.b16 %v538
    %v2361 = vunpack.c.h.b16 %v538
    %v2362 = vunpack.c.l.b16 %v539
    %v2363 = vunpack.c.h.b16 %v539
    %v2364 = vunpack.c.l.b16 %v540
    %v2365 = vunpack.c.h.b16 %v540
    %v2366 = vunpack.c.l.b16 %v541
    %v2367 = vunpack.c.h.b16 %v541
    %v2368 = vunpack.c.l.b16 %v542
    %v2369 = vunpack.c.h.b16 %v542
    %v2370 = vunpack.c.l.b16 %v543
    %v2371 = vunpack.c.h.b16 %v543
    %v2372 = vunpack.c.l.b16 %v544
    %v2373 = vunpack.c.h.b16 %v544
    %v2374 = vunpack.c.l.b16 %v545
    %v2375 = vunpack.c.h.b16 %v545
    %v2376 = vunpack.c.l.b16 %v546
    %v2377 = vunpack.c.h.b16 %v546
    %v2378 = vunpack.c.l.b16 %v547
    %v2379 = vunpack.c.h.b16 %v547
    %v2380 = vunpack.c.l.b16 %v548
    %v2381 = vunpack.c.h.b16 %v548
    %v2382 = vunpack.c.l.b16 %v549
    %v2383 = vunpack.c.h.b16 %v549
    %v2384 = vunpack.c.l.b16 %v550
    %v2385 = vunpack.c.h.b16 %v550
    %v2386 = vunpack.c.l.b16 %v551
    %v2387 = vunpack.c.h.b16 %v551
    %v2388 = vunpack.c.l.b16 %v552
    %v2389 = vunpack.c.h.b16 %v552
    %v2390 = vunpack.c.l.b16 %v553
    %v2391 = vunpack.c.h.b16 %v553
    %v2392 = vunpack.c.l.b16 %v554
    %v2393 = vunpack.c.h.b16 %v554
    %v2394 = vunpack.c.l.b16 %v555
    %v2395 = vunpack.c.h.b16 %v555
    %v2396 = vunpack.c.l.b16 %v556
    %v2397 = vunpack.c.h.b16 %v556
    %v2398 = vunpack.c.l.b16 %v557
    %v2399 = vunpack.c.h.b16 %v557
    %v2400 = vunpack.c.l.b16 %v558
    %v2401 = vunpack.c.h.b16 %v558
    %v2402 = vunpack.c.l.b16 %v559
    %v2403 = vunpack.c.h.b16 %v559
    %v2404 = vunpack.c.l.b16 %v560
    %v2405 = vunpack.c.h.b16 %v560
    %v2406 = vunpack.c.l.b16 %v561
    %v2407 = vunpack.c.h.b16 %v561
    %v2408 = vunpack.c.l.b16 %v562
    %v2409 = vunpack.c.h.b16 %v562
    %v2410 = vunpack.c.l.b16 %v563
    %v2411 = vunpack.c.h.b16 %v563
    %v2412 = vunpack.c.l.b16 %v564
    %v2413 = vunpack.c.h.b16 %v564
    %v2414 = vunpack.c.l.b16 %v565
    %v2415 = vunpack.c.h.b16 %v565
    %v2416 = vunpack.c.l.b16 %v566
    %v2417 = vunpack.c.h.b16 %v566
    %v2418 = vunpack.c.l.b16 %v567
    %v2419 = vunpack.c.h.b16 %v567
    %v2420 = vunpack.c.l.b16 %v568
    %v2421 = vunpack.c.h.b16 %v568
    %v2422 = vunpack.c.l.b16 %v569
    %v2423 = vunpack.c.h.b16 %v569
    %v2424 = vunpack.c.l.b16 %v570
    %v2425 = vunpack.c.h.b16 %v570
    %v2426 = vunpack.c.l.b16 %v571
    %v2427 = vunpack.c.h.b16 %v571
    %v2428 = vunpack.c.l.b16 %v572
    %v2429 = vunpack.c.h.b16 %v572
    %v2430 = vunpack.c.l.b16 %v573
    %v2431 = vunpack.c.h.b16 %v573
    %v2432 = vunpack.c.l.b16 %v574
    %v2433 = vunpack.c.h.b16 %v574
    %v2434 = vunpack.c.l.b16 %v575
    %v2435 = vunpack.c.h.b16 %v575
    %v2436 = vunpack.c.l.b16 %v576
    %v2437 = vunpack.c.h.b16 %v576
    %v2438 = vunpack.c.l.b16 %v577
    %v2439 = vunpack.c.h.b16 %v577
    %v2440 = vunpack.c.l.b16 %v578
    %v2441 = vunpack.c.h.b16 %v578
    %v2442 = vunpack.c.l.b16 %v579
    %v2443 = vunpack.c.h.b16 %v579
    %v2444 = vunpack.c.l.b16 %v580
    %v2445 = vunpack.c.h.b16 %v580
    %v2446 = vunpack.c.l.b16 %v581
    %v2447 = vunpack.c.h.b16 %v581
    %v2448 = vunpack.c.l.b16 %v582
    %v2449 = vunpack.c.h.b16 %v582
    %v2450 = vunpack.c.l.b16 %v583
    %v2451 = vunpack.c.h.b16 %v583
    %v2452 = vunpack.c.l.b16 %v584
    %v2453 = vunpack.c.h.b16 %v584
    %v2454 = vunpack.c.l.b16 %v585
    %v2455 = vunpack.c.h.b16 %v585
    %v2456 = vunpack.c.l.b16 %v586
    %v2457 = vunpack.c.h.b16 %v586
    %v2458 = vunpack.c.l.b16 %v587
    %v2459 = vunpack.c.h.b16 %v587
    %v2460 = vunpack.c.l.b16 %v588
    %v2461 = vunpack.c.h.b16 %v588
    %v2462 = vunpack.c.l.b16 %v589
    %v2463 = vunpack.c.h.b16 %v589
    %v2464 = vunpack.c.l.b16 %v590
    %v2465 = vunpack.c.h.b16 %v590
    %v2466 = vunpack.c.l.b16 %v591
    %v2467 = vunpack.c.h.b16 %v591
    %v2468 = vunpack.c.l.b16 %v592
    %v2469 = vunpack.c.h.b16 %v592
    %v2470 = vunpack.c.l.b16 %v593
    %v2471 = vunpack.c.h.b16 %v593
    %v2472 = vunpack.c.l.b16 %v594
    %v2473 = vunpack.c.h.b16 %v594
    %v2474 = vunpack.c.l.b16 %v595
    %v2475 = vunpack.c.h.b16 %v595
    %v2476 = vunpack.c.l.b16 %v596
    %v2477 = vunpack.c.h.b16 %v596
    %v2478 = vunpack.c.l.b16 %v597
    %v2479 = vunpack.c.h.b16 %v597
    %v2480 = vunpack.c.l.b16 %v598
    %v2481 = vunpack.c.h.b16 %v598
    %v2482 = vunpack.c.l.b16 %v599
    %v2483 = vunpack.c.h.b16 %v599
    %v2484 = vunpack.c.l.b16 %v600
    %v2485 = vunpack.c.h.b16 %v600
    %v2486 = vunpack.c.l.b16 %v601
    %v2487 = vunpack.c.h.b16 %v601
    %v2488 = vunpack.c.l.b16 %v602
    %v2489 = vunpack.c.h.b16 %v602
    %v2490 = vunpack.c.l.b16 %v603
    %v2491 = vunpack.c.h.b16 %v603
    %v2492 = vunpack.c.l.b16 %v604
    %v2493 = vunpack.c.h.b16 %v604
    %v2494 = vunpack.c.l.b16 %v605
    %v2495 = vunpack.c.h.b16 %v605
    %v2496 = vunpack.c.l.b16 %v606
    %v2497 = vunpack.c.h.b16 %v606
    %v2498 = vpack.c.b16 %v1350, %v1346
    %v2499 = vpack.c.b16 %v1351, %v1347
    %v2500 = vpack.c.b16 %v1352, %v1348
    %v2501 = vpack.c.b16 %v1353, %v1349
    %v2502 = vpack.c.b16 %v1358, %v1354
    %v2503 = vpack.c.b16 %v1359, %v1355
    %v2504 = vpack.c.b16 %v1360, %v1356
    %v2505 = vpack.c.b16 %v1361, %v1357
    %v2506 = vpack.c.b16 %v1366, %v1362
    %v2507 = vpack.c.b16 %v1367, %v1363
    %v2508 = vpack.c.b16 %v1368, %v1364
    %v2509 = vpack.c.b16 %v1369, %v1365
    %v2510 = vpack.c.b16 %v1374, %v1370
    %v2511 = vpack.c.b16 %v1375, %v1371
    %v2512 = vpack.c.b16 %v1376, %v1372
    %v2513 = vpack.c.b16 %v1377, %v1373
    %v2514 = vpack.c.b16 %v1382, %v1378
    %v2515 = vpack.c.b16 %v1383, %v1379
    %v2516 = vpack.c.b16 %v1384, %v1380
    %v2517 = vpack.c.b16 %v1385, %v1381
    %v2518 = vpack.c.b16 %v1390, %v1386
    %v2519 = vpack.c.b16 %v1391, %v1387
    %v2520 = vpack.c.b16 %v1392, %v1388
    %v2521 = vpack.c.b16 %v1393, %v1389
    %v2522 = vpack.c.b16 %v1398, %v1394
    %v2523 = vpack.c.b16 %v1399, %v1395
    %v2524 = vpack.c.b16 %v1400, %v1396
    %v2525 = vpack.c.b16 %v1401, %v1397
    %v2526 = vpack.c.b16 %v1406, %v1402
    %v2527 = vpack.c.b16 %v1407, %v1403
    %v2528 = vpack.c.b16 %v1408, %v1404
    %v2529 = vpack.c.b16 %v1409, %v1405
    %v2530 = vpack.c.b16 %v1414, %v1410
    %v2531 = vpack.c.b16 %v1415, %v1411
    %v2532 = vpack.c.b16 %v1416, %v1412
    %v2533 = vpack.c.b16 %v1417, %v1413
    %v2534 = vpack.c.b16 %v1422, %v1418
    %v2535 = vpack.c.b16 %v1423, %v1419
    %v2536 = vpack.c.b16 %v1424, %v1420
    %v2537 = vpack.c.b16 %v1425, %v1421
    %v2538 = vpack.c.b16 %v1430, %v1426
    %v2539 = vpack.c.b16 %v1431, %v1427
    %v2540 = vpack.c.b16 %v1432, %v1428
    %v2541 = vpack.c.b16 %v1433, %v1429
    %v2542 = vpack.c.b16 %v1438, %v1434
    %v2543 = vpack.c.b16 %v1439, %v1435
    %v2544 = vpack.c.b16 %v1440, %v1436
    %v2545 = vpack.c.b16 %v1441, %v1437
    %v2546 = vpack.c.b16 %v1446, %v1442
    %v2547 = vpack.c.b16 %v1447, %v1443
    %v2548 = vpack.c.b16 %v1448, %v1444
    %v2549 = vpack.c.b16 %v1449, %v1445
    %v2550 = vpack.c.b16 %v1454, %v1450
    %v2551 = vpack.c.b16 %v1455, %v1451
    %v2552 = vpack.c.b16 %v1456, %v1452
    %v2553 = vpack.c.b16 %v1457, %v1453
    %v2554 = vpack.c.b16 %v1462, %v1458
    %v2555 = vpack.c.b16 %v1463, %v1459
    %v2556 = vpack.c.b16 %v1464, %v1460
    %v2557 = vpack.c.b16 %v1465, %v1461
    %v2558 = vpack.c.b16 %v1470, %v1466
    %v2559 = vpack.c.b16 %v1471, %v1467
    %v2560 = vpack.c.b16 %v1472, %v1468
    %v2561 = vpack.c.b16 %v1473, %v1469
    %v2562 = vpack.c.b16 %v1478, %v1474
    %v2563 = vpack.c.b16 %v1479, %v1475
    %v2564 = vpack.c.b16 %v1480, %v1476
    %v2565 = vpack.c.b16 %v1481, %v1477
    %v2566 = vpack.c.b16 %v1486, %v1482
    %v2567 = vpack.c.b16 %v1487, %v1483
    %v2568 = vpack.c.b16 %v1488, %v1484
    %v2569 = vpack.c.b16 %v1489, %v1485
    %v2570 = vpack.c.b16 %v1494, %v1490
    %v2571 = vpack.c.b16 %v1495, %v1491
    %v2572 = vpack.c.b16 %v1496, %v1492
    %v2573 = vpack.c.b16 %v1497, %v1493
    %v2574 = vpack.c.b16 %v1502, %v1498
    %v2575 = vpack.c.b16 %v1503, %v1499
    %v2576 = vpack.c.b16 %v1504, %v1500
    %v2577 = vpack.c.b16 %v1505, %v1501
    %v2578 = vpack.c.b16 %v1510, %v1506
    %v2579 = vpack.c.b16 %v1511, %v1507
    %v2580 = vpack.c.b16 %v1512, %v1508
    %v2581 = vpack.c.b16 %v1513, %v1509
    %v2582 = vpack.c.b16 %v1518, %v1514
    %v2583 = vpack.c.b16 %v1519, %v1515
    %v2584 = vpack.c.b16 %v1520, %v1516
    %v2585 = vpack.c.b16 %v1521, %v1517
    %v2586 = vpack.c.b16 %v1526, %v1522
    %v2587 = vpack.c.b16 %v1527, %v1523
    %v2588 = vpack.c.b16 %v1528, %v1524
    %v2589 = vpack.c.b16 %v1529, %v1525
    %v2590 = vpack.c.b16 %v1534, %v1530
    %v2591 = vpack.c.b16 %v1535, %v1531
    %v2592 = vpack.c.b16 %v1536, %v1532
    %v2593 = vpack.c.b16 %v1537, %v1533
    %v2594 = vpack.c.b16 %v1542, %v1538
    %v2595 = vpack.c.b16 %v1543, %v1539
    %v2596 = vpack.c.b16 %v1544, %v1540
    %v2597 = vpack.c.b16 %v1545, %v1541
    %v2598 = vpack.c.b16 %v1550, %v1546
    %v2599 = vpack.c.b16 %v1551, %v1547
    %v2600 = vpack.c.b16 %v1552, %v1548
    %v2601 = vpack.c.b16 %v1553, %v1549
    %v2602 = vpack.c.b16 %v1558, %v1554
    %v2603 = vpack.c.b16 %v1559, %v1555
    %v2604 = vpack.c.b16 %v1560, %v1556
    %v2605 = vpack.c.b16 %v1561, %v1557
    %v2606 = vpack.c.b16 %v1566, %v1562
    %v2607 = vpack.c.b16 %v1567, %v1563
    %v2608 = vpack.c.b16 %v1568, %v1564
    %v2609 = vpack.c.b16 %v1569, %v1565
    %v2610 = vpack.c.b16 %v1574, %v1570
    %v2611 = vpack.c.b16 %v1575, %v1571
    %v2612 = vpack.c.b16 %v1576, %v1572
    %v2613 = vpack.c.b16 %v1577, %v1573
    %v2614 = vpack.c.b16 %v1582, %v1578
    %v2615 = vpack.c.b16 %v1583, %v1579
    %v2616 = vpack.c.b16 %v1584, %v1580
    %v2617 = vpack.c.b16 %v1585, %v1581
    %v2618 = vpack.c.b16 %v1590, %v1586
    %v2619 = vpack.c.b16 %v1591, %v1587
    %v2620 = vpack.c.b16 %v1592, %v1588
    %v2621 = vpack.c.b16 %v1593, %v1589
    %v2622 = vpack.c.b16 %v1598, %v1594
    %v2623 = vpack.c.b16 %v1599, %v1595
    %v2624 = vpack.c.b16 %v1600, %v1596
    %v2625 = vpack.c.b16 %v1601, %v1597
    %v2626 = vpack.c.b16 %v1606, %v1602
    %v2627 = vpack.c.b16 %v1607, %v1603
    %v2628 = vpack.c.b16 %v1608, %v1604
    %v2629 = vpack.c.b16 %v1609, %v1605
    %v2630 = vpack.c.b16 %v1614, %v1610
    %v2631 = vpack.c.b16 %v1615, %v1611
    %v2632 = vpack.c.b16 %v1616, %v1612
    %v2633 = vpack.c.b16 %v1617, %v1613
    %v2634 = vpack.c.b16 %v1622, %v1618
    %v2635 = vpack.c.b16 %v1623, %v1619
    %v2636 = vpack.c.b16 %v1624, %v1620
    %v2637 = vpack.c.b16 %v1625, %v1621
    %v2638 = vpack.c.b16 %v1630, %v1626
    %v2639 = vpack.c.b16 %v1631, %v1627
    %v2640 = vpack.c.b16 %v1632, %v1628
    %v2641 = vpack.c.b16 %v1633, %v1629
    %v2642 = vpack.c.b16 %v1638, %v1634
    %v2643 = vpack.c.b16 %v1639, %v1635
    %v2644 = vpack.c.b16 %v1640, %v1636
    %v2645 = vpack.c.b16 %v1641, %v1637
    %v2646 = vpack.c.b16 %v1646, %v1642
    %v2647 = vpack.c.b16 %v1647, %v1643
    %v2648 = vpack.c.b16 %v1648, %v1644
    %v2649 = vpack.c.b16 %v1649, %v1645
    %v2650 = vpack.c.b16 %v1654, %v1650
    %v2651 = vpack.c.b16 %v1655, %v1651
    %v2652 = vpack.c.b16 %v1656, %v1652
    %v2653 = vpack.c.b16 %v1657, %v1653
    %v2654 = vpack.c.b16 %v1662, %v1658
    %v2655 = vpack.c.b16 %v1663, %v1659
    %v2656 = vpack.c.b16 %v1664, %v1660
    %v2657 = vpack.c.b16 %v1665, %v1661
    %v2658 = vpack.c.b16 %v1670, %v1666
    %v2659 = vpack.c.b16 %v1671, %v1667
    %v2660 = vpack.c.b16 %v1672, %v1668
    %v2661 = vpack.c.b16 %v1673, %v1669
    %v2662 = vpack.c.b16 %v1678, %v1674
    %v2663 = vpack.c.b16 %v1679, %v1675
    %v2664 = vpack.c.b16 %v1680, %v1676
    %v2665 = vpack.c.b16 %v1681, %v1677
    %v2666 = vpack.c.b16 %v1686, %v1682
    %v2667 = vpack.c.b16 %v1687, %v1683
    %v2668 = vpack.c.b16 %v1688, %v1684
    %v2669 = vpack.c.b16 %v1689, %v1685
    %v2670 = vpack.c.b16 %v1694, %v1690
    %v2671 = vpack.c.b16 %v1695, %v1691
    %v2672 = vpack.c.b16 %v1696, %v1692
    %v2673 = vpack.c.b16 %v1697, %v1693
    %v2674 = vpack.c.b16 %v1702, %v1698
    %v2675 = vpack.c.b16 %v1703, %v1699
    %v2676 = vpack.c.b16 %v1704, %v1700
    %v2677 = vpack.c.b16 %v1705, %v1701
    %v2678 = vpack.c.b16 %v1710, %v1706
    %v2679 = vpack.c.b16 %v1711, %v1707
    %v2680 = vpack.c.b16 %v1712, %v1708
    %v2681 = vpack.c.b16 %v1713, %v1709
    %v2682 = vpack.c.b16 %v1718, %v1714
    %v2683 = vpack.c.b16 %v1719, %v1715
    %v2684 = vpack.c.b16 %v1720, %v1716
    %v2685 = vpack.c.b16 %v1721, %v1717
    %v2686 = vpack.c.b16 %v1726, %v1722
    %v2687 = vpack.c.b16 %v1727, %v1723
    %v2688 = vpack.c.b16 %v1728, %v1724
    %v2689 = vpack.c.b16 %v1729, %v1725
    %v2690 = vpack.c.b16 %v1734, %v1730
    %v2691 = vpack.c.b16 %v1735, %v1731
    %v2692 = vpack.c.b16 %v1736, %v1732
    %v2693 = vpack.c.b16 %v1737, %v1733
    %v2694 = vpack.c.b16 %v1742, %v1738
    %v2695 = vpack.c.b16 %v1743, %v1739
    %v2696 = vpack.c.b16 %v1744, %v1740
    %v2697 = vpack.c.b16 %v1745, %v1741
    %v2698 = vpack.c.b16 %v1750, %v1746
    %v2699 = vpack.c.b16 %v1751, %v1747
    %v2700 = vpack.c.b16 %v1752, %v1748
    %v2701 = vpack.c.b16 %v1753, %v1749
    %v2702 = vpack.c.b16 %v1758, %v1754
    %v2703 = vpack.c.b16 %v1759, %v1755
    %v2704 = vpack.c.b16 %v1760, %v1756
    %v2705 = vpack.c.b16 %v1761, %v1757
    %v2706 = vpack.c.b16 %v1766, %v1762
    %v2707 = vpack.c.b16 %v1767, %v1763
    %v2708 = vpack.c.b16 %v1768, %v1764
    %v2709 = vpack.c.b16 %v1769, %v1765
    %v2710 = vpack.c.b16 %v1774, %v1770
    %v2711 = vpack.c.b16 %v1775, %v1771
    %v2712 = vpack.c.b16 %v1776, %v1772
    %v2713 = vpack.c.b16 %v1777, %v1773
    %v2714 = vpack.c.b16 %v1782, %v1778
    %v2715 = vpack.c.b16 %v1783, %v1779
    %v2716 = vpack.c.b16 %v1784, %v1780
    %v2717 = vpack.c.b16 %v1785, %v1781
    %v2718 = vpack.c.b16 %v1790, %v1786
    %v2719 = vpack.c.b16 %v1791, %v1787
    %v2720 = vpack.c.b16 %v1792, %v1788
    %v2721 = vpack.c.b16 %v1793, %v1789
    %v2722 = vpack.c.b16 %v1798, %v1794
    %v2723 = vpack.c.b16 %v1799, %v1795
    %v2724 = vpack.c.b16 %v1800, %v1796
    %v2725 = vpack.c.b16 %v1801, %v1797
    %v2726 = vpack.c.b16 %v1806, %v1802
    %v2727 = vpack.c.b16 %v1807, %v1803
    %v2728 = vpack.c.b16 %v1808, %v1804
    %v2729 = vpack.c.b16 %v1809, %v1805
    %v2730 = vpack.c.b16 %v1814, %v1810
    %v2731 = vpack.c.b16 %v1815, %v1811
    %v2732 = vpack.c.b16 %v1816, %v1812
    %v2733 = vpack.c.b16 %v1817, %v1813
    %v2734 = vpack.c.b16 %v1822, %v1818
    %v2735 = vpack.c.b16 %v1823, %v1819
    %v2736 = vpack.c.b16 %v1824, %v1820
    %v2737 = vpack.c.b16 %v1825, %v1821
    %v2738 = vpack.c.b16 %v1830, %v1826
    %v2739 = vpack.c.b16 %v1831, %v1827
    %v2740 = vpack.c.b16 %v1832, %v1828
    %v2741 = vpack.c.b16 %v1833, %v1829
    %v2742 = vpack.c.b16 %v1838, %v1834
    %v2743 = vpack.c.b16 %v1839, %v1835
    %v2744 = vpack.c.b16 %v1840, %v1836
    %v2745 = vpack.c.b16 %v1841, %v1837
    %v2746 = vpack.c.b16 %v1846, %v1842
    %v2747 = vpack.c.b16 %v1847, %v1843
    %v2748 = vpack.c.b16 %v1848, %v1844
    %v2749 = vpack.c.b16 %v1849, %v1845
    %v2750 = vpack.c.b16 %v1854, %v1850
    %v2751 = vpack.c.b16 %v1855, %v1851
    %v2752 = vpack.c.b16 %v1856, %v1852
    %v2753 = vpack.c.b16 %v1857, %v1853
    %v2754 = vpack.c.b16 %v1862, %v1858
    %v2755 = vpack.c.b16 %v1863, %v1859
    %v2756 = vpack.c.b16 %v1864, %v1860
    %v2757 = vpack.c.b16 %v1865, %v1861
    %v2758 = vpack.c.b16 %v1870, %v1866
    %v2759 = vpack.c.b16 %v1871, %v1867
    %v2760 = vpack.c.b16 %v1872, %v1868
    %v2761 = vpack.c.b16 %v1873, %v1869
    %v2762 = vpack.c.b16 %v1878, %v1874
    %v2763 = vpack.c.b16 %v1879, %v1875
    %v2764 = vpack.c.b16 %v1880, %v1876
    %v2765 = vpack.c.b16 %v1881, %v1877
    %v2766 = vpack.c.b16 %v1886, %v1882
    %v2767 = vpack.c.b16 %v1887, %v1883
    %v2768 = vpack.c.b16 %v1888, %v1884
    %v2769 = vpack.c.b16 %v1889, %v1885
    %v2770 = vpack.c.b16 %v1894, %v1890
    %v2771 = vpack.c.b16 %v1895, %v1891
    %v2772 = vpack.c.b16 %v1896, %v1892
    %v2773 = vpack.c.b16 %v1897, %v1893
    %v2774 = vpack.c.b16 %v1902, %v1898
    %v2775 = vpack.c.b16 %v1903, %v1899
    %v2776 = vpack.c.b16 %v1904, %v1900
    %v2777 = vpack.c.b16 %v1905, %v1901
    %v2778 = vpack.c.b16 %v1910, %v1906
    %v2779 = vpack.c.b16 %v1911, %v1907
    %v2780 = vpack.c.b16 %v1912, %v1908
    %v2781 = vpack.c.b16 %v1913, %v1909
    %v2782 = vpack.c.b16 %v1918, %v1914
    %v2783 = vpack.c.b16 %v1919, %v1915
    %v2784 = vpack.c.b16 %v1920, %v1916
    %v2785 = vpack.c.b16 %v1921, %v1917
    %v2786 = vpack.c.b16 %v1926, %v1922
    %v2787 = vpack.c.b16 %v1927, %v1923
    %v2788 = vpack.c.b16 %v1928, %v1924
    %v2789 = vpack.c.b16 %v1929, %v1925
    %v2790 = vpack.c.b16 %v1934, %v1930
    %v2791 = vpack.c.b16 %v1935, %v1931
    %v2792 = vpack.c.b16 %v1936, %v1932
    %v2793 = vpack.c.b16 %v1937, %v1933
    %v2794 = vpack.c.b16 %v1942, %v1938
    %v2795 = vpack.c.b16 %v1943, %v1939
    %v2796 = vpack.c.b16 %v1944, %v1940
    %v2797 = vpack.c.b16 %v1945, %v1941
    %v2798 = vpack.c.b16 %v1950, %v1946
    %v2799 = vpack.c.b16 %v1951, %v1947
    %v2800 = vpack.c.b16 %v1952, %v1948
    %v2801 = vpack.c.b16 %v1953, %v1949
    %v2802 = vpack.c.b16 %v1958, %v1954
    %v2803 = vpack.c.b16 %v1959, %v1955
    %v2804 = vpack.c.b16 %v1960, %v1956
    %v2805 = vpack.c.b16 %v1961, %v1957
    %v2806 = vpack.c.b16 %v1966, %v1962
    %v2807 = vpack.c.b16 %v1967, %v1963
    %v2808 = vpack.c.b16 %v1968, %v1964
    %v2809 = vpack.c.b16 %v1969, %v1965
    %v2810 = vpack.c.b16 %v1974, %v1970
    %v2811 = vpack.c.b16 %v1975, %v1971
    %v2812 = vpack.c.b16 %v1976, %v1972
    %v2813 = vpack.c.b16 %v1977, %v1973
    %v2814 = vpack.c.b16 %v1982, %v1978
    %v2815 = vpack.c.b16 %v1983, %v1979
    %v2816 = vpack.c.b16 %v1984, %v1980
    %v2817 = vpack.c.b16 %v1985, %v1981
    %v2818 = vpack.c.b16 %v1990, %v1986
    %v2819 = vpack.c.b16 %v1991, %v1987
    %v2820 = vpack.c.b16 %v1992, %v1988
    %v2821 = vpack.c.b16 %v1993, %v1989
    %v2822 = vpack.c.b16 %v1998, %v1994
    %v2823 = vpack.c.b16 %v1999, %v1995
    %v2824 = vpack.c.b16 %v2000, %v1996
    %v2825 = vpack.c.b16 %v2001, %v1997
    %v2826 = vpack.c.b16 %v2006, %v2002
    %v2827 = vpack.c.b16 %v2007, %v2003
    %v2828 = vpack.c.b16 %v2008, %v2004
    %v2829 = vpack.c.b16 %v2009, %v2005
    %v2830 = vpack.c.b16 %v2014, %v2010
    %v2831 = vpack.c.b16 %v2015, %v2011
    %v2832 = vpack.c.b16 %v2016, %v2012
    %v2833 = vpack.c.b16 %v2017, %v2013
    %v2834 = vpack.c.b16 %v2022, %v2018
    %v2835 = vpack.c.b16 %v2023, %v2019
    %v2836 = vpack.c.b16 %v2024, %v2020
    %v2837 = vpack.c.b16 %v2025, %v2021
    %v2838 = vpack.c.b16 %v2030, %v2026
    %v2839 = vpack.c.b16 %v2031, %v2027
    %v2840 = vpack.c.b16 %v2032, %v2028
    %v2841 = vpack.c.b16 %v2033, %v2029
    %v2842 = vpack.c.b16 %v2038, %v2034
    %v2843 = vpack.c.b16 %v2039, %v2035
    %v2844 = vpack.c.b16 %v2040, %v2036
    %v2845 = vpack.c.b16 %v2041, %v2037
    %v2846 = vpack.c.b16 %v2046, %v2042
    %v2847 = vpack.c.b16 %v2047, %v2043
    %v2848 = vpack.c.b16 %v2048, %v2044
    %v2849 = vpack.c.b16 %v2049, %v2045
    %v2850 = vpack.c.b16 %v2054, %v2050
    %v2851 = vpack.c.b16 %v2055, %v2051
    %v2852 = vpack.c.b16 %v2056, %v2052
    %v2853 = vpack.c.b16 %v2057, %v2053
    %v2854 = vpack.c.b16 %v2062, %v2058
    %v2855 = vpack.c.b16 %v2063, %v2059
    %v2856 = vpack.c.b16 %v2064, %v2060
    %v2857 = vpack.c.b16 %v2065, %v2061
    %v2858 = vpack.c.b16 %v2070, %v2066
    %v2859 = vpack.c.b16 %v2071, %v2067
    %v2860 = vpack.c.b16 %v2072, %v2068
    %v2861 = vpack.c.b16 %v2073, %v2069
    %v2862 = vpack.c.b16 %v2078, %v2074
    %v2863 = vpack.c.b16 %v2079, %v2075
    %v2864 = vpack.c.b16 %v2080, %v2076
    %v2865 = vpack.c.b16 %v2081, %v2077
    %v2866 = vpack.c.b16 %v2086, %v2082
    %v2867 = vpack.c.b16 %v2087, %v2083
    %v2868 = vpack.c.b16 %v2088, %v2084
    %v2869 = vpack.c.b16 %v2089, %v2085
    %v2870 = vpack.c.b16 %v2094, %v2090
    %v2871 = vpack.c.b16 %v2095, %v2091
    %v2872 = vpack.c.b16 %v2096, %v2092
    %v2873 = vpack.c.b16 %v2097, %v2093
    %v2874 = vpack.c.b16 %v2102, %v2098
    %v2875 = vpack.c.b16 %v2103, %v2099
    %v2876 = vpack.c.b16 %v2104, %v2100
    %v2877 = vpack.c.b16 %v2105, %v2101
    %v2878 = vpack.c.b16 %v2110, %v2106
    %v2879 = vpack.c.b16 %v2111, %v2107
    %v2880 = vpack.c.b16 %v2112, %v2108
    %v2881 = vpack.c.b16 %v2113, %v2109
    %v2882 = vpack.c.b16 %v2118, %v2114
    %v2883 = vpack.c.b16 %v2119, %v2115
    %v2884 = vpack.c.b16 %v2120, %v2116
    %v2885 = vpack.c.b16 %v2121, %v2117
    %v2886 = vpack.c.b16 %v2126, %v2122
    %v2887 = vpack.c.b16 %v2127, %v2123
    %v2888 = vpack.c.b16 %v2128, %v2124
    %v2889 = vpack.c.b16 %v2129, %v2125
    %v2890 = vpack.c.b16 %v2134, %v2130
    %v2891 = vpack.c.b16 %v2135, %v2131
    %v2892 = vpack.c.b16 %v2136, %v2132
    %v2893 = vpack.c.b16 %v2137, %v2133
    %v2894 = vpack.c.b16 %v2142, %v2138
    %v2895 = vpack.c.b16 %v2143, %v2139
    %v2896 = vpack.c.b16 %v2144, %v2140
    %v2897 = vpack.c.b16 %v2145, %v2141
    %v2898 = vpack.c.b16 %v2150, %v2146
    %v2899 = vpack.c.b16 %v2151, %v2147
    %v2900 = vpack.c.b16 %v2152, %v2148
    %v2901 = vpack.c.b16 %v2153, %v2149
    %v2902 = vpack.c.b16 %v2158, %v2154
    %v2903 = vpack.c.b16 %v2159, %v2155
    %v2904 = vpack.c.b16 %v2160, %v2156
    %v2905 = vpack.c.b16 %v2161, %v2157
    %v2906 = vpack.c.b16 %v2166, %v2162
    %v2907 = vpack.c.b16 %v2167, %v2163
    %v2908 = vpack.c.b16 %v2168, %v2164
    %v2909 = vpack.c.b16 %v2169, %v2165
    %v2910 = vpack.c.b16 %v2174, %v2170
    %v2911 = vpack.c.b16 %v2175, %v2171
    %v2912 = vpack.c.b16 %v2176, %v2172
    %v2913 = vpack.c.b16 %v2177, %v2173
    %v2914 = vpack.c.b16 %v2182, %v2178
    %v2915 = vpack.c.b16 %v2183, %v2179
    %v2916 = vpack.c.b16 %v2184, %v2180
    %v2917 = vpack.c.b16 %v2185, %v2181
    %v2918 = vpack.c.b16 %v2190, %v2186
    %v2919 = vpack.c.b16 %v2191, %v2187
    %v2920 = vpack.c.b16 %v2192, %v2188
    %v2921 = vpack.c.b16 %v2193, %v2189
    %v2922 = vpack.c.b16 %v2198, %v2194
    %v2923 = vpack.c.b16 %v2199, %v2195
    %v2924 = vpack.c.b16 %v2200, %v2196
    %v2925 = vpack.c.b16 %v2201, %v2197
    %v2926 = vpack.c.b16 %v2206, %v2202
    %v2927 = vpack.c.b16 %v2207, %v2203
    %v2928 = vpack.c.b16 %v2208, %v2204
    %v2929 = vpack.c.b16 %v2209, %v2205
    %v2930 = vpack.c.b16 %v2214, %v2210
    %v2931 = vpack.c.b16 %v2215, %v2211
    %v2932 = vpack.c.b16 %v2216, %v2212
    %v2933 = vpack.c.b16 %v2217, %v2213
    %v2934 = vpack.c.b16 %v2222, %v2218
    %v2935 = vpack.c.b16 %v2223, %v2219
    %v2936 = vpack.c.b16 %v2224, %v2220
    %v2937 = vpack.c.b16 %v2225, %v2221
    %v2938 = vpack.c.b16 %v2230, %v2226
    %v2939 = vpack.c.b16 %v2231, %v2227
    %v2940 = vpack.c.b16 %v2232, %v2228
    %v2941 = vpack.c.b16 %v2233, %v2229
    %v2942 = vpack.c.b16 %v2238, %v2234
    %v2943 = vpack.c.b16 %v2239, %v2235
    %v2944 = vpack.c.b16 %v2240, %v2236
    %v2945 = vpack.c.b16 %v2241, %v2237
    %v2946 = vpack.c.b16 %v2246, %v2242
    %v2947 = vpack.c.b16 %v2247, %v2243
    %v2948 = vpack.c.b16 %v2248, %v2244
    %v2949 = vpack.c.b16 %v2249, %v2245
    %v2950 = vpack.c.b16 %v2254, %v2250
    %v2951 = vpack.c.b16 %v2255, %v2251
    %v2952 = vpack.c.b16 %v2256, %v2252
    %v2953 = vpack.c.b16 %v2257, %v2253
    %v2954 = vpack.c.b16 %v2262, %v2258
    %v2955 = vpack.c.b16 %v2263, %v2259
    %v2956 = vpack.c.b16 %v2264, %v2260
    %v2957 = vpack.c.b16 %v2265, %v2261
    %v2958 = vpack.c.b16 %v2270, %v2266
    %v2959 = vpack.c.b16 %v2271, %v2267
    %v2960 = vpack.c.b16 %v2272, %v2268
    %v2961 = vpack.c.b16 %v2273, %v2269
    %v2962 = vpack.c.b16 %v2278, %v2274
    %v2963 = vpack.c.b16 %v2279, %v2275
    %v2964 = vpack.c.b16 %v2280, %v2276
    %v2965 = vpack.c.b16 %v2281, %v2277
    %v2966 = vpack.c.b16 %v2286, %v2282
    %v2967 = vpack.c.b16 %v2287, %v2283
    %v2968 = vpack.c.b16 %v2288, %v2284
    %v2969 = vpack.c.b16 %v2289, %v2285
    %v2970 = vpack.c.b16 %v2294, %v2290
    %v2971 = vpack.c.b16 %v2295, %v2291
    %v2972 = vpack.c.b16 %v2296, %v2292
    %v2973 = vpack.c.b16 %v2297, %v2293
    %v2974 = vpack.c.b16 %v2302, %v2298
    %v2975 = vpack.c.b16 %v2303, %v2299
    %v2976 = vpack.c.b16 %v2304, %v2300
    %v2977 = vpack.c.b16 %v2305, %v2301
    %v2978 = vpack.c.b16 %v2310, %v2306
    %v2979 = vpack.c.b16 %v2311, %v2307
    %v2980 = vpack.c.b16 %v2312, %v2308
    %v2981 = vpack.c.b16 %v2313, %v2309
    %v2982 = vpack.c.b16 %v2318, %v2314
    %v2983 = vpack.c.b16 %v2319, %v2315
    %v2984 = vpack.c.b16 %v2320, %v2316
    %v2985 = vpack.c.b16 %v2321, %v2317
    %v2986 = vpack.c.b16 %v2326, %v2322
    %v2987 = vpack.c.b16 %v2327, %v2323
    %v2988 = vpack.c.b16 %v2328, %v2324
    %v2989 = vpack.c.b16 %v2329, %v2325
    %v2990 = vpack.c.b16 %v2334, %v2330
    %v2991 = vpack.c.b16 %v2335, %v2331
    %v2992 = vpack.c.b16 %v2336, %v2332
    %v2993 = vpack.c.b16 %v2337, %v2333
    %v2994 = vpack.c.b16 %v2342, %v2338
    %v2995 = vpack.c.b16 %v2343, %v2339
    %v2996 = vpack.c.b16 %v2344, %v2340
    %v2997 = vpack.c.b16 %v2345, %v2341
    %v2998 = vpack.c.b16 %v2350, %v2346
    %v2999 = vpack.c.b16 %v2351, %v2347
    %v3000 = vpack.c.b16 %v2352, %v2348
    %v3001 = vpack.c.b16 %v2353, %v2349
    %v3002 = vpack.c.b16 %v2358, %v2354
    %v3003 = vpack.c.b16 %v2359, %v2355
    %v3004 = vpack.c.b16 %v2360, %v2356
    %v3005 = vpack.c.b16 %v2361, %v2357
    %v3006 = vpack.c.b16 %v2366, %v2362
    %v3007 = vpack.c.b16 %v2367, %v2363
    %v3008 = vpack.c.b16 %v2368, %v2364
    %v3009 = vpack.c.b16 %v2369, %v2365
    %v3010 = vpack.c.b16 %v2374, %v2370
    %v3011 = vpack.c.b16 %v2375, %v2371
    %v3012 = vpack.c.b16 %v2376, %v2372
    %v3013 = vpack.c.b16 %v2377, %v2373
    %v3014 = vpack.c.b16 %v2382, %v2378
    %v3015 = vpack.c.b16 %v2383, %v2379
    %v3016 = vpack.c.b16 %v2384, %v2380
    %v3017 = vpack.c.b16 %v2385, %v2381
    %v3018 = vpack.c.b16 %v2390, %v2386
    %v3019 = vpack.c.b16 %v2391, %v2387
    %v3020 = vpack.c.b16 %v2392, %v2388
    %v3021 = vpack.c.b16 %v2393, %v2389
    %v3022 = vpack.c.b16 %v2398, %v2394
    %v3023 = vpack.c.b16 %v2399, %v2395
    %v3024 = vpack.c.b16 %v2400, %v2396
    %v3025 = vpack.c.b16 %v2401, %v2397
    %v3026 = vpack.c.b16 %v2406, %v2402
    %v3027 = vpack.c.b16 %v2407, %v2403
    %v3028 = vpack.c.b16 %v2408, %v2404
    %v3029 = vpack.c.b16 %v2409, %v2405
    %v3030 = vpack.c.b16 %v2414, %v2410
    %v3031 = vpack.c.b16 %v2415, %v2411
    %v3032 = vpack.c.b16 %v2416, %v2412
    %v3033 = vpack.c.b16 %v2417, %v2413
    %v3034 = vpack.c.b16 %v2422, %v2418
    %v3035 = vpack.c.b16 %v2423, %v2419
    %v3036 = vpack.c.b16 %v2424, %v2420
    %v3037 = vpack.c.b16 %v2425, %v2421
    %v3038 = vpack.c.b16 %v2430, %v2426
    %v3039 = vpack.c.b16 %v2431, %v2427
    %v3040 = vpack.c.b16 %v2432, %v2428
    %v3041 = vpack.c.b16 %v2433, %v2429
    %v3042 = vpack.c.b16 %v2438, %v2434
    %v3043 = vpack.c.b16 %v2439, %v2435
    %v3044 = vpack.c.b16 %v2440, %v2436
    %v3045 = vpack.c.b16 %v2441, %v2437
    %v3046 = vpack.c.b16 %v2446, %v2442
    %v3047 = vpack.c.b16 %v2447, %v2443
    %v3048 = vpack.c.b16 %v2448, %v2444
    %v3049 = vpack.c.b16 %v2449, %v2445
    %v3050 = vpack.c.b16 %v2454, %v2450
    %v3051 = vpack.c.b16 %v2455, %v2451
    %v3052 = vpack.c.b16 %v2456, %v2452
    %v3053 = vpack.c.b16 %v2457, %v2453
    %v3054 = vpack.c.b16 %v2462, %v2458
    %v3055 = vpack.c.b16 %v2463, %v2459
    %v3056 = vpack.c.b16 %v2464, %v2460
    %v3057 = vpack.c.b16 %v2465, %v2461
    %v3058 = vpack.c.b16 %v2470, %v2466
    %v3059 = vpack.c.b16 %v2471, %v2467
    %v3060 = vpack.c.b16 %v2472, %v2468
    %v3061 = vpack.c.b16 %v2473, %v2469
    %v3062 = vpack.c.b16 %v2478, %v2474
    %v3063 = vpack.c.b16 %v2479, %v2475
    %v3064 = vpack.c.b16 %v2480, %v2476
    %v3065 = vpack.c.b16 %v2481, %v2477
    %v3066 = vpack.c.b16 %v2486, %v2482
    %v3067 = vpack.c.b16 %v2487, %v2483
    %v3068 = vpack.c.b16 %v2488, %v2484
    %v3069 = vpack.c.b16 %v2489, %v2485
    %v3070 = vpack.c.b16 %v2494, %v2490
    %v3071 = vpack.c.b16 %v2495, %v2491
    %v3072 = vpack.c.b16 %v2496, %v2492
    %v3073 = vpack.c.b16 %v2497, %v2493
    %3650 = vmatprep.subr.bf16.mxu0 %v2499
    %3651 = vmatpush1.bf16.msra.mxu0 %v2498
    %3652 = vmatprep.subr.bf16.mxu0 %v2503
    %3653 = vmatpush1.bf16.msra.mxu0 %v2502
    %3654 = vmatprep.subr.bf16.mxu0 %v2507
    %3655 = vmatpush1.bf16.msra.mxu0 %v2506
    %3656 = vmatprep.subr.bf16.mxu0 %v2511
    %3657 = vmatpush1.bf16.msra.mxu0 %v2510
    %3658 = vmatprep.subr.bf16.mxu0 %v2515
    %3659 = vmatpush1.bf16.msra.mxu0 %v2514
    %3660 = vmatprep.subr.bf16.mxu0 %v2519
    %3661 = vmatpush1.bf16.msra.mxu0 %v2518
    %3662 = vmatprep.subr.bf16.mxu0 %v2523
    %3663 = vmatpush1.bf16.msra.mxu0 %v2522
    %3664 = vmatprep.subr.bf16.mxu0 %v2527
    %3665 = vmatpush1.bf16.msra.mxu0 %v2526
    %3666 = vmatprep.subr.bf16.mxu0 %v2531
    %3667 = vmatpush1.bf16.msra.mxu0 %v2530
    %3668 = vmatprep.subr.bf16.mxu0 %v2535
    %3669 = vmatpush1.bf16.msra.mxu0 %v2534
    %3670 = vmatprep.subr.bf16.mxu0 %v2539
    %3671 = vmatpush1.bf16.msra.mxu0 %v2538
    %3672 = vmatprep.subr.bf16.mxu0 %v2543
    %3673 = vmatpush1.bf16.msra.mxu0 %v2542
    %3674 = vmatprep.subr.bf16.mxu0 %v2547
    %3675 = vmatpush1.bf16.msra.mxu0 %v2546
    %3676 = vmatprep.subr.bf16.mxu0 %v2551
    %3677 = vmatpush1.bf16.msra.mxu0 %v2550
    %3678 = vmatprep.subr.bf16.mxu0 %v2555
    %3679 = vmatpush1.bf16.msra.mxu0 %v2554
    %3680 = vmatprep.subr.bf16.mxu0 %v2559
    %3681 = vmatpush1.bf16.msra.mxu0 %v2558
    %3682 = vmatprep.mubr.bf16.mxu0 %v669
    %3683 = vmatmul.mubr.bf16.gmra.mrb[0].mxu0 %v655
    %v3684 = vpop.f32.mrb[0].mxu0
    %v3685 = vadd.f32 %v612, %v3684
    %v3686 = vpop.f32.mrb[0].mxu0
    %v3687 = vadd.f32 %v616, %v3686
    %v3688 = vpop.f32.mrb[0].mxu0
    %v3689 = vpop.f32.mrb[0].mxu0
    %3690 = vdwg.mxu0
    %3691 = vmatprep.subr.bf16.mxu0 %v2563
    %3692 = vmatpush1.bf16.msra.mxu0 %v2562
    %3693 = vmatprep.subr.bf16.mxu0 %v2567
    %3694 = vmatpush1.bf16.msra.mxu0 %v2566
    %3695 = vmatprep.subr.bf16.mxu0 %v2571
    %3696 = vmatpush1.bf16.msra.mxu0 %v2570
    %3697 = vmatprep.subr.bf16.mxu0 %v2575
    %3698 = vmatpush1.bf16.msra.mxu0 %v2574
    %3699 = vmatprep.subr.bf16.mxu0 %v2579
    %3700 = vmatpush1.bf16.msra.mxu0 %v2578
    %3701 = vmatprep.subr.bf16.mxu0 %v2583
    %3702 = vmatpush1.bf16.msra.mxu0 %v2582
    %3703 = vmatprep.subr.bf16.mxu0 %v2587
    %3704 = vmatpush1.bf16.msra.mxu0 %v2586
    %3705 = vmatprep.subr.bf16.mxu0 %v2591
    %3706 = vmatpush1.bf16.msra.mxu0 %v2590
    %3707 = vmatprep.subr.bf16.mxu0 %v2595
    %3708 = vmatpush1.bf16.msra.mxu0 %v2594
    %3709 = vmatprep.subr.bf16.mxu0 %v2599
    %3710 = vmatpush1.bf16.msra.mxu0 %v2598
    %3711 = vmatprep.subr.bf16.mxu0 %v2603
    %3712 = vmatpush1.bf16.msra.mxu0 %v2602
    %3713 = vmatprep.subr.bf16.mxu0 %v2607
    %3714 = vmatpush1.bf16.msra.mxu0 %v2606
    %3715 = vmatprep.subr.bf16.mxu0 %v2611
    %3716 = vmatpush1.bf16.msra.mxu0 %v2610
    %3717 = vmatprep.subr.bf16.mxu0 %v2615
    %3718 = vmatpush1.bf16.msra.mxu0 %v2614
    %3719 = vmatprep.subr.bf16.mxu0 %v2619
    %3720 = vmatpush1.bf16.msra.mxu0 %v2618
    %3721 = vmatprep.subr.bf16.mxu0 %v2623
    %3722 = vmatpush1.bf16.msra.mxu0 %v2622
    %3723 = vmatprep.mubr.bf16.mxu0 %v679
    %3724 = vmatmul.mubr.bf16.gmra.mrb[0].mxu0 %v677
    %v3725 = vpop.f32.mrb[0].mxu0
    %v3726 = vadd.f32 %v3685, %v3725
    %v3727 = vpop.f32.mrb[0].mxu0
    %v3728 = vadd.f32 %v3687, %v3727
    %v3729 = vpop.f32.mrb[0].mxu0
    %v3730 = vpop.f32.mrb[0].mxu0
    %3731 = vdwg.mxu0
    %3732 = vmatprep.subr.bf16.mxu0 %v2627
    %3733 = vmatpush1.bf16.msra.mxu0 %v2626
    %3734 = vmatprep.subr.bf16.mxu0 %v2631
    %3735 = vmatpush1.bf16.msra.mxu0 %v2630
    %3736 = vmatprep.subr.bf16.mxu0 %v2635
    %3737 = vmatpush1.bf16.msra.mxu0 %v2634
    %3738 = vmatprep.subr.bf16.mxu0 %v2639
    %3739 = vmatpush1.bf16.msra.mxu0 %v2638
    %3740 = vmatprep.subr.bf16.mxu0 %v2643
    %3741 = vmatpush1.bf16.msra.mxu0 %v2642
    %3742 = vmatprep.subr.bf16.mxu0 %v2647
    %3743 = vmatpush1.bf16.msra.mxu0 %v2646
    %3744 = vmatprep.subr.bf16.mxu0 %v2651
    %3745 = vmatpush1.bf16.msra.mxu0 %v2650
    %3746 = vmatprep.subr.bf16.mxu0 %v2655
    %3747 = vmatpush1.bf16.msra.mxu0 %v2654
    %3748 = vmatprep.subr.bf16.mxu0 %v2659
    %3749 = vmatpush1.bf16.msra.mxu0 %v2658
    %3750 = vmatprep.subr.bf16.mxu0 %v2663
    %3751 = vmatpush1.bf16.msra.mxu0 %v2662
    %3752 = vmatprep.subr.bf16.mxu0 %v2667
    %3753 = vmatpush1.bf16.msra.mxu0 %v2666
    %3754 = vmatprep.subr.bf16.mxu0 %v2671
    %3755 = vmatpush1.bf16.msra.mxu0 %v2670
    %3756 = vmatprep.subr.bf16.mxu0 %v2675
    %3757 = vmatpush1.bf16.msra.mxu0 %v2674
    %3758 = vmatprep.subr.bf16.mxu0 %v2679
    %3759 = vmatpush1.bf16.msra.mxu0 %v2678
    %3760 = vmatprep.subr.bf16.mxu0 %v2683
    %3761 = vmatpush1.bf16.msra.mxu0 %v2682
    %3762 = vmatprep.subr.bf16.mxu0 %v2687
    %3763 = vmatpush1.bf16.msra.mxu0 %v2686
    %3764 = vmatprep.mubr.bf16.mxu0 %v676
    %3765 = vmatmul.mubr.bf16.gmra.mrb[0].mxu0 %v662
    %v3766 = vpop.f32.mrb[0].mxu0
    %v3767 = vadd.f32 %v3726, %v3766
    %v3768 = vpop.f32.mrb[0].mxu0
    %v3769 = vadd.f32 %v3728, %v3768
    %v3770 = vpop.f32.mrb[0].mxu0
    %v3771 = vpop.f32.mrb[0].mxu0
    %3772 = vdwg.mxu0
    %3773 = vmatprep.subr.bf16.mxu0 %v2691
    %3774 = vmatpush1.bf16.msra.mxu0 %v2690
    %3775 = vmatprep.subr.bf16.mxu0 %v2695
    %3776 = vmatpush1.bf16.msra.mxu0 %v2694
    %3777 = vmatprep.subr.bf16.mxu0 %v2699
    %3778 = vmatpush1.bf16.msra.mxu0 %v2698
    %3779 = vmatprep.subr.bf16.mxu0 %v2703
    %3780 = vmatpush1.bf16.msra.mxu0 %v2702
    %3781 = vmatprep.subr.bf16.mxu0 %v2707
    %3782 = vmatpush1.bf16.msra.mxu0 %v2706
    %3783 = vmatprep.subr.bf16.mxu0 %v2711
    %3784 = vmatpush1.bf16.msra.mxu0 %v2710
    %3785 = vmatprep.subr.bf16.mxu0 %v2715
    %3786 = vmatpush1.bf16.msra.mxu0 %v2714
    %3787 = vmatprep.subr.bf16.mxu0 %v2719
    %3788 = vmatpush1.bf16.msra.mxu0 %v2718
    %3789 = vmatprep.subr.bf16.mxu0 %v2723
    %3790 = vmatpush1.bf16.msra.mxu0 %v2722
    %3791 = vmatprep.subr.bf16.mxu0 %v2727
    %3792 = vmatpush1.bf16.msra.mxu0 %v2726
    %3793 = vmatprep.subr.bf16.mxu0 %v2731
    %3794 = vmatpush1.bf16.msra.mxu0 %v2730
    %3795 = vmatprep.subr.bf16.mxu0 %v2735
    %3796 = vmatpush1.bf16.msra.mxu0 %v2734
    %3797 = vmatprep.subr.bf16.mxu0 %v2739
    %3798 = vmatpush1.bf16.msra.mxu0 %v2738
    %3799 = vmatprep.subr.bf16.mxu0 %v2743
    %3800 = vmatpush1.bf16.msra.mxu0 %v2742
    %3801 = vmatprep.subr.bf16.mxu0 %v2747
    %3802 = vmatpush1.bf16.msra.mxu0 %v2746
    %3803 = vmatprep.subr.bf16.mxu0 %v2751
    %3804 = vmatpush1.bf16.msra.mxu0 %v2750
    %3805 = vmatprep.mubr.bf16.mxu0 %v680
    %3806 = vmatmul.mubr.bf16.gmra.mrb[0].mxu0 %v678
    %v3807 = vpop.f32.mrb[0].mxu0
    %v3808 = vadd.f32 %v3767, %v3807
    %v3809 = vpop.f32.mrb[0].mxu0
    %v3810 = vadd.f32 %v3769, %v3809
    %v3811 = vpop.f32.mrb[0].mxu0
    %v3812 = vpop.f32.mrb[0].mxu0
    %3813 = vdwg.mxu0
    %3814 = vmatprep.subr.bf16.mxu0 %v2755
    %3815 = vmatpush1.bf16.msra.mxu0 %v2754
    %3816 = vmatprep.subr.bf16.mxu0 %v2759
    %3817 = vmatpush1.bf16.msra.mxu0 %v2758
    %3818 = vmatprep.subr.bf16.mxu0 %v2763
    %3819 = vmatpush1.bf16.msra.mxu0 %v2762
    %3820 = vmatprep.subr.bf16.mxu0 %v2767
    %3821 = vmatpush1.bf16.msra.mxu0 %v2766
    %3822 = vmatprep.subr.bf16.mxu0 %v2771
    %3823 = vmatpush1.bf16.msra.mxu0 %v2770
    %3824 = vmatprep.subr.bf16.mxu0 %v2775
    %3825 = vmatpush1.bf16.msra.mxu0 %v2774
    %3826 = vmatprep.subr.bf16.mxu0 %v2779
    %3827 = vmatpush1.bf16.msra.mxu0 %v2778
    %3828 = vmatprep.subr.bf16.mxu0 %v2783
    %3829 = vmatpush1.bf16.msra.mxu0 %v2782
    %3830 = vmatprep.subr.bf16.mxu0 %v2787
    %3831 = vmatpush1.bf16.msra.mxu0 %v2786
    %3832 = vmatprep.subr.bf16.mxu0 %v2791
    %3833 = vmatpush1.bf16.msra.mxu0 %v2790
    %3834 = vmatprep.subr.bf16.mxu0 %v2795
    %3835 = vmatpush1.bf16.msra.mxu0 %v2794
    %3836 = vmatprep.subr.bf16.mxu0 %v2799
    %3837 = vmatpush1.bf16.msra.mxu0 %v2798
    %3838 = vmatprep.subr.bf16.mxu0 %v2803
    %3839 = vmatpush1.bf16.msra.mxu0 %v2802
    %3840 = vmatprep.subr.bf16.mxu0 %v2807
    %3841 = vmatpush1.bf16.msra.mxu0 %v2806
    %3842 = vmatprep.subr.bf16.mxu0 %v2811
    %3843 = vmatpush1.bf16.msra.mxu0 %v2810
    %3844 = vmatprep.subr.bf16.mxu0 %v2815
    %3845 = vmatpush1.bf16.msra.mxu0 %v2814
    %3846 = vmatprep.mubr.bf16.mxu0 %v718
    %3847 = vmatmul.mubr.bf16.gmra.mrb[0].mxu0 %v704
    %v3848 = vpop.f32.mrb[0].mxu0
    %v3849 = vadd.f32 %v3808, %v3848
    %v3850 = vpop.f32.mrb[0].mxu0
    %v3851 = vadd.f32 %v3810, %v3850
    %v3852 = vpop.f32.mrb[0].mxu0
    %v3853 = vpop.f32.mrb[0].mxu0
    %3854 = vdwg.mxu0
    %3855 = vmatprep.subr.bf16.mxu0 %v2819
    %3856 = vmatpush1.bf16.msra.mxu0 %v2818
    %3857 = vmatprep.subr.bf16.mxu0 %v2823
    %3858 = vmatpush1.bf16.msra.mxu0 %v2822
    %3859 = vmatprep.subr.bf16.mxu0 %v2827
    %3860 = vmatpush1.bf16.msra.mxu0 %v2826
    %3861 = vmatprep.subr.bf16.mxu0 %v2831
    %3862 = vmatpush1.bf16.msra.mxu0 %v2830
    %3863 = vmatprep.subr.bf16.mxu0 %v2835
    %3864 = vmatpush1.bf16.msra.mxu0 %v2834
    %3865 = vmatprep.subr.bf16.mxu0 %v2839
    %3866 = vmatpush1.bf16.msra.mxu0 %v2838
    %3867 = vmatprep.subr.bf16.mxu0 %v2843
    %3868 = vmatpush1.bf16.msra.mxu0 %v2842
    %3869 = vmatprep.subr.bf16.mxu0 %v2847
    %3870 = vmatpush1.bf16.msra.mxu0 %v2846
    %3871 = vmatprep.subr.bf16.mxu0 %v2851
    %3872 = vmatpush1.bf16.msra.mxu0 %v2850
    %3873 = vmatprep.subr.bf16.mxu0 %v2855
    %3874 = vmatpush1.bf16.msra.mxu0 %v2854
    %3875 = vmatprep.subr.bf16.mxu0 %v2859
    %3876 = vmatpush1.bf16.msra.mxu0 %v2858
    %3877 = vmatprep.subr.bf16.mxu0 %v2863
    %3878 = vmatpush1.bf16.msra.mxu0 %v2862
    %3879 = vmatprep.subr.bf16.mxu0 %v2867
    %3880 = vmatpush1.bf16.msra.mxu0 %v2866
    %3881 = vmatprep.subr.bf16.mxu0 %v2871
    %3882 = vmatpush1.bf16.msra.mxu0 %v2870
    %3883 = vmatprep.subr.bf16.mxu0 %v2875
    %3884 = vmatpush1.bf16.msra.mxu0 %v2874
    %3885 = vmatprep.subr.bf16.mxu0 %v2879
    %3886 = vmatpush1.bf16.msra.mxu0 %v2878
    %3887 = vmatprep.mubr.bf16.mxu0 %v728
    %3888 = vmatmul.mubr.bf16.gmra.mrb[0].mxu0 %v726
    %v3889 = vpop.f32.mrb[0].mxu0
    %v3890 = vadd.f32 %v3849, %v3889
    %v3891 = vpop.f32.mrb[0].mxu0
    %v3892 = vadd.f32 %v3851, %v3891
    %v3893 = vpop.f32.mrb[0].mxu0
    %v3894 = vpop.f32.mrb[0].mxu0
    %3895 = vdwg.mxu0
    %3896 = vmatprep.subr.bf16.mxu0 %v2883
    %3897 = vmatpush1.bf16.msra.mxu0 %v2882
    %3898 = vmatprep.subr.bf16.mxu0 %v2887
    %3899 = vmatpush1.bf16.msra.mxu0 %v2886
    %3900 = vmatprep.subr.bf16.mxu0 %v2891
    %3901 = vmatpush1.bf16.msra.mxu0 %v2890
    %3902 = vmatprep.subr.bf16.mxu0 %v2895
    %3903 = vmatpush1.bf16.msra.mxu0 %v2894
    %3904 = vmatprep.subr.bf16.mxu0 %v2899
    %3905 = vmatpush1.bf16.msra.mxu0 %v2898
    %3906 = vmatprep.subr.bf16.mxu0 %v2903
    %3907 = vmatpush1.bf16.msra.mxu0 %v2902
    %3908 = vmatprep.subr.bf16.mxu0 %v2907
    %3909 = vmatpush1.bf16.msra.mxu0 %v2906
    %3910 = vmatprep.subr.bf16.mxu0 %v2911
    %3911 = vmatpush1.bf16.msra.mxu0 %v2910
    %3912 = vmatprep.subr.bf16.mxu0 %v2915
    %3913 = vmatpush1.bf16.msra.mxu0 %v2914
    %3914 = vmatprep.subr.bf16.mxu0 %v2919
    %3915 = vmatpush1.bf16.msra.mxu0 %v2918
    %3916 = vmatprep.subr.bf16.mxu0 %v2923
    %3917 = vmatpush1.bf16.msra.mxu0 %v2922
    %3918 = vmatprep.subr.bf16.mxu0 %v2927
    %3919 = vmatpush1.bf16.msra.mxu0 %v2926
    %3920 = vmatprep.subr.bf16.mxu0 %v2931
    %3921 = vmatpush1.bf16.msra.mxu0 %v2930
    %3922 = vmatprep.subr.bf16.mxu0 %v2935
    %3923 = vmatpush1.bf16.msra.mxu0 %v2934
    %3924 = vmatprep.subr.bf16.mxu0 %v2939
    %3925 = vmatpush1.bf16.msra.mxu0 %v2938
    %3926 = vmatprep.subr.bf16.mxu0 %v2943
    %3927 = vmatpush1.bf16.msra.mxu0 %v2942
    %3928 = vmatprep.mubr.bf16.mxu0 %v725
    %3929 = vmatmul.mubr.bf16.gmra.mrb[0].mxu0 %v711
    %v3930 = vpop.f32.mrb[0].mxu0
    %v3931 = vadd.f32 %v3890, %v3930
    %v3932 = vpop.f32.mrb[0].mxu0
    %v3933 = vadd.f32 %v3892, %v3932
    %v3934 = vpop.f32.mrb[0].mxu0
    %v3935 = vpop.f32.mrb[0].mxu0
    %3936 = vdwg.mxu0
    %3937 = vmatprep.subr.bf16.mxu0 %v2947
    %3938 = vmatpush1.bf16.msra.mxu0 %v2946
    %3939 = vmatprep.subr.bf16.mxu0 %v2951
    %3940 = vmatpush1.bf16.msra.mxu0 %v2950
    %3941 = vmatprep.subr.bf16.mxu0 %v2955
    %3942 = vmatpush1.bf16.msra.mxu0 %v2954
    %3943 = vmatprep.subr.bf16.mxu0 %v2959
    %3944 = vmatpush1.bf16.msra.mxu0 %v2958
    %3945 = vmatprep.subr.bf16.mxu0 %v2963
    %3946 = vmatpush1.bf16.msra.mxu0 %v2962
    %3947 = vmatprep.subr.bf16.mxu0 %v2967
    %3948 = vmatpush1.bf16.msra.mxu0 %v2966
    %3949 = vmatprep.subr.bf16.mxu0 %v2971
    %3950 = vmatpush1.bf16.msra.mxu0 %v2970
    %3951 = vmatprep.subr.bf16.mxu0 %v2975
    %3952 = vmatpush1.bf16.msra.mxu0 %v2974
    %3953 = vmatprep.subr.bf16.mxu0 %v2979
    %3954 = vmatpush1.bf16.msra.mxu0 %v2978
    %3955 = vmatprep.subr.bf16.mxu0 %v2983
    %3956 = vmatpush1.bf16.msra.mxu0 %v2982
    %3957 = vmatprep.subr.bf16.mxu0 %v2987
    %3958 = vmatpush1.bf16.msra.mxu0 %v2986
    %3959 = vmatprep.subr.bf16.mxu0 %v2991
    %3960 = vmatpush1.bf16.msra.mxu0 %v2990
    %3961 = vmatprep.subr.bf16.mxu0 %v2995
    %3962 = vmatpush1.bf16.msra.mxu0 %v2994
    %3963 = vmatprep.subr.bf16.mxu0 %v2999
    %3964 = vmatpush1.bf16.msra.mxu0 %v2998
    %3965 = vmatprep.subr.bf16.mxu0 %v3003
    %3966 = vmatpush1.bf16.msra.mxu0 %v3002
    %3967 = vmatprep.subr.bf16.mxu0 %v3007
    %3968 = vmatpush1.bf16.msra.mxu0 %v3006
    %3969 = vmatprep.mubr.bf16.mxu0 %v729
    %3970 = vmatmul.mubr.bf16.gmra.mrb[0].mxu0 %v727
    %v3971 = vpop.f32.mrb[0].mxu0
    %v3972 = vadd.f32 %v3931, %v3971
    %v3973 = vpop.f32.mrb[0].mxu0
    %v3974 = vadd.f32 %v3933, %v3973
    %v3975 = vpop.f32.mrb[0].mxu0
    %v3976 = vpop.f32.mrb[0].mxu0
    %3977 = vdwg.mxu0
    %3978 = vmatprep.subr.bf16.mxu0 %v3011
    %3979 = vmatpush1.bf16.msra.mxu0 %v3010
    %3980 = vmatprep.subr.bf16.mxu0 %v3015
    %3981 = vmatpush1.bf16.msra.mxu0 %v3014
    %3982 = vmatprep.subr.bf16.mxu0 %v3019
    %3983 = vmatpush1.bf16.msra.mxu0 %v3018
    %3984 = vmatprep.subr.bf16.mxu0 %v3023
    %3985 = vmatpush1.bf16.msra.mxu0 %v3022
    %3986 = vmatprep.subr.bf16.mxu0 %v3027
    %3987 = vmatpush1.bf16.msra.mxu0 %v3026
    %3988 = vmatprep.subr.bf16.mxu0 %v3031
    %3989 = vmatpush1.bf16.msra.mxu0 %v3030
    %3990 = vmatprep.subr.bf16.mxu0 %v3035
    %3991 = vmatpush1.bf16.msra.mxu0 %v3034
    %3992 = vmatprep.subr.bf16.mxu0 %v3039
    %3993 = vmatpush1.bf16.msra.mxu0 %v3038
    %3994 = vmatprep.subr.bf16.mxu0 %v3043
    %3995 = vmatpush1.bf16.msra.mxu0 %v3042
    %3996 = vmatprep.subr.bf16.mxu0 %v3047
    %3997 = vmatpush1.bf16.msra.mxu0 %v3046
    %3998 = vmatprep.subr.bf16.mxu0 %v3051
    %3999 = vmatpush1.bf16.msra.mxu0 %v3050
    %4000 = vmatprep.subr.bf16.mxu0 %v3055
    %4001 = vmatpush1.bf16.msra.mxu0 %v3054
    %4002 = vmatprep.subr.bf16.mxu0 %v3059
    %4003 = vmatpush1.bf16.msra.mxu0 %v3058
    %4004 = vmatprep.subr.bf16.mxu0 %v3063
    %4005 = vmatpush1.bf16.msra.mxu0 %v3062
    %4006 = vmatprep.subr.bf16.mxu0 %v3067
    %4007 = vmatpush1.bf16.msra.mxu0 %v3066
    %4008 = vmatprep.subr.bf16.mxu0 %v3071
    %4009 = vmatpush1.bf16.msra.mxu0 %v3070
    %4010 = vmatprep.mubr.bf16.mxu0 %v751
    %4011 = vmatmul.mubr.bf16.gmra.mrb[0].mxu0 %v744
    %v4012 = vpop.f32.mrb[0].mxu0
    %v4013 = vadd.f32 %v3972, %v4012
    %v4014 = vpop.f32.mrb[0].mxu0
    %v4015 = vadd.f32 %v3974, %v4014
    %v4016 = vpop.f32.mrb[0].mxu0
    %v4017 = vpop.f32.mrb[0].mxu0
    %4018 = vdwg.mxu0
    %4019 = vmatprep.subr.bf16.mxu0 %v2501
    %4020 = vmatpush1.bf16.msra.mxu0 %v2500
    %4021 = vmatprep.subr.bf16.mxu0 %v2505
    %4022 = vmatpush1.bf16.msra.mxu0 %v2504
    %4023 = vmatprep.subr.bf16.mxu0 %v2509
    %4024 = vmatpush1.bf16.msra.mxu0 %v2508
    %4025 = vmatprep.subr.bf16.mxu0 %v2513
    %4026 = vmatpush1.bf16.msra.mxu0 %v2512
    %4027 = vmatprep.subr.bf16.mxu0 %v2517
    %4028 = vmatpush1.bf16.msra.mxu0 %v2516
    %4029 = vmatprep.subr.bf16.mxu0 %v2521
    %4030 = vmatpush1.bf16.msra.mxu0 %v2520
    %4031 = vmatprep.subr.bf16.mxu0 %v2525
    %4032 = vmatpush1.bf16.msra.mxu0 %v2524
    %4033 = vmatprep.subr.bf16.mxu0 %v2529
    %4034 = vmatpush1.bf16.msra.mxu0 %v2528
    %4035 = vmatprep.subr.bf16.mxu0 %v2533
    %4036 = vmatpush1.bf16.msra.mxu0 %v2532
    %4037 = vmatprep.subr.bf16.mxu0 %v2537
    %4038 = vmatpush1.bf16.msra.mxu0 %v2536
    %4039 = vmatprep.subr.bf16.mxu0 %v2541
    %4040 = vmatpush1.bf16.msra.mxu0 %v2540
    %4041 = vmatprep.subr.bf16.mxu0 %v2545
    %4042 = vmatpush1.bf16.msra.mxu0 %v2544
    %4043 = vmatprep.subr.bf16.mxu0 %v2549
    %4044 = vmatpush1.bf16.msra.mxu0 %v2548
    %4045 = vmatprep.subr.bf16.mxu0 %v2553
    %4046 = vmatpush1.bf16.msra.mxu0 %v2552
    %4047 = vmatprep.subr.bf16.mxu0 %v2557
    %4048 = vmatpush1.bf16.msra.mxu0 %v2556
    %4049 = vmatprep.subr.bf16.mxu0 %v2561
    %4050 = vmatpush1.bf16.msra.mxu0 %v2560
    %4051 = vmatprep.mubr.bf16.mxu0 %v669
    %4052 = vmatmul.mubr.bf16.gmra.mrb[0].mxu0 %v655
    %v4053 = vpop.f32.mrb[0].mxu0
    %v4054 = vadd.f32 %v620, %v4053
    %v4055 = vpop.f32.mrb[0].mxu0
    %v4056 = vadd.f32 %v624, %v4055
    %v4057 = vpop.f32.mrb[0].mxu0
    %v4058 = vpop.f32.mrb[0].mxu0
    %4059 = vdwg.mxu0
    %4060 = vmatprep.subr.bf16.mxu0 %v2565
    %4061 = vmatpush1.bf16.msra.mxu0 %v2564
    %4062 = vmatprep.subr.bf16.mxu0 %v2569
    %4063 = vmatpush1.bf16.msra.mxu0 %v2568
    %4064 = vmatprep.subr.bf16.mxu0 %v2573
    %4065 = vmatpush1.bf16.msra.mxu0 %v2572
    %4066 = vmatprep.subr.bf16.mxu0 %v2577
    %4067 = vmatpush1.bf16.msra.mxu0 %v2576
    %4068 = vmatprep.subr.bf16.mxu0 %v2581
    %4069 = vmatpush1.bf16.msra.mxu0 %v2580
    %4070 = vmatprep.subr.bf16.mxu0 %v2585
    %4071 = vmatpush1.bf16.msra.mxu0 %v2584
    %4072 = vmatprep.subr.bf16.mxu0 %v2589
    %4073 = vmatpush1.bf16.msra.mxu0 %v2588
    %4074 = vmatprep.subr.bf16.mxu0 %v2593
    %4075 = vmatpush1.bf16.msra.mxu0 %v2592
    %4076 = vmatprep.subr.bf16.mxu0 %v2597
    %4077 = vmatpush1.bf16.msra.mxu0 %v2596
    %4078 = vmatprep.subr.bf16.mxu0 %v2601
    %4079 = vmatpush1.bf16.msra.mxu0 %v2600
    %4080 = vmatprep.subr.bf16.mxu0 %v2605
    %4081 = vmatpush1.bf16.msra.mxu0 %v2604
    %4082 = vmatprep.subr.bf16.mxu0 %v2609
    %4083 = vmatpush1.bf16.msra.mxu0 %v2608
    %4084 = vmatprep.subr.bf16.mxu0 %v2613
    %4085 = vmatpush1.bf16.msra.mxu0 %v2612
    %4086 = vmatprep.subr.bf16.mxu0 %v2617
    %4087 = vmatpush1.bf16.msra.mxu0 %v2616
    %4088 = vmatprep.subr.bf16.mxu0 %v2621
    %4089 = vmatpush1.bf16.msra.mxu0 %v2620
    %4090 = vmatprep.subr.bf16.mxu0 %v2625
    %4091 = vmatpush1.bf16.msra.mxu0 %v2624
    %4092 = vmatprep.mubr.bf16.mxu0 %v679
    %4093 = vmatmul.mubr.bf16.gmra.mrb[0].mxu0 %v677
    %v4094 = vpop.f32.mrb[0].mxu0
    %v4095 = vadd.f32 %v4054, %v4094
    %v4096 = vpop.f32.mrb[0].mxu0
    %v4097 = vadd.f32 %v4056, %v4096
    %v4098 = vpop.f32.mrb[0].mxu0
    %v4099 = vpop.f32.mrb[0].mxu0
    %4100 = vdwg.mxu0
    %4101 = vmatprep.subr.bf16.mxu0 %v2629
    %4102 = vmatpush1.bf16.msra.mxu0 %v2628
    %4103 = vmatprep.subr.bf16.mxu0 %v2633
    %4104 = vmatpush1.bf16.msra.mxu0 %v2632
    %4105 = vmatprep.subr.bf16.mxu0 %v2637
    %4106 = vmatpush1.bf16.msra.mxu0 %v2636
    %4107 = vmatprep.subr.bf16.mxu0 %v2641
    %4108 = vmatpush1.bf16.msra.mxu0 %v2640
    %4109 = vmatprep.subr.bf16.mxu0 %v2645
    %4110 = vmatpush1.bf16.msra.mxu0 %v2644
    %4111 = vmatprep.subr.bf16.mxu0 %v2649
    %4112 = vmatpush1.bf16.msra.mxu0 %v2648
    %4113 = vmatprep.subr.bf16.mxu0 %v2653
    %4114 = vmatpush1.bf16.msra.mxu0 %v2652
    %4115 = vmatprep.subr.bf16.mxu0 %v2657
    %4116 = vmatpush1.bf16.msra.mxu0 %v2656
    %4117 = vmatprep.subr.bf16.mxu0 %v2661
    %4118 = vmatpush1.bf16.msra.mxu0 %v2660
    %4119 = vmatprep.subr.bf16.mxu0 %v2665
    %4120 = vmatpush1.bf16.msra.mxu0 %v2664
    %4121 = vmatprep.subr.bf16.mxu0 %v2669
    %4122 = vmatpush1.bf16.msra.mxu0 %v2668
    %4123 = vmatprep.subr.bf16.mxu0 %v2673
    %4124 = vmatpush1.bf16.msra.mxu0 %v2672
    %4125 = vmatprep.subr.bf16.mxu0 %v2677
    %4126 = vmatpush1.bf16.msra.mxu0 %v2676
    %4127 = vmatprep.subr.bf16.mxu0 %v2681
    %4128 = vmatpush1.bf16.msra.mxu0 %v2680
    %4129 = vmatprep.subr.bf16.mxu0 %v2685
    %4130 = vmatpush1.bf16.msra.mxu0 %v2684
    %4131 = vmatprep.subr.bf16.mxu0 %v2689
    %4132 = vmatpush1.bf16.msra.mxu0 %v2688
    %4133 = vmatprep.mubr.bf16.mxu0 %v676
    %4134 = vmatmul.mubr.bf16.gmra.mrb[0].mxu0 %v662
    %v4135 = vpop.f32.mrb[0].mxu0
    %v4136 = vadd.f32 %v4095, %v4135
    %v4137 = vpop.f32.mrb[0].mxu0
    %v4138 = vadd.f32 %v4097, %v4137
    %v4139 = vpop.f32.mrb[0].mxu0
    %v4140 = vpop.f32.mrb[0].mxu0
    %4141 = vdwg.mxu0
    %4142 = vmatprep.subr.bf16.mxu0 %v2693
    %4143 = vmatpush1.bf16.msra.mxu0 %v2692
    %4144 = vmatprep.subr.bf16.mxu0 %v2697
    %4145 = vmatpush1.bf16.msra.mxu0 %v2696
    %4146 = vmatprep.subr.bf16.mxu0 %v2701
    %4147 = vmatpush1.bf16.msra.mxu0 %v2700
    %4148 = vmatprep.subr.bf16.mxu0 %v2705
    %4149 = vmatpush1.bf16.msra.mxu0 %v2704
    %4150 = vmatprep.subr.bf16.mxu0 %v2709
    %4151 = vmatpush1.bf16.msra.mxu0 %v2708
    %4152 = vmatprep.subr.bf16.mxu0 %v2713
    %4153 = vmatpush1.bf16.msra.mxu0 %v2712
    %4154 = vmatprep.subr.bf16.mxu0 %v2717
    %4155 = vmatpush1.bf16.msra.mxu0 %v2716
    %4156 = vmatprep.subr.bf16.mxu0 %v2721
    %4157 = vmatpush1.bf16.msra.mxu0 %v2720
    %4158 = vmatprep.subr.bf16.mxu0 %v2725
    %4159 = vmatpush1.bf16.msra.mxu0 %v2724
    %4160 = vmatprep.subr.bf16.mxu0 %v2729
    %4161 = vmatpush1.bf16.msra.mxu0 %v2728
    %4162 = vmatprep.subr.bf16.mxu0 %v2733
    %4163 = vmatpush1.bf16.msra.mxu0 %v2732
    %4164 = vmatprep.subr.bf16.mxu0 %v2737
    %4165 = vmatpush1.bf16.msra.mxu0 %v2736
    %4166 = vmatprep.subr.bf16.mxu0 %v2741
    %4167 = vmatpush1.bf16.msra.mxu0 %v2740
    %4168 = vmatprep.subr.bf16.mxu0 %v2745
    %4169 = vmatpush1.bf16.msra.mxu0 %v2744
    %4170 = vmatprep.subr.bf16.mxu0 %v2749
    %4171 = vmatpush1.bf16.msra.mxu0 %v2748
    %4172 = vmatprep.subr.bf16.mxu0 %v2753
    %4173 = vmatpush1.bf16.msra.mxu0 %v2752
    %4174 = vmatprep.mubr.bf16.mxu0 %v680
    %4175 = vmatmul.mubr.bf16.gmra.mrb[0].mxu0 %v678
    %v4176 = vpop.f32.mrb[0].mxu0
    %v4177 = vadd.f32 %v4136, %v4176
    %v4178 = vpop.f32.mrb[0].mxu0
    %v4179 = vadd.f32 %v4138, %v4178
    %v4180 = vpop.f32.mrb[0].mxu0
    %v4181 = vpop.f32.mrb[0].mxu0
    %4182 = vdwg.mxu0
    %4183 = vmatprep.subr.bf16.mxu0 %v2757
    %4184 = vmatpush1.bf16.msra.mxu0 %v2756
    %4185 = vmatprep.subr.bf16.mxu0 %v2761
    %4186 = vmatpush1.bf16.msra.mxu0 %v2760
    %4187 = vmatprep.subr.bf16.mxu0 %v2765
    %4188 = vmatpush1.bf16.msra.mxu0 %v2764
    %4189 = vmatprep.subr.bf16.mxu0 %v2769
    %4190 = vmatpush1.bf16.msra.mxu0 %v2768
    %4191 = vmatprep.subr.bf16.mxu0 %v2773
    %4192 = vmatpush1.bf16.msra.mxu0 %v2772
    %4193 = vmatprep.subr.bf16.mxu0 %v2777
    %4194 = vmatpush1.bf16.msra.mxu0 %v2776
    %4195 = vmatprep.subr.bf16.mxu0 %v2781
    %4196 = vmatpush1.bf16.msra.mxu0 %v2780
    %4197 = vmatprep.subr.bf16.mxu0 %v2785
    %4198 = vmatpush1.bf16.msra.mxu0 %v2784
    %4199 = vmatprep.subr.bf16.mxu0 %v2789
    %4200 = vmatpush1.bf16.msra.mxu0 %v2788
    %4201 = vmatprep.subr.bf16.mxu0 %v2793
    %4202 = vmatpush1.bf16.msra.mxu0 %v2792
    %4203 = vmatprep.subr.bf16.mxu0 %v2797
    %4204 = vmatpush1.bf16.msra.mxu0 %v2796
    %4205 = vmatprep.subr.bf16.mxu0 %v2801
    %4206 = vmatpush1.bf16.msra.mxu0 %v2800
    %4207 = vmatprep.subr.bf16.mxu0 %v2805
    %4208 = vmatpush1.bf16.msra.mxu0 %v2804
    %4209 = vmatprep.subr.bf16.mxu0 %v2809
    %4210 = vmatpush1.bf16.msra.mxu0 %v2808
    %4211 = vmatprep.subr.bf16.mxu0 %v2813
    %4212 = vmatpush1.bf16.msra.mxu0 %v2812
    %4213 = vmatprep.subr.bf16.mxu0 %v2817
    %4214 = vmatpush1.bf16.msra.mxu0 %v2816
    %4215 = vmatprep.mubr.bf16.mxu0 %v718
    %4216 = vmatmul.mubr.bf16.gmra.mrb[0].mxu0 %v704
    %v4217 = vpop.f32.mrb[0].mxu0
    %v4218 = vadd.f32 %v4177, %v4217
    %v4219 = vpop.f32.mrb[0].mxu0
    %v4220 = vadd.f32 %v4179, %v4219
    %v4221 = vpop.f32.mrb[0].mxu0
    %v4222 = vpop.f32.mrb[0].mxu0
    %4223 = vdwg.mxu0
    %4224 = vmatprep.subr.bf16.mxu0 %v2821
    %4225 = vmatpush1.bf16.msra.mxu0 %v2820
    %4226 = vmatprep.subr.bf16.mxu0 %v2825
    %4227 = vmatpush1.bf16.msra.mxu0 %v2824
    %4228 = vmatprep.subr.bf16.mxu0 %v2829
    %4229 = vmatpush1.bf16.msra.mxu0 %v2828
    %4230 = vmatprep.subr.bf16.mxu0 %v2833
    %4231 = vmatpush1.bf16.msra.mxu0 %v2832
    %4232 = vmatprep.subr.bf16.mxu0 %v2837
    %4233 = vmatpush1.bf16.msra.mxu0 %v2836
    %4234 = vmatprep.subr.bf16.mxu0 %v2841
    %4235 = vmatpush1.bf16.msra.mxu0 %v2840
    %4236 = vmatprep.subr.bf16.mxu0 %v2845
    %4237 = vmatpush1.bf16.msra.mxu0 %v2844
    %4238 = vmatprep.subr.bf16.mxu0 %v2849
    %4239 = vmatpush1.bf16.msra.mxu0 %v2848
    %4240 = vmatprep.subr.bf16.mxu0 %v2853
    %4241 = vmatpush1.bf16.msra.mxu0 %v2852
    %4242 = vmatprep.subr.bf16.mxu0 %v2857
    %4243 = vmatpush1.bf16.msra.mxu0 %v2856
    %4244 = vmatprep.subr.bf16.mxu0 %v2861
    %4245 = vmatpush1.bf16.msra.mxu0 %v2860
    %4246 = vmatprep.subr.bf16.mxu0 %v2865
    %4247 = vmatpush1.bf16.msra.mxu0 %v2864
    %4248 = vmatprep.subr.bf16.mxu0 %v2869
    %4249 = vmatpush1.bf16.msra.mxu0 %v2868
    %4250 = vmatprep.subr.bf16.mxu0 %v2873
    %4251 = vmatpush1.bf16.msra.mxu0 %v2872
    %4252 = vmatprep.subr.bf16.mxu0 %v2877
    %4253 = vmatpush1.bf16.msra.mxu0 %v2876
    %4254 = vmatprep.subr.bf16.mxu0 %v2881
    %4255 = vmatpush1.bf16.msra.mxu0 %v2880
    %4256 = vmatprep.mubr.bf16.mxu0 %v728
    %4257 = vmatmul.mubr.bf16.gmra.mrb[0].mxu0 %v726
    %v4258 = vpop.f32.mrb[0].mxu0
    %v4259 = vadd.f32 %v4218, %v4258
    %v4260 = vpop.f32.mrb[0].mxu0
    %v4261 = vadd.f32 %v4220, %v4260
    %v4262 = vpop.f32.mrb[0].mxu0
    %v4263 = vpop.f32.mrb[0].mxu0
    %4264 = vdwg.mxu0
    %4265 = vmatprep.subr.bf16.mxu0 %v2885
    %4266 = vmatpush1.bf16.msra.mxu0 %v2884
    %4267 = vmatprep.subr.bf16.mxu0 %v2889
    %4268 = vmatpush1.bf16.msra.mxu0 %v2888
    %4269 = vmatprep.subr.bf16.mxu0 %v2893
    %4270 = vmatpush1.bf16.msra.mxu0 %v2892
    %4271 = vmatprep.subr.bf16.mxu0 %v2897
    %4272 = vmatpush1.bf16.msra.mxu0 %v2896
    %4273 = vmatprep.subr.bf16.mxu0 %v2901
    %4274 = vmatpush1.bf16.msra.mxu0 %v2900
    %4275 = vmatprep.subr.bf16.mxu0 %v2905
    %4276 = vmatpush1.bf16.msra.mxu0 %v2904
    %4277 = vmatprep.subr.bf16.mxu0 %v2909
    %4278 = vmatpush1.bf16.msra.mxu0 %v2908
    %4279 = vmatprep.subr.bf16.mxu0 %v2913
    %4280 = vmatpush1.bf16.msra.mxu0 %v2912
    %4281 = vmatprep.subr.bf16.mxu0 %v2917
    %4282 = vmatpush1.bf16.msra.mxu0 %v2916
    %4283 = vmatprep.subr.bf16.mxu0 %v2921
    %4284 = vmatpush1.bf16.msra.mxu0 %v2920
    %4285 = vmatprep.subr.bf16.mxu0 %v2925
    %4286 = vmatpush1.bf16.msra.mxu0 %v2924
    %4287 = vmatprep.subr.bf16.mxu0 %v2929
    %4288 = vmatpush1.bf16.msra.mxu0 %v2928
    %4289 = vmatprep.subr.bf16.mxu0 %v2933
    %4290 = vmatpush1.bf16.msra.mxu0 %v2932
    %4291 = vmatprep.subr.bf16.mxu0 %v2937
    %4292 = vmatpush1.bf16.msra.mxu0 %v2936
    %4293 = vmatprep.subr.bf16.mxu0 %v2941
    %4294 = vmatpush1.bf16.msra.mxu0 %v2940
    %4295 = vmatprep.subr.bf16.mxu0 %v2945
    %4296 = vmatpush1.bf16.msra.mxu0 %v2944
    %4297 = vmatprep.mubr.bf16.mxu0 %v725
    %4298 = vmatmul.mubr.bf16.gmra.mrb[0].mxu0 %v711
    %v4299 = vpop.f32.mrb[0].mxu0
    %v4300 = vadd.f32 %v4259, %v4299
    %v4301 = vpop.f32.mrb[0].mxu0
    %v4302 = vadd.f32 %v4261, %v4301
    %v4303 = vpop.f32.mrb[0].mxu0
    %v4304 = vpop.f32.mrb[0].mxu0
    %4305 = vdwg.mxu0
    %4306 = vmatprep.subr.bf16.mxu0 %v2949
    %4307 = vmatpush1.bf16.msra.mxu0 %v2948
    %4308 = vmatprep.subr.bf16.mxu0 %v2953
    %4309 = vmatpush1.bf16.msra.mxu0 %v2952
    %4310 = vmatprep.subr.bf16.mxu0 %v2957
    %4311 = vmatpush1.bf16.msra.mxu0 %v2956
    %4312 = vmatprep.subr.bf16.mxu0 %v2961
    %4313 = vmatpush1.bf16.msra.mxu0 %v2960
    %4314 = vmatprep.subr.bf16.mxu0 %v2965
    %4315 = vmatpush1.bf16.msra.mxu0 %v2964
    %4316 = vmatprep.subr.bf16.mxu0 %v2969
    %4317 = vmatpush1.bf16.msra.mxu0 %v2968
    %4318 = vmatprep.subr.bf16.mxu0 %v2973
    %4319 = vmatpush1.bf16.msra.mxu0 %v2972
    %4320 = vmatprep.subr.bf16.mxu0 %v2977
    %4321 = vmatpush1.bf16.msra.mxu0 %v2976
    %4322 = vmatprep.subr.bf16.mxu0 %v2981
    %4323 = vmatpush1.bf16.msra.mxu0 %v2980
    %4324 = vmatprep.subr.bf16.mxu0 %v2985
    %4325 = vmatpush1.bf16.msra.mxu0 %v2984
    %4326 = vmatprep.subr.bf16.mxu0 %v2989
    %4327 = vmatpush1.bf16.msra.mxu0 %v2988
    %4328 = vmatprep.subr.bf16.mxu0 %v2993
    %4329 = vmatpush1.bf16.msra.mxu0 %v2992
    %4330 = vmatprep.subr.bf16.mxu0 %v2997
    %4331 = vmatpush1.bf16.msra.mxu0 %v2996
    %4332 = vmatprep.subr.bf16.mxu0 %v3001
    %4333 = vmatpush1.bf16.msra.mxu0 %v3000
    %4334 = vmatprep.subr.bf16.mxu0 %v3005
    %4335 = vmatpush1.bf16.msra.mxu0 %v3004
    %4336 = vmatprep.subr.bf16.mxu0 %v3009
    %4337 = vmatpush1.bf16.msra.mxu0 %v3008
    %4338 = vmatprep.mubr.bf16.mxu0 %v729
    %4339 = vmatmul.mubr.bf16.gmra.mrb[0].mxu0 %v727
    %v4340 = vpop.f32.mrb[0].mxu0
    %v4341 = vadd.f32 %v4300, %v4340
    %v4342 = vpop.f32.mrb[0].mxu0
    %v4343 = vadd.f32 %v4302, %v4342
    %v4344 = vpop.f32.mrb[0].mxu0
    %v4345 = vpop.f32.mrb[0].mxu0
    %4346 = vdwg.mxu0
    %4347 = vmatprep.subr.bf16.mxu0 %v3013
    %4348 = vmatpush1.bf16.msra.mxu0 %v3012
    %4349 = vmatprep.subr.bf16.mxu0 %v3017
    %4350 = vmatpush1.bf16.msra.mxu0 %v3016
    %4351 = vmatprep.subr.bf16.mxu0 %v3021
    %4352 = vmatpush1.bf16.msra.mxu0 %v3020
    %4353 = vmatprep.subr.bf16.mxu0 %v3025
    %4354 = vmatpush1.bf16.msra.mxu0 %v3024
    %4355 = vmatprep.subr.bf16.mxu0 %v3029
    %4356 = vmatpush1.bf16.msra.mxu0 %v3028
    %4357 = vmatprep.subr.bf16.mxu0 %v3033
    %4358 = vmatpush1.bf16.msra.mxu0 %v3032
    %4359 = vmatprep.subr.bf16.mxu0 %v3037
    %4360 = vmatpush1.bf16.msra.mxu0 %v3036
    %4361 = vmatprep.subr.bf16.mxu0 %v3041
    %4362 = vmatpush1.bf16.msra.mxu0 %v3040
    %4363 = vmatprep.subr.bf16.mxu0 %v3045
    %4364 = vmatpush1.bf16.msra.mxu0 %v3044
    %4365 = vmatprep.subr.bf16.mxu0 %v3049
    %4366 = vmatpush1.bf16.msra.mxu0 %v3048
    %4367 = vmatprep.subr.bf16.mxu0 %v3053
    %4368 = vmatpush1.bf16.msra.mxu0 %v3052
    %4369 = vmatprep.subr.bf16.mxu0 %v3057
    %4370 = vmatpush1.bf16.msra.mxu0 %v3056
    %4371 = vmatprep.subr.bf16.mxu0 %v3061
    %4372 = vmatpush1.bf16.msra.mxu0 %v3060
    %4373 = vmatprep.subr.bf16.mxu0 %v3065
    %4374 = vmatpush1.bf16.msra.mxu0 %v3064
    %4375 = vmatprep.subr.bf16.mxu0 %v3069
    %4376 = vmatpush1.bf16.msra.mxu0 %v3068
    %4377 = vmatprep.subr.bf16.mxu0 %v3073
    %4378 = vmatpush1.bf16.msra.mxu0 %v3072
    %4379 = vmatprep.mubr.bf16.mxu0 %v751
    %4380 = vmatmul.mubr.bf16.gmra.mrb[0].mxu0 %v744
    %v4381 = vpop.f32.mrb[0].mxu0
    %v4382 = vadd.f32 %v4341, %v4381
    %v4383 = vpop.f32.mrb[0].mxu0
    %v4384 = vadd.f32 %v4343, %v4383
    %v4385 = vpop.f32.mrb[0].mxu0
    %v4386 = vpop.f32.mrb[0].mxu0
    %4387 = vdwg.mxu0
    %v4388 = vmax.f32 %v4013, 0.0
    %v4389 = vmax.f32 %v4015, 0.0
    %v4390 = vmax.f32 %v4382, 0.0
    %v4391 = vmax.f32 %v4384, 0.0
    %v4392 = vpack.c.bf16 %v4388, %v4388
    %v4393 = vpack.c.bf16 %v4389, %v4389
    %v4394 = vpack.c.bf16 %v4390, %v4390
    %v4395 = vpack.c.bf16 %v4391, %v4391
    %v4396 = vld [vmem:[%s3] sm:$0xf]
    %v4397 = vld [vmem:[%s3 + $0x4] sm:$0xf]
    %v4398 = vld [vmem:[%s3 + $0x8] sm:$0xf]
    %v4399 = vld [vmem:[%s3 + $0xc] sm:$0xf]
    %v4400 = vld [vmem:[%s3 + $0x10] sm:$0xf]
    %v4401 = vld [vmem:[%s3 + $0x14] sm:$0xf]
    %v4402 = vld [vmem:[%s3 + $0x18] sm:$0xf]
    %v4403 = vld [vmem:[%s3 + $0x1c] sm:$0xf]
    %v4404 = vld [vmem:[%s3 + $0x20] sm:$0xf]
    %v4405 = vld [vmem:[%s3 + $0x24] sm:$0xf]
    %v4406 = vld [vmem:[%s3 + $0x28] sm:$0xf]
    %v4407 = vld [vmem:[%s3 + $0x2c] sm:$0xf]
    %v4408 = vld [vmem:[%s3 + $0x30] sm:$0xf]
    %v4409 = vld [vmem:[%s3 + $0x34] sm:$0xf]
    %v4410 = vld [vmem:[%s3 + $0x38] sm:$0xf]
    %v4411 = vld [vmem:[%s3 + $0x3c] sm:$0xf]
    %v4412 = vld [vmem:[%s3 + $0x40] sm:$0xf]
    %v4413 = vld [vmem:[%s3 + $0x44] sm:$0xf]
    %v4414 = vld [vmem:[%s3 + $0x48] sm:$0xf]
    %v4415 = vld [vmem:[%s3 + $0x4c] sm:$0xf]
    %v4416 = vld [vmem:[%s3 + $0x50] sm:$0xf]
    %v4417 = vld [vmem:[%s3 + $0x54] sm:$0xf]
    %v4418 = vld [vmem:[%s3 + $0x58] sm:$0xf]
    %v4419 = vld [vmem:[%s3 + $0x5c] sm:$0xf]
    %v4420 = vld [vmem:[%s3 + $0x60] sm:$0xf]
    %v4421 = vld [vmem:[%s3 + $0x64] sm:$0xf]
    %v4422 = vld [vmem:[%s3 + $0x68] sm:$0xf]
    %v4423 = vld [vmem:[%s3 + $0x6c] sm:$0xf]
    %v4424 = vld [vmem:[%s3 + $0x70] sm:$0xf]
    %v4425 = vld [vmem:[%s3 + $0x74] sm:$0xf]
    %v4426 = vld [vmem:[%s3 + $0x78] sm:$0xf]
    %v4427 = vld [vmem:[%s3 + $0x7c] sm:$0xf]
    %v4428 = vld [vmem:[%s3 + $0x80] sm:$0xf]
    %v4429 = vld [vmem:[%s3 + $0x84] sm:$0xf]
    %v4430 = vld [vmem:[%s3 + $0x88] sm:$0xf]
    %v4431 = vld [vmem:[%s3 + $0x8c] sm:$0xf]
    %v4432 = vld [vmem:[%s3 + $0x90] sm:$0xf]
    %v4433 = vld [vmem:[%s3 + $0x94] sm:$0xf]
    %v4434 = vld [vmem:[%s3 + $0x98] sm:$0xf]
    %v4435 = vld [vmem:[%s3 + $0x9c] sm:$0xf]
    %v4436 = vld [vmem:[%s3 + $0xa0] sm:$0xf]
    %v4437 = vld [vmem:[%s3 + $0xa4] sm:$0xf]
    %v4438 = vld [vmem:[%s3 + $0xa8] sm:$0xf]
    %v4439 = vld [vmem:[%s3 + $0xac] sm:$0xf]
    %v4440 = vld [vmem:[%s3 + $0xb0] sm:$0xf]
    %v4441 = vld [vmem:[%s3 + $0xb4] sm:$0xf]
    %v4442 = vld [vmem:[%s3 + $0xb8] sm:$0xf]
    %v4443 = vld [vmem:[%s3 + $0xbc] sm:$0xf]
    %v4444 = vld [vmem:[%s3 + $0xc0] sm:$0xf]
    %v4445 = vld [vmem:[%s3 + $0xc4] sm:$0xf]
    %v4446 = vld [vmem:[%s3 + $0xc8] sm:$0xf]
    %v4447 = vld [vmem:[%s3 + $0xcc] sm:$0xf]
    %v4448 = vld [vmem:[%s3 + $0xd0] sm:$0xf]
    %v4449 = vld [vmem:[%s3 + $0xd4] sm:$0xf]
    %v4450 = vld [vmem:[%s3 + $0xd8] sm:$0xf]
    %v4451 = vld [vmem:[%s3 + $0xdc] sm:$0xf]
    %v4452 = vld [vmem:[%s3 + $0xe0] sm:$0xf]
    %v4453 = vld [vmem:[%s3 + $0xe4] sm:$0xf]
    %v4454 = vld [vmem:[%s3 + $0xe8] sm:$0xf]
    %v4455 = vld [vmem:[%s3 + $0xec] sm:$0xf]
    %v4456 = vld [vmem:[%s3 + $0xf0] sm:$0xf]
    %v4457 = vld [vmem:[%s3 + $0xf4] sm:$0xf]
    %v4458 = vld [vmem:[%s3 + $0xf8] sm:$0x3]
    %v4459 = vld [vmem:[%s4] sm:$0x1]
    %v4461 = vlaneseq
    %v4462 = vshrl.u32 %v4461, 7
    %v4463 = vsub.s32 0, %v4462
    %v4464 = vrot.slane %v4459, %v4463
    %v4529 = vunpack.c.l.b16 %v4396
    %v4530 = vunpack.c.l.b16 %v4397
    %v4531 = vunpack.c.l.b16 %v4398
    %v4532 = vunpack.c.l.b16 %v4399
    %v4533 = vunpack.c.l.b16 %v4400
    %v4534 = vunpack.c.l.b16 %v4401
    %v4535 = vunpack.c.l.b16 %v4402
    %v4536 = vunpack.c.l.b16 %v4403
    %v4537 = vunpack.c.l.b16 %v4404
    %v4538 = vunpack.c.l.b16 %v4405
    %v4539 = vunpack.c.l.b16 %v4406
    %v4540 = vunpack.c.l.b16 %v4407
    %v4541 = vunpack.c.l.b16 %v4408
    %v4542 = vunpack.c.l.b16 %v4409
    %v4543 = vunpack.c.l.b16 %v4410
    %v4544 = vunpack.c.l.b16 %v4411
    %v4545 = vunpack.c.l.b16 %v4412
    %v4546 = vunpack.c.l.b16 %v4413
    %v4547 = vunpack.c.l.b16 %v4414
    %v4548 = vunpack.c.l.b16 %v4415
    %v4549 = vunpack.c.l.b16 %v4416
    %v4550 = vunpack.c.l.b16 %v4417
    %v4551 = vunpack.c.l.b16 %v4418
    %v4552 = vunpack.c.l.b16 %v4419
    %v4553 = vunpack.c.l.b16 %v4420
    %v4554 = vunpack.c.l.b16 %v4421
    %v4555 = vunpack.c.l.b16 %v4422
    %v4556 = vunpack.c.l.b16 %v4423
    %v4557 = vunpack.c.l.b16 %v4424
    %v4558 = vunpack.c.l.b16 %v4425
    %v4559 = vunpack.c.l.b16 %v4426
    %v4560 = vunpack.c.l.b16 %v4427
    %v4561 = vunpack.c.l.b16 %v4428
    %v4562 = vunpack.c.l.b16 %v4429
    %v4563 = vunpack.c.l.b16 %v4430
    %v4564 = vunpack.c.l.b16 %v4431
    %v4565 = vunpack.c.l.b16 %v4432
    %v4566 = vunpack.c.l.b16 %v4433
    %v4567 = vunpack.c.l.b16 %v4434
    %v4568 = vunpack.c.l.b16 %v4435
    %v4569 = vunpack.c.l.b16 %v4436
    %v4570 = vunpack.c.l.b16 %v4437
    %v4571 = vunpack.c.l.b16 %v4438
    %v4572 = vunpack.c.l.b16 %v4439
    %v4573 = vunpack.c.l.b16 %v4440
    %v4574 = vunpack.c.l.b16 %v4441
    %v4575 = vunpack.c.l.b16 %v4442
    %v4576 = vunpack.c.l.b16 %v4443
    %v4577 = vunpack.c.l.b16 %v4444
    %v4578 = vunpack.c.l.b16 %v4445
    %v4579 = vunpack.c.l.b16 %v4446
    %v4580 = vunpack.c.l.b16 %v4447
    %v4581 = vunpack.c.l.b16 %v4448
    %v4582 = vunpack.c.l.b16 %v4449
    %v4583 = vunpack.c.l.b16 %v4450
    %v4584 = vunpack.c.l.b16 %v4451
    %v4585 = vunpack.c.l.b16 %v4452
    %v4586 = vunpack.c.l.b16 %v4453
    %v4587 = vunpack.c.l.b16 %v4454
    %v4588 = vunpack.c.l.b16 %v4455
    %v4589 = vunpack.c.l.b16 %v4456
    %v4590 = vunpack.c.l.b16 %v4457
    %v4591 = vunpack.c.l.b16 %v4458
    %v4592 = vpack.c.b16 %v4530, %v4529
    %v4593 = vpack.c.b16 %v4532, %v4531
    %v4594 = vpack.c.b16 %v4534, %v4533
    %v4595 = vpack.c.b16 %v4536, %v4535
    %v4596 = vpack.c.b16 %v4538, %v4537
    %v4597 = vpack.c.b16 %v4540, %v4539
    %v4598 = vpack.c.b16 %v4542, %v4541
    %v4599 = vpack.c.b16 %v4544, %v4543
    %v4600 = vpack.c.b16 %v4546, %v4545
    %v4601 = vpack.c.b16 %v4548, %v4547
    %v4602 = vpack.c.b16 %v4550, %v4549
    %v4603 = vpack.c.b16 %v4552, %v4551
    %v4604 = vpack.c.b16 %v4554, %v4553
    %v4605 = vpack.c.b16 %v4556, %v4555
    %v4606 = vpack.c.b16 %v4558, %v4557
    %v4607 = vpack.c.b16 %v4560, %v4559
    %v4608 = vpack.c.b16 %v4562, %v4561
    %v4609 = vpack.c.b16 %v4564, %v4563
    %v4610 = vpack.c.b16 %v4566, %v4565
    %v4611 = vpack.c.b16 %v4568, %v4567
    %v4612 = vpack.c.b16 %v4570, %v4569
    %v4613 = vpack.c.b16 %v4572, %v4571
    %v4614 = vpack.c.b16 %v4574, %v4573
    %v4615 = vpack.c.b16 %v4576, %v4575
    %v4616 = vpack.c.b16 %v4578, %v4577
    %v4617 = vpack.c.b16 %v4580, %v4579
    %v4618 = vpack.c.b16 %v4582, %v4581
    %v4619 = vpack.c.b16 %v4584, %v4583
    %v4620 = vpack.c.b16 %v4586, %v4585
    %v4621 = vpack.c.b16 %v4588, %v4587
    %v4622 = vpack.c.b16 %v4590, %v4589
    %v4623 = vpack.c.b16 %v4591, %v4591
    %vm4655 = vcmask 949248
    %v4657 = vsel %vm4655, %v4395, 0
    %vm4659 = vcmask 1041408
    %v4661 = vsel %vm4659, %v4623, 0
    %4663 = vmatprep.subr.bf16.mxu0 0
    %4664 = vmatpush1.bf16.msra.mxu0 %v4592
    %4665 = vmatprep.subr.bf16.mxu0 0
    %4666 = vmatpush1.bf16.msra.mxu0 %v4593
    %4667 = vmatprep.subr.bf16.mxu0 0
    %4668 = vmatpush1.bf16.msra.mxu0 %v4594
    %4669 = vmatprep.subr.bf16.mxu0 0
    %4670 = vmatpush1.bf16.msra.mxu0 %v4595
    %4671 = vmatprep.subr.bf16.mxu0 0
    %4672 = vmatpush1.bf16.msra.mxu0 %v4596
    %4673 = vmatprep.subr.bf16.mxu0 0
    %4674 = vmatpush1.bf16.msra.mxu0 %v4597
    %4675 = vmatprep.subr.bf16.mxu0 0
    %4676 = vmatpush1.bf16.msra.mxu0 %v4598
    %4677 = vmatprep.subr.bf16.mxu0 0
    %4678 = vmatpush1.bf16.msra.mxu0 %v4599
    %4679 = vmatprep.subr.bf16.mxu0 0
    %4680 = vmatpush1.bf16.msra.mxu0 %v4600
    %4681 = vmatprep.subr.bf16.mxu0 0
    %4682 = vmatpush1.bf16.msra.mxu0 %v4601
    %4683 = vmatprep.subr.bf16.mxu0 0
    %4684 = vmatpush1.bf16.msra.mxu0 %v4602
    %4685 = vmatprep.subr.bf16.mxu0 0
    %4686 = vmatpush1.bf16.msra.mxu0 %v4603
    %4687 = vmatprep.subr.bf16.mxu0 0
    %4688 = vmatpush1.bf16.msra.mxu0 %v4604
    %4689 = vmatprep.subr.bf16.mxu0 0
    %4690 = vmatpush1.bf16.msra.mxu0 %v4605
    %4691 = vmatprep.subr.bf16.mxu0 0
    %4692 = vmatpush1.bf16.msra.mxu0 %v4606
    %4693 = vmatprep.subr.bf16.mxu0 0
    %4694 = vmatpush1.bf16.msra.mxu0 %v4607
    %4695 = vmatprep.mubr.bf16.mxu0 %v4393
    %4696 = vmatmul.mubr.bf16.gmra.mrb[0].mxu0 %v4392
    %v4697 = vpop.f32.mrb[0].mxu0
    %v4698 = vadd.f32 %v4464, %v4697
    %v4699 = vpop.f32.mrb[0].mxu0
    %v4700 = vpop.f32.mrb[0].mxu0
    %v4701 = vpop.f32.mrb[0].mxu0
    %4702 = vdwg.mxu0
    %4703 = vmatprep.subr.bf16.mxu0 0
    %4704 = vmatpush1.bf16.msra.mxu0 %v4608
    %4705 = vmatprep.subr.bf16.mxu0 0
    %4706 = vmatpush1.bf16.msra.mxu0 %v4609
    %4707 = vmatprep.subr.bf16.mxu0 0
    %4708 = vmatpush1.bf16.msra.mxu0 %v4610
    %4709 = vmatprep.subr.bf16.mxu0 0
    %4710 = vmatpush1.bf16.msra.mxu0 %v4611
    %4711 = vmatprep.subr.bf16.mxu0 0
    %4712 = vmatpush1.bf16.msra.mxu0 %v4612
    %4713 = vmatprep.subr.bf16.mxu0 0
    %4714 = vmatpush1.bf16.msra.mxu0 %v4613
    %4715 = vmatprep.subr.bf16.mxu0 0
    %4716 = vmatpush1.bf16.msra.mxu0 %v4614
    %4717 = vmatprep.subr.bf16.mxu0 0
    %4718 = vmatpush1.bf16.msra.mxu0 %v4615
    %4719 = vmatprep.subr.bf16.mxu0 0
    %4720 = vmatpush1.bf16.msra.mxu0 %v4616
    %4721 = vmatprep.subr.bf16.mxu0 0
    %4722 = vmatpush1.bf16.msra.mxu0 %v4617
    %4723 = vmatprep.subr.bf16.mxu0 0
    %4724 = vmatpush1.bf16.msra.mxu0 %v4618
    %4725 = vmatprep.subr.bf16.mxu0 0
    %4726 = vmatpush1.bf16.msra.mxu0 %v4619
    %4727 = vmatprep.subr.bf16.mxu0 0
    %4728 = vmatpush1.bf16.msra.mxu0 %v4620
    %4729 = vmatprep.subr.bf16.mxu0 0
    %4730 = vmatpush1.bf16.msra.mxu0 %v4621
    %4731 = vmatprep.subr.bf16.mxu0 0
    %4732 = vmatpush1.bf16.msra.mxu0 %v4622
    %4733 = vmatprep.subr.bf16.mxu0 0
    %4734 = vmatpush1.bf16.msra.mxu0 %v4661
    %4735 = vmatprep.mubr.bf16.mxu0 %v4657
    %4736 = vmatmul.mubr.bf16.gmra.mrb[0].mxu0 %v4394
    %v4737 = vpop.f32.mrb[0].mxu0
    %v4738 = vadd.f32 %v4698, %v4737
    %v4739 = vpop.f32.mrb[0].mxu0
    %v4740 = vpop.f32.mrb[0].mxu0
    %v4741 = vpop.f32.mrb[0].mxu0
    %4742 = vdwg.mxu0
    %v4743 = vmax.f32 %v4738, 0.0
    %v4744 = vpack.c.bf16 %v4743, %v4743
    %v4745 = vld [vmem:[%s5] sm:$0xf]
    %v4746 = vld [vmem:[%s5 + $0x4] sm:$0xf]
    %v4747 = vld [vmem:[%s5 + $0x8] sm:$0xf]
    %v4748 = vld [vmem:[%s5 + $0xc] sm:$0xf]
    %v4749 = vld [vmem:[%s5 + $0x10] sm:$0xf]
    %v4750 = vld [vmem:[%s5 + $0x14] sm:$0xf]
    %v4751 = vld [vmem:[%s5 + $0x18] sm:$0x1]
    %v4752 = vld [vmem:[%s6] sm:$0x1]
    %v4754 = vlaneseq
    %v4755 = vshrl.u32 %v4754, 7
    %v4756 = vsub.s32 0, %v4755
    %v4757 = vrot.slane %v4752, %v4756
    %v4766 = vunpack.c.l.b16 %v4745
    %v4767 = vunpack.c.l.b16 %v4746
    %v4768 = vunpack.c.l.b16 %v4747
    %v4769 = vunpack.c.l.b16 %v4748
    %v4770 = vunpack.c.l.b16 %v4749
    %v4771 = vunpack.c.l.b16 %v4750
    %v4772 = vunpack.c.l.b16 %v4751
    %v4773 = vpack.c.b16 %v4767, %v4766
    %v4774 = vpack.c.b16 %v4769, %v4768
    %v4775 = vpack.c.b16 %v4771, %v4770
    %v4776 = vpack.c.b16 %v4772, %v4772
    %vm4780 = vcmask 408576
    %v4782 = vsel %vm4780, %v4744, 0
    %vm4784 = vcmask 1040384
    %v4786 = vsel %vm4784, %v4776, 0
    %4788 = vmatprep.subr.bf16.mxu0 0
    %4789 = vmatpush1.bf16.msra.mxu0 %v4773
    %4790 = vmatprep.subr.bf16.mxu0 0
    %4791 = vmatpush1.bf16.msra.mxu0 %v4774
    %4792 = vmatprep.subr.bf16.mxu0 0
    %4793 = vmatpush1.bf16.msra.mxu0 %v4775
    %4794 = vmatprep.subr.bf16.mxu0 0
    %4795 = vmatpush1.bf16.msra.mxu0 %v4786
    %4796 = vmatprep.subr.bf16.mxu0 0
    %4797 = vmatpush1.bf16.msra.mxu0 0
    %4798 = vmatprep.subr.bf16.mxu0 0
    %4799 = vmatpush1.bf16.msra.mxu0 0
    %4800 = vmatprep.subr.bf16.mxu0 0
    %4801 = vmatpush1.bf16.msra.mxu0 0
    %4802 = vmatprep.subr.bf16.mxu0 0
    %4803 = vmatpush1.bf16.msra.mxu0 0
    %4804 = vmatprep.subr.bf16.mxu0 0
    %4805 = vmatpush1.bf16.msra.mxu0 0
    %4806 = vmatprep.subr.bf16.mxu0 0
    %4807 = vmatpush1.bf16.msra.mxu0 0
    %4808 = vmatprep.subr.bf16.mxu0 0
    %4809 = vmatpush1.bf16.msra.mxu0 0
    %4810 = vmatprep.subr.bf16.mxu0 0
    %4811 = vmatpush1.bf16.msra.mxu0 0
    %4812 = vmatprep.subr.bf16.mxu0 0
    %4813 = vmatpush1.bf16.msra.mxu0 0
    %4814 = vmatprep.subr.bf16.mxu0 0
    %4815 = vmatpush1.bf16.msra.mxu0 0
    %4816 = vmatprep.subr.bf16.mxu0 0
    %4817 = vmatpush1.bf16.msra.mxu0 0
    %4818 = vmatprep.subr.bf16.mxu0 0
    %4819 = vmatpush1.bf16.msra.mxu0 0
    %4820 = vmatprep.mubr.bf16.mxu0 0
    %4821 = vmatmul.mubr.bf16.gmra.mrb[0].mxu0 %v4782
    %v4822 = vpop.f32.mrb[0].mxu0
    %v4823 = vadd.f32 %v4757, %v4822
    %v4824 = vpop.f32.mrb[0].mxu0
    %v4825 = vpop.f32.mrb[0].mxu0
    %v4826 = vpop.f32.mrb[0].mxu0
    %4827 = vdwg.mxu0
    %vm4828 = vcmask 74752
    %v4829 = vsel %vm4828, %v4823, -inf
    %4830 = vmax.xlane.f32.xlu0 %v4829
    %v4831 = vpop.xlane.xlu0 %4830
    %v4832 = vsub.f32 %v4823, %v4831
    %v4833 = vmul.f32 %v4832, 1.442695
    %v4834 = vpow.pop %v4833
    %v4835 = vsel %vm4828, %v4834, 0.0
    %4836 = vadd.xlane.f32.xlu0 %v4835
    %v4837 = vpop.xlane.xlu0 %4836
    %v4838 = vrcp.pop %v4837
    %v4839 = vmul.f32 %v4834, %v4838
    %4840 = vst.msk [vmem:[#allocation2] sm:$0x3] %vm4828, %v4839
    // Predicated region
    $region30: #{cnn_classifier_forward.13} parent=1 // pred_check
      _
    $region31: #{cnn_classifier_forward.13} parent=1 // pred_check_branch
      %4842 = sbr.rel (0) target = $region33
    $region32: #{cnn_classifier_forward.13} parent=1 // pred_region
      %s4844 = ssub.s32 32, 32
      %4845 = vsyncadd [#allocation3], %s4844
      %s4847 = sshll.u32 [#allocation2], 4
      %s4848 = int_to_ptr.vmem [resolvable:$true] %s4847
      %4850 = dma.vmem_to_hbm [thread:$0]  %s4848, 32, %s7, [#allocation3]
    $region33: #{cnn_classifier_forward.13} parent=1 // pred_fallthru
      _
    // Predicated region
    $region34: #{cnn_classifier_forward.13} parent=1 // pred_check
      _
    $region35: #{cnn_classifier_forward.13} parent=1 // pred_check_branch
      %4852 = sbr.rel (0) target = $region37
    $region36: #{cnn_classifier_forward.13} parent=1 // pred_region
      %4853 = dma.done [#allocation3], 32
    $region37: #{cnn_classifier_forward.13} parent=1 // pred_fallthru
      _
    %4854 = vsyncpa [#allocation3], 1

</llo_original>
